<compile_context>
chip_gen: v7x
topology: tpu7x:2x2x1
jax: 0.10.0
libtpu: 0.0.40
codegen_flags: <defaults>
</compile_context>

<pallas_src>
import jax
import jax.numpy as jnp
from jax import lax
from jax.experimental import pallas as pl
from jax.experimental.pallas import tpu as pltpu

# ----------------------------- static sizes ---------------------------------
B           = 4                      # num_batch
NVAR        = 8                      # basis coefficients per axis
NUM         = 16                     # trajectory samples
NUM_OBS     = 2
NUM_CIRCLES = 3
NREP        = NUM_OBS * NUM_CIRCLES  # 6
T_FIN       = 3.0

INP_DIM  = 16
PCD_DIM  = 40
PCD_FEAT = 32
HID_MLP  = 128
GRU_H    = 128
N2       = 2 * NVAR                  # 16
N_EQ     = 9                         # equality constraints
AUG_R    = N2 + N_EQ + 1             # 26 rows of the augmented GJ system
AUG_C    = N2 + N_EQ                 # 25 cols (KKT dimension)
OUT_DIM  = N2 * N2 + N2              # 272
MAXITER  = 5

# ------------------------- physical constants -------------------------------
A_EGO, B_EGO            = 3.0, 1.5
MARGIN_LON, MARGIN_LAT  = 0.2, 0.2
WHEEL_BASE, STEER_MAX   = 2.5, 0.5
RHO_OBS, RHO_INEQ       = 1.0, 1.0
WEIGHT_SMOOTH           = 200.0
V_MIN, V_MAX, A_MAX     = 0.001, 18.0, 6.0
INP_MEAN, INP_STD       = 0.3, 1.7
MIN_PCD, MAX_PCD        = -10.0, 30.0


# ----------------------------- basis matrices --------------------------------
def make_basis():
    t = jnp.linspace(0.0, T_FIN, NUM)
    tau = t / T_FIN
    j = jnp.arange(NVAR)
    P = tau[:, None] ** j[None, :]
    Pdot = jnp.where(j[None, :] >= 1,
                     j[None, :] * tau[:, None] ** jnp.maximum(j[None, :] - 1, 0),
                     0.0) / T_FIN
    Pddot = jnp.where(j[None, :] >= 2,
                      j[None, :] * (j[None, :] - 1)
                      * tau[:, None] ** jnp.maximum(j[None, :] - 2, 0),
                      0.0) / (T_FIN ** 2)
    return (P.astype(jnp.float32), Pdot.astype(jnp.float32),
            Pddot.astype(jnp.float32))


def make_constants():
    P, Pdot, Pddot = make_basis()
    A_eq_x = jnp.stack([P[0], Pdot[0], Pddot[0], P[-1]], axis=0)            # (4, nvar)
    A_eq_y = jnp.stack([P[0], Pdot[0], Pddot[0], P[-1], Pdot[-1]], axis=0)  # (5, nvar)
    A_eq = jnp.zeros((N_EQ, N2), jnp.float32)
    A_eq = A_eq.at[0:4, 0:NVAR].set(A_eq_x)
    A_eq = A_eq.at[4:9, NVAR:N2].set(A_eq_y)

    Pt, Pdt, Pddt = P.T, Pdot.T, Pddot.T                                    # (8, 16)
    Z = jnp.zeros((NVAR, NUM), jnp.float32)
    # primal (B,16) @ PT_ALL (16,96) -> [x | xdot | xddot | y | ydot | yddot]
    PT_ALL = jnp.concatenate([
        jnp.concatenate([Pt, Pdt, Pddt, Z, Z, Z], axis=1),
        jnp.concatenate([Z, Z, Z, Pt, Pdt, Pddt], axis=1)], axis=0)          # (16, 96)
    # primal_x (B,8) @ PT_TILE6 (8,96) -> x tiled over all 6 obstacle circles
    PT_TILE6 = jnp.tile(Pt, (1, NREP))                                       # (8, 96)
    return {"A_eq": A_eq, "PT_ALL": PT_ALL, "PT_TILE6": PT_TILE6}


# =============================== Pallas kernel ===============================
def _qcqp_kernel(
    # ---- encoder inputs & weights ----
    inp_ref, pcd_ref,
    pn1w_ref, pn1b_ref, pn2w_ref, pn2b_ref,
    m1wi_ref, m1wp_ref, m1b_ref,
    m2wAt_ref, m2wb_ref, m2bAt_ref, m2bb_ref,
    h0wi_ref, h0wp_ref, h0b_ref,
    # ---- GRU / output projection weights ----
    wihp_ref, wihr_ref, bih_ref, whh_ref, bhh_ref,
    gowAt_ref, gowb_ref, gobAt_ref, gobb_ref,
    # ---- QP / residual constants ----
    ptall_ref, pt6_ref, xo_ref, yo_ref, ao_ref, bo_ref, yub_ref, ylb_ref,
    tmpl_ref,
    # ---- outputs ----
    primal_out_ref, acc_out_ref,
    # ---- scratch (persists across grid steps) ----
    avect_ref, bvec_ref, h_ref, g3_ref, aug_ref,
):
    f32 = jnp.float32
    step = pl.program_id(0)

    # ------------- step 0: encoder networks + iteration-state init -----------
    @pl.when(step == 0)
    def _init():
        inp_n = (inp_ref[...] - INP_MEAN) / INP_STD
        pcd_s = (pcd_ref[...] - MIN_PCD) / (MAX_PCD - MIN_PCD)
        f1 = jnp.maximum(jnp.dot(pcd_s, pn1w_ref[...],
                                 preferred_element_type=f32) + pn1b_ref[...], 0.0)
        pf = jnp.maximum(jnp.dot(f1, pn2w_ref[...],
                                 preferred_element_type=f32) + pn2b_ref[...], 0.0)
        m1 = jnp.maximum(jnp.dot(inp_n, m1wi_ref[...], preferred_element_type=f32)
                         + jnp.dot(pf, m1wp_ref[...], preferred_element_type=f32)
                         + m1b_ref[...], 0.0)
        avect_ref[...] = (jnp.dot(m1, m2wAt_ref[...], preferred_element_type=f32)
                          + m2bAt_ref[...])
        bvec_ref[...] = (jnp.dot(m1, m2wb_ref[...], preferred_element_type=f32)
                         + m2bb_ref[...])
        h_ref[...] = jnp.tanh(jnp.dot(inp_n, h0wi_ref[...], preferred_element_type=f32)
                              + jnp.dot(pf, h0wp_ref[...], preferred_element_type=f32)
                              + h0b_ref[...])
        aug_ref[...] = tmpl_ref[...]          # constant A_eq / A_eq^T / b_eq / 200I blocks
        acc_out_ref[...] = jnp.zeros((B, 1), f32)

    At_vec = avect_ref[...]      # (B, 256)  row-major A^T
    b_vec = bvec_ref[...]        # (B, 16)
    h = h_ref[...]               # (B, 128)

    # ------------------------------ KKT assembly ------------------------------
    # G = A^T laid out row-major in VMEM scratch (16 contiguous lane slices).
    for i in range(N2):
        g3_ref[:, i, :] = At_vec[:, N2 * i:N2 * (i + 1)]
    G3 = g3_ref[...]                                          # (B, 16, 16) = A^T
    # cost block: 200*I + A^T A == 200*I + G G^T  (batched MXU matmul; the
    # 200*I lives in the constant template so no per-step eye construction).
    Q3 = (jnp.einsum('bik,bjk->bij', G3, G3, preferred_element_type=f32)
          + tmpl_ref[:, 0:N2, 0:N2])
    aug_ref[:, 0:N2, 0:N2] = Q3
    # rhs top: A^T b  ==  G b  (single tiny batched MXU matmul, lane-major out)
    q3 = jnp.einsum('bik,bjk->bij', b_vec.reshape(B, 1, N2), G3,
                    preferred_element_type=f32)               # (B, 1, 16)
    aug_ref[:, AUG_C, 0:N2] = q3[:, 0, :]                     # rhs row, first 16 entries

    # --------------------- in-kernel KKT solve (Gauss-Jordan) -----------------
    # Augmented system M = [[K],[rhs^T]] (26 x 25).  K is symmetric, so reducing
    # K with the in-place GJ recurrence leaves the bottom row equal to the
    # solution^T.  No pivoting needed (SPD block, then -(Schur complement)).
    # Each pivot is a single rank-1 update: the column normalisation is folded
    # in by replacing the pivot entry of the pivot row with (piv - 1).
    cidx_r = lax.broadcasted_iota(jnp.int32, (1, 1, AUG_C), 2)
    M = aug_ref[...]                                          # (B, 26, 25)
    for k in range(AUG_C):
        colk = M[:, :, k:k + 1]                               # (B, 26, 1)
        piv = M[:, k:k + 1, k:k + 1]                          # (B, 1, 1)
        colk_n = colk * (1.0 / piv)
        rowk = M[:, k:k + 1, :]                               # (B, 1, 25)
        rowk_m = jnp.where(cidx_r == k, piv - 1.0, rowk)
        M = M - colk_n * rowk_m
    primal = M[:, AUG_C, 0:N2]                                # bottom row -> (B, 16)
    primal_out_ref[...] = primal

    # -------------------------- residual (compute_alph_d) ---------------------
    r96 = jnp.dot(primal, ptall_ref[...], preferred_element_type=f32)   # (B, 96)
    xdot  = r96[:, 1 * NUM:2 * NUM]
    xddot = r96[:, 2 * NUM:3 * NUM]
    y     = r96[:, 3 * NUM:4 * NUM]
    ydot  = r96[:, 4 * NUM:5 * NUM]
    yddot = r96[:, 5 * NUM:6 * NUM]

    eps = 1e-12

    # obstacle residuals, one vectorised pass over all 6*16 circle samples
    x_ext = jnp.dot(primal[:, 0:NVAR], pt6_ref[...],
                    preferred_element_type=f32)               # (B, 96)
    y_ext = jnp.dot(primal[:, NVAR:N2], pt6_ref[...],
                    preferred_element_type=f32)               # (B, 96)
    wc = x_ext - xo_ref[...]
    ws = y_ext - yo_ref[...]
    aoo = ao_ref[...]
    boo = bo_ref[...]
    s_num = ws * aoo
    c_num = wc * boo
    r_o = jnp.sqrt(s_num * s_num + c_num * c_num)
    inv_r = 1.0 / jnp.maximum(r_o, eps)
    cos_o = jnp.where(r_o > 0.0, c_num * inv_r, 1.0)
    sin_o = jnp.where(r_o > 0.0, s_num * inv_r, 0.0)
    c1 = RHO_OBS * (aoo * aoo * cos_o * cos_o + boo * boo * sin_o * sin_o)
    c2 = RHO_OBS * (aoo * wc * cos_o + boo * ws * sin_o)
    d_obs = jnp.maximum(1.0, c2 / c1)
    rx = wc - aoo * d_obs * cos_o
    ry = ws - boo * d_obs * sin_o
    obs_sq = jnp.sum(rx * rx + ry * ry, axis=1, keepdims=True)

    # velocity residuals : alpha_v = clip(atan2(ydot, xdot), +-pi/3)
    r_v = jnp.sqrt(xdot * xdot + ydot * ydot)
    inv_rv = 1.0 / jnp.maximum(r_v, eps)
    cos0 = jnp.where(r_v > 0.0, xdot * inv_rv, 1.0)
    sin0 = jnp.where(r_v > 0.0, ydot * inv_rv, 0.0)
    s3 = 0.8660254037844386                               # sin(pi/3)
    in_rng = cos0 >= 0.5                                   # |alpha| <= pi/3
    cos_v = jnp.where(in_rng, cos0, 0.5)
    sin_v = jnp.where(in_rng, sin0, jnp.where(sin0 >= 0.0, s3, -s3))
    d_v = jnp.clip(RHO_INEQ * (xdot * cos_v + ydot * sin_v)
                   / (RHO_INEQ * (cos_v * cos_v + sin_v * sin_v)), V_MIN, V_MAX)
    rvx = xdot - d_v * cos_v
    rvy = ydot - d_v * sin_v
    vel_sq = jnp.sum(rvx * rvx + rvy * rvy, axis=1, keepdims=True)

    # acceleration residuals : alpha_a = atan2(yddot, xddot)
    r_a = jnp.sqrt(xddot * xddot + yddot * yddot)
    inv_ra = 1.0 / jnp.maximum(r_a, eps)
    cos_a = jnp.where(r_a > 0.0, xddot * inv_ra, 1.0)
    sin_a = jnp.where(r_a > 0.0, yddot * inv_ra, 0.0)
    d_a = jnp.clip(RHO_INEQ * (xddot * cos_a + yddot * sin_a)
                   / (RHO_INEQ * (cos_a * cos_a + sin_a * sin_a)), 0.0, A_MAX)
    rax = xddot - d_a * cos_a
    ray = yddot - d_a * sin_a
    acc_sq = jnp.sum(rax * rax + ray * ray, axis=1, keepdims=True)

    # lane residuals : A_lane = [P; -P]
    yub, ylb = yub_ref[...], ylb_ref[...]
    s1 = jnp.maximum(0.0, -y + yub)
    s2 = jnp.maximum(0.0, y - ylb)
    res_l1 = y - yub + s1
    res_l2 = -y + ylb + s2
    lane_sq = jnp.sum(res_l1 * res_l1 + res_l2 * res_l2, axis=1, keepdims=True)

    # steering penalty (minimax polynomial arctan, no transcendental chain)
    v2 = xdot * xdot + ydot * ydot + 1e-4
    curv = (xddot * ydot - xdot * yddot) / (v2 * jnp.sqrt(v2))
    u = curv * WHEEL_BASE
    au = jnp.abs(u)
    xq = jnp.minimum(au, 1.0 / jnp.maximum(au, 1.0))
    x2q = xq * xq
    pa = xq * (0.99997726 + x2q * (-0.33262347 + x2q * (0.19354346
               + x2q * (-0.11643287 + x2q * (0.05265332 + x2q * (-0.01172120))))))
    at = jnp.where(au <= 1.0, pa, (0.5 * jnp.pi) - pa)
    steer = jnp.where(u < 0.0, -at, at)
    pen = (jnp.maximum(0.0, steer - STEER_MAX)
           + jnp.maximum(0.0, -steer - STEER_MAX))
    steer_sq = jnp.sum(pen * pen, axis=1, keepdims=True)

    res_norm = (jnp.sqrt(acc_sq) + jnp.sqrt(vel_sq) + jnp.sqrt(obs_sq)
                + jnp.sqrt(lane_sq) + jnp.sqrt(steer_sq))                 # (B, 1)
    acc_out_ref[...] = acc_out_ref[...] + res_norm

    # ----------------- GRU context update + output projections ----------------
    # Skipped on the last iteration: its outputs are never consumed.
    @pl.when(step < MAXITER - 1)
    def _gru_update():
        def _sig(v):                 # sigmoid via tanh (single EUP op, no divide)
            return 0.5 * (jnp.tanh(0.5 * v) + 1.0)

        gi = (jnp.dot(primal, wihp_ref[...], preferred_element_type=f32)
              + res_norm * wihr_ref[...] + bih_ref[...])                 # (B, 384)
        gh = jnp.dot(h, whh_ref[...], preferred_element_type=f32) + bhh_ref[...]
        r_g = _sig(gi[:, 0:GRU_H] + gh[:, 0:GRU_H])
        z_g = _sig(gi[:, GRU_H:2 * GRU_H] + gh[:, GRU_H:2 * GRU_H])
        n_g = jnp.tanh(gi[:, 2 * GRU_H:3 * GRU_H] + r_g * gh[:, 2 * GRU_H:3 * GRU_H])
        h_new = (1.0 - z_g) * n_g + z_g * h
        h_ref[...] = h_new
        avect_ref[...] = (jnp.dot(h_new, gowAt_ref[...], preferred_element_type=f32)
                          + gobAt_ref[...])
        bvec_ref[...] = (jnp.dot(h_new, gowb_ref[...], preferred_element_type=f32)
                         + gobb_ref[...])

    # ------------------------------- finalize ---------------------------------
    @pl.when(step == MAXITER - 1)
    def _finalize():
        acc_out_ref[...] = acc_out_ref[...] * (1.0 / MAXITER)


# ============================ parameters / glue ==============================
def init_params(key):
    ks = jax.random.split(key, 10)

    def lin(k, din, dout):
        kw, kb = jax.random.split(k)
        w = jax.random.normal(kw, (din, dout), jnp.float32) / jnp.sqrt(float(din))
        b = 0.01 * jax.random.normal(kb, (dout,), jnp.float32)
        return w, b

    return {
        "pn1": lin(ks[0], PCD_DIM, 64),
        "pn2": lin(ks[1], 64, PCD_FEAT),
        "mlp1": lin(ks[2], INP_DIM + PCD_FEAT, HID_MLP),
        "mlp2": lin(ks[3], HID_MLP, OUT_DIM),
        "h0": lin(ks[4], INP_DIM + PCD_FEAT, GRU_H),
        "gru_wih": jax.random.normal(ks[5], (N2 + 1, 3 * GRU_H), jnp.float32)
                   / jnp.sqrt(float(N2 + 1)),
        "gru_whh": jax.random.normal(ks[6], (GRU_H, 3 * GRU_H), jnp.float32)
                   / jnp.sqrt(float(GRU_H)),
        "gru_bih": 0.01 * jax.random.normal(ks[7], (3 * GRU_H,), jnp.float32),
        "gru_bhh": 0.01 * jax.random.normal(ks[8], (3 * GRU_H,), jnp.float32),
        "gru_out": lin(ks[9], GRU_H, OUT_DIM),
    }


def forward(params, consts, inp, init_state_ego, param_des, pcd_data,
            closest_obs, psi_obs, dim_x_obs, dim_y_obs, y_ub, y_lb,
            P_diag, Pddot_diag, pcd_mean, pcd_std, goal_des):
    del param_des, P_diag, Pddot_diag, pcd_mean, pcd_std   # unused (as in torch)
    f32 = jnp.float32

    # ---- obstacle circle trajectories / ellipse axes (once per forward) ----
    x_obs = closest_obs[:, :NUM_OBS]
    y_obs = closest_obs[:, NUM_OBS:2 * NUM_OBS]
    x_traj = jnp.broadcast_to(x_obs[:, :, None], (B, NUM_OBS, NUM))
    y_traj = jnp.broadcast_to(y_obs[:, :, None], (B, NUM_OBS, NUM))
    psi_traj = jnp.broadcast_to(psi_obs[:, :, None], (B, NUM_OBS, NUM))
    r2 = (dim_x_obs - dim_y_obs) / 2.0
    centres = jnp.stack([jnp.zeros_like(r2), r2, -r2], axis=2)           # (B, no, 3)
    x_circ = x_traj[:, :, None, :] + centres[..., None] * jnp.cos(psi_traj)[:, :, None, :]
    y_circ = y_traj[:, :, None, :] + centres[..., None] * jnp.sin(psi_traj)[:, :, None, :]
    xo2d = x_circ.reshape(B, NREP * NUM).astype(f32)
    yo2d = y_circ.reshape(B, NREP * NUM).astype(f32)

    radius = dim_y_obs / 2.0
    a1 = A_EGO + radius + MARGIN_LON
    b1 = B_EGO + radius + MARGIN_LAT
    ao = jnp.broadcast_to(a1[:, :, None], (B, NUM_OBS, NUM_CIRCLES)).reshape(B, NREP)
    bo = jnp.broadcast_to(b1[:, :, None], (B, NUM_OBS, NUM_CIRCLES)).reshape(B, NREP)
    ao2d = jnp.broadcast_to(ao[:, :, None], (B, NREP, NUM)).reshape(B, NREP * NUM).astype(f32)
    bo2d = jnp.broadcast_to(bo[:, :, None], (B, NREP, NUM)).reshape(B, NREP * NUM).astype(f32)

    # ---- boundary conditions + constant KKT template (26 x 25 augmented) ----
    b_eq = jnp.stack([init_state_ego[:, 0], init_state_ego[:, 2], init_state_ego[:, 4],
                      goal_des[:, 0],
                      init_state_ego[:, 1], init_state_ego[:, 3], init_state_ego[:, 5],
                      goal_des[:, 1], jnp.zeros((B,), f32)], axis=1)       # (B, 9)
    A_eq = consts["A_eq"]
    eye200 = WEIGHT_SMOOTH * jnp.eye(N2, dtype=f32)
    tmpl = jnp.zeros((B, AUG_R, AUG_C), f32)
    tmpl = tmpl.at[:, 0:N2, 0:N2].set(jnp.broadcast_to(eye200[None], (B, N2, N2)))
    tmpl = tmpl.at[:, 0:N2, N2:AUG_C].set(jnp.broadcast_to(A_eq.T[None], (B, N2, N_EQ)))
    tmpl = tmpl.at[:, N2:AUG_C, 0:N2].set(jnp.broadcast_to(A_eq[None], (B, N_EQ, N2)))
    tmpl = tmpl.at[:, AUG_C, N2:AUG_C].set(b_eq)

    # ---- split / permute weights host-side (lane-friendly kernel layout) ----
    # Only the column-permuted A^T head and the b head are needed in-kernel
    # (the KKT system uses only A^T); the row-major A head is dropped.
    pn1w, pn1b = params["pn1"]
    pn2w, pn2b = params["pn2"]
    m1w, m1b = params["mlp1"]
    m2w, m2b = params["mlp2"]
    h0w, h0b = params["h0"]
    gow, gob = params["gru_out"]

    def split_out(w, b):
        wA = w[:, :N2 * N2]
        wAt = wA.reshape(-1, N2, N2).transpose(0, 2, 1).reshape(-1, N2 * N2)
        wb = w[:, N2 * N2:OUT_DIM]
        bAt = b[:N2 * N2].reshape(N2, N2).T.reshape(1, N2 * N2)
        bb_ = b[N2 * N2:OUT_DIM].reshape(1, -1)
        return wAt, wb, bAt, bb_

    m2wAt, m2wb, m2bAt, m2bb = split_out(m2w, m2b)
    gowAt, gowb, gobAt, gobb = split_out(gow, gob)

    wih = params["gru_wih"]
    wihp, wihr = wih[:N2], wih[N2:N2 + 1]
    bih = params["gru_bih"].reshape(1, -1)
    whh = params["gru_whh"]
    bhh = params["gru_bhh"].reshape(1, -1)

    args = [
        inp.astype(f32), pcd_data.astype(f32),
        pn1w, pn1b.reshape(1, -1), pn2w, pn2b.reshape(1, -1),
        m1w[:INP_DIM], m1w[INP_DIM:], m1b.reshape(1, -1),
        m2wAt, m2wb, m2bAt, m2bb,
        h0w[:INP_DIM], h0w[INP_DIM:], h0b.reshape(1, -1),
        wihp, wihr, bih, whh, bhh,
        gowAt, gowb, gobAt, gobb,
        consts["PT_ALL"], consts["PT_TILE6"], xo2d, yo2d, ao2d, bo2d,
        y_ub.reshape(B, 1).astype(f32), y_lb.reshape(B, 1).astype(f32), tmpl,
    ]

    def _fs(shape):
        nd = len(shape)
        return pl.BlockSpec(tuple(shape), lambda i, nd=nd: (0,) * nd)

    primal, acc = pl.pallas_call(
        _qcqp_kernel,
        out_shape=(jax.ShapeDtypeStruct((B, N2), f32),
                   jax.ShapeDtypeStruct((B, 1), f32)),
        grid=(MAXITER,),
        in_specs=[_fs(a.shape) for a in args],
        out_specs=(_fs((B, N2)), _fs((B, 1))),
        scratch_shapes=[
            pltpu.VMEM((B, N2 * N2), f32),       # A_mat_vec^T (row-major A^T)
            pltpu.VMEM((B, N2), f32),            # b_vec
            pltpu.VMEM((B, GRU_H), f32),         # GRU hidden state
            pltpu.VMEM((B, N2, N2), f32),        # G = A^T staging for the MXU
            pltpu.VMEM((B, AUG_R, AUG_C), f32),  # augmented KKT system
        ],
        compiler_params=pltpu.CompilerParams(
            dimension_semantics=("arbitrary",)),
    )(*args)
    return primal, acc[:, 0]


# ================================== main =====================================
if __name__ == "__main__":
    key = jax.random.PRNGKey(0)
    kp, kd = jax.random.split(key)
    params = init_params(kp)
    consts = make_constants()

    ks = jax.random.split(kd, 14)
    f32 = jnp.float32
    inp = jax.random.normal(ks[0], (B, INP_DIM), f32)
    init_state_ego = jnp.concatenate([
        jax.random.uniform(ks[1], (B, 2), f32, -2.0, 2.0),   # x, y
        jax.random.uniform(ks[2], (B, 2), f32, 1.0, 5.0),    # vx, vy
        jax.random.uniform(ks[3], (B, 2), f32, -1.0, 1.0),   # ax, ay
    ], axis=1)
    param_des = jax.random.normal(ks[4], (B, 2), f32)
    pcd_data = jax.random.uniform(ks[5], (B, PCD_DIM), f32, MIN_PCD, MAX_PCD)
    closest_obs = jax.random.uniform(ks[6], (B, 2 * NUM_OBS), f32, 5.0, 30.0)
    psi_obs = jax.random.uniform(ks[7], (B, NUM_OBS), f32, -3.14, 3.14)
    dim_x_obs = jax.random.uniform(ks[8], (B, NUM_OBS), f32, 4.0, 6.0)
    dim_y_obs = jax.random.uniform(ks[9], (B, NUM_OBS), f32, 1.5, 2.5)
    y_ub = jax.random.uniform(ks[10], (B,), f32, 3.0, 5.0)
    y_lb = -jax.random.uniform(ks[11], (B,), f32, 3.0, 5.0)
    goal_des = jnp.concatenate([
        jax.random.uniform(ks[12], (B, 1), f32, 30.0, 60.0),
        jax.random.uniform(ks[13], (B, 1), f32, -2.0, 2.0)], axis=1)
    P_diag = jnp.zeros((1,), f32)
    Pddot_diag = jnp.zeros((1,), f32)
    pcd_mean = jnp.zeros((1,), f32)
    pcd_std = jnp.ones((1,), f32)

    fwd = jax.jit(lambda *a: forward(params, consts, *a))
    primal_sol, acc_res = fwd(inp, init_state_ego, param_des, pcd_data,
                              closest_obs, psi_obs, dim_x_obs, dim_y_obs,
                              y_ub, y_lb, P_diag, Pddot_diag, pcd_mean,
                              pcd_std, goal_des)
    jax.block_until_ready((primal_sol, acc_res))

    assert primal_sol.shape == (B, N2)
    assert acc_res.shape == (B,)
    assert bool(jnp.all(jnp.isfinite(primal_sol)))
    assert bool(jnp.all(jnp.isfinite(acc_res)))
    print("KERNEL_OK")
</pallas_src>

<mosaic_0001>
module attributes {stable_mosaic.version = 11 : i64} {
  func.func @_qcqp_kernel(%arg0: i32, %arg1: memref<4x16xf32, #tpu.memory_space<vmem>>, %arg2: memref<4x40xf32, #tpu.memory_space<vmem>>, %arg3: memref<40x64xf32, #tpu.memory_space<vmem>>, %arg4: memref<1x64xf32, #tpu.memory_space<vmem>>, %arg5: memref<64x32xf32, #tpu.memory_space<vmem>>, %arg6: memref<1x32xf32, #tpu.memory_space<vmem>>, %arg7: memref<16x128xf32, #tpu.memory_space<vmem>>, %arg8: memref<32x128xf32, #tpu.memory_space<vmem>>, %arg9: memref<1x128xf32, #tpu.memory_space<vmem>>, %arg10: memref<128x256xf32, #tpu.memory_space<vmem>>, %arg11: memref<128x16xf32, #tpu.memory_space<vmem>>, %arg12: memref<1x256xf32, #tpu.memory_space<vmem>>, %arg13: memref<1x16xf32, #tpu.memory_space<vmem>>, %arg14: memref<16x128xf32, #tpu.memory_space<vmem>>, %arg15: memref<32x128xf32, #tpu.memory_space<vmem>>, %arg16: memref<1x128xf32, #tpu.memory_space<vmem>>, %arg17: memref<16x384xf32, #tpu.memory_space<vmem>>, %arg18: memref<1x384xf32, #tpu.memory_space<vmem>>, %arg19: memref<1x384xf32, #tpu.memory_space<vmem>>, %arg20: memref<128x384xf32, #tpu.memory_space<vmem>>, %arg21: memref<1x384xf32, #tpu.memory_space<vmem>>, %arg22: memref<128x256xf32, #tpu.memory_space<vmem>>, %arg23: memref<128x16xf32, #tpu.memory_space<vmem>>, %arg24: memref<1x256xf32, #tpu.memory_space<vmem>>, %arg25: memref<1x16xf32, #tpu.memory_space<vmem>>, %arg26: memref<16x96xf32, #tpu.memory_space<vmem>>, %arg27: memref<8x96xf32, #tpu.memory_space<vmem>>, %arg28: memref<4x96xf32, #tpu.memory_space<vmem>>, %arg29: memref<4x96xf32, #tpu.memory_space<vmem>>, %arg30: memref<4x96xf32, #tpu.memory_space<vmem>>, %arg31: memref<4x96xf32, #tpu.memory_space<vmem>>, %arg32: memref<4x1xf32, #tpu.memory_space<vmem>>, %arg33: memref<4x1xf32, #tpu.memory_space<vmem>>, %arg34: memref<4x26x25xf32, #tpu.memory_space<vmem>>, %arg35: memref<4x16xf32, #tpu.memory_space<vmem>>, %arg36: memref<4x1xf32, #tpu.memory_space<vmem>>, %arg37: memref<4x256xf32, #tpu.memory_space<vmem>>, %arg38: memref<4x16xf32, #tpu.memory_space<vmem>>, %arg39: memref<4x128xf32, #tpu.memory_space<vmem>>, %arg40: memref<4x16x16xf32, #tpu.memory_space<vmem>>, %arg41: memref<4x26x25xf32, #tpu.memory_space<vmem>>) attributes {dimension_semantics = [#tpu.dimension_semantics<arbitrary>], iteration_bounds = array<i64: 5>, scalar_prefetch = 0 : i64, scratch_operands = 5 : i64, tpu.core_type = #tpu.core_type<tc>, window_params = [{pipeline_mode = #tpu.pipeline_mode<synchronous>, transform_indices = @transform_0, window_bounds = array<i64: 4, 16>}, {pipeline_mode = #tpu.pipeline_mode<synchronous>, transform_indices = @transform_1, window_bounds = array<i64: 4, 40>}, {pipeline_mode = #tpu.pipeline_mode<synchronous>, transform_indices = @transform_2, window_bounds = array<i64: 40, 64>}, {pipeline_mode = #tpu.pipeline_mode<synchronous>, transform_indices = @transform_3, window_bounds = array<i64: 1, 64>}, {pipeline_mode = #tpu.pipeline_mode<synchronous>, transform_indices = @transform_4, window_bounds = array<i64: 64, 32>}, {pipeline_mode = #tpu.pipeline_mode<synchronous>, transform_indices = @transform_5, window_bounds = array<i64: 1, 32>}, {pipeline_mode = #tpu.pipeline_mode<synchronous>, transform_indices = @transform_6, window_bounds = array<i64: 16, 128>}, {pipeline_mode = #tpu.pipeline_mode<synchronous>, transform_indices = @transform_7, window_bounds = array<i64: 32, 128>}, {pipeline_mode = #tpu.pipeline_mode<synchronous>, transform_indices = @transform_8, window_bounds = array<i64: 1, 128>}, {pipeline_mode = #tpu.pipeline_mode<synchronous>, transform_indices = @transform_9, window_bounds = array<i64: 128, 256>}, {pipeline_mode = #tpu.pipeline_mode<synchronous>, transform_indices = @transform_10, window_bounds = array<i64: 128, 16>}, {pipeline_mode = #tpu.pipeline_mode<synchronous>, transform_indices = @transform_11, window_bounds = array<i64: 1, 256>}, {pipeline_mode = #tpu.pipeline_mode<synchronous>, transform_indices = @transform_12, window_bounds = array<i64: 1, 16>}, {pipeline_mode = #tpu.pipeline_mode<synchronous>, transform_indices = @transform_13, window_bounds = array<i64: 16, 128>}, {pipeline_mode = #tpu.pipeline_mode<synchronous>, transform_indices = @transform_14, window_bounds = array<i64: 32, 128>}, {pipeline_mode = #tpu.pipeline_mode<synchronous>, transform_indices = @transform_15, window_bounds = array<i64: 1, 128>}, {pipeline_mode = #tpu.pipeline_mode<synchronous>, transform_indices = @transform_16, window_bounds = array<i64: 16, 384>}, {pipeline_mode = #tpu.pipeline_mode<synchronous>, transform_indices = @transform_17, window_bounds = array<i64: 1, 384>}, {pipeline_mode = #tpu.pipeline_mode<synchronous>, transform_indices = @transform_18, window_bounds = array<i64: 1, 384>}, {pipeline_mode = #tpu.pipeline_mode<synchronous>, transform_indices = @transform_19, window_bounds = array<i64: 128, 384>}, {pipeline_mode = #tpu.pipeline_mode<synchronous>, transform_indices = @transform_20, window_bounds = array<i64: 1, 384>}, {pipeline_mode = #tpu.pipeline_mode<synchronous>, transform_indices = @transform_21, window_bounds = array<i64: 128, 256>}, {pipeline_mode = #tpu.pipeline_mode<synchronous>, transform_indices = @transform_22, window_bounds = array<i64: 128, 16>}, {pipeline_mode = #tpu.pipeline_mode<synchronous>, transform_indices = @transform_23, window_bounds = array<i64: 1, 256>}, {pipeline_mode = #tpu.pipeline_mode<synchronous>, transform_indices = @transform_24, window_bounds = array<i64: 1, 16>}, {pipeline_mode = #tpu.pipeline_mode<synchronous>, transform_indices = @transform_25, window_bounds = array<i64: 16, 96>}, {pipeline_mode = #tpu.pipeline_mode<synchronous>, transform_indices = @transform_26, window_bounds = array<i64: 8, 96>}, {pipeline_mode = #tpu.pipeline_mode<synchronous>, transform_indices = @transform_27, window_bounds = array<i64: 4, 96>}, {pipeline_mode = #tpu.pipeline_mode<synchronous>, transform_indices = @transform_28, window_bounds = array<i64: 4, 96>}, {pipeline_mode = #tpu.pipeline_mode<synchronous>, transform_indices = @transform_29, window_bounds = array<i64: 4, 96>}, {pipeline_mode = #tpu.pipeline_mode<synchronous>, transform_indices = @transform_30, window_bounds = array<i64: 4, 96>}, {pipeline_mode = #tpu.pipeline_mode<synchronous>, transform_indices = @transform_31, window_bounds = array<i64: 4, 1>}, {pipeline_mode = #tpu.pipeline_mode<synchronous>, transform_indices = @transform_32, window_bounds = array<i64: 4, 1>}, {pipeline_mode = #tpu.pipeline_mode<synchronous>, transform_indices = @transform_33, window_bounds = array<i64: 4, 26, 25>}, {pipeline_mode = #tpu.pipeline_mode<synchronous>, transform_indices = @transform_34, window_bounds = array<i64: 4, 16>}, {pipeline_mode = #tpu.pipeline_mode<synchronous>, transform_indices = @transform_35, window_bounds = array<i64: 4, 1>}]} {
    %c0_i32 = arith.constant 0 : i32
    %0 = arith.cmpi eq, %arg0, %c0_i32 : i32
    %1 = arith.extui %0 : i1 to i32
    %c0_i32_0 = arith.constant 0 : i32
    %2 = arith.cmpi ne, %1, %c0_i32_0 : i32
    scf.if %2 {
      %c0_198 = arith.constant 0 : index
      %c0_199 = arith.constant 0 : index
      %853 = vector.load %arg1[%c0_198, %c0_199] : memref<4x16xf32, #tpu.memory_space<vmem>>, vector<4x16xf32>
      %cst_200 = arith.constant 3.000000e-01 : f32
      %854 = vector.broadcast %cst_200 : f32 to vector<4x16xf32>
      %855 = arith.subf %853, %854 : vector<4x16xf32>
      %cst_201 = arith.constant 1.700000e+00 : f32
      %856 = vector.broadcast %cst_201 : f32 to vector<4x16xf32>
      %857 = arith.divf %855, %856 : vector<4x16xf32>
      %c0_202 = arith.constant 0 : index
      %c0_203 = arith.constant 0 : index
      %858 = vector.load %arg2[%c0_202, %c0_203] : memref<4x40xf32, #tpu.memory_space<vmem>>, vector<4x40xf32>
      %cst_204 = arith.constant -1.000000e+01 : f32
      %859 = vector.broadcast %cst_204 : f32 to vector<4x40xf32>
      %860 = arith.subf %858, %859 : vector<4x40xf32>
      %cst_205 = arith.constant 4.000000e+01 : f32
      %861 = vector.broadcast %cst_205 : f32 to vector<4x40xf32>
      %862 = arith.divf %860, %861 : vector<4x40xf32>
      %c0_206 = arith.constant 0 : index
      %c0_207 = arith.constant 0 : index
      %863 = vector.load %arg3[%c0_206, %c0_207] : memref<40x64xf32, #tpu.memory_space<vmem>>, vector<40x64xf32>
      %cst_208 = arith.constant dense<0.000000e+00> : vector<4x64xf32>
      %864 = tpu.matmul %862, %863, %cst_208 {dimension_numbers = #tpu.dot_dimension_numbers<[1], [0], [0], [1], [0, 0, 1, 1], [], []>} : vector<4x40xf32>, vector<40x64xf32>, vector<4x64xf32> -> vector<4x64xf32>
      %c0_209 = arith.constant 0 : index
      %c0_210 = arith.constant 0 : index
      %865 = vector.load %arg4[%c0_209, %c0_210] : memref<1x64xf32, #tpu.memory_space<vmem>>, vector<1x64xf32>
      %866 = vector.broadcast %865 : vector<1x64xf32> to vector<4x64xf32>
      %867 = arith.addf %864, %866 : vector<4x64xf32>
      %cst_211 = arith.constant 0.000000e+00 : f32
      %868 = vector.broadcast %cst_211 : f32 to vector<4x64xf32>
      %869 = arith.maximumf %867, %868 : vector<4x64xf32>
      %c0_212 = arith.constant 0 : index
      %c0_213 = arith.constant 0 : index
      %870 = vector.load %arg5[%c0_212, %c0_213] : memref<64x32xf32, #tpu.memory_space<vmem>>, vector<64x32xf32>
      %cst_214 = arith.constant dense<0.000000e+00> : vector<4x32xf32>
      %871 = tpu.matmul %869, %870, %cst_214 {dimension_numbers = #tpu.dot_dimension_numbers<[1], [0], [0], [1], [0, 0, 1, 1], [], []>} : vector<4x64xf32>, vector<64x32xf32>, vector<4x32xf32> -> vector<4x32xf32>
      %c0_215 = arith.constant 0 : index
      %c0_216 = arith.constant 0 : index
      %872 = vector.load %arg6[%c0_215, %c0_216] : memref<1x32xf32, #tpu.memory_space<vmem>>, vector<1x32xf32>
      %873 = vector.broadcast %872 : vector<1x32xf32> to vector<4x32xf32>
      %874 = arith.addf %871, %873 : vector<4x32xf32>
      %cst_217 = arith.constant 0.000000e+00 : f32
      %875 = vector.broadcast %cst_217 : f32 to vector<4x32xf32>
      %876 = arith.maximumf %874, %875 : vector<4x32xf32>
      %c0_218 = arith.constant 0 : index
      %c0_219 = arith.constant 0 : index
      %877 = vector.load %arg7[%c0_218, %c0_219] : memref<16x128xf32, #tpu.memory_space<vmem>>, vector<16x128xf32>
      %cst_220 = arith.constant dense<0.000000e+00> : vector<4x128xf32>
      %878 = tpu.matmul %857, %877, %cst_220 {dimension_numbers = #tpu.dot_dimension_numbers<[1], [0], [0], [1], [0, 0, 1, 1], [], []>} : vector<4x16xf32>, vector<16x128xf32>, vector<4x128xf32> -> vector<4x128xf32>
      %c0_221 = arith.constant 0 : index
      %c0_222 = arith.constant 0 : index
      %879 = vector.load %arg8[%c0_221, %c0_222] : memref<32x128xf32, #tpu.memory_space<vmem>>, vector<32x128xf32>
      %cst_223 = arith.constant dense<0.000000e+00> : vector<4x128xf32>
      %880 = tpu.matmul %876, %879, %cst_223 {dimension_numbers = #tpu.dot_dimension_numbers<[1], [0], [0], [1], [0, 0, 1, 1], [], []>} : vector<4x32xf32>, vector<32x128xf32>, vector<4x128xf32> -> vector<4x128xf32>
      %881 = arith.addf %878, %880 : vector<4x128xf32>
      %c0_224 = arith.constant 0 : index
      %c0_225 = arith.constant 0 : index
      %882 = vector.load %arg9[%c0_224, %c0_225] : memref<1x128xf32, #tpu.memory_space<vmem>>, vector<1x128xf32>
      %883 = vector.broadcast %882 : vector<1x128xf32> to vector<4x128xf32>
      %884 = arith.addf %881, %883 : vector<4x128xf32>
      %cst_226 = arith.constant 0.000000e+00 : f32
      %885 = vector.broadcast %cst_226 : f32 to vector<4x128xf32>
      %886 = arith.maximumf %884, %885 : vector<4x128xf32>
      %c0_227 = arith.constant 0 : index
      %c0_228 = arith.constant 0 : index
      %887 = vector.load %arg10[%c0_227, %c0_228] : memref<128x256xf32, #tpu.memory_space<vmem>>, vector<128x256xf32>
      %cst_229 = arith.constant dense<0.000000e+00> : vector<4x256xf32>
      %888 = tpu.matmul %886, %887, %cst_229 {dimension_numbers = #tpu.dot_dimension_numbers<[1], [0], [0], [1], [0, 0, 1, 1], [], []>} : vector<4x128xf32>, vector<128x256xf32>, vector<4x256xf32> -> vector<4x256xf32>
      %c0_230 = arith.constant 0 : index
      %c0_231 = arith.constant 0 : index
      %889 = vector.load %arg12[%c0_230, %c0_231] : memref<1x256xf32, #tpu.memory_space<vmem>>, vector<1x256xf32>
      %890 = vector.broadcast %889 : vector<1x256xf32> to vector<4x256xf32>
      %891 = arith.addf %888, %890 : vector<4x256xf32>
      %c0_232 = arith.constant 0 : index
      %c0_233 = arith.constant 0 : index
      %892 = vector.load %arg37[%c0_232, %c0_233] : memref<4x256xf32, #tpu.memory_space<vmem>>, vector<4x256xf32>
      tpu.vector_store %arg37[%c0_232, %c0_233], %891 {strides = array<i32>} : memref<4x256xf32, #tpu.memory_space<vmem>>, vector<4x256xf32>,
      %c0_234 = arith.constant 0 : index
      %c0_235 = arith.constant 0 : index
      %893 = vector.load %arg11[%c0_234, %c0_235] : memref<128x16xf32, #tpu.memory_space<vmem>>, vector<128x16xf32>
      %cst_236 = arith.constant dense<0.000000e+00> : vector<4x16xf32>
      %894 = tpu.matmul %886, %893, %cst_236 {dimension_numbers = #tpu.dot_dimension_numbers<[1], [0], [0], [1], [0, 0, 1, 1], [], []>} : vector<4x128xf32>, vector<128x16xf32>, vector<4x16xf32> -> vector<4x16xf32>
      %c0_237 = arith.constant 0 : index
      %c0_238 = arith.constant 0 : index
      %895 = vector.load %arg13[%c0_237, %c0_238] : memref<1x16xf32, #tpu.memory_space<vmem>>, vector<1x16xf32>
      %896 = vector.broadcast %895 : vector<1x16xf32> to vector<4x16xf32>
      %897 = arith.addf %894, %896 : vector<4x16xf32>
      %c0_239 = arith.constant 0 : index
      %c0_240 = arith.constant 0 : index
      %898 = vector.load %arg38[%c0_239, %c0_240] : memref<4x16xf32, #tpu.memory_space<vmem>>, vector<4x16xf32>
      tpu.vector_store %arg38[%c0_239, %c0_240], %897 {strides = array<i32>} : memref<4x16xf32, #tpu.memory_space<vmem>>, vector<4x16xf32>,
      %c0_241 = arith.constant 0 : index
      %c0_242 = arith.constant 0 : index
      %899 = vector.load %arg14[%c0_241, %c0_242] : memref<16x128xf32, #tpu.memory_space<vmem>>, vector<16x128xf32>
      %cst_243 = arith.constant dense<0.000000e+00> : vector<4x128xf32>
      %900 = tpu.matmul %857, %899, %cst_243 {dimension_numbers = #tpu.dot_dimension_numbers<[1], [0], [0], [1], [0, 0, 1, 1], [], []>} : vector<4x16xf32>, vector<16x128xf32>, vector<4x128xf32> -> vector<4x128xf32>
      %c0_244 = arith.constant 0 : index
      %c0_245 = arith.constant 0 : index
      %901 = vector.load %arg15[%c0_244, %c0_245] : memref<32x128xf32, #tpu.memory_space<vmem>>, vector<32x128xf32>
      %cst_246 = arith.constant dense<0.000000e+00> : vector<4x128xf32>
      %902 = tpu.matmul %876, %901, %cst_246 {dimension_numbers = #tpu.dot_dimension_numbers<[1], [0], [0], [1], [0, 0, 1, 1], [], []>} : vector<4x32xf32>, vector<32x128xf32>, vector<4x128xf32> -> vector<4x128xf32>
      %903 = arith.addf %900, %902 : vector<4x128xf32>
      %c0_247 = arith.constant 0 : index
      %c0_248 = arith.constant 0 : index
      %904 = vector.load %arg16[%c0_247, %c0_248] : memref<1x128xf32, #tpu.memory_space<vmem>>, vector<1x128xf32>
      %905 = vector.broadcast %904 : vector<1x128xf32> to vector<4x128xf32>
      %906 = arith.addf %903, %905 : vector<4x128xf32>
      %907 = math.tanh %906 : vector<4x128xf32>
      %c0_249 = arith.constant 0 : index
      %c0_250 = arith.constant 0 : index
      %908 = vector.load %arg39[%c0_249, %c0_250] : memref<4x128xf32, #tpu.memory_space<vmem>>, vector<4x128xf32>
      tpu.vector_store %arg39[%c0_249, %c0_250], %907 {strides = array<i32>} : memref<4x128xf32, #tpu.memory_space<vmem>>, vector<4x128xf32>,
      %c0_251 = arith.constant 0 : index
      %c0_252 = arith.constant 0 : index
      %c0_253 = arith.constant 0 : index
      %909 = vector.load %arg34[%c0_251, %c0_252, %c0_253] : memref<4x26x25xf32, #tpu.memory_space<vmem>>, vector<4x26x25xf32>
      %c0_254 = arith.constant 0 : index
      %c0_255 = arith.constant 0 : index
      %c0_256 = arith.constant 0 : index
      %910 = vector.load %arg41[%c0_254, %c0_255, %c0_256] : memref<4x26x25xf32, #tpu.memory_space<vmem>>, vector<4x26x25xf32>
      tpu.vector_store %arg41[%c0_254, %c0_255, %c0_256], %909 {strides = array<i32>} : memref<4x26x25xf32, #tpu.memory_space<vmem>>, vector<4x26x25xf32>,
      %cst_257 = arith.constant 0.000000e+00 : f32
      %911 = vector.broadcast %cst_257 : f32 to vector<4x1xf32>
      %c0_258 = arith.constant 0 : index
      %c0_259 = arith.constant 0 : index
      %912 = vector.load %arg36[%c0_258, %c0_259] : memref<4x1xf32, #tpu.memory_space<vmem>>, vector<4x1xf32>
      tpu.vector_store %arg36[%c0_258, %c0_259], %911 {strides = array<i32>} : memref<4x1xf32, #tpu.memory_space<vmem>>, vector<4x1xf32>,
    } else {
    }
    %c0 = arith.constant 0 : index
    %c0_1 = arith.constant 0 : index
    %3 = vector.load %arg37[%c0, %c0_1] : memref<4x256xf32, #tpu.memory_space<vmem>>, vector<4x256xf32>
    %c0_2 = arith.constant 0 : index
    %c0_3 = arith.constant 0 : index
    %4 = vector.load %arg38[%c0_2, %c0_3] : memref<4x16xf32, #tpu.memory_space<vmem>>, vector<4x16xf32>
    %c0_4 = arith.constant 0 : index
    %c0_5 = arith.constant 0 : index
    %5 = vector.load %arg39[%c0_4, %c0_5] : memref<4x128xf32, #tpu.memory_space<vmem>>, vector<4x128xf32>
    %6 = vector.extract_strided_slice %3 {offsets = [0, 0], sizes = [4, 16], strides = [1, 1]} : vector<4x256xf32> to vector<4x16xf32>
    %c0_6 = arith.constant 0 : index
    %c0_7 = arith.constant 0 : index
    %c0_8 = arith.constant 0 : index
    %7 = vector.load %arg40[%c0_6, %c0_7, %c0_8] : memref<4x16x16xf32, #tpu.memory_space<vmem>>, vector<4x1x16xf32>
    %8 = vector.shape_cast %7 : vector<4x1x16xf32> to vector<4x16xf32>
    %9 = vector.shape_cast %6 : vector<4x16xf32> to vector<4x1x16xf32>
    tpu.vector_store %arg40[%c0_6, %c0_7, %c0_8], %9 {strides = array<i32>} : memref<4x16x16xf32, #tpu.memory_space<vmem>>, vector<4x1x16xf32>,
    %10 = vector.extract_strided_slice %3 {offsets = [0, 16], sizes = [4, 16], strides = [1, 1]} : vector<4x256xf32> to vector<4x16xf32>
    %c0_9 = arith.constant 0 : index
    %c1 = arith.constant 1 : index
    %c0_10 = arith.constant 0 : index
    %11 = vector.load %arg40[%c0_9, %c1, %c0_10] : memref<4x16x16xf32, #tpu.memory_space<vmem>>, vector<4x1x16xf32>
    %12 = vector.shape_cast %11 : vector<4x1x16xf32> to vector<4x16xf32>
    %13 = vector.shape_cast %10 : vector<4x16xf32> to vector<4x1x16xf32>
    tpu.vector_store %arg40[%c0_9, %c1, %c0_10], %13 {strides = array<i32>} : memref<4x16x16xf32, #tpu.memory_space<vmem>>, vector<4x1x16xf32>,
    %14 = vector.extract_strided_slice %3 {offsets = [0, 32], sizes = [4, 16], strides = [1, 1]} : vector<4x256xf32> to vector<4x16xf32>
    %c0_11 = arith.constant 0 : index
    %c2 = arith.constant 2 : index
    %c0_12 = arith.constant 0 : index
    %15 = vector.load %arg40[%c0_11, %c2, %c0_12] : memref<4x16x16xf32, #tpu.memory_space<vmem>>, vector<4x1x16xf32>
    %16 = vector.shape_cast %15 : vector<4x1x16xf32> to vector<4x16xf32>
    %17 = vector.shape_cast %14 : vector<4x16xf32> to vector<4x1x16xf32>
    tpu.vector_store %arg40[%c0_11, %c2, %c0_12], %17 {strides = array<i32>} : memref<4x16x16xf32, #tpu.memory_space<vmem>>, vector<4x1x16xf32>,
    %18 = vector.extract_strided_slice %3 {offsets = [0, 48], sizes = [4, 16], strides = [1, 1]} : vector<4x256xf32> to vector<4x16xf32>
    %c0_13 = arith.constant 0 : index
    %c3 = arith.constant 3 : index
    %c0_14 = arith.constant 0 : index
    %19 = vector.load %arg40[%c0_13, %c3, %c0_14] : memref<4x16x16xf32, #tpu.memory_space<vmem>>, vector<4x1x16xf32>
    %20 = vector.shape_cast %19 : vector<4x1x16xf32> to vector<4x16xf32>
    %21 = vector.shape_cast %18 : vector<4x16xf32> to vector<4x1x16xf32>
    tpu.vector_store %arg40[%c0_13, %c3, %c0_14], %21 {strides = array<i32>} : memref<4x16x16xf32, #tpu.memory_space<vmem>>, vector<4x1x16xf32>,
    %22 = vector.extract_strided_slice %3 {offsets = [0, 64], sizes = [4, 16], strides = [1, 1]} : vector<4x256xf32> to vector<4x16xf32>
    %c0_15 = arith.constant 0 : index
    %c4 = arith.constant 4 : index
    %c0_16 = arith.constant 0 : index
    %23 = vector.load %arg40[%c0_15, %c4, %c0_16] : memref<4x16x16xf32, #tpu.memory_space<vmem>>, vector<4x1x16xf32>
    %24 = vector.shape_cast %23 : vector<4x1x16xf32> to vector<4x16xf32>
    %25 = vector.shape_cast %22 : vector<4x16xf32> to vector<4x1x16xf32>
    tpu.vector_store %arg40[%c0_15, %c4, %c0_16], %25 {strides = array<i32>} : memref<4x16x16xf32, #tpu.memory_space<vmem>>, vector<4x1x16xf32>,
    %26 = vector.extract_strided_slice %3 {offsets = [0, 80], sizes = [4, 16], strides = [1, 1]} : vector<4x256xf32> to vector<4x16xf32>
    %c0_17 = arith.constant 0 : index
    %c5 = arith.constant 5 : index
    %c0_18 = arith.constant 0 : index
    %27 = vector.load %arg40[%c0_17, %c5, %c0_18] : memref<4x16x16xf32, #tpu.memory_space<vmem>>, vector<4x1x16xf32>
    %28 = vector.shape_cast %27 : vector<4x1x16xf32> to vector<4x16xf32>
    %29 = vector.shape_cast %26 : vector<4x16xf32> to vector<4x1x16xf32>
    tpu.vector_store %arg40[%c0_17, %c5, %c0_18], %29 {strides = array<i32>} : memref<4x16x16xf32, #tpu.memory_space<vmem>>, vector<4x1x16xf32>,
    %30 = vector.extract_strided_slice %3 {offsets = [0, 96], sizes = [4, 16], strides = [1, 1]} : vector<4x256xf32> to vector<4x16xf32>
    %c0_19 = arith.constant 0 : index
    %c6 = arith.constant 6 : index
    %c0_20 = arith.constant 0 : index
    %31 = vector.load %arg40[%c0_19, %c6, %c0_20] : memref<4x16x16xf32, #tpu.memory_space<vmem>>, vector<4x1x16xf32>
    %32 = vector.shape_cast %31 : vector<4x1x16xf32> to vector<4x16xf32>
    %33 = vector.shape_cast %30 : vector<4x16xf32> to vector<4x1x16xf32>
    tpu.vector_store %arg40[%c0_19, %c6, %c0_20], %33 {strides = array<i32>} : memref<4x16x16xf32, #tpu.memory_space<vmem>>, vector<4x1x16xf32>,
    %34 = vector.extract_strided_slice %3 {offsets = [0, 112], sizes = [4, 16], strides = [1, 1]} : vector<4x256xf32> to vector<4x16xf32>
    %c0_21 = arith.constant 0 : index
    %c7 = arith.constant 7 : index
    %c0_22 = arith.constant 0 : index
    %35 = vector.load %arg40[%c0_21, %c7, %c0_22] : memref<4x16x16xf32, #tpu.memory_space<vmem>>, vector<4x1x16xf32>
    %36 = vector.shape_cast %35 : vector<4x1x16xf32> to vector<4x16xf32>
    %37 = vector.shape_cast %34 : vector<4x16xf32> to vector<4x1x16xf32>
    tpu.vector_store %arg40[%c0_21, %c7, %c0_22], %37 {strides = array<i32>} : memref<4x16x16xf32, #tpu.memory_space<vmem>>, vector<4x1x16xf32>,
    %38 = vector.extract_strided_slice %3 {offsets = [0, 128], sizes = [4, 16], strides = [1, 1]} : vector<4x256xf32> to vector<4x16xf32>
    %c0_23 = arith.constant 0 : index
    %c8 = arith.constant 8 : index
    %c0_24 = arith.constant 0 : index
    %39 = vector.load %arg40[%c0_23, %c8, %c0_24] : memref<4x16x16xf32, #tpu.memory_space<vmem>>, vector<4x1x16xf32>
    %40 = vector.shape_cast %39 : vector<4x1x16xf32> to vector<4x16xf32>
    %41 = vector.shape_cast %38 : vector<4x16xf32> to vector<4x1x16xf32>
    tpu.vector_store %arg40[%c0_23, %c8, %c0_24], %41 {strides = array<i32>} : memref<4x16x16xf32, #tpu.memory_space<vmem>>, vector<4x1x16xf32>,
    %42 = vector.extract_strided_slice %3 {offsets = [0, 144], sizes = [4, 16], strides = [1, 1]} : vector<4x256xf32> to vector<4x16xf32>
    %c0_25 = arith.constant 0 : index
    %c9 = arith.constant 9 : index
    %c0_26 = arith.constant 0 : index
    %43 = vector.load %arg40[%c0_25, %c9, %c0_26] : memref<4x16x16xf32, #tpu.memory_space<vmem>>, vector<4x1x16xf32>
    %44 = vector.shape_cast %43 : vector<4x1x16xf32> to vector<4x16xf32>
    %45 = vector.shape_cast %42 : vector<4x16xf32> to vector<4x1x16xf32>
    tpu.vector_store %arg40[%c0_25, %c9, %c0_26], %45 {strides = array<i32>} : memref<4x16x16xf32, #tpu.memory_space<vmem>>, vector<4x1x16xf32>,
    %46 = vector.extract_strided_slice %3 {offsets = [0, 160], sizes = [4, 16], strides = [1, 1]} : vector<4x256xf32> to vector<4x16xf32>
    %c0_27 = arith.constant 0 : index
    %c10 = arith.constant 10 : index
    %c0_28 = arith.constant 0 : index
    %47 = vector.load %arg40[%c0_27, %c10, %c0_28] : memref<4x16x16xf32, #tpu.memory_space<vmem>>, vector<4x1x16xf32>
    %48 = vector.shape_cast %47 : vector<4x1x16xf32> to vector<4x16xf32>
    %49 = vector.shape_cast %46 : vector<4x16xf32> to vector<4x1x16xf32>
    tpu.vector_store %arg40[%c0_27, %c10, %c0_28], %49 {strides = array<i32>} : memref<4x16x16xf32, #tpu.memory_space<vmem>>, vector<4x1x16xf32>,
    %50 = vector.extract_strided_slice %3 {offsets = [0, 176], sizes = [4, 16], strides = [1, 1]} : vector<4x256xf32> to vector<4x16xf32>
    %c0_29 = arith.constant 0 : index
    %c11 = arith.constant 11 : index
    %c0_30 = arith.constant 0 : index
    %51 = vector.load %arg40[%c0_29, %c11, %c0_30] : memref<4x16x16xf32, #tpu.memory_space<vmem>>, vector<4x1x16xf32>
    %52 = vector.shape_cast %51 : vector<4x1x16xf32> to vector<4x16xf32>
    %53 = vector.shape_cast %50 : vector<4x16xf32> to vector<4x1x16xf32>
    tpu.vector_store %arg40[%c0_29, %c11, %c0_30], %53 {strides = array<i32>} : memref<4x16x16xf32, #tpu.memory_space<vmem>>, vector<4x1x16xf32>,
    %54 = vector.extract_strided_slice %3 {offsets = [0, 192], sizes = [4, 16], strides = [1, 1]} : vector<4x256xf32> to vector<4x16xf32>
    %c0_31 = arith.constant 0 : index
    %c12 = arith.constant 12 : index
    %c0_32 = arith.constant 0 : index
    %55 = vector.load %arg40[%c0_31, %c12, %c0_32] : memref<4x16x16xf32, #tpu.memory_space<vmem>>, vector<4x1x16xf32>
    %56 = vector.shape_cast %55 : vector<4x1x16xf32> to vector<4x16xf32>
    %57 = vector.shape_cast %54 : vector<4x16xf32> to vector<4x1x16xf32>
    tpu.vector_store %arg40[%c0_31, %c12, %c0_32], %57 {strides = array<i32>} : memref<4x16x16xf32, #tpu.memory_space<vmem>>, vector<4x1x16xf32>,
    %58 = vector.extract_strided_slice %3 {offsets = [0, 208], sizes = [4, 16], strides = [1, 1]} : vector<4x256xf32> to vector<4x16xf32>
    %c0_33 = arith.constant 0 : index
    %c13 = arith.constant 13 : index
    %c0_34 = arith.constant 0 : index
    %59 = vector.load %arg40[%c0_33, %c13, %c0_34] : memref<4x16x16xf32, #tpu.memory_space<vmem>>, vector<4x1x16xf32>
    %60 = vector.shape_cast %59 : vector<4x1x16xf32> to vector<4x16xf32>
    %61 = vector.shape_cast %58 : vector<4x16xf32> to vector<4x1x16xf32>
    tpu.vector_store %arg40[%c0_33, %c13, %c0_34], %61 {strides = array<i32>} : memref<4x16x16xf32, #tpu.memory_space<vmem>>, vector<4x1x16xf32>,
    %62 = vector.extract_strided_slice %3 {offsets = [0, 224], sizes = [4, 16], strides = [1, 1]} : vector<4x256xf32> to vector<4x16xf32>
    %c0_35 = arith.constant 0 : index
    %c14 = arith.constant 14 : index
    %c0_36 = arith.constant 0 : index
    %63 = vector.load %arg40[%c0_35, %c14, %c0_36] : memref<4x16x16xf32, #tpu.memory_space<vmem>>, vector<4x1x16xf32>
    %64 = vector.shape_cast %63 : vector<4x1x16xf32> to vector<4x16xf32>
    %65 = vector.shape_cast %62 : vector<4x16xf32> to vector<4x1x16xf32>
    tpu.vector_store %arg40[%c0_35, %c14, %c0_36], %65 {strides = array<i32>} : memref<4x16x16xf32, #tpu.memory_space<vmem>>, vector<4x1x16xf32>,
    %66 = vector.extract_strided_slice %3 {offsets = [0, 240], sizes = [4, 16], strides = [1, 1]} : vector<4x256xf32> to vector<4x16xf32>
    %c0_37 = arith.constant 0 : index
    %c15 = arith.constant 15 : index
    %c0_38 = arith.constant 0 : index
    %67 = vector.load %arg40[%c0_37, %c15, %c0_38] : memref<4x16x16xf32, #tpu.memory_space<vmem>>, vector<4x1x16xf32>
    %68 = vector.shape_cast %67 : vector<4x1x16xf32> to vector<4x16xf32>
    %69 = vector.shape_cast %66 : vector<4x16xf32> to vector<4x1x16xf32>
    tpu.vector_store %arg40[%c0_37, %c15, %c0_38], %69 {strides = array<i32>} : memref<4x16x16xf32, #tpu.memory_space<vmem>>, vector<4x1x16xf32>,
    %c0_39 = arith.constant 0 : index
    %c0_40 = arith.constant 0 : index
    %c0_41 = arith.constant 0 : index
    %70 = vector.load %arg40[%c0_39, %c0_40, %c0_41] : memref<4x16x16xf32, #tpu.memory_space<vmem>>, vector<4x16x16xf32>
    "tpu.trace_start"() <{level = 10 : i32, message = "bik,bjk->bij"}> : () -> ()
    %cst = arith.constant dense<0.000000e+00> : vector<4x16x16xf32>
    %71 = tpu.matmul %70, %70, %cst {dimension_numbers = #tpu.dot_dimension_numbers<[2], [2], [1], [1], [0, 0, 0, 1, 1, 1], [0], [0]>} : vector<4x16x16xf32>, vector<4x16x16xf32>, vector<4x16x16xf32> -> vector<4x16x16xf32>
    "tpu.trace_stop"() : () -> ()
    %c0_42 = arith.constant 0 : index
    %c0_43 = arith.constant 0 : index
    %c0_44 = arith.constant 0 : index
    %72 = vector.load %arg34[%c0_42, %c0_43, %c0_44] : memref<4x26x25xf32, #tpu.memory_space<vmem>>, vector<4x16x16xf32>
    %73 = arith.addf %71, %72 : vector<4x16x16xf32>
    %c0_45 = arith.constant 0 : index
    %c0_46 = arith.constant 0 : index
    %c0_47 = arith.constant 0 : index
    %74 = vector.load %arg41[%c0_45, %c0_46, %c0_47] : memref<4x26x25xf32, #tpu.memory_space<vmem>>, vector<4x16x16xf32>
    tpu.vector_store %arg41[%c0_45, %c0_46, %c0_47], %73 {strides = array<i32>} : memref<4x26x25xf32, #tpu.memory_space<vmem>>, vector<4x16x16xf32>,
    %75 = vector.shape_cast %4 : vector<4x16xf32> to vector<4x1x16xf32>
    "tpu.trace_start"() <{level = 10 : i32, message = "bik,bjk->bij"}> : () -> ()
    %cst_48 = arith.constant dense<0.000000e+00> : vector<4x1x16xf32>
    %76 = tpu.matmul %75, %70, %cst_48 {dimension_numbers = #tpu.dot_dimension_numbers<[2], [2], [1], [1], [0, 0, 0, 1, 1, 1], [0], [0]>} : vector<4x1x16xf32>, vector<4x16x16xf32>, vector<4x1x16xf32> -> vector<4x1x16xf32>
    "tpu.trace_stop"() : () -> ()
    %77 = vector.shape_cast %76 : vector<4x1x16xf32> to vector<4x16xf32>
    %c0_49 = arith.constant 0 : index
    %c25 = arith.constant 25 : index
    %c0_50 = arith.constant 0 : index
    %78 = vector.load %arg41[%c0_49, %c25, %c0_50] : memref<4x26x25xf32, #tpu.memory_space<vmem>>, vector<4x1x16xf32>
    %79 = vector.shape_cast %78 : vector<4x1x16xf32> to vector<4x16xf32>
    %80 = vector.shape_cast %77 : vector<4x16xf32> to vector<4x1x16xf32>
    tpu.vector_store %arg41[%c0_49, %c25, %c0_50], %80 {strides = array<i32>} : memref<4x26x25xf32, #tpu.memory_space<vmem>>, vector<4x1x16xf32>,
    %81 = tpu.iota {dimensions = array<i32: 2>} : vector<1x1x25xi32>
    %c0_51 = arith.constant 0 : index
    %c0_52 = arith.constant 0 : index
    %c0_53 = arith.constant 0 : index
    %82 = vector.load %arg41[%c0_51, %c0_52, %c0_53] : memref<4x26x25xf32, #tpu.memory_space<vmem>>, vector<4x26x25xf32>
    %83 = vector.extract_strided_slice %82 {offsets = [0, 0, 0], sizes = [4, 26, 1], strides = [1, 1, 1]} : vector<4x26x25xf32> to vector<4x26x1xf32>
    %84 = vector.extract_strided_slice %82 {offsets = [0, 0, 0], sizes = [4, 1, 1], strides = [1, 1, 1]} : vector<4x26x25xf32> to vector<4x1x1xf32>
    %cst_54 = arith.constant 1.000000e+00 : f32
    %85 = vector.broadcast %cst_54 : f32 to vector<4x1x1xf32>
    %86 = arith.divf %85, %84 : vector<4x1x1xf32>
    %87 = vector.broadcast %86 : vector<4x1x1xf32> to vector<4x26x1xf32>
    %88 = arith.mulf %83, %87 : vector<4x26x1xf32>
    %89 = vector.extract_strided_slice %82 {offsets = [0, 0, 0], sizes = [4, 1, 25], strides = [1, 1, 1]} : vector<4x26x25xf32> to vector<4x1x25xf32>
    %c0_i32_55 = arith.constant 0 : i32
    %90 = vector.broadcast %c0_i32_55 : i32 to vector<1x1x25xi32>
    %91 = arith.cmpi eq, %81, %90 : vector<1x1x25xi32>
    %cst_56 = arith.constant 1.000000e+00 : f32
    %92 = vector.broadcast %cst_56 : f32 to vector<4x1x1xf32>
    %93 = arith.subf %84, %92 : vector<4x1x1xf32>
    %94 = vector.shape_cast %91 : vector<1x1x25xi1> to vector<1x1x25xi1>
    %95 = vector.broadcast %94 : vector<1x1x25xi1> to vector<4x1x25xi1>
    %96 = vector.shape_cast %93 : vector<4x1x1xf32> to vector<4x1x1xf32>
    %97 = vector.broadcast %96 : vector<4x1x1xf32> to vector<4x1x25xf32>
    %98 = arith.select %95, %97, %89 : vector<4x1x25xi1>, vector<4x1x25xf32>
    %99 = vector.broadcast %88 : vector<4x26x1xf32> to vector<4x26x25xf32>
    %100 = vector.broadcast %98 : vector<4x1x25xf32> to vector<4x26x25xf32>
    %101 = arith.mulf %99, %100 : vector<4x26x25xf32>
    %102 = arith.subf %82, %101 : vector<4x26x25xf32>
    %103 = vector.extract_strided_slice %102 {offsets = [0, 0, 1], sizes = [4, 26, 1], strides = [1, 1, 1]} : vector<4x26x25xf32> to vector<4x26x1xf32>
    %104 = vector.extract_strided_slice %102 {offsets = [0, 1, 1], sizes = [4, 1, 1], strides = [1, 1, 1]} : vector<4x26x25xf32> to vector<4x1x1xf32>
    %cst_57 = arith.constant 1.000000e+00 : f32
    %105 = vector.broadcast %cst_57 : f32 to vector<4x1x1xf32>
    %106 = arith.divf %105, %104 : vector<4x1x1xf32>
    %107 = vector.broadcast %106 : vector<4x1x1xf32> to vector<4x26x1xf32>
    %108 = arith.mulf %103, %107 : vector<4x26x1xf32>
    %109 = vector.extract_strided_slice %102 {offsets = [0, 1, 0], sizes = [4, 1, 25], strides = [1, 1, 1]} : vector<4x26x25xf32> to vector<4x1x25xf32>
    %c1_i32 = arith.constant 1 : i32
    %110 = vector.broadcast %c1_i32 : i32 to vector<1x1x25xi32>
    %111 = arith.cmpi eq, %81, %110 : vector<1x1x25xi32>
    %cst_58 = arith.constant 1.000000e+00 : f32
    %112 = vector.broadcast %cst_58 : f32 to vector<4x1x1xf32>
    %113 = arith.subf %104, %112 : vector<4x1x1xf32>
    %114 = vector.shape_cast %111 : vector<1x1x25xi1> to vector<1x1x25xi1>
    %115 = vector.broadcast %114 : vector<1x1x25xi1> to vector<4x1x25xi1>
    %116 = vector.shape_cast %113 : vector<4x1x1xf32> to vector<4x1x1xf32>
    %117 = vector.broadcast %116 : vector<4x1x1xf32> to vector<4x1x25xf32>
    %118 = arith.select %115, %117, %109 : vector<4x1x25xi1>, vector<4x1x25xf32>
    %119 = vector.broadcast %108 : vector<4x26x1xf32> to vector<4x26x25xf32>
    %120 = vector.broadcast %118 : vector<4x1x25xf32> to vector<4x26x25xf32>
    %121 = arith.mulf %119, %120 : vector<4x26x25xf32>
    %122 = arith.subf %102, %121 : vector<4x26x25xf32>
    %123 = vector.extract_strided_slice %122 {offsets = [0, 0, 2], sizes = [4, 26, 1], strides = [1, 1, 1]} : vector<4x26x25xf32> to vector<4x26x1xf32>
    %124 = vector.extract_strided_slice %122 {offsets = [0, 2, 2], sizes = [4, 1, 1], strides = [1, 1, 1]} : vector<4x26x25xf32> to vector<4x1x1xf32>
    %cst_59 = arith.constant 1.000000e+00 : f32
    %125 = vector.broadcast %cst_59 : f32 to vector<4x1x1xf32>
    %126 = arith.divf %125, %124 : vector<4x1x1xf32>
    %127 = vector.broadcast %126 : vector<4x1x1xf32> to vector<4x26x1xf32>
    %128 = arith.mulf %123, %127 : vector<4x26x1xf32>
    %129 = vector.extract_strided_slice %122 {offsets = [0, 2, 0], sizes = [4, 1, 25], strides = [1, 1, 1]} : vector<4x26x25xf32> to vector<4x1x25xf32>
    %c2_i32 = arith.constant 2 : i32
    %130 = vector.broadcast %c2_i32 : i32 to vector<1x1x25xi32>
    %131 = arith.cmpi eq, %81, %130 : vector<1x1x25xi32>
    %cst_60 = arith.constant 1.000000e+00 : f32
    %132 = vector.broadcast %cst_60 : f32 to vector<4x1x1xf32>
    %133 = arith.subf %124, %132 : vector<4x1x1xf32>
    %134 = vector.shape_cast %131 : vector<1x1x25xi1> to vector<1x1x25xi1>
    %135 = vector.broadcast %134 : vector<1x1x25xi1> to vector<4x1x25xi1>
    %136 = vector.shape_cast %133 : vector<4x1x1xf32> to vector<4x1x1xf32>
    %137 = vector.broadcast %136 : vector<4x1x1xf32> to vector<4x1x25xf32>
    %138 = arith.select %135, %137, %129 : vector<4x1x25xi1>, vector<4x1x25xf32>
    %139 = vector.broadcast %128 : vector<4x26x1xf32> to vector<4x26x25xf32>
    %140 = vector.broadcast %138 : vector<4x1x25xf32> to vector<4x26x25xf32>
    %141 = arith.mulf %139, %140 : vector<4x26x25xf32>
    %142 = arith.subf %122, %141 : vector<4x26x25xf32>
    %143 = vector.extract_strided_slice %142 {offsets = [0, 0, 3], sizes = [4, 26, 1], strides = [1, 1, 1]} : vector<4x26x25xf32> to vector<4x26x1xf32>
    %144 = vector.extract_strided_slice %142 {offsets = [0, 3, 3], sizes = [4, 1, 1], strides = [1, 1, 1]} : vector<4x26x25xf32> to vector<4x1x1xf32>
    %cst_61 = arith.constant 1.000000e+00 : f32
    %145 = vector.broadcast %cst_61 : f32 to vector<4x1x1xf32>
    %146 = arith.divf %145, %144 : vector<4x1x1xf32>
    %147 = vector.broadcast %146 : vector<4x1x1xf32> to vector<4x26x1xf32>
    %148 = arith.mulf %143, %147 : vector<4x26x1xf32>
    %149 = vector.extract_strided_slice %142 {offsets = [0, 3, 0], sizes = [4, 1, 25], strides = [1, 1, 1]} : vector<4x26x25xf32> to vector<4x1x25xf32>
    %c3_i32 = arith.constant 3 : i32
    %150 = vector.broadcast %c3_i32 : i32 to vector<1x1x25xi32>
    %151 = arith.cmpi eq, %81, %150 : vector<1x1x25xi32>
    %cst_62 = arith.constant 1.000000e+00 : f32
    %152 = vector.broadcast %cst_62 : f32 to vector<4x1x1xf32>
    %153 = arith.subf %144, %152 : vector<4x1x1xf32>
    %154 = vector.shape_cast %151 : vector<1x1x25xi1> to vector<1x1x25xi1>
    %155 = vector.broadcast %154 : vector<1x1x25xi1> to vector<4x1x25xi1>
    %156 = vector.shape_cast %153 : vector<4x1x1xf32> to vector<4x1x1xf32>
    %157 = vector.broadcast %156 : vector<4x1x1xf32> to vector<4x1x25xf32>
    %158 = arith.select %155, %157, %149 : vector<4x1x25xi1>, vector<4x1x25xf32>
    %159 = vector.broadcast %148 : vector<4x26x1xf32> to vector<4x26x25xf32>
    %160 = vector.broadcast %158 : vector<4x1x25xf32> to vector<4x26x25xf32>
    %161 = arith.mulf %159, %160 : vector<4x26x25xf32>
    %162 = arith.subf %142, %161 : vector<4x26x25xf32>
    %163 = vector.extract_strided_slice %162 {offsets = [0, 0, 4], sizes = [4, 26, 1], strides = [1, 1, 1]} : vector<4x26x25xf32> to vector<4x26x1xf32>
    %164 = vector.extract_strided_slice %162 {offsets = [0, 4, 4], sizes = [4, 1, 1], strides = [1, 1, 1]} : vector<4x26x25xf32> to vector<4x1x1xf32>
    %cst_63 = arith.constant 1.000000e+00 : f32
    %165 = vector.broadcast %cst_63 : f32 to vector<4x1x1xf32>
    %166 = arith.divf %165, %164 : vector<4x1x1xf32>
    %167 = vector.broadcast %166 : vector<4x1x1xf32> to vector<4x26x1xf32>
    %168 = arith.mulf %163, %167 : vector<4x26x1xf32>
    %169 = vector.extract_strided_slice %162 {offsets = [0, 4, 0], sizes = [4, 1, 25], strides = [1, 1, 1]} : vector<4x26x25xf32> to vector<4x1x25xf32>
    %c4_i32 = arith.constant 4 : i32
    %170 = vector.broadcast %c4_i32 : i32 to vector<1x1x25xi32>
    %171 = arith.cmpi eq, %81, %170 : vector<1x1x25xi32>
    %cst_64 = arith.constant 1.000000e+00 : f32
    %172 = vector.broadcast %cst_64 : f32 to vector<4x1x1xf32>
    %173 = arith.subf %164, %172 : vector<4x1x1xf32>
    %174 = vector.shape_cast %171 : vector<1x1x25xi1> to vector<1x1x25xi1>
    %175 = vector.broadcast %174 : vector<1x1x25xi1> to vector<4x1x25xi1>
    %176 = vector.shape_cast %173 : vector<4x1x1xf32> to vector<4x1x1xf32>
    %177 = vector.broadcast %176 : vector<4x1x1xf32> to vector<4x1x25xf32>
    %178 = arith.select %175, %177, %169 : vector<4x1x25xi1>, vector<4x1x25xf32>
    %179 = vector.broadcast %168 : vector<4x26x1xf32> to vector<4x26x25xf32>
    %180 = vector.broadcast %178 : vector<4x1x25xf32> to vector<4x26x25xf32>
    %181 = arith.mulf %179, %180 : vector<4x26x25xf32>
    %182 = arith.subf %162, %181 : vector<4x26x25xf32>
    %183 = vector.extract_strided_slice %182 {offsets = [0, 0, 5], sizes = [4, 26, 1], strides = [1, 1, 1]} : vector<4x26x25xf32> to vector<4x26x1xf32>
    %184 = vector.extract_strided_slice %182 {offsets = [0, 5, 5], sizes = [4, 1, 1], strides = [1, 1, 1]} : vector<4x26x25xf32> to vector<4x1x1xf32>
    %cst_65 = arith.constant 1.000000e+00 : f32
    %185 = vector.broadcast %cst_65 : f32 to vector<4x1x1xf32>
    %186 = arith.divf %185, %184 : vector<4x1x1xf32>
    %187 = vector.broadcast %186 : vector<4x1x1xf32> to vector<4x26x1xf32>
    %188 = arith.mulf %183, %187 : vector<4x26x1xf32>
    %189 = vector.extract_strided_slice %182 {offsets = [0, 5, 0], sizes = [4, 1, 25], strides = [1, 1, 1]} : vector<4x26x25xf32> to vector<4x1x25xf32>
    %c5_i32 = arith.constant 5 : i32
    %190 = vector.broadcast %c5_i32 : i32 to vector<1x1x25xi32>
    %191 = arith.cmpi eq, %81, %190 : vector<1x1x25xi32>
    %cst_66 = arith.constant 1.000000e+00 : f32
    %192 = vector.broadcast %cst_66 : f32 to vector<4x1x1xf32>
    %193 = arith.subf %184, %192 : vector<4x1x1xf32>
    %194 = vector.shape_cast %191 : vector<1x1x25xi1> to vector<1x1x25xi1>
    %195 = vector.broadcast %194 : vector<1x1x25xi1> to vector<4x1x25xi1>
    %196 = vector.shape_cast %193 : vector<4x1x1xf32> to vector<4x1x1xf32>
    %197 = vector.broadcast %196 : vector<4x1x1xf32> to vector<4x1x25xf32>
    %198 = arith.select %195, %197, %189 : vector<4x1x25xi1>, vector<4x1x25xf32>
    %199 = vector.broadcast %188 : vector<4x26x1xf32> to vector<4x26x25xf32>
    %200 = vector.broadcast %198 : vector<4x1x25xf32> to vector<4x26x25xf32>
    %201 = arith.mulf %199, %200 : vector<4x26x25xf32>
    %202 = arith.subf %182, %201 : vector<4x26x25xf32>
    %203 = vector.extract_strided_slice %202 {offsets = [0, 0, 6], sizes = [4, 26, 1], strides = [1, 1, 1]} : vector<4x26x25xf32> to vector<4x26x1xf32>
    %204 = vector.extract_strided_slice %202 {offsets = [0, 6, 6], sizes = [4, 1, 1], strides = [1, 1, 1]} : vector<4x26x25xf32> to vector<4x1x1xf32>
    %cst_67 = arith.constant 1.000000e+00 : f32
    %205 = vector.broadcast %cst_67 : f32 to vector<4x1x1xf32>
    %206 = arith.divf %205, %204 : vector<4x1x1xf32>
    %207 = vector.broadcast %206 : vector<4x1x1xf32> to vector<4x26x1xf32>
    %208 = arith.mulf %203, %207 : vector<4x26x1xf32>
    %209 = vector.extract_strided_slice %202 {offsets = [0, 6, 0], sizes = [4, 1, 25], strides = [1, 1, 1]} : vector<4x26x25xf32> to vector<4x1x25xf32>
    %c6_i32 = arith.constant 6 : i32
    %210 = vector.broadcast %c6_i32 : i32 to vector<1x1x25xi32>
    %211 = arith.cmpi eq, %81, %210 : vector<1x1x25xi32>
    %cst_68 = arith.constant 1.000000e+00 : f32
    %212 = vector.broadcast %cst_68 : f32 to vector<4x1x1xf32>
    %213 = arith.subf %204, %212 : vector<4x1x1xf32>
    %214 = vector.shape_cast %211 : vector<1x1x25xi1> to vector<1x1x25xi1>
    %215 = vector.broadcast %214 : vector<1x1x25xi1> to vector<4x1x25xi1>
    %216 = vector.shape_cast %213 : vector<4x1x1xf32> to vector<4x1x1xf32>
    %217 = vector.broadcast %216 : vector<4x1x1xf32> to vector<4x1x25xf32>
    %218 = arith.select %215, %217, %209 : vector<4x1x25xi1>, vector<4x1x25xf32>
    %219 = vector.broadcast %208 : vector<4x26x1xf32> to vector<4x26x25xf32>
    %220 = vector.broadcast %218 : vector<4x1x25xf32> to vector<4x26x25xf32>
    %221 = arith.mulf %219, %220 : vector<4x26x25xf32>
    %222 = arith.subf %202, %221 : vector<4x26x25xf32>
    %223 = vector.extract_strided_slice %222 {offsets = [0, 0, 7], sizes = [4, 26, 1], strides = [1, 1, 1]} : vector<4x26x25xf32> to vector<4x26x1xf32>
    %224 = vector.extract_strided_slice %222 {offsets = [0, 7, 7], sizes = [4, 1, 1], strides = [1, 1, 1]} : vector<4x26x25xf32> to vector<4x1x1xf32>
    %cst_69 = arith.constant 1.000000e+00 : f32
    %225 = vector.broadcast %cst_69 : f32 to vector<4x1x1xf32>
    %226 = arith.divf %225, %224 : vector<4x1x1xf32>
    %227 = vector.broadcast %226 : vector<4x1x1xf32> to vector<4x26x1xf32>
    %228 = arith.mulf %223, %227 : vector<4x26x1xf32>
    %229 = vector.extract_strided_slice %222 {offsets = [0, 7, 0], sizes = [4, 1, 25], strides = [1, 1, 1]} : vector<4x26x25xf32> to vector<4x1x25xf32>
    %c7_i32 = arith.constant 7 : i32
    %230 = vector.broadcast %c7_i32 : i32 to vector<1x1x25xi32>
    %231 = arith.cmpi eq, %81, %230 : vector<1x1x25xi32>
    %cst_70 = arith.constant 1.000000e+00 : f32
    %232 = vector.broadcast %cst_70 : f32 to vector<4x1x1xf32>
    %233 = arith.subf %224, %232 : vector<4x1x1xf32>
    %234 = vector.shape_cast %231 : vector<1x1x25xi1> to vector<1x1x25xi1>
    %235 = vector.broadcast %234 : vector<1x1x25xi1> to vector<4x1x25xi1>
    %236 = vector.shape_cast %233 : vector<4x1x1xf32> to vector<4x1x1xf32>
    %237 = vector.broadcast %236 : vector<4x1x1xf32> to vector<4x1x25xf32>
    %238 = arith.select %235, %237, %229 : vector<4x1x25xi1>, vector<4x1x25xf32>
    %239 = vector.broadcast %228 : vector<4x26x1xf32> to vector<4x26x25xf32>
    %240 = vector.broadcast %238 : vector<4x1x25xf32> to vector<4x26x25xf32>
    %241 = arith.mulf %239, %240 : vector<4x26x25xf32>
    %242 = arith.subf %222, %241 : vector<4x26x25xf32>
    %243 = vector.extract_strided_slice %242 {offsets = [0, 0, 8], sizes = [4, 26, 1], strides = [1, 1, 1]} : vector<4x26x25xf32> to vector<4x26x1xf32>
    %244 = vector.extract_strided_slice %242 {offsets = [0, 8, 8], sizes = [4, 1, 1], strides = [1, 1, 1]} : vector<4x26x25xf32> to vector<4x1x1xf32>
    %cst_71 = arith.constant 1.000000e+00 : f32
    %245 = vector.broadcast %cst_71 : f32 to vector<4x1x1xf32>
    %246 = arith.divf %245, %244 : vector<4x1x1xf32>
    %247 = vector.broadcast %246 : vector<4x1x1xf32> to vector<4x26x1xf32>
    %248 = arith.mulf %243, %247 : vector<4x26x1xf32>
    %249 = vector.extract_strided_slice %242 {offsets = [0, 8, 0], sizes = [4, 1, 25], strides = [1, 1, 1]} : vector<4x26x25xf32> to vector<4x1x25xf32>
    %c8_i32 = arith.constant 8 : i32
    %250 = vector.broadcast %c8_i32 : i32 to vector<1x1x25xi32>
    %251 = arith.cmpi eq, %81, %250 : vector<1x1x25xi32>
    %cst_72 = arith.constant 1.000000e+00 : f32
    %252 = vector.broadcast %cst_72 : f32 to vector<4x1x1xf32>
    %253 = arith.subf %244, %252 : vector<4x1x1xf32>
    %254 = vector.shape_cast %251 : vector<1x1x25xi1> to vector<1x1x25xi1>
    %255 = vector.broadcast %254 : vector<1x1x25xi1> to vector<4x1x25xi1>
    %256 = vector.shape_cast %253 : vector<4x1x1xf32> to vector<4x1x1xf32>
    %257 = vector.broadcast %256 : vector<4x1x1xf32> to vector<4x1x25xf32>
    %258 = arith.select %255, %257, %249 : vector<4x1x25xi1>, vector<4x1x25xf32>
    %259 = vector.broadcast %248 : vector<4x26x1xf32> to vector<4x26x25xf32>
    %260 = vector.broadcast %258 : vector<4x1x25xf32> to vector<4x26x25xf32>
    %261 = arith.mulf %259, %260 : vector<4x26x25xf32>
    %262 = arith.subf %242, %261 : vector<4x26x25xf32>
    %263 = vector.extract_strided_slice %262 {offsets = [0, 0, 9], sizes = [4, 26, 1], strides = [1, 1, 1]} : vector<4x26x25xf32> to vector<4x26x1xf32>
    %264 = vector.extract_strided_slice %262 {offsets = [0, 9, 9], sizes = [4, 1, 1], strides = [1, 1, 1]} : vector<4x26x25xf32> to vector<4x1x1xf32>
    %cst_73 = arith.constant 1.000000e+00 : f32
    %265 = vector.broadcast %cst_73 : f32 to vector<4x1x1xf32>
    %266 = arith.divf %265, %264 : vector<4x1x1xf32>
    %267 = vector.broadcast %266 : vector<4x1x1xf32> to vector<4x26x1xf32>
    %268 = arith.mulf %263, %267 : vector<4x26x1xf32>
    %269 = vector.extract_strided_slice %262 {offsets = [0, 9, 0], sizes = [4, 1, 25], strides = [1, 1, 1]} : vector<4x26x25xf32> to vector<4x1x25xf32>
    %c9_i32 = arith.constant 9 : i32
    %270 = vector.broadcast %c9_i32 : i32 to vector<1x1x25xi32>
    %271 = arith.cmpi eq, %81, %270 : vector<1x1x25xi32>
    %cst_74 = arith.constant 1.000000e+00 : f32
    %272 = vector.broadcast %cst_74 : f32 to vector<4x1x1xf32>
    %273 = arith.subf %264, %272 : vector<4x1x1xf32>
    %274 = vector.shape_cast %271 : vector<1x1x25xi1> to vector<1x1x25xi1>
    %275 = vector.broadcast %274 : vector<1x1x25xi1> to vector<4x1x25xi1>
    %276 = vector.shape_cast %273 : vector<4x1x1xf32> to vector<4x1x1xf32>
    %277 = vector.broadcast %276 : vector<4x1x1xf32> to vector<4x1x25xf32>
    %278 = arith.select %275, %277, %269 : vector<4x1x25xi1>, vector<4x1x25xf32>
    %279 = vector.broadcast %268 : vector<4x26x1xf32> to vector<4x26x25xf32>
    %280 = vector.broadcast %278 : vector<4x1x25xf32> to vector<4x26x25xf32>
    %281 = arith.mulf %279, %280 : vector<4x26x25xf32>
    %282 = arith.subf %262, %281 : vector<4x26x25xf32>
    %283 = vector.extract_strided_slice %282 {offsets = [0, 0, 10], sizes = [4, 26, 1], strides = [1, 1, 1]} : vector<4x26x25xf32> to vector<4x26x1xf32>
    %284 = vector.extract_strided_slice %282 {offsets = [0, 10, 10], sizes = [4, 1, 1], strides = [1, 1, 1]} : vector<4x26x25xf32> to vector<4x1x1xf32>
    %cst_75 = arith.constant 1.000000e+00 : f32
    %285 = vector.broadcast %cst_75 : f32 to vector<4x1x1xf32>
    %286 = arith.divf %285, %284 : vector<4x1x1xf32>
    %287 = vector.broadcast %286 : vector<4x1x1xf32> to vector<4x26x1xf32>
    %288 = arith.mulf %283, %287 : vector<4x26x1xf32>
    %289 = vector.extract_strided_slice %282 {offsets = [0, 10, 0], sizes = [4, 1, 25], strides = [1, 1, 1]} : vector<4x26x25xf32> to vector<4x1x25xf32>
    %c10_i32 = arith.constant 10 : i32
    %290 = vector.broadcast %c10_i32 : i32 to vector<1x1x25xi32>
    %291 = arith.cmpi eq, %81, %290 : vector<1x1x25xi32>
    %cst_76 = arith.constant 1.000000e+00 : f32
    %292 = vector.broadcast %cst_76 : f32 to vector<4x1x1xf32>
    %293 = arith.subf %284, %292 : vector<4x1x1xf32>
    %294 = vector.shape_cast %291 : vector<1x1x25xi1> to vector<1x1x25xi1>
    %295 = vector.broadcast %294 : vector<1x1x25xi1> to vector<4x1x25xi1>
    %296 = vector.shape_cast %293 : vector<4x1x1xf32> to vector<4x1x1xf32>
    %297 = vector.broadcast %296 : vector<4x1x1xf32> to vector<4x1x25xf32>
    %298 = arith.select %295, %297, %289 : vector<4x1x25xi1>, vector<4x1x25xf32>
    %299 = vector.broadcast %288 : vector<4x26x1xf32> to vector<4x26x25xf32>
    %300 = vector.broadcast %298 : vector<4x1x25xf32> to vector<4x26x25xf32>
    %301 = arith.mulf %299, %300 : vector<4x26x25xf32>
    %302 = arith.subf %282, %301 : vector<4x26x25xf32>
    %303 = vector.extract_strided_slice %302 {offsets = [0, 0, 11], sizes = [4, 26, 1], strides = [1, 1, 1]} : vector<4x26x25xf32> to vector<4x26x1xf32>
    %304 = vector.extract_strided_slice %302 {offsets = [0, 11, 11], sizes = [4, 1, 1], strides = [1, 1, 1]} : vector<4x26x25xf32> to vector<4x1x1xf32>
    %cst_77 = arith.constant 1.000000e+00 : f32
    %305 = vector.broadcast %cst_77 : f32 to vector<4x1x1xf32>
    %306 = arith.divf %305, %304 : vector<4x1x1xf32>
    %307 = vector.broadcast %306 : vector<4x1x1xf32> to vector<4x26x1xf32>
    %308 = arith.mulf %303, %307 : vector<4x26x1xf32>
    %309 = vector.extract_strided_slice %302 {offsets = [0, 11, 0], sizes = [4, 1, 25], strides = [1, 1, 1]} : vector<4x26x25xf32> to vector<4x1x25xf32>
    %c11_i32 = arith.constant 11 : i32
    %310 = vector.broadcast %c11_i32 : i32 to vector<1x1x25xi32>
    %311 = arith.cmpi eq, %81, %310 : vector<1x1x25xi32>
    %cst_78 = arith.constant 1.000000e+00 : f32
    %312 = vector.broadcast %cst_78 : f32 to vector<4x1x1xf32>
    %313 = arith.subf %304, %312 : vector<4x1x1xf32>
    %314 = vector.shape_cast %311 : vector<1x1x25xi1> to vector<1x1x25xi1>
    %315 = vector.broadcast %314 : vector<1x1x25xi1> to vector<4x1x25xi1>
    %316 = vector.shape_cast %313 : vector<4x1x1xf32> to vector<4x1x1xf32>
    %317 = vector.broadcast %316 : vector<4x1x1xf32> to vector<4x1x25xf32>
    %318 = arith.select %315, %317, %309 : vector<4x1x25xi1>, vector<4x1x25xf32>
    %319 = vector.broadcast %308 : vector<4x26x1xf32> to vector<4x26x25xf32>
    %320 = vector.broadcast %318 : vector<4x1x25xf32> to vector<4x26x25xf32>
    %321 = arith.mulf %319, %320 : vector<4x26x25xf32>
    %322 = arith.subf %302, %321 : vector<4x26x25xf32>
    %323 = vector.extract_strided_slice %322 {offsets = [0, 0, 12], sizes = [4, 26, 1], strides = [1, 1, 1]} : vector<4x26x25xf32> to vector<4x26x1xf32>
    %324 = vector.extract_strided_slice %322 {offsets = [0, 12, 12], sizes = [4, 1, 1], strides = [1, 1, 1]} : vector<4x26x25xf32> to vector<4x1x1xf32>
    %cst_79 = arith.constant 1.000000e+00 : f32
    %325 = vector.broadcast %cst_79 : f32 to vector<4x1x1xf32>
    %326 = arith.divf %325, %324 : vector<4x1x1xf32>
    %327 = vector.broadcast %326 : vector<4x1x1xf32> to vector<4x26x1xf32>
    %328 = arith.mulf %323, %327 : vector<4x26x1xf32>
    %329 = vector.extract_strided_slice %322 {offsets = [0, 12, 0], sizes = [4, 1, 25], strides = [1, 1, 1]} : vector<4x26x25xf32> to vector<4x1x25xf32>
    %c12_i32 = arith.constant 12 : i32
    %330 = vector.broadcast %c12_i32 : i32 to vector<1x1x25xi32>
    %331 = arith.cmpi eq, %81, %330 : vector<1x1x25xi32>
    %cst_80 = arith.constant 1.000000e+00 : f32
    %332 = vector.broadcast %cst_80 : f32 to vector<4x1x1xf32>
    %333 = arith.subf %324, %332 : vector<4x1x1xf32>
    %334 = vector.shape_cast %331 : vector<1x1x25xi1> to vector<1x1x25xi1>
    %335 = vector.broadcast %334 : vector<1x1x25xi1> to vector<4x1x25xi1>
    %336 = vector.shape_cast %333 : vector<4x1x1xf32> to vector<4x1x1xf32>
    %337 = vector.broadcast %336 : vector<4x1x1xf32> to vector<4x1x25xf32>
    %338 = arith.select %335, %337, %329 : vector<4x1x25xi1>, vector<4x1x25xf32>
    %339 = vector.broadcast %328 : vector<4x26x1xf32> to vector<4x26x25xf32>
    %340 = vector.broadcast %338 : vector<4x1x25xf32> to vector<4x26x25xf32>
    %341 = arith.mulf %339, %340 : vector<4x26x25xf32>
    %342 = arith.subf %322, %341 : vector<4x26x25xf32>
    %343 = vector.extract_strided_slice %342 {offsets = [0, 0, 13], sizes = [4, 26, 1], strides = [1, 1, 1]} : vector<4x26x25xf32> to vector<4x26x1xf32>
    %344 = vector.extract_strided_slice %342 {offsets = [0, 13, 13], sizes = [4, 1, 1], strides = [1, 1, 1]} : vector<4x26x25xf32> to vector<4x1x1xf32>
    %cst_81 = arith.constant 1.000000e+00 : f32
    %345 = vector.broadcast %cst_81 : f32 to vector<4x1x1xf32>
    %346 = arith.divf %345, %344 : vector<4x1x1xf32>
    %347 = vector.broadcast %346 : vector<4x1x1xf32> to vector<4x26x1xf32>
    %348 = arith.mulf %343, %347 : vector<4x26x1xf32>
    %349 = vector.extract_strided_slice %342 {offsets = [0, 13, 0], sizes = [4, 1, 25], strides = [1, 1, 1]} : vector<4x26x25xf32> to vector<4x1x25xf32>
    %c13_i32 = arith.constant 13 : i32
    %350 = vector.broadcast %c13_i32 : i32 to vector<1x1x25xi32>
    %351 = arith.cmpi eq, %81, %350 : vector<1x1x25xi32>
    %cst_82 = arith.constant 1.000000e+00 : f32
    %352 = vector.broadcast %cst_82 : f32 to vector<4x1x1xf32>
    %353 = arith.subf %344, %352 : vector<4x1x1xf32>
    %354 = vector.shape_cast %351 : vector<1x1x25xi1> to vector<1x1x25xi1>
    %355 = vector.broadcast %354 : vector<1x1x25xi1> to vector<4x1x25xi1>
    %356 = vector.shape_cast %353 : vector<4x1x1xf32> to vector<4x1x1xf32>
    %357 = vector.broadcast %356 : vector<4x1x1xf32> to vector<4x1x25xf32>
    %358 = arith.select %355, %357, %349 : vector<4x1x25xi1>, vector<4x1x25xf32>
    %359 = vector.broadcast %348 : vector<4x26x1xf32> to vector<4x26x25xf32>
    %360 = vector.broadcast %358 : vector<4x1x25xf32> to vector<4x26x25xf32>
    %361 = arith.mulf %359, %360 : vector<4x26x25xf32>
    %362 = arith.subf %342, %361 : vector<4x26x25xf32>
    %363 = vector.extract_strided_slice %362 {offsets = [0, 0, 14], sizes = [4, 26, 1], strides = [1, 1, 1]} : vector<4x26x25xf32> to vector<4x26x1xf32>
    %364 = vector.extract_strided_slice %362 {offsets = [0, 14, 14], sizes = [4, 1, 1], strides = [1, 1, 1]} : vector<4x26x25xf32> to vector<4x1x1xf32>
    %cst_83 = arith.constant 1.000000e+00 : f32
    %365 = vector.broadcast %cst_83 : f32 to vector<4x1x1xf32>
    %366 = arith.divf %365, %364 : vector<4x1x1xf32>
    %367 = vector.broadcast %366 : vector<4x1x1xf32> to vector<4x26x1xf32>
    %368 = arith.mulf %363, %367 : vector<4x26x1xf32>
    %369 = vector.extract_strided_slice %362 {offsets = [0, 14, 0], sizes = [4, 1, 25], strides = [1, 1, 1]} : vector<4x26x25xf32> to vector<4x1x25xf32>
    %c14_i32 = arith.constant 14 : i32
    %370 = vector.broadcast %c14_i32 : i32 to vector<1x1x25xi32>
    %371 = arith.cmpi eq, %81, %370 : vector<1x1x25xi32>
    %cst_84 = arith.constant 1.000000e+00 : f32
    %372 = vector.broadcast %cst_84 : f32 to vector<4x1x1xf32>
    %373 = arith.subf %364, %372 : vector<4x1x1xf32>
    %374 = vector.shape_cast %371 : vector<1x1x25xi1> to vector<1x1x25xi1>
    %375 = vector.broadcast %374 : vector<1x1x25xi1> to vector<4x1x25xi1>
    %376 = vector.shape_cast %373 : vector<4x1x1xf32> to vector<4x1x1xf32>
    %377 = vector.broadcast %376 : vector<4x1x1xf32> to vector<4x1x25xf32>
    %378 = arith.select %375, %377, %369 : vector<4x1x25xi1>, vector<4x1x25xf32>
    %379 = vector.broadcast %368 : vector<4x26x1xf32> to vector<4x26x25xf32>
    %380 = vector.broadcast %378 : vector<4x1x25xf32> to vector<4x26x25xf32>
    %381 = arith.mulf %379, %380 : vector<4x26x25xf32>
    %382 = arith.subf %362, %381 : vector<4x26x25xf32>
    %383 = vector.extract_strided_slice %382 {offsets = [0, 0, 15], sizes = [4, 26, 1], strides = [1, 1, 1]} : vector<4x26x25xf32> to vector<4x26x1xf32>
    %384 = vector.extract_strided_slice %382 {offsets = [0, 15, 15], sizes = [4, 1, 1], strides = [1, 1, 1]} : vector<4x26x25xf32> to vector<4x1x1xf32>
    %cst_85 = arith.constant 1.000000e+00 : f32
    %385 = vector.broadcast %cst_85 : f32 to vector<4x1x1xf32>
    %386 = arith.divf %385, %384 : vector<4x1x1xf32>
    %387 = vector.broadcast %386 : vector<4x1x1xf32> to vector<4x26x1xf32>
    %388 = arith.mulf %383, %387 : vector<4x26x1xf32>
    %389 = vector.extract_strided_slice %382 {offsets = [0, 15, 0], sizes = [4, 1, 25], strides = [1, 1, 1]} : vector<4x26x25xf32> to vector<4x1x25xf32>
    %c15_i32 = arith.constant 15 : i32
    %390 = vector.broadcast %c15_i32 : i32 to vector<1x1x25xi32>
    %391 = arith.cmpi eq, %81, %390 : vector<1x1x25xi32>
    %cst_86 = arith.constant 1.000000e+00 : f32
    %392 = vector.broadcast %cst_86 : f32 to vector<4x1x1xf32>
    %393 = arith.subf %384, %392 : vector<4x1x1xf32>
    %394 = vector.shape_cast %391 : vector<1x1x25xi1> to vector<1x1x25xi1>
    %395 = vector.broadcast %394 : vector<1x1x25xi1> to vector<4x1x25xi1>
    %396 = vector.shape_cast %393 : vector<4x1x1xf32> to vector<4x1x1xf32>
    %397 = vector.broadcast %396 : vector<4x1x1xf32> to vector<4x1x25xf32>
    %398 = arith.select %395, %397, %389 : vector<4x1x25xi1>, vector<4x1x25xf32>
    %399 = vector.broadcast %388 : vector<4x26x1xf32> to vector<4x26x25xf32>
    %400 = vector.broadcast %398 : vector<4x1x25xf32> to vector<4x26x25xf32>
    %401 = arith.mulf %399, %400 : vector<4x26x25xf32>
    %402 = arith.subf %382, %401 : vector<4x26x25xf32>
    %403 = vector.extract_strided_slice %402 {offsets = [0, 0, 16], sizes = [4, 26, 1], strides = [1, 1, 1]} : vector<4x26x25xf32> to vector<4x26x1xf32>
    %404 = vector.extract_strided_slice %402 {offsets = [0, 16, 16], sizes = [4, 1, 1], strides = [1, 1, 1]} : vector<4x26x25xf32> to vector<4x1x1xf32>
    %cst_87 = arith.constant 1.000000e+00 : f32
    %405 = vector.broadcast %cst_87 : f32 to vector<4x1x1xf32>
    %406 = arith.divf %405, %404 : vector<4x1x1xf32>
    %407 = vector.broadcast %406 : vector<4x1x1xf32> to vector<4x26x1xf32>
    %408 = arith.mulf %403, %407 : vector<4x26x1xf32>
    %409 = vector.extract_strided_slice %402 {offsets = [0, 16, 0], sizes = [4, 1, 25], strides = [1, 1, 1]} : vector<4x26x25xf32> to vector<4x1x25xf32>
    %c16_i32 = arith.constant 16 : i32
    %410 = vector.broadcast %c16_i32 : i32 to vector<1x1x25xi32>
    %411 = arith.cmpi eq, %81, %410 : vector<1x1x25xi32>
    %cst_88 = arith.constant 1.000000e+00 : f32
    %412 = vector.broadcast %cst_88 : f32 to vector<4x1x1xf32>
    %413 = arith.subf %404, %412 : vector<4x1x1xf32>
    %414 = vector.shape_cast %411 : vector<1x1x25xi1> to vector<1x1x25xi1>
    %415 = vector.broadcast %414 : vector<1x1x25xi1> to vector<4x1x25xi1>
    %416 = vector.shape_cast %413 : vector<4x1x1xf32> to vector<4x1x1xf32>
    %417 = vector.broadcast %416 : vector<4x1x1xf32> to vector<4x1x25xf32>
    %418 = arith.select %415, %417, %409 : vector<4x1x25xi1>, vector<4x1x25xf32>
    %419 = vector.broadcast %408 : vector<4x26x1xf32> to vector<4x26x25xf32>
    %420 = vector.broadcast %418 : vector<4x1x25xf32> to vector<4x26x25xf32>
    %421 = arith.mulf %419, %420 : vector<4x26x25xf32>
    %422 = arith.subf %402, %421 : vector<4x26x25xf32>
    %423 = vector.extract_strided_slice %422 {offsets = [0, 0, 17], sizes = [4, 26, 1], strides = [1, 1, 1]} : vector<4x26x25xf32> to vector<4x26x1xf32>
    %424 = vector.extract_strided_slice %422 {offsets = [0, 17, 17], sizes = [4, 1, 1], strides = [1, 1, 1]} : vector<4x26x25xf32> to vector<4x1x1xf32>
    %cst_89 = arith.constant 1.000000e+00 : f32
    %425 = vector.broadcast %cst_89 : f32 to vector<4x1x1xf32>
    %426 = arith.divf %425, %424 : vector<4x1x1xf32>
    %427 = vector.broadcast %426 : vector<4x1x1xf32> to vector<4x26x1xf32>
    %428 = arith.mulf %423, %427 : vector<4x26x1xf32>
    %429 = vector.extract_strided_slice %422 {offsets = [0, 17, 0], sizes = [4, 1, 25], strides = [1, 1, 1]} : vector<4x26x25xf32> to vector<4x1x25xf32>
    %c17_i32 = arith.constant 17 : i32
    %430 = vector.broadcast %c17_i32 : i32 to vector<1x1x25xi32>
    %431 = arith.cmpi eq, %81, %430 : vector<1x1x25xi32>
    %cst_90 = arith.constant 1.000000e+00 : f32
    %432 = vector.broadcast %cst_90 : f32 to vector<4x1x1xf32>
    %433 = arith.subf %424, %432 : vector<4x1x1xf32>
    %434 = vector.shape_cast %431 : vector<1x1x25xi1> to vector<1x1x25xi1>
    %435 = vector.broadcast %434 : vector<1x1x25xi1> to vector<4x1x25xi1>
    %436 = vector.shape_cast %433 : vector<4x1x1xf32> to vector<4x1x1xf32>
    %437 = vector.broadcast %436 : vector<4x1x1xf32> to vector<4x1x25xf32>
    %438 = arith.select %435, %437, %429 : vector<4x1x25xi1>, vector<4x1x25xf32>
    %439 = vector.broadcast %428 : vector<4x26x1xf32> to vector<4x26x25xf32>
    %440 = vector.broadcast %438 : vector<4x1x25xf32> to vector<4x26x25xf32>
    %441 = arith.mulf %439, %440 : vector<4x26x25xf32>
    %442 = arith.subf %422, %441 : vector<4x26x25xf32>
    %443 = vector.extract_strided_slice %442 {offsets = [0, 0, 18], sizes = [4, 26, 1], strides = [1, 1, 1]} : vector<4x26x25xf32> to vector<4x26x1xf32>
    %444 = vector.extract_strided_slice %442 {offsets = [0, 18, 18], sizes = [4, 1, 1], strides = [1, 1, 1]} : vector<4x26x25xf32> to vector<4x1x1xf32>
    %cst_91 = arith.constant 1.000000e+00 : f32
    %445 = vector.broadcast %cst_91 : f32 to vector<4x1x1xf32>
    %446 = arith.divf %445, %444 : vector<4x1x1xf32>
    %447 = vector.broadcast %446 : vector<4x1x1xf32> to vector<4x26x1xf32>
    %448 = arith.mulf %443, %447 : vector<4x26x1xf32>
    %449 = vector.extract_strided_slice %442 {offsets = [0, 18, 0], sizes = [4, 1, 25], strides = [1, 1, 1]} : vector<4x26x25xf32> to vector<4x1x25xf32>
    %c18_i32 = arith.constant 18 : i32
    %450 = vector.broadcast %c18_i32 : i32 to vector<1x1x25xi32>
    %451 = arith.cmpi eq, %81, %450 : vector<1x1x25xi32>
    %cst_92 = arith.constant 1.000000e+00 : f32
    %452 = vector.broadcast %cst_92 : f32 to vector<4x1x1xf32>
    %453 = arith.subf %444, %452 : vector<4x1x1xf32>
    %454 = vector.shape_cast %451 : vector<1x1x25xi1> to vector<1x1x25xi1>
    %455 = vector.broadcast %454 : vector<1x1x25xi1> to vector<4x1x25xi1>
    %456 = vector.shape_cast %453 : vector<4x1x1xf32> to vector<4x1x1xf32>
    %457 = vector.broadcast %456 : vector<4x1x1xf32> to vector<4x1x25xf32>
    %458 = arith.select %455, %457, %449 : vector<4x1x25xi1>, vector<4x1x25xf32>
    %459 = vector.broadcast %448 : vector<4x26x1xf32> to vector<4x26x25xf32>
    %460 = vector.broadcast %458 : vector<4x1x25xf32> to vector<4x26x25xf32>
    %461 = arith.mulf %459, %460 : vector<4x26x25xf32>
    %462 = arith.subf %442, %461 : vector<4x26x25xf32>
    %463 = vector.extract_strided_slice %462 {offsets = [0, 0, 19], sizes = [4, 26, 1], strides = [1, 1, 1]} : vector<4x26x25xf32> to vector<4x26x1xf32>
    %464 = vector.extract_strided_slice %462 {offsets = [0, 19, 19], sizes = [4, 1, 1], strides = [1, 1, 1]} : vector<4x26x25xf32> to vector<4x1x1xf32>
    %cst_93 = arith.constant 1.000000e+00 : f32
    %465 = vector.broadcast %cst_93 : f32 to vector<4x1x1xf32>
    %466 = arith.divf %465, %464 : vector<4x1x1xf32>
    %467 = vector.broadcast %466 : vector<4x1x1xf32> to vector<4x26x1xf32>
    %468 = arith.mulf %463, %467 : vector<4x26x1xf32>
    %469 = vector.extract_strided_slice %462 {offsets = [0, 19, 0], sizes = [4, 1, 25], strides = [1, 1, 1]} : vector<4x26x25xf32> to vector<4x1x25xf32>
    %c19_i32 = arith.constant 19 : i32
    %470 = vector.broadcast %c19_i32 : i32 to vector<1x1x25xi32>
    %471 = arith.cmpi eq, %81, %470 : vector<1x1x25xi32>
    %cst_94 = arith.constant 1.000000e+00 : f32
    %472 = vector.broadcast %cst_94 : f32 to vector<4x1x1xf32>
    %473 = arith.subf %464, %472 : vector<4x1x1xf32>
    %474 = vector.shape_cast %471 : vector<1x1x25xi1> to vector<1x1x25xi1>
    %475 = vector.broadcast %474 : vector<1x1x25xi1> to vector<4x1x25xi1>
    %476 = vector.shape_cast %473 : vector<4x1x1xf32> to vector<4x1x1xf32>
    %477 = vector.broadcast %476 : vector<4x1x1xf32> to vector<4x1x25xf32>
    %478 = arith.select %475, %477, %469 : vector<4x1x25xi1>, vector<4x1x25xf32>
    %479 = vector.broadcast %468 : vector<4x26x1xf32> to vector<4x26x25xf32>
    %480 = vector.broadcast %478 : vector<4x1x25xf32> to vector<4x26x25xf32>
    %481 = arith.mulf %479, %480 : vector<4x26x25xf32>
    %482 = arith.subf %462, %481 : vector<4x26x25xf32>
    %483 = vector.extract_strided_slice %482 {offsets = [0, 0, 20], sizes = [4, 26, 1], strides = [1, 1, 1]} : vector<4x26x25xf32> to vector<4x26x1xf32>
    %484 = vector.extract_strided_slice %482 {offsets = [0, 20, 20], sizes = [4, 1, 1], strides = [1, 1, 1]} : vector<4x26x25xf32> to vector<4x1x1xf32>
    %cst_95 = arith.constant 1.000000e+00 : f32
    %485 = vector.broadcast %cst_95 : f32 to vector<4x1x1xf32>
    %486 = arith.divf %485, %484 : vector<4x1x1xf32>
    %487 = vector.broadcast %486 : vector<4x1x1xf32> to vector<4x26x1xf32>
    %488 = arith.mulf %483, %487 : vector<4x26x1xf32>
    %489 = vector.extract_strided_slice %482 {offsets = [0, 20, 0], sizes = [4, 1, 25], strides = [1, 1, 1]} : vector<4x26x25xf32> to vector<4x1x25xf32>
    %c20_i32 = arith.constant 20 : i32
    %490 = vector.broadcast %c20_i32 : i32 to vector<1x1x25xi32>
    %491 = arith.cmpi eq, %81, %490 : vector<1x1x25xi32>
    %cst_96 = arith.constant 1.000000e+00 : f32
    %492 = vector.broadcast %cst_96 : f32 to vector<4x1x1xf32>
    %493 = arith.subf %484, %492 : vector<4x1x1xf32>
    %494 = vector.shape_cast %491 : vector<1x1x25xi1> to vector<1x1x25xi1>
    %495 = vector.broadcast %494 : vector<1x1x25xi1> to vector<4x1x25xi1>
    %496 = vector.shape_cast %493 : vector<4x1x1xf32> to vector<4x1x1xf32>
    %497 = vector.broadcast %496 : vector<4x1x1xf32> to vector<4x1x25xf32>
    %498 = arith.select %495, %497, %489 : vector<4x1x25xi1>, vector<4x1x25xf32>
    %499 = vector.broadcast %488 : vector<4x26x1xf32> to vector<4x26x25xf32>
    %500 = vector.broadcast %498 : vector<4x1x25xf32> to vector<4x26x25xf32>
    %501 = arith.mulf %499, %500 : vector<4x26x25xf32>
    %502 = arith.subf %482, %501 : vector<4x26x25xf32>
    %503 = vector.extract_strided_slice %502 {offsets = [0, 0, 21], sizes = [4, 26, 1], strides = [1, 1, 1]} : vector<4x26x25xf32> to vector<4x26x1xf32>
    %504 = vector.extract_strided_slice %502 {offsets = [0, 21, 21], sizes = [4, 1, 1], strides = [1, 1, 1]} : vector<4x26x25xf32> to vector<4x1x1xf32>
    %cst_97 = arith.constant 1.000000e+00 : f32
    %505 = vector.broadcast %cst_97 : f32 to vector<4x1x1xf32>
    %506 = arith.divf %505, %504 : vector<4x1x1xf32>
    %507 = vector.broadcast %506 : vector<4x1x1xf32> to vector<4x26x1xf32>
    %508 = arith.mulf %503, %507 : vector<4x26x1xf32>
    %509 = vector.extract_strided_slice %502 {offsets = [0, 21, 0], sizes = [4, 1, 25], strides = [1, 1, 1]} : vector<4x26x25xf32> to vector<4x1x25xf32>
    %c21_i32 = arith.constant 21 : i32
    %510 = vector.broadcast %c21_i32 : i32 to vector<1x1x25xi32>
    %511 = arith.cmpi eq, %81, %510 : vector<1x1x25xi32>
    %cst_98 = arith.constant 1.000000e+00 : f32
    %512 = vector.broadcast %cst_98 : f32 to vector<4x1x1xf32>
    %513 = arith.subf %504, %512 : vector<4x1x1xf32>
    %514 = vector.shape_cast %511 : vector<1x1x25xi1> to vector<1x1x25xi1>
    %515 = vector.broadcast %514 : vector<1x1x25xi1> to vector<4x1x25xi1>
    %516 = vector.shape_cast %513 : vector<4x1x1xf32> to vector<4x1x1xf32>
    %517 = vector.broadcast %516 : vector<4x1x1xf32> to vector<4x1x25xf32>
    %518 = arith.select %515, %517, %509 : vector<4x1x25xi1>, vector<4x1x25xf32>
    %519 = vector.broadcast %508 : vector<4x26x1xf32> to vector<4x26x25xf32>
    %520 = vector.broadcast %518 : vector<4x1x25xf32> to vector<4x26x25xf32>
    %521 = arith.mulf %519, %520 : vector<4x26x25xf32>
    %522 = arith.subf %502, %521 : vector<4x26x25xf32>
    %523 = vector.extract_strided_slice %522 {offsets = [0, 0, 22], sizes = [4, 26, 1], strides = [1, 1, 1]} : vector<4x26x25xf32> to vector<4x26x1xf32>
    %524 = vector.extract_strided_slice %522 {offsets = [0, 22, 22], sizes = [4, 1, 1], strides = [1, 1, 1]} : vector<4x26x25xf32> to vector<4x1x1xf32>
    %cst_99 = arith.constant 1.000000e+00 : f32
    %525 = vector.broadcast %cst_99 : f32 to vector<4x1x1xf32>
    %526 = arith.divf %525, %524 : vector<4x1x1xf32>
    %527 = vector.broadcast %526 : vector<4x1x1xf32> to vector<4x26x1xf32>
    %528 = arith.mulf %523, %527 : vector<4x26x1xf32>
    %529 = vector.extract_strided_slice %522 {offsets = [0, 22, 0], sizes = [4, 1, 25], strides = [1, 1, 1]} : vector<4x26x25xf32> to vector<4x1x25xf32>
    %c22_i32 = arith.constant 22 : i32
    %530 = vector.broadcast %c22_i32 : i32 to vector<1x1x25xi32>
    %531 = arith.cmpi eq, %81, %530 : vector<1x1x25xi32>
    %cst_100 = arith.constant 1.000000e+00 : f32
    %532 = vector.broadcast %cst_100 : f32 to vector<4x1x1xf32>
    %533 = arith.subf %524, %532 : vector<4x1x1xf32>
    %534 = vector.shape_cast %531 : vector<1x1x25xi1> to vector<1x1x25xi1>
    %535 = vector.broadcast %534 : vector<1x1x25xi1> to vector<4x1x25xi1>
    %536 = vector.shape_cast %533 : vector<4x1x1xf32> to vector<4x1x1xf32>
    %537 = vector.broadcast %536 : vector<4x1x1xf32> to vector<4x1x25xf32>
    %538 = arith.select %535, %537, %529 : vector<4x1x25xi1>, vector<4x1x25xf32>
    %539 = vector.broadcast %528 : vector<4x26x1xf32> to vector<4x26x25xf32>
    %540 = vector.broadcast %538 : vector<4x1x25xf32> to vector<4x26x25xf32>
    %541 = arith.mulf %539, %540 : vector<4x26x25xf32>
    %542 = arith.subf %522, %541 : vector<4x26x25xf32>
    %543 = vector.extract_strided_slice %542 {offsets = [0, 0, 23], sizes = [4, 26, 1], strides = [1, 1, 1]} : vector<4x26x25xf32> to vector<4x26x1xf32>
    %544 = vector.extract_strided_slice %542 {offsets = [0, 23, 23], sizes = [4, 1, 1], strides = [1, 1, 1]} : vector<4x26x25xf32> to vector<4x1x1xf32>
    %cst_101 = arith.constant 1.000000e+00 : f32
    %545 = vector.broadcast %cst_101 : f32 to vector<4x1x1xf32>
    %546 = arith.divf %545, %544 : vector<4x1x1xf32>
    %547 = vector.broadcast %546 : vector<4x1x1xf32> to vector<4x26x1xf32>
    %548 = arith.mulf %543, %547 : vector<4x26x1xf32>
    %549 = vector.extract_strided_slice %542 {offsets = [0, 23, 0], sizes = [4, 1, 25], strides = [1, 1, 1]} : vector<4x26x25xf32> to vector<4x1x25xf32>
    %c23_i32 = arith.constant 23 : i32
    %550 = vector.broadcast %c23_i32 : i32 to vector<1x1x25xi32>
    %551 = arith.cmpi eq, %81, %550 : vector<1x1x25xi32>
    %cst_102 = arith.constant 1.000000e+00 : f32
    %552 = vector.broadcast %cst_102 : f32 to vector<4x1x1xf32>
    %553 = arith.subf %544, %552 : vector<4x1x1xf32>
    %554 = vector.shape_cast %551 : vector<1x1x25xi1> to vector<1x1x25xi1>
    %555 = vector.broadcast %554 : vector<1x1x25xi1> to vector<4x1x25xi1>
    %556 = vector.shape_cast %553 : vector<4x1x1xf32> to vector<4x1x1xf32>
    %557 = vector.broadcast %556 : vector<4x1x1xf32> to vector<4x1x25xf32>
    %558 = arith.select %555, %557, %549 : vector<4x1x25xi1>, vector<4x1x25xf32>
    %559 = vector.broadcast %548 : vector<4x26x1xf32> to vector<4x26x25xf32>
    %560 = vector.broadcast %558 : vector<4x1x25xf32> to vector<4x26x25xf32>
    %561 = arith.mulf %559, %560 : vector<4x26x25xf32>
    %562 = arith.subf %542, %561 : vector<4x26x25xf32>
    %563 = vector.extract_strided_slice %562 {offsets = [0, 0, 24], sizes = [4, 26, 1], strides = [1, 1, 1]} : vector<4x26x25xf32> to vector<4x26x1xf32>
    %564 = vector.extract_strided_slice %562 {offsets = [0, 24, 24], sizes = [4, 1, 1], strides = [1, 1, 1]} : vector<4x26x25xf32> to vector<4x1x1xf32>
    %cst_103 = arith.constant 1.000000e+00 : f32
    %565 = vector.broadcast %cst_103 : f32 to vector<4x1x1xf32>
    %566 = arith.divf %565, %564 : vector<4x1x1xf32>
    %567 = vector.broadcast %566 : vector<4x1x1xf32> to vector<4x26x1xf32>
    %568 = arith.mulf %563, %567 : vector<4x26x1xf32>
    %569 = vector.extract_strided_slice %562 {offsets = [0, 24, 0], sizes = [4, 1, 25], strides = [1, 1, 1]} : vector<4x26x25xf32> to vector<4x1x25xf32>
    %c24_i32 = arith.constant 24 : i32
    %570 = vector.broadcast %c24_i32 : i32 to vector<1x1x25xi32>
    %571 = arith.cmpi eq, %81, %570 : vector<1x1x25xi32>
    %cst_104 = arith.constant 1.000000e+00 : f32
    %572 = vector.broadcast %cst_104 : f32 to vector<4x1x1xf32>
    %573 = arith.subf %564, %572 : vector<4x1x1xf32>
    %574 = vector.shape_cast %571 : vector<1x1x25xi1> to vector<1x1x25xi1>
    %575 = vector.broadcast %574 : vector<1x1x25xi1> to vector<4x1x25xi1>
    %576 = vector.shape_cast %573 : vector<4x1x1xf32> to vector<4x1x1xf32>
    %577 = vector.broadcast %576 : vector<4x1x1xf32> to vector<4x1x25xf32>
    %578 = arith.select %575, %577, %569 : vector<4x1x25xi1>, vector<4x1x25xf32>
    %579 = vector.broadcast %568 : vector<4x26x1xf32> to vector<4x26x25xf32>
    %580 = vector.broadcast %578 : vector<4x1x25xf32> to vector<4x26x25xf32>
    %581 = arith.mulf %579, %580 : vector<4x26x25xf32>
    %582 = arith.subf %562, %581 : vector<4x26x25xf32>
    %583 = vector.extract_strided_slice %582 {offsets = [0, 25, 0], sizes = [4, 1, 16], strides = [1, 1, 1]} : vector<4x26x25xf32> to vector<4x1x16xf32>
    %584 = vector.shape_cast %583 : vector<4x1x16xf32> to vector<4x16xf32>
    %c0_105 = arith.constant 0 : index
    %c0_106 = arith.constant 0 : index
    %585 = vector.load %arg35[%c0_105, %c0_106] : memref<4x16xf32, #tpu.memory_space<vmem>>, vector<4x16xf32>
    tpu.vector_store %arg35[%c0_105, %c0_106], %584 {strides = array<i32>} : memref<4x16xf32, #tpu.memory_space<vmem>>, vector<4x16xf32>,
    %c0_107 = arith.constant 0 : index
    %c0_108 = arith.constant 0 : index
    %586 = vector.load %arg26[%c0_107, %c0_108] : memref<16x96xf32, #tpu.memory_space<vmem>>, vector<16x96xf32>
    %cst_109 = arith.constant dense<0.000000e+00> : vector<4x96xf32>
    %587 = tpu.matmul %584, %586, %cst_109 {dimension_numbers = #tpu.dot_dimension_numbers<[1], [0], [0], [1], [0, 0, 1, 1], [], []>} : vector<4x16xf32>, vector<16x96xf32>, vector<4x96xf32> -> vector<4x96xf32>
    %588 = vector.extract_strided_slice %587 {offsets = [0, 16], sizes = [4, 16], strides = [1, 1]} : vector<4x96xf32> to vector<4x16xf32>
    %589 = vector.extract_strided_slice %587 {offsets = [0, 32], sizes = [4, 16], strides = [1, 1]} : vector<4x96xf32> to vector<4x16xf32>
    %590 = vector.extract_strided_slice %587 {offsets = [0, 48], sizes = [4, 16], strides = [1, 1]} : vector<4x96xf32> to vector<4x16xf32>
    %591 = vector.extract_strided_slice %587 {offsets = [0, 64], sizes = [4, 16], strides = [1, 1]} : vector<4x96xf32> to vector<4x16xf32>
    %592 = vector.extract_strided_slice %587 {offsets = [0, 80], sizes = [4, 16], strides = [1, 1]} : vector<4x96xf32> to vector<4x16xf32>
    %593 = vector.extract_strided_slice %584 {offsets = [0, 0], sizes = [4, 8], strides = [1, 1]} : vector<4x16xf32> to vector<4x8xf32>
    %c0_110 = arith.constant 0 : index
    %c0_111 = arith.constant 0 : index
    %594 = vector.load %arg27[%c0_110, %c0_111] : memref<8x96xf32, #tpu.memory_space<vmem>>, vector<8x96xf32>
    %cst_112 = arith.constant dense<0.000000e+00> : vector<4x96xf32>
    %595 = tpu.matmul %593, %594, %cst_112 {dimension_numbers = #tpu.dot_dimension_numbers<[1], [0], [0], [1], [0, 0, 1, 1], [], []>} : vector<4x8xf32>, vector<8x96xf32>, vector<4x96xf32> -> vector<4x96xf32>
    %596 = vector.extract_strided_slice %584 {offsets = [0, 8], sizes = [4, 8], strides = [1, 1]} : vector<4x16xf32> to vector<4x8xf32>
    %c0_113 = arith.constant 0 : index
    %c0_114 = arith.constant 0 : index
    %597 = vector.load %arg27[%c0_113, %c0_114] : memref<8x96xf32, #tpu.memory_space<vmem>>, vector<8x96xf32>
    %cst_115 = arith.constant dense<0.000000e+00> : vector<4x96xf32>
    %598 = tpu.matmul %596, %597, %cst_115 {dimension_numbers = #tpu.dot_dimension_numbers<[1], [0], [0], [1], [0, 0, 1, 1], [], []>} : vector<4x8xf32>, vector<8x96xf32>, vector<4x96xf32> -> vector<4x96xf32>
    %c0_116 = arith.constant 0 : index
    %c0_117 = arith.constant 0 : index
    %599 = vector.load %arg28[%c0_116, %c0_117] : memref<4x96xf32, #tpu.memory_space<vmem>>, vector<4x96xf32>
    %600 = arith.subf %595, %599 : vector<4x96xf32>
    %c0_118 = arith.constant 0 : index
    %c0_119 = arith.constant 0 : index
    %601 = vector.load %arg29[%c0_118, %c0_119] : memref<4x96xf32, #tpu.memory_space<vmem>>, vector<4x96xf32>
    %602 = arith.subf %598, %601 : vector<4x96xf32>
    %c0_120 = arith.constant 0 : index
    %c0_121 = arith.constant 0 : index
    %603 = vector.load %arg30[%c0_120, %c0_121] : memref<4x96xf32, #tpu.memory_space<vmem>>, vector<4x96xf32>
    %c0_122 = arith.constant 0 : index
    %c0_123 = arith.constant 0 : index
    %604 = vector.load %arg31[%c0_122, %c0_123] : memref<4x96xf32, #tpu.memory_space<vmem>>, vector<4x96xf32>
    %605 = arith.mulf %602, %603 : vector<4x96xf32>
    %606 = arith.mulf %600, %604 : vector<4x96xf32>
    %607 = arith.mulf %605, %605 : vector<4x96xf32>
    %608 = arith.mulf %606, %606 : vector<4x96xf32>
    %609 = arith.addf %607, %608 : vector<4x96xf32>
    %610 = math.sqrt %609 : vector<4x96xf32>
    %cst_124 = arith.constant 9.99999996E-13 : f32
    %611 = vector.broadcast %cst_124 : f32 to vector<4x96xf32>
    %612 = arith.maximumf %610, %611 : vector<4x96xf32>
    %cst_125 = arith.constant 1.000000e+00 : f32
    %613 = vector.broadcast %cst_125 : f32 to vector<4x96xf32>
    %614 = arith.divf %613, %612 : vector<4x96xf32>
    %cst_126 = arith.constant 0.000000e+00 : f32
    %615 = vector.broadcast %cst_126 : f32 to vector<4x96xf32>
    %616 = arith.cmpf ogt, %610, %615 : vector<4x96xf32>
    %617 = arith.mulf %606, %614 : vector<4x96xf32>
    %cst_127 = arith.constant 1.000000e+00 : f32
    %618 = vector.broadcast %cst_127 : f32 to vector<4x96xf32>
    %619 = arith.select %616, %617, %618 : vector<4x96xi1>, vector<4x96xf32>
    %cst_128 = arith.constant 0.000000e+00 : f32
    %620 = vector.broadcast %cst_128 : f32 to vector<4x96xf32>
    %621 = arith.cmpf ogt, %610, %620 : vector<4x96xf32>
    %622 = arith.mulf %605, %614 : vector<4x96xf32>
    %cst_129 = arith.constant 0.000000e+00 : f32
    %623 = vector.broadcast %cst_129 : f32 to vector<4x96xf32>
    %624 = arith.select %621, %622, %623 : vector<4x96xi1>, vector<4x96xf32>
    %625 = arith.mulf %603, %603 : vector<4x96xf32>
    %626 = arith.mulf %625, %619 : vector<4x96xf32>
    %627 = arith.mulf %626, %619 : vector<4x96xf32>
    %628 = arith.mulf %604, %604 : vector<4x96xf32>
    %629 = arith.mulf %628, %624 : vector<4x96xf32>
    %630 = arith.mulf %629, %624 : vector<4x96xf32>
    %631 = arith.addf %627, %630 : vector<4x96xf32>
    %cst_130 = arith.constant 1.000000e+00 : f32
    %632 = vector.broadcast %cst_130 : f32 to vector<4x96xf32>
    %633 = arith.mulf %632, %631 : vector<4x96xf32>
    %634 = arith.mulf %603, %600 : vector<4x96xf32>
    %635 = arith.mulf %634, %619 : vector<4x96xf32>
    %636 = arith.mulf %604, %602 : vector<4x96xf32>
    %637 = arith.mulf %636, %624 : vector<4x96xf32>
    %638 = arith.addf %635, %637 : vector<4x96xf32>
    %cst_131 = arith.constant 1.000000e+00 : f32
    %639 = vector.broadcast %cst_131 : f32 to vector<4x96xf32>
    %640 = arith.mulf %639, %638 : vector<4x96xf32>
    %641 = arith.divf %640, %633 : vector<4x96xf32>
    %cst_132 = arith.constant 1.000000e+00 : f32
    %642 = vector.broadcast %cst_132 : f32 to vector<4x96xf32>
    %643 = arith.maximumf %642, %641 : vector<4x96xf32>
    %644 = arith.mulf %603, %643 : vector<4x96xf32>
    %645 = arith.mulf %644, %619 : vector<4x96xf32>
    %646 = arith.subf %600, %645 : vector<4x96xf32>
    %647 = arith.mulf %604, %643 : vector<4x96xf32>
    %648 = arith.mulf %647, %624 : vector<4x96xf32>
    %649 = arith.subf %602, %648 : vector<4x96xf32>
    %650 = arith.mulf %646, %646 : vector<4x96xf32>
    %651 = arith.mulf %649, %649 : vector<4x96xf32>
    %652 = arith.addf %650, %651 : vector<4x96xf32>
    %cst_133 = arith.constant dense<0.000000e+00> : vector<4xf32>
    %653 = vector.multi_reduction <add>, %652, %cst_133 [1] : vector<4x96xf32> to vector<4xf32>
    %654 = vector.shape_cast %653 : vector<4xf32> to vector<4x1xf32>
    %655 = arith.mulf %588, %588 : vector<4x16xf32>
    %656 = arith.mulf %591, %591 : vector<4x16xf32>
    %657 = arith.addf %655, %656 : vector<4x16xf32>
    %658 = math.sqrt %657 : vector<4x16xf32>
    %cst_134 = arith.constant 9.99999996E-13 : f32
    %659 = vector.broadcast %cst_134 : f32 to vector<4x16xf32>
    %660 = arith.maximumf %658, %659 : vector<4x16xf32>
    %cst_135 = arith.constant 1.000000e+00 : f32
    %661 = vector.broadcast %cst_135 : f32 to vector<4x16xf32>
    %662 = arith.divf %661, %660 : vector<4x16xf32>
    %cst_136 = arith.constant 0.000000e+00 : f32
    %663 = vector.broadcast %cst_136 : f32 to vector<4x16xf32>
    %664 = arith.cmpf ogt, %658, %663 : vector<4x16xf32>
    %665 = arith.mulf %588, %662 : vector<4x16xf32>
    %cst_137 = arith.constant 1.000000e+00 : f32
    %666 = vector.broadcast %cst_137 : f32 to vector<4x16xf32>
    %667 = arith.select %664, %665, %666 : vector<4x16xi1>, vector<4x16xf32>
    %cst_138 = arith.constant 0.000000e+00 : f32
    %668 = vector.broadcast %cst_138 : f32 to vector<4x16xf32>
    %669 = arith.cmpf ogt, %658, %668 : vector<4x16xf32>
    %670 = arith.mulf %591, %662 : vector<4x16xf32>
    %cst_139 = arith.constant 0.000000e+00 : f32
    %671 = vector.broadcast %cst_139 : f32 to vector<4x16xf32>
    %672 = arith.select %669, %670, %671 : vector<4x16xi1>, vector<4x16xf32>
    %cst_140 = arith.constant 5.000000e-01 : f32
    %673 = vector.broadcast %cst_140 : f32 to vector<4x16xf32>
    %674 = arith.cmpf oge, %667, %673 : vector<4x16xf32>
    %cst_141 = arith.constant 5.000000e-01 : f32
    %675 = vector.broadcast %cst_141 : f32 to vector<4x16xf32>
    %676 = arith.select %674, %667, %675 : vector<4x16xi1>, vector<4x16xf32>
    %cst_142 = arith.constant 0.000000e+00 : f32
    %677 = vector.broadcast %cst_142 : f32 to vector<4x16xf32>
    %678 = arith.cmpf oge, %672, %677 : vector<4x16xf32>
    %cst_143 = arith.constant 0.866025388 : f32
    %cst_144 = arith.constant -0.866025388 : f32
    %679 = vector.broadcast %cst_143 : f32 to vector<4x16xf32>
    %680 = vector.broadcast %cst_144 : f32 to vector<4x16xf32>
    %681 = arith.select %678, %679, %680 : vector<4x16xi1>, vector<4x16xf32>
    %682 = arith.select %674, %672, %681 : vector<4x16xi1>, vector<4x16xf32>
    %683 = arith.mulf %588, %676 : vector<4x16xf32>
    %684 = arith.mulf %591, %682 : vector<4x16xf32>
    %685 = arith.addf %683, %684 : vector<4x16xf32>
    %cst_145 = arith.constant 1.000000e+00 : f32
    %686 = vector.broadcast %cst_145 : f32 to vector<4x16xf32>
    %687 = arith.mulf %686, %685 : vector<4x16xf32>
    %688 = arith.mulf %676, %676 : vector<4x16xf32>
    %689 = arith.mulf %682, %682 : vector<4x16xf32>
    %690 = arith.addf %688, %689 : vector<4x16xf32>
    %cst_146 = arith.constant 1.000000e+00 : f32
    %691 = vector.broadcast %cst_146 : f32 to vector<4x16xf32>
    %692 = arith.mulf %691, %690 : vector<4x16xf32>
    %693 = arith.divf %687, %692 : vector<4x16xf32>
    %cst_147 = arith.constant 1.000000e-03 : f32
    %cst_148 = arith.constant 1.800000e+01 : f32
    %694 = vector.broadcast %cst_147 : f32 to vector<4x16xf32>
    %695 = arith.maximumf %694, %693 : vector<4x16xf32>
    %696 = vector.broadcast %cst_148 : f32 to vector<4x16xf32>
    %697 = arith.minimumf %696, %695 : vector<4x16xf32>
    %698 = arith.mulf %697, %676 : vector<4x16xf32>
    %699 = arith.subf %588, %698 : vector<4x16xf32>
    %700 = arith.mulf %697, %682 : vector<4x16xf32>
    %701 = arith.subf %591, %700 : vector<4x16xf32>
    %702 = arith.mulf %699, %699 : vector<4x16xf32>
    %703 = arith.mulf %701, %701 : vector<4x16xf32>
    %704 = arith.addf %702, %703 : vector<4x16xf32>
    %cst_149 = arith.constant dense<0.000000e+00> : vector<4xf32>
    %705 = vector.multi_reduction <add>, %704, %cst_149 [1] : vector<4x16xf32> to vector<4xf32>
    %706 = vector.shape_cast %705 : vector<4xf32> to vector<4x1xf32>
    %707 = arith.mulf %589, %589 : vector<4x16xf32>
    %708 = arith.mulf %592, %592 : vector<4x16xf32>
    %709 = arith.addf %707, %708 : vector<4x16xf32>
    %710 = math.sqrt %709 : vector<4x16xf32>
    %cst_150 = arith.constant 9.99999996E-13 : f32
    %711 = vector.broadcast %cst_150 : f32 to vector<4x16xf32>
    %712 = arith.maximumf %710, %711 : vector<4x16xf32>
    %cst_151 = arith.constant 1.000000e+00 : f32
    %713 = vector.broadcast %cst_151 : f32 to vector<4x16xf32>
    %714 = arith.divf %713, %712 : vector<4x16xf32>
    %cst_152 = arith.constant 0.000000e+00 : f32
    %715 = vector.broadcast %cst_152 : f32 to vector<4x16xf32>
    %716 = arith.cmpf ogt, %710, %715 : vector<4x16xf32>
    %717 = arith.mulf %589, %714 : vector<4x16xf32>
    %cst_153 = arith.constant 1.000000e+00 : f32
    %718 = vector.broadcast %cst_153 : f32 to vector<4x16xf32>
    %719 = arith.select %716, %717, %718 : vector<4x16xi1>, vector<4x16xf32>
    %cst_154 = arith.constant 0.000000e+00 : f32
    %720 = vector.broadcast %cst_154 : f32 to vector<4x16xf32>
    %721 = arith.cmpf ogt, %710, %720 : vector<4x16xf32>
    %722 = arith.mulf %592, %714 : vector<4x16xf32>
    %cst_155 = arith.constant 0.000000e+00 : f32
    %723 = vector.broadcast %cst_155 : f32 to vector<4x16xf32>
    %724 = arith.select %721, %722, %723 : vector<4x16xi1>, vector<4x16xf32>
    %725 = arith.mulf %589, %719 : vector<4x16xf32>
    %726 = arith.mulf %592, %724 : vector<4x16xf32>
    %727 = arith.addf %725, %726 : vector<4x16xf32>
    %cst_156 = arith.constant 1.000000e+00 : f32
    %728 = vector.broadcast %cst_156 : f32 to vector<4x16xf32>
    %729 = arith.mulf %728, %727 : vector<4x16xf32>
    %730 = arith.mulf %719, %719 : vector<4x16xf32>
    %731 = arith.mulf %724, %724 : vector<4x16xf32>
    %732 = arith.addf %730, %731 : vector<4x16xf32>
    %cst_157 = arith.constant 1.000000e+00 : f32
    %733 = vector.broadcast %cst_157 : f32 to vector<4x16xf32>
    %734 = arith.mulf %733, %732 : vector<4x16xf32>
    %735 = arith.divf %729, %734 : vector<4x16xf32>
    %cst_158 = arith.constant 0.000000e+00 : f32
    %cst_159 = arith.constant 6.000000e+00 : f32
    %736 = vector.broadcast %cst_158 : f32 to vector<4x16xf32>
    %737 = arith.maximumf %736, %735 : vector<4x16xf32>
    %738 = vector.broadcast %cst_159 : f32 to vector<4x16xf32>
    %739 = arith.minimumf %738, %737 : vector<4x16xf32>
    %740 = arith.mulf %739, %719 : vector<4x16xf32>
    %741 = arith.subf %589, %740 : vector<4x16xf32>
    %742 = arith.mulf %739, %724 : vector<4x16xf32>
    %743 = arith.subf %592, %742 : vector<4x16xf32>
    %744 = arith.mulf %741, %741 : vector<4x16xf32>
    %745 = arith.mulf %743, %743 : vector<4x16xf32>
    %746 = arith.addf %744, %745 : vector<4x16xf32>
    %cst_160 = arith.constant dense<0.000000e+00> : vector<4xf32>
    %747 = vector.multi_reduction <add>, %746, %cst_160 [1] : vector<4x16xf32> to vector<4xf32>
    %748 = vector.shape_cast %747 : vector<4xf32> to vector<4x1xf32>
    %c0_161 = arith.constant 0 : index
    %c0_162 = arith.constant 0 : index
    %749 = vector.load %arg32[%c0_161, %c0_162] : memref<4x1xf32, #tpu.memory_space<vmem>>, vector<4x1xf32>
    %c0_163 = arith.constant 0 : index
    %c0_164 = arith.constant 0 : index
    %750 = vector.load %arg33[%c0_163, %c0_164] : memref<4x1xf32, #tpu.memory_space<vmem>>, vector<4x1xf32>
    %cst_165 = arith.constant 0.000000e+00 : f32
    %751 = vector.broadcast %cst_165 : f32 to vector<4x16xf32>
    %752 = arith.subf %751, %590 : vector<4x16xf32>
    %753 = vector.broadcast %749 : vector<4x1xf32> to vector<4x16xf32>
    %754 = arith.addf %752, %753 : vector<4x16xf32>
    %cst_166 = arith.constant 0.000000e+00 : f32
    %755 = vector.broadcast %cst_166 : f32 to vector<4x16xf32>
    %756 = arith.maximumf %755, %754 : vector<4x16xf32>
    %757 = vector.broadcast %750 : vector<4x1xf32> to vector<4x16xf32>
    %758 = arith.subf %590, %757 : vector<4x16xf32>
    %cst_167 = arith.constant 0.000000e+00 : f32
    %759 = vector.broadcast %cst_167 : f32 to vector<4x16xf32>
    %760 = arith.maximumf %759, %758 : vector<4x16xf32>
    %761 = vector.broadcast %749 : vector<4x1xf32> to vector<4x16xf32>
    %762 = arith.subf %590, %761 : vector<4x16xf32>
    %763 = arith.addf %762, %756 : vector<4x16xf32>
    %cst_168 = arith.constant 0.000000e+00 : f32
    %764 = vector.broadcast %cst_168 : f32 to vector<4x16xf32>
    %765 = arith.subf %764, %590 : vector<4x16xf32>
    %766 = vector.broadcast %750 : vector<4x1xf32> to vector<4x16xf32>
    %767 = arith.addf %765, %766 : vector<4x16xf32>
    %768 = arith.addf %767, %760 : vector<4x16xf32>
    %769 = arith.mulf %763, %763 : vector<4x16xf32>
    %770 = arith.mulf %768, %768 : vector<4x16xf32>
    %771 = arith.addf %769, %770 : vector<4x16xf32>
    %cst_169 = arith.constant dense<0.000000e+00> : vector<4xf32>
    %772 = vector.multi_reduction <add>, %771, %cst_169 [1] : vector<4x16xf32> to vector<4xf32>
    %773 = vector.shape_cast %772 : vector<4xf32> to vector<4x1xf32>
    %774 = arith.mulf %588, %588 : vector<4x16xf32>
    %775 = arith.mulf %591, %591 : vector<4x16xf32>
    %776 = arith.addf %774, %775 : vector<4x16xf32>
    %cst_170 = arith.constant 9.99999974E-5 : f32
    %777 = vector.broadcast %cst_170 : f32 to vector<4x16xf32>
    %778 = arith.addf %776, %777 : vector<4x16xf32>
    %779 = arith.mulf %589, %591 : vector<4x16xf32>
    %780 = arith.mulf %588, %592 : vector<4x16xf32>
    %781 = arith.subf %779, %780 : vector<4x16xf32>
    %782 = math.sqrt %778 : vector<4x16xf32>
    %783 = arith.mulf %778, %782 : vector<4x16xf32>
    %784 = arith.divf %781, %783 : vector<4x16xf32>
    %cst_171 = arith.constant 2.500000e+00 : f32
    %785 = vector.broadcast %cst_171 : f32 to vector<4x16xf32>
    %786 = arith.mulf %784, %785 : vector<4x16xf32>
    %787 = math.absf %786 : vector<4x16xf32>
    %cst_172 = arith.constant 1.000000e+00 : f32
    %788 = vector.broadcast %cst_172 : f32 to vector<4x16xf32>
    %789 = arith.maximumf %787, %788 : vector<4x16xf32>
    %cst_173 = arith.constant 1.000000e+00 : f32
    %790 = vector.broadcast %cst_173 : f32 to vector<4x16xf32>
    %791 = arith.divf %790, %789 : vector<4x16xf32>
    %792 = arith.minimumf %787, %791 : vector<4x16xf32>
    %793 = arith.mulf %792, %792 : vector<4x16xf32>
    %cst_174 = arith.constant -1.172120e-02 : f32
    %794 = vector.broadcast %cst_174 : f32 to vector<4x16xf32>
    %795 = arith.mulf %793, %794 : vector<4x16xf32>
    %cst_175 = arith.constant 0.0526533201 : f32
    %796 = vector.broadcast %cst_175 : f32 to vector<4x16xf32>
    %797 = arith.addf %796, %795 : vector<4x16xf32>
    %798 = arith.mulf %793, %797 : vector<4x16xf32>
    %cst_176 = arith.constant -0.116432868 : f32
    %799 = vector.broadcast %cst_176 : f32 to vector<4x16xf32>
    %800 = arith.addf %799, %798 : vector<4x16xf32>
    %801 = arith.mulf %793, %800 : vector<4x16xf32>
    %cst_177 = arith.constant 0.193543464 : f32
    %802 = vector.broadcast %cst_177 : f32 to vector<4x16xf32>
    %803 = arith.addf %802, %801 : vector<4x16xf32>
    %804 = arith.mulf %793, %803 : vector<4x16xf32>
    %cst_178 = arith.constant -0.332623482 : f32
    %805 = vector.broadcast %cst_178 : f32 to vector<4x16xf32>
    %806 = arith.addf %805, %804 : vector<4x16xf32>
    %807 = arith.mulf %793, %806 : vector<4x16xf32>
    %cst_179 = arith.constant 0.999977231 : f32
    %808 = vector.broadcast %cst_179 : f32 to vector<4x16xf32>
    %809 = arith.addf %808, %807 : vector<4x16xf32>
    %810 = arith.mulf %792, %809 : vector<4x16xf32>
    %cst_180 = arith.constant 1.000000e+00 : f32
    %811 = vector.broadcast %cst_180 : f32 to vector<4x16xf32>
    %812 = arith.cmpf ole, %787, %811 : vector<4x16xf32>
    %cst_181 = arith.constant 1.57079637 : f32
    %813 = vector.broadcast %cst_181 : f32 to vector<4x16xf32>
    %814 = arith.subf %813, %810 : vector<4x16xf32>
    %815 = arith.select %812, %810, %814 : vector<4x16xi1>, vector<4x16xf32>
    %cst_182 = arith.constant 0.000000e+00 : f32
    %816 = vector.broadcast %cst_182 : f32 to vector<4x16xf32>
    %817 = arith.cmpf olt, %786, %816 : vector<4x16xf32>
    %cst_183 = arith.constant 0.000000e+00 : f32
    %818 = vector.broadcast %cst_183 : f32 to vector<4x16xf32>
    %819 = arith.subf %818, %815 : vector<4x16xf32>
    %820 = arith.select %817, %819, %815 : vector<4x16xi1>, vector<4x16xf32>
    %cst_184 = arith.constant 5.000000e-01 : f32
    %821 = vector.broadcast %cst_184 : f32 to vector<4x16xf32>
    %822 = arith.subf %820, %821 : vector<4x16xf32>
    %cst_185 = arith.constant 0.000000e+00 : f32
    %823 = vector.broadcast %cst_185 : f32 to vector<4x16xf32>
    %824 = arith.maximumf %823, %822 : vector<4x16xf32>
    %cst_186 = arith.constant 0.000000e+00 : f32
    %825 = vector.broadcast %cst_186 : f32 to vector<4x16xf32>
    %826 = arith.subf %825, %820 : vector<4x16xf32>
    %cst_187 = arith.constant 5.000000e-01 : f32
    %827 = vector.broadcast %cst_187 : f32 to vector<4x16xf32>
    %828 = arith.subf %826, %827 : vector<4x16xf32>
    %cst_188 = arith.constant 0.000000e+00 : f32
    %829 = vector.broadcast %cst_188 : f32 to vector<4x16xf32>
    %830 = arith.maximumf %829, %828 : vector<4x16xf32>
    %831 = arith.addf %824, %830 : vector<4x16xf32>
    %832 = arith.mulf %831, %831 : vector<4x16xf32>
    %cst_189 = arith.constant dense<0.000000e+00> : vector<4xf32>
    %833 = vector.multi_reduction <add>, %832, %cst_189 [1] : vector<4x16xf32> to vector<4xf32>
    %834 = vector.shape_cast %833 : vector<4xf32> to vector<4x1xf32>
    %835 = math.sqrt %748 : vector<4x1xf32>
    %836 = math.sqrt %706 : vector<4x1xf32>
    %837 = arith.addf %835, %836 : vector<4x1xf32>
    %838 = math.sqrt %654 : vector<4x1xf32>
    %839 = arith.addf %837, %838 : vector<4x1xf32>
    %840 = math.sqrt %773 : vector<4x1xf32>
    %841 = arith.addf %839, %840 : vector<4x1xf32>
    %842 = math.sqrt %834 : vector<4x1xf32>
    %843 = arith.addf %841, %842 : vector<4x1xf32>
    %c0_190 = arith.constant 0 : index
    %c0_191 = arith.constant 0 : index
    %844 = vector.load %arg36[%c0_190, %c0_191] : memref<4x1xf32, #tpu.memory_space<vmem>>, vector<4x1xf32>
    %845 = arith.addf %844, %843 : vector<4x1xf32>
    %c0_192 = arith.constant 0 : index
    %c0_193 = arith.constant 0 : index
    %846 = vector.load %arg36[%c0_192, %c0_193] : memref<4x1xf32, #tpu.memory_space<vmem>>, vector<4x1xf32>
    tpu.vector_store %arg36[%c0_192, %c0_193], %845 {strides = array<i32>} : memref<4x1xf32, #tpu.memory_space<vmem>>, vector<4x1xf32>,
    %c4_i32_194 = arith.constant 4 : i32
    %847 = arith.cmpi slt, %arg0, %c4_i32_194 : i32
    %848 = arith.extui %847 : i1 to i32
    %c0_i32_195 = arith.constant 0 : i32
    %849 = arith.cmpi ne, %848, %c0_i32_195 : i32
    scf.if %849 {
      %c0_198 = arith.constant 0 : index
      %c0_199 = arith.constant 0 : index
      %853 = vector.load %arg17[%c0_198, %c0_199] : memref<16x384xf32, #tpu.memory_space<vmem>>, vector<16x384xf32>
      %cst_200 = arith.constant dense<0.000000e+00> : vector<4x384xf32>
      %854 = tpu.matmul %584, %853, %cst_200 {dimension_numbers = #tpu.dot_dimension_numbers<[1], [0], [0], [1], [0, 0, 1, 1], [], []>} : vector<4x16xf32>, vector<16x384xf32>, vector<4x384xf32> -> vector<4x384xf32>
      %c0_201 = arith.constant 0 : index
      %c0_202 = arith.constant 0 : index
      %855 = vector.load %arg18[%c0_201, %c0_202] : memref<1x384xf32, #tpu.memory_space<vmem>>, vector<1x384xf32>
      %856 = vector.broadcast %843 : vector<4x1xf32> to vector<4x384xf32>
      %857 = vector.broadcast %855 : vector<1x384xf32> to vector<4x384xf32>
      %858 = arith.mulf %856, %857 : vector<4x384xf32>
      %859 = arith.addf %854, %858 : vector<4x384xf32>
      %c0_203 = arith.constant 0 : index
      %c0_204 = arith.constant 0 : index
      %860 = vector.load %arg19[%c0_203, %c0_204] : memref<1x384xf32, #tpu.memory_space<vmem>>, vector<1x384xf32>
      %861 = vector.broadcast %860 : vector<1x384xf32> to vector<4x384xf32>
      %862 = arith.addf %859, %861 : vector<4x384xf32>
      %c0_205 = arith.constant 0 : index
      %c0_206 = arith.constant 0 : index
      %863 = vector.load %arg20[%c0_205, %c0_206] : memref<128x384xf32, #tpu.memory_space<vmem>>, vector<128x384xf32>
      %cst_207 = arith.constant dense<0.000000e+00> : vector<4x384xf32>
      %864 = tpu.matmul %5, %863, %cst_207 {dimension_numbers = #tpu.dot_dimension_numbers<[1], [0], [0], [1], [0, 0, 1, 1], [], []>} : vector<4x128xf32>, vector<128x384xf32>, vector<4x384xf32> -> vector<4x384xf32>
      %c0_208 = arith.constant 0 : index
      %c0_209 = arith.constant 0 : index
      %865 = vector.load %arg21[%c0_208, %c0_209] : memref<1x384xf32, #tpu.memory_space<vmem>>, vector<1x384xf32>
      %866 = vector.broadcast %865 : vector<1x384xf32> to vector<4x384xf32>
      %867 = arith.addf %864, %866 : vector<4x384xf32>
      %868 = vector.extract_strided_slice %862 {offsets = [0, 0], sizes = [4, 128], strides = [1, 1]} : vector<4x384xf32> to vector<4x128xf32>
      %869 = vector.extract_strided_slice %867 {offsets = [0, 0], sizes = [4, 128], strides = [1, 1]} : vector<4x384xf32> to vector<4x128xf32>
      %870 = arith.addf %868, %869 : vector<4x128xf32>
      %cst_210 = arith.constant 5.000000e-01 : f32
      %871 = vector.broadcast %cst_210 : f32 to vector<4x128xf32>
      %872 = arith.mulf %871, %870 : vector<4x128xf32>
      %873 = math.tanh %872 : vector<4x128xf32>
      %cst_211 = arith.constant 1.000000e+00 : f32
      %874 = vector.broadcast %cst_211 : f32 to vector<4x128xf32>
      %875 = arith.addf %873, %874 : vector<4x128xf32>
      %cst_212 = arith.constant 5.000000e-01 : f32
      %876 = vector.broadcast %cst_212 : f32 to vector<4x128xf32>
      %877 = arith.mulf %876, %875 : vector<4x128xf32>
      %878 = vector.extract_strided_slice %862 {offsets = [0, 128], sizes = [4, 128], strides = [1, 1]} : vector<4x384xf32> to vector<4x128xf32>
      %879 = vector.extract_strided_slice %867 {offsets = [0, 128], sizes = [4, 128], strides = [1, 1]} : vector<4x384xf32> to vector<4x128xf32>
      %880 = arith.addf %878, %879 : vector<4x128xf32>
      %cst_213 = arith.constant 5.000000e-01 : f32
      %881 = vector.broadcast %cst_213 : f32 to vector<4x128xf32>
      %882 = arith.mulf %881, %880 : vector<4x128xf32>
      %883 = math.tanh %882 : vector<4x128xf32>
      %cst_214 = arith.constant 1.000000e+00 : f32
      %884 = vector.broadcast %cst_214 : f32 to vector<4x128xf32>
      %885 = arith.addf %883, %884 : vector<4x128xf32>
      %cst_215 = arith.constant 5.000000e-01 : f32
      %886 = vector.broadcast %cst_215 : f32 to vector<4x128xf32>
      %887 = arith.mulf %886, %885 : vector<4x128xf32>
      %888 = vector.extract_strided_slice %862 {offsets = [0, 256], sizes = [4, 128], strides = [1, 1]} : vector<4x384xf32> to vector<4x128xf32>
      %889 = vector.extract_strided_slice %867 {offsets = [0, 256], sizes = [4, 128], strides = [1, 1]} : vector<4x384xf32> to vector<4x128xf32>
      %890 = arith.mulf %877, %889 : vector<4x128xf32>
      %891 = arith.addf %888, %890 : vector<4x128xf32>
      %892 = math.tanh %891 : vector<4x128xf32>
      %cst_216 = arith.constant 1.000000e+00 : f32
      %893 = vector.broadcast %cst_216 : f32 to vector<4x128xf32>
      %894 = arith.subf %893, %887 : vector<4x128xf32>
      %895 = arith.mulf %894, %892 : vector<4x128xf32>
      %896 = arith.mulf %887, %5 : vector<4x128xf32>
      %897 = arith.addf %895, %896 : vector<4x128xf32>
      %c0_217 = arith.constant 0 : index
      %c0_218 = arith.constant 0 : index
      %898 = vector.load %arg39[%c0_217, %c0_218] : memref<4x128xf32, #tpu.memory_space<vmem>>, vector<4x128xf32>
      tpu.vector_store %arg39[%c0_217, %c0_218], %897 {strides = array<i32>} : memref<4x128xf32, #tpu.memory_space<vmem>>, vector<4x128xf32>,
      %c0_219 = arith.constant 0 : index
      %c0_220 = arith.constant 0 : index
      %899 = vector.load %arg22[%c0_219, %c0_220] : memref<128x256xf32, #tpu.memory_space<vmem>>, vector<128x256xf32>
      %cst_221 = arith.constant dense<0.000000e+00> : vector<4x256xf32>
      %900 = tpu.matmul %897, %899, %cst_221 {dimension_numbers = #tpu.dot_dimension_numbers<[1], [0], [0], [1], [0, 0, 1, 1], [], []>} : vector<4x128xf32>, vector<128x256xf32>, vector<4x256xf32> -> vector<4x256xf32>
      %c0_222 = arith.constant 0 : index
      %c0_223 = arith.constant 0 : index
      %901 = vector.load %arg24[%c0_222, %c0_223] : memref<1x256xf32, #tpu.memory_space<vmem>>, vector<1x256xf32>
      %902 = vector.broadcast %901 : vector<1x256xf32> to vector<4x256xf32>
      %903 = arith.addf %900, %902 : vector<4x256xf32>
      %c0_224 = arith.constant 0 : index
      %c0_225 = arith.constant 0 : index
      %904 = vector.load %arg37[%c0_224, %c0_225] : memref<4x256xf32, #tpu.memory_space<vmem>>, vector<4x256xf32>
      tpu.vector_store %arg37[%c0_224, %c0_225], %903 {strides = array<i32>} : memref<4x256xf32, #tpu.memory_space<vmem>>, vector<4x256xf32>,
      %c0_226 = arith.constant 0 : index
      %c0_227 = arith.constant 0 : index
      %905 = vector.load %arg23[%c0_226, %c0_227] : memref<128x16xf32, #tpu.memory_space<vmem>>, vector<128x16xf32>
      %cst_228 = arith.constant dense<0.000000e+00> : vector<4x16xf32>
      %906 = tpu.matmul %897, %905, %cst_228 {dimension_numbers = #tpu.dot_dimension_numbers<[1], [0], [0], [1], [0, 0, 1, 1], [], []>} : vector<4x128xf32>, vector<128x16xf32>, vector<4x16xf32> -> vector<4x16xf32>
      %c0_229 = arith.constant 0 : index
      %c0_230 = arith.constant 0 : index
      %907 = vector.load %arg25[%c0_229, %c0_230] : memref<1x16xf32, #tpu.memory_space<vmem>>, vector<1x16xf32>
      %908 = vector.broadcast %907 : vector<1x16xf32> to vector<4x16xf32>
      %909 = arith.addf %906, %908 : vector<4x16xf32>
      %c0_231 = arith.constant 0 : index
      %c0_232 = arith.constant 0 : index
      %910 = vector.load %arg38[%c0_231, %c0_232] : memref<4x16xf32, #tpu.memory_space<vmem>>, vector<4x16xf32>
      tpu.vector_store %arg38[%c0_231, %c0_232], %909 {strides = array<i32>} : memref<4x16xf32, #tpu.memory_space<vmem>>, vector<4x16xf32>,
    } else {
    }
    %c4_i32_196 = arith.constant 4 : i32
    %850 = arith.cmpi eq, %arg0, %c4_i32_196 : i32
    %851 = arith.extui %850 : i1 to i32
    %c0_i32_197 = arith.constant 0 : i32
    %852 = arith.cmpi ne, %851, %c0_i32_197 : i32
    scf.if %852 {
      %c0_198 = arith.constant 0 : index
      %c0_199 = arith.constant 0 : index
      %853 = vector.load %arg36[%c0_198, %c0_199] : memref<4x1xf32, #tpu.memory_space<vmem>>, vector<4x1xf32>
      %cst_200 = arith.constant 2.000000e-01 : f32
      %854 = vector.broadcast %cst_200 : f32 to vector<4x1xf32>
      %855 = arith.mulf %853, %854 : vector<4x1xf32>
      %c0_201 = arith.constant 0 : index
      %c0_202 = arith.constant 0 : index
      %856 = vector.load %arg36[%c0_201, %c0_202] : memref<4x1xf32, #tpu.memory_space<vmem>>, vector<4x1xf32>
      tpu.vector_store %arg36[%c0_201, %c0_202], %855 {strides = array<i32>} : memref<4x1xf32, #tpu.memory_space<vmem>>, vector<4x1xf32>,
    } else {
    }
    return
  }
  func.func @transform_0(%arg0: i32) -> (i32, i32) {
    %c0_i32 = arith.constant 0 : i32
    %c0_i32_0 = arith.constant 0 : i32
    %c0_i32_1 = arith.constant 0 : i32
    return %c0_i32, %c0_i32_0 : i32, i32
  }
  func.func @transform_1(%arg0: i32) -> (i32, i32) {
    %c0_i32 = arith.constant 0 : i32
    %c0_i32_0 = arith.constant 0 : i32
    %c0_i32_1 = arith.constant 0 : i32
    return %c0_i32, %c0_i32_0 : i32, i32
  }
  func.func @transform_2(%arg0: i32) -> (i32, i32) {
    %c0_i32 = arith.constant 0 : i32
    %c0_i32_0 = arith.constant 0 : i32
    %c0_i32_1 = arith.constant 0 : i32
    return %c0_i32, %c0_i32_0 : i32, i32
  }
  func.func @transform_3(%arg0: i32) -> (i32, i32) {
    %c0_i32 = arith.constant 0 : i32
    %c0_i32_0 = arith.constant 0 : i32
    %c0_i32_1 = arith.constant 0 : i32
    return %c0_i32, %c0_i32_0 : i32, i32
  }
  func.func @transform_4(%arg0: i32) -> (i32, i32) {
    %c0_i32 = arith.constant 0 : i32
    %c0_i32_0 = arith.constant 0 : i32
    %c0_i32_1 = arith.constant 0 : i32
    return %c0_i32, %c0_i32_0 : i32, i32
  }
  func.func @transform_5(%arg0: i32) -> (i32, i32) {
    %c0_i32 = arith.constant 0 : i32
    %c0_i32_0 = arith.constant 0 : i32
    %c0_i32_1 = arith.constant 0 : i32
    return %c0_i32, %c0_i32_0 : i32, i32
  }
  func.func @transform_6(%arg0: i32) -> (i32, i32) {
    %c0_i32 = arith.constant 0 : i32
    %c0_i32_0 = arith.constant 0 : i32
    %c0_i32_1 = arith.constant 0 : i32
    return %c0_i32, %c0_i32_0 : i32, i32
  }
  func.func @transform_7(%arg0: i32) -> (i32, i32) {
    %c0_i32 = arith.constant 0 : i32
    %c0_i32_0 = arith.constant 0 : i32
    %c0_i32_1 = arith.constant 0 : i32
    return %c0_i32, %c0_i32_0 : i32, i32
  }
  func.func @transform_8(%arg0: i32) -> (i32, i32) {
    %c0_i32 = arith.constant 0 : i32
    %c0_i32_0 = arith.constant 0 : i32
    %c0_i32_1 = arith.constant 0 : i32
    return %c0_i32, %c0_i32_0 : i32, i32
  }
  func.func @transform_9(%arg0: i32) -> (i32, i32) {
    %c0_i32 = arith.constant 0 : i32
    %c0_i32_0 = arith.constant 0 : i32
    %c0_i32_1 = arith.constant 0 : i32
    return %c0_i32, %c0_i32_0 : i32, i32
  }
  func.func @transform_10(%arg0: i32) -> (i32, i32) {
    %c0_i32 = arith.constant 0 : i32
    %c0_i32_0 = arith.constant 0 : i32
    %c0_i32_1 = arith.constant 0 : i32
    return %c0_i32, %c0_i32_0 : i32, i32
  }
  func.func @transform_11(%arg0: i32) -> (i32, i32) {
    %c0_i32 = arith.constant 0 : i32
    %c0_i32_0 = arith.constant 0 : i32
    %c0_i32_1 = arith.constant 0 : i32
    return %c0_i32, %c0_i32_0 : i32, i32
  }
  func.func @transform_12(%arg0: i32) -> (i32, i32) {
    %c0_i32 = arith.constant 0 : i32
    %c0_i32_0 = arith.constant 0 : i32
    %c0_i32_1 = arith.constant 0 : i32
    return %c0_i32, %c0_i32_0 : i32, i32
  }
  func.func @transform_13(%arg0: i32) -> (i32, i32) {
    %c0_i32 = arith.constant 0 : i32
    %c0_i32_0 = arith.constant 0 : i32
    %c0_i32_1 = arith.constant 0 : i32
    return %c0_i32, %c0_i32_0 : i32, i32
  }
  func.func @transform_14(%arg0: i32) -> (i32, i32) {
    %c0_i32 = arith.constant 0 : i32
    %c0_i32_0 = arith.constant 0 : i32
    %c0_i32_1 = arith.constant 0 : i32
    return %c0_i32, %c0_i32_0 : i32, i32
  }
  func.func @transform_15(%arg0: i32) -> (i32, i32) {
    %c0_i32 = arith.constant 0 : i32
    %c0_i32_0 = arith.constant 0 : i32
    %c0_i32_1 = arith.constant 0 : i32
    return %c0_i32, %c0_i32_0 : i32, i32
  }
  func.func @transform_16(%arg0: i32) -> (i32, i32) {
    %c0_i32 = arith.constant 0 : i32
    %c0_i32_0 = arith.constant 0 : i32
    %c0_i32_1 = arith.constant 0 : i32
    return %c0_i32, %c0_i32_0 : i32, i32
  }
  func.func @transform_17(%arg0: i32) -> (i32, i32) {
    %c0_i32 = arith.constant 0 : i32
    %c0_i32_0 = arith.constant 0 : i32
    %c0_i32_1 = arith.constant 0 : i32
    return %c0_i32, %c0_i32_0 : i32, i32
  }
  func.func @transform_18(%arg0: i32) -> (i32, i32) {
    %c0_i32 = arith.constant 0 : i32
    %c0_i32_0 = arith.constant 0 : i32
    %c0_i32_1 = arith.constant 0 : i32
    return %c0_i32, %c0_i32_0 : i32, i32
  }
  func.func @transform_19(%arg0: i32) -> (i32, i32) {
    %c0_i32 = arith.constant 0 : i32
    %c0_i32_0 = arith.constant 0 : i32
    %c0_i32_1 = arith.constant 0 : i32
    return %c0_i32, %c0_i32_0 : i32, i32
  }
  func.func @transform_20(%arg0: i32) -> (i32, i32) {
    %c0_i32 = arith.constant 0 : i32
    %c0_i32_0 = arith.constant 0 : i32
    %c0_i32_1 = arith.constant 0 : i32
    return %c0_i32, %c0_i32_0 : i32, i32
  }
  func.func @transform_21(%arg0: i32) -> (i32, i32) {
    %c0_i32 = arith.constant 0 : i32
    %c0_i32_0 = arith.constant 0 : i32
    %c0_i32_1 = arith.constant 0 : i32
    return %c0_i32, %c0_i32_0 : i32, i32
  }
  func.func @transform_22(%arg0: i32) -> (i32, i32) {
    %c0_i32 = arith.constant 0 : i32
    %c0_i32_0 = arith.constant 0 : i32
    %c0_i32_1 = arith.constant 0 : i32
    return %c0_i32, %c0_i32_0 : i32, i32
  }
  func.func @transform_23(%arg0: i32) -> (i32, i32) {
    %c0_i32 = arith.constant 0 : i32
    %c0_i32_0 = arith.constant 0 : i32
    %c0_i32_1 = arith.constant 0 : i32
    return %c0_i32, %c0_i32_0 : i32, i32
  }
  func.func @transform_24(%arg0: i32) -> (i32, i32) {
    %c0_i32 = arith.constant 0 : i32
    %c0_i32_0 = arith.constant 0 : i32
    %c0_i32_1 = arith.constant 0 : i32
    return %c0_i32, %c0_i32_0 : i32, i32
  }
  func.func @transform_25(%arg0: i32) -> (i32, i32) {
    %c0_i32 = arith.constant 0 : i32
    %c0_i32_0 = arith.constant 0 : i32
    %c0_i32_1 = arith.constant 0 : i32
    return %c0_i32, %c0_i32_0 : i32, i32
  }
  func.func @transform_26(%arg0: i32) -> (i32, i32) {
    %c0_i32 = arith.constant 0 : i32
    %c0_i32_0 = arith.constant 0 : i32
    %c0_i32_1 = arith.constant 0 : i32
    return %c0_i32, %c0_i32_0 : i32, i32
  }
  func.func @transform_27(%arg0: i32) -> (i32, i32) {
    %c0_i32 = arith.constant 0 : i32
    %c0_i32_0 = arith.constant 0 : i32
    %c0_i32_1 = arith.constant 0 : i32
    return %c0_i32, %c0_i32_0 : i32, i32
  }
  func.func @transform_28(%arg0: i32) -> (i32, i32) {
    %c0_i32 = arith.constant 0 : i32
    %c0_i32_0 = arith.constant 0 : i32
    %c0_i32_1 = arith.constant 0 : i32
    return %c0_i32, %c0_i32_0 : i32, i32
  }
  func.func @transform_29(%arg0: i32) -> (i32, i32) {
    %c0_i32 = arith.constant 0 : i32
    %c0_i32_0 = arith.constant 0 : i32
    %c0_i32_1 = arith.constant 0 : i32
    return %c0_i32, %c0_i32_0 : i32, i32
  }
  func.func @transform_30(%arg0: i32) -> (i32, i32) {
    %c0_i32 = arith.constant 0 : i32
    %c0_i32_0 = arith.constant 0 : i32
    %c0_i32_1 = arith.constant 0 : i32
    return %c0_i32, %c0_i32_0 : i32, i32
  }
  func.func @transform_31(%arg0: i32) -> (i32, i32) {
    %c0_i32 = arith.constant 0 : i32
    %c0_i32_0 = arith.constant 0 : i32
    %c0_i32_1 = arith.constant 0 : i32
    return %c0_i32, %c0_i32_0 : i32, i32
  }
  func.func @transform_32(%arg0: i32) -> (i32, i32) {
    %c0_i32 = arith.constant 0 : i32
    %c0_i32_0 = arith.constant 0 : i32
    %c0_i32_1 = arith.constant 0 : i32
    return %c0_i32, %c0_i32_0 : i32, i32
  }
  func.func @transform_33(%arg0: i32) -> (i32, i32, i32) {
    %c0_i32 = arith.constant 0 : i32
    %c0_i32_0 = arith.constant 0 : i32
    %c0_i32_1 = arith.constant 0 : i32
    %c0_i32_2 = arith.constant 0 : i32
    return %c0_i32, %c0_i32_0, %c0_i32_1 : i32, i32, i32
  }
  func.func @transform_34(%arg0: i32) -> (i32, i32) {
    %c0_i32 = arith.constant 0 : i32
    %c0_i32_0 = arith.constant 0 : i32
    %c0_i32_1 = arith.constant 0 : i32
    return %c0_i32, %c0_i32_0 : i32, i32
  }
  func.func @transform_35(%arg0: i32) -> (i32, i32) {
    %c0_i32 = arith.constant 0 : i32
    %c0_i32_0 = arith.constant 0 : i32
    %c0_i32_1 = arith.constant 0 : i32
    return %c0_i32, %c0_i32_0 : i32, i32
  }
}

</mosaic_0001>

<llo_original>
// kernel: _lambda_.1
$region0: #{_lambda_.1}
  #allocation0 [shape = 'u32[]', space=smem, size = 0x4, offset = 0x4, fixed_abs, tag = 'smem constant byte address 0x4 - core index']
  #allocation1 [shape = 'u32[144,128]{1,0:T(1,128)}', space=vmem, size = 0x12000, scoped, tag = 'internal scratch']
  #allocation2 [shape = 'f32[4,256]{1,0:T(4,128)}', space=vmem, size = 0x1000, scoped, tag = 'scratch operand']
  #allocation3 [shape = 'f32[4,16]{1,0:T(4,128)}', space=vmem, size = 0x800, scoped, tag = 'scratch operand']
  #allocation4 [shape = 'f32[4,128]{1,0:T(4,128)}', space=vmem, size = 0x800, scoped, tag = 'scratch operand']
  #allocation5 [shape = 'f32[4,16,16]{2,1,0:T(8,128)}', space=vmem, size = 0x8000, scoped, tag = 'scratch operand']
  #allocation6 [shape = 'f32[4,26,25]{2,1,0:T(8,128)}', space=vmem, size = 0x10000, scoped, tag = 'scratch operand']
  %s0 = inlined_call_operand.smem [shape: u32[36], index: -1, kind: input, shape index: {}]
  %s1 = sld [smem:[%s0]]
  %s2 = scalar_lea.smem %s0, 1
  %s3 = sld [smem:[%s2]]
  %s4 = scalar_lea.smem %s0, 2
  %s5 = sld [smem:[%s4]]
  %s6 = scalar_lea.smem %s0, 3
  %s7 = sld [smem:[%s6]]
  %s8 = scalar_lea.smem %s0, 4
  %s9 = sld [smem:[%s8]]
  %s10 = scalar_lea.smem %s0, 5
  %s11 = sld [smem:[%s10]]
  %s12 = scalar_lea.smem %s0, 6
  %s13 = sld [smem:[%s12]]
  %s14 = scalar_lea.smem %s0, 7
  %s15 = sld [smem:[%s14]]
  %s16 = scalar_lea.smem %s0, 8
  %s17 = sld [smem:[%s16]]
  %s18 = scalar_lea.smem %s0, 9
  %s19 = sld [smem:[%s18]]
  %s20 = scalar_lea.smem %s0, 10
  %s21 = sld [smem:[%s20]]
  %s22 = scalar_lea.smem %s0, 11
  %s23 = sld [smem:[%s22]]
  %s24 = scalar_lea.smem %s0, 12
  %s25 = sld [smem:[%s24]]
  %s26 = scalar_lea.smem %s0, 13
  %s27 = sld [smem:[%s26]]
  %s28 = scalar_lea.smem %s0, 14
  %s29 = sld [smem:[%s28]]
  %s30 = scalar_lea.smem %s0, 15
  %s31 = sld [smem:[%s30]]
  %s32 = scalar_lea.smem %s0, 16
  %s33 = sld [smem:[%s32]]
  %s34 = scalar_lea.smem %s0, 17
  %s35 = sld [smem:[%s34]]
  %s36 = scalar_lea.smem %s0, 18
  %s37 = sld [smem:[%s36]]
  %s38 = scalar_lea.smem %s0, 19
  %s39 = sld [smem:[%s38]]
  %s40 = scalar_lea.smem %s0, 20
  %s41 = sld [smem:[%s40]]
  %s42 = scalar_lea.smem %s0, 21
  %s43 = sld [smem:[%s42]]
  %s44 = scalar_lea.smem %s0, 22
  %s45 = sld [smem:[%s44]]
  %s46 = scalar_lea.smem %s0, 23
  %s47 = sld [smem:[%s46]]
  %s48 = scalar_lea.smem %s0, 24
  %s49 = sld [smem:[%s48]]
  %s50 = scalar_lea.smem %s0, 25
  %s51 = sld [smem:[%s50]]
  %s52 = scalar_lea.smem %s0, 26
  %s53 = sld [smem:[%s52]]
  %s54 = scalar_lea.smem %s0, 27
  %s55 = sld [smem:[%s54]]
  %s56 = scalar_lea.smem %s0, 28
  %s57 = sld [smem:[%s56]]
  %s58 = scalar_lea.smem %s0, 29
  %s59 = sld [smem:[%s58]]
  %s60 = scalar_lea.smem %s0, 30
  %s61 = sld [smem:[%s60]]
  %s62 = scalar_lea.smem %s0, 31
  %s63 = sld [smem:[%s62]]
  %s64 = scalar_lea.smem %s0, 32
  %s65 = sld [smem:[%s64]]
  %s66 = scalar_lea.smem %s0, 33
  %s67 = sld [smem:[%s66]]
  %s68 = scalar_lea.smem %s0, 34
  %s69 = sld [smem:[%s68]]
  %s70 = scalar_lea.smem %s0, 35
  %s71 = sld [smem:[%s70]]
  %72 = xla_tuple %s69, %s71
  %s73 = sld [smem:[#allocation0]]
  $region217: #{_lambda_.1} parent=0
    _
  %s75 = ssub.s32 1, %s73
  %s76 = scalar_select 0, %s75, %s73
  $region1: #{_lambda_.1} parent=0
    #allocation7 [shape = 'u8[2048]{0}', space=vmem, size = 0x800, scoped, tag = 'input window, operand 0, single buffered']
    #allocation8 [shape = 's32[2]{0}', space=sflag, size = 0x8, scoped, tag = 'scoped memory for _lambda_.1']
    #allocation9 [shape = 's32[2]{0}', space=sflag, size = 0x8, scoped, tag = 'scoped memory for _lambda_.1']
    #allocation10 [shape = 'u8[2048]{0}', space=vmem, size = 0x800, scoped, tag = 'input window, operand 1, single buffered']
    #allocation11 [shape = 's32[1]{0}', space=sflag, size = 0x4, scoped, tag = 'scoped memory for _lambda_.1']
    #allocation12 [shape = 'u8[1024]{0}', space=vmem, size = 0x400, scoped, tag = 'input window, operand 11, single buffered']
    #allocation13 [shape = 'u8[512]{0}', space=vmem, size = 0x400, scoped, tag = 'input window, operand 12, single buffered']
    #allocation14 [shape = 's32[1]{0}', space=sflag, size = 0x4, scoped, tag = 'scoped memory for _lambda_.1']
    #allocation15 [shape = 'u8[512]{0}', space=vmem, size = 0x400, scoped, tag = 'input window, operand 24, single buffered']
    #allocation16 [shape = 'u8[8192]{0}', space=vmem, size = 0x2000, scoped, tag = 'input window, operand 25, single buffered']
    #allocation17 [shape = 's32[1]{0}', space=sflag, size = 0x4, scoped, tag = 'scoped memory for _lambda_.1']
    #allocation18 [shape = 'u8[4096]{0}', space=vmem, size = 0x1000, scoped, tag = 'input window, operand 26, single buffered']
    #allocation19 [shape = 'u8[2048]{0}', space=vmem, size = 0x800, scoped, tag = 'output window, operand 0, single buffered']
    %77 = vsyncpa [#allocation8], 0
    %78 = vsyncpa [#allocation11], 0
    %79 = vsyncpa [#allocation14], 0
    %80 = vsyncpa [#allocation17], 0
    %81 = vsyncpa [#allocation9], 0
    loop: start=0, step=1, limit=7
    $region2: #{_lambda_.1} parent=1 // loop_pre_header
      _
    $region3: #{_lambda_.1} parent=1 // loop_header
      %s83 = sphi 0, %s87
      %p84 = scmp.ge.s32.totalorder %s83, 7
      %s91 = sphi 0, %s91
      %s93 = sphi 0, %s91
      %s94 = sphi 0, %s93
      %s108 = sphi 0, %s94
      %s112 = sphi 0, %s112
      %s114 = sphi 0, %s112
      %s115 = sphi 0, %s114
      %s129 = sphi 0, %s115
      %s133 = sphi 0, %s133
      %s135 = sphi 0, %s133
      %s136 = sphi 0, %s135
      %s150 = sphi 0, %s136
      %s154 = sphi 0, %s154
      %s156 = sphi 0, %s154
      %s157 = sphi 0, %s156
      %s171 = sphi 0, %s157
      %s175 = sphi 0, %s175
      %s177 = sphi 0, %s175
      %s178 = sphi 0, %s177
      %s192 = sphi 0, %s178
      %s196 = sphi 0, %s196
      %s198 = sphi 0, %s196
      %s199 = sphi 0, %s198
      %s213 = sphi 0, %s199
      %s217 = sphi 0, %s217
      %s219 = sphi 0, %s217
      %s220 = sphi 0, %s219
      %s234 = sphi 0, %s220
      %s238 = sphi 0, %s238
      %s240 = sphi 0, %s238
      %s241 = sphi 0, %s240
      %s255 = sphi 0, %s241
      %s259 = sphi 0, %s259
      %s261 = sphi 0, %s259
      %s262 = sphi 0, %s261
      %s276 = sphi 0, %s262
      %s280 = sphi 0, %s280
      %s282 = sphi 0, %s280
      %s283 = sphi 0, %s282
      %s297 = sphi 0, %s283
      %s301 = sphi 0, %s301
      %s303 = sphi 0, %s301
      %s304 = sphi 0, %s303
      %s318 = sphi 0, %s304
      %s322 = sphi 0, %s322
      %s324 = sphi 0, %s322
      %s325 = sphi 0, %s324
      %s339 = sphi 0, %s325
      %s343 = sphi 0, %s343
      %s345 = sphi 0, %s343
      %s346 = sphi 0, %s345
      %s360 = sphi 0, %s346
      %s364 = sphi 0, %s364
      %s366 = sphi 0, %s364
      %s367 = sphi 0, %s366
      %s381 = sphi 0, %s367
      %s385 = sphi 0, %s385
      %s387 = sphi 0, %s385
      %s388 = sphi 0, %s387
      %s402 = sphi 0, %s388
      %s406 = sphi 0, %s406
      %s408 = sphi 0, %s406
      %s409 = sphi 0, %s408
      %s423 = sphi 0, %s409
      %s427 = sphi 0, %s427
      %s429 = sphi 0, %s427
      %s430 = sphi 0, %s429
      %s444 = sphi 0, %s430
      %s448 = sphi 0, %s448
      %s450 = sphi 0, %s448
      %s451 = sphi 0, %s450
      %s465 = sphi 0, %s451
      %s469 = sphi 0, %s469
      %s471 = sphi 0, %s469
      %s472 = sphi 0, %s471
      %s486 = sphi 0, %s472
      %s490 = sphi 0, %s490
      %s492 = sphi 0, %s490
      %s493 = sphi 0, %s492
      %s507 = sphi 0, %s493
      %s511 = sphi 0, %s511
      %s513 = sphi 0, %s511
      %s514 = sphi 0, %s513
      %s528 = sphi 0, %s514
      %s532 = sphi 0, %s532
      %s534 = sphi 0, %s532
      %s535 = sphi 0, %s534
      %s549 = sphi 0, %s535
      %s553 = sphi 0, %s553
      %s555 = sphi 0, %s553
      %s556 = sphi 0, %s555
      %s570 = sphi 0, %s556
      %s574 = sphi 0, %s574
      %s576 = sphi 0, %s574
      %s577 = sphi 0, %s576
      %s591 = sphi 0, %s577
      %s595 = sphi 0, %s595
      %s597 = sphi 0, %s595
      %s598 = sphi 0, %s597
      %s612 = sphi 0, %s598
      %s616 = sphi 0, %s616
      %s618 = sphi 0, %s616
      %s619 = sphi 0, %s618
      %s633 = sphi 0, %s619
      %s637 = sphi 0, %s637
      %s639 = sphi 0, %s637
      %s640 = sphi 0, %s639
      %s654 = sphi 0, %s640
      %s658 = sphi 0, %s658
      %s660 = sphi 0, %s658
      %s661 = sphi 0, %s660
      %s675 = sphi 0, %s661
      %s679 = sphi 0, %s679
      %s681 = sphi 0, %s679
      %s682 = sphi 0, %s681
      %s696 = sphi 0, %s682
      %s700 = sphi 0, %s700
      %s702 = sphi 0, %s700
      %s703 = sphi 0, %s702
      %s717 = sphi 0, %s703
      %s721 = sphi 0, %s721
      %s723 = sphi 0, %s721
      %s724 = sphi 0, %s723
      %s738 = sphi 0, %s724
      %s742 = sphi 0, %s742
      %s744 = sphi 0, %s742
      %s745 = sphi 0, %s744
      %s759 = sphi 0, %s745
      %s763 = sphi 0, %s763
      %s765 = sphi 0, %s763
      %s766 = sphi 0, %s765
      %s780 = sphi 0, %s766
      %s784 = sphi 0, %s784
      %s786 = sphi 0, %s784
      %s787 = sphi 0, %s786
      %s801 = sphi 0, %s787
      %s805 = sphi 0, %s805
      %s807 = sphi 0, %s805
      %s808 = sphi 0, %s807
      %s822 = sphi 0, %s808
      %s826 = sphi 0, %s826
      %s828 = sphi 0, %s826
      %s829 = sphi 0, %s828
      %s843 = sphi 0, %s829
    $region4: #{_lambda_.1} parent=1 // loop_header_branch
      %86 = sbr.rel (%p84) target = $region8
    $region5: #{_lambda_.1} parent=1 // loop_body
      %s88 = ssub.s32 %s83, 1
      %s89 = ssub.s32 %s83, 2
      %s90 = sadd.s32 %s83, 1
      %s92 = sadd.s32 %s91, 1
      %p95 = scmp.eq.s32.totalorder %s83, 4
      %p96 = scmp.ne.s32.totalorder %s91, %s93
      %p97 = scmp.eq.s32.totalorder %s83, 0
      %p98 = por %p96, %p97
      %p99 = scmp.ne.s32.totalorder %s91, %s93
      %p100 = scmp.eq.s32.totalorder %s88, 4
      %p101 = por %p99, %p100
      %p102 = scmp.ne.s32.totalorder %s93, %s94
      %p103 = scmp.eq.s32.totalorder %s88, 0
      %p104 = por %p102, %p103
      %p105 = scmp.ne.s32.totalorder %s93, %s94
      %p106 = scmp.eq.s32.totalorder %s89, 4
      %p107 = por %p105, %p106
      %p109 = scmp.ne.s32.totalorder %s94, %s108
      %p110 = scmp.eq.s32.totalorder %s89, 0
      %p111 = por %p109, %p110
      %s113 = sadd.s32 %s112, 1
      %p116 = scmp.eq.s32.totalorder %s83, 4
      %p117 = scmp.ne.s32.totalorder %s112, %s114
      %p118 = scmp.eq.s32.totalorder %s83, 0
      %p119 = por %p117, %p118
      %p120 = scmp.ne.s32.totalorder %s112, %s114
      %p121 = scmp.eq.s32.totalorder %s88, 4
      %p122 = por %p120, %p121
      %p123 = scmp.ne.s32.totalorder %s114, %s115
      %p124 = scmp.eq.s32.totalorder %s88, 0
      %p125 = por %p123, %p124
      %p126 = scmp.ne.s32.totalorder %s114, %s115
      %p127 = scmp.eq.s32.totalorder %s89, 4
      %p128 = por %p126, %p127
      %p130 = scmp.ne.s32.totalorder %s115, %s129
      %p131 = scmp.eq.s32.totalorder %s89, 0
      %p132 = por %p130, %p131
      %s134 = sadd.s32 %s133, 1
      %p137 = scmp.eq.s32.totalorder %s83, 4
      %p138 = scmp.ne.s32.totalorder %s133, %s135
      %p139 = scmp.eq.s32.totalorder %s83, 0
      %p140 = por %p138, %p139
      %p141 = scmp.ne.s32.totalorder %s133, %s135
      %p142 = scmp.eq.s32.totalorder %s88, 4
      %p143 = por %p141, %p142
      %p144 = scmp.ne.s32.totalorder %s135, %s136
      %p145 = scmp.eq.s32.totalorder %s88, 0
      %p146 = por %p144, %p145
      %p147 = scmp.ne.s32.totalorder %s135, %s136
      %p148 = scmp.eq.s32.totalorder %s89, 4
      %p149 = por %p147, %p148
      %p151 = scmp.ne.s32.totalorder %s136, %s150
      %p152 = scmp.eq.s32.totalorder %s89, 0
      %p153 = por %p151, %p152
      %s155 = sadd.s32 %s154, 1
      %p158 = scmp.eq.s32.totalorder %s83, 4
      %p159 = scmp.ne.s32.totalorder %s154, %s156
      %p160 = scmp.eq.s32.totalorder %s83, 0
      %p161 = por %p159, %p160
      %p162 = scmp.ne.s32.totalorder %s154, %s156
      %p163 = scmp.eq.s32.totalorder %s88, 4
      %p164 = por %p162, %p163
      %p165 = scmp.ne.s32.totalorder %s156, %s157
      %p166 = scmp.eq.s32.totalorder %s88, 0
      %p167 = por %p165, %p166
      %p168 = scmp.ne.s32.totalorder %s156, %s157
      %p169 = scmp.eq.s32.totalorder %s89, 4
      %p170 = por %p168, %p169
      %p172 = scmp.ne.s32.totalorder %s157, %s171
      %p173 = scmp.eq.s32.totalorder %s89, 0
      %p174 = por %p172, %p173
      %s176 = sadd.s32 %s175, 1
      %p179 = scmp.eq.s32.totalorder %s83, 4
      %p180 = scmp.ne.s32.totalorder %s175, %s177
      %p181 = scmp.eq.s32.totalorder %s83, 0
      %p182 = por %p180, %p181
      %p183 = scmp.ne.s32.totalorder %s175, %s177
      %p184 = scmp.eq.s32.totalorder %s88, 4
      %p185 = por %p183, %p184
      %p186 = scmp.ne.s32.totalorder %s177, %s178
      %p187 = scmp.eq.s32.totalorder %s88, 0
      %p188 = por %p186, %p187
      %p189 = scmp.ne.s32.totalorder %s177, %s178
      %p190 = scmp.eq.s32.totalorder %s89, 4
      %p191 = por %p189, %p190
      %p193 = scmp.ne.s32.totalorder %s178, %s192
      %p194 = scmp.eq.s32.totalorder %s89, 0
      %p195 = por %p193, %p194
      %s197 = sadd.s32 %s196, 1
      %p200 = scmp.eq.s32.totalorder %s83, 4
      %p201 = scmp.ne.s32.totalorder %s196, %s198
      %p202 = scmp.eq.s32.totalorder %s83, 0
      %p203 = por %p201, %p202
      %p204 = scmp.ne.s32.totalorder %s196, %s198
      %p205 = scmp.eq.s32.totalorder %s88, 4
      %p206 = por %p204, %p205
      %p207 = scmp.ne.s32.totalorder %s198, %s199
      %p208 = scmp.eq.s32.totalorder %s88, 0
      %p209 = por %p207, %p208
      %p210 = scmp.ne.s32.totalorder %s198, %s199
      %p211 = scmp.eq.s32.totalorder %s89, 4
      %p212 = por %p210, %p211
      %p214 = scmp.ne.s32.totalorder %s199, %s213
      %p215 = scmp.eq.s32.totalorder %s89, 0
      %p216 = por %p214, %p215
      %s218 = sadd.s32 %s217, 1
      %p221 = scmp.eq.s32.totalorder %s83, 4
      %p222 = scmp.ne.s32.totalorder %s217, %s219
      %p223 = scmp.eq.s32.totalorder %s83, 0
      %p224 = por %p222, %p223
      %p225 = scmp.ne.s32.totalorder %s217, %s219
      %p226 = scmp.eq.s32.totalorder %s88, 4
      %p227 = por %p225, %p226
      %p228 = scmp.ne.s32.totalorder %s219, %s220
      %p229 = scmp.eq.s32.totalorder %s88, 0
      %p230 = por %p228, %p229
      %p231 = scmp.ne.s32.totalorder %s219, %s220
      %p232 = scmp.eq.s32.totalorder %s89, 4
      %p233 = por %p231, %p232
      %p235 = scmp.ne.s32.totalorder %s220, %s234
      %p236 = scmp.eq.s32.totalorder %s89, 0
      %p237 = por %p235, %p236
      %s239 = sadd.s32 %s238, 1
      %p242 = scmp.eq.s32.totalorder %s83, 4
      %p243 = scmp.ne.s32.totalorder %s238, %s240
      %p244 = scmp.eq.s32.totalorder %s83, 0
      %p245 = por %p243, %p244
      %p246 = scmp.ne.s32.totalorder %s238, %s240
      %p247 = scmp.eq.s32.totalorder %s88, 4
      %p248 = por %p246, %p247
      %p249 = scmp.ne.s32.totalorder %s240, %s241
      %p250 = scmp.eq.s32.totalorder %s88, 0
      %p251 = por %p249, %p250
      %p252 = scmp.ne.s32.totalorder %s240, %s241
      %p253 = scmp.eq.s32.totalorder %s89, 4
      %p254 = por %p252, %p253
      %p256 = scmp.ne.s32.totalorder %s241, %s255
      %p257 = scmp.eq.s32.totalorder %s89, 0
      %p258 = por %p256, %p257
      %s260 = sadd.s32 %s259, 1
      %p263 = scmp.eq.s32.totalorder %s83, 4
      %p264 = scmp.ne.s32.totalorder %s259, %s261
      %p265 = scmp.eq.s32.totalorder %s83, 0
      %p266 = por %p264, %p265
      %p267 = scmp.ne.s32.totalorder %s259, %s261
      %p268 = scmp.eq.s32.totalorder %s88, 4
      %p269 = por %p267, %p268
      %p270 = scmp.ne.s32.totalorder %s261, %s262
      %p271 = scmp.eq.s32.totalorder %s88, 0
      %p272 = por %p270, %p271
      %p273 = scmp.ne.s32.totalorder %s261, %s262
      %p274 = scmp.eq.s32.totalorder %s89, 4
      %p275 = por %p273, %p274
      %p277 = scmp.ne.s32.totalorder %s262, %s276
      %p278 = scmp.eq.s32.totalorder %s89, 0
      %p279 = por %p277, %p278
      %s281 = sadd.s32 %s280, 1
      %p284 = scmp.eq.s32.totalorder %s83, 4
      %p285 = scmp.ne.s32.totalorder %s280, %s282
      %p286 = scmp.eq.s32.totalorder %s83, 0
      %p287 = por %p285, %p286
      %p288 = scmp.ne.s32.totalorder %s280, %s282
      %p289 = scmp.eq.s32.totalorder %s88, 4
      %p290 = por %p288, %p289
      %p291 = scmp.ne.s32.totalorder %s282, %s283
      %p292 = scmp.eq.s32.totalorder %s88, 0
      %p293 = por %p291, %p292
      %p294 = scmp.ne.s32.totalorder %s282, %s283
      %p295 = scmp.eq.s32.totalorder %s89, 4
      %p296 = por %p294, %p295
      %p298 = scmp.ne.s32.totalorder %s283, %s297
      %p299 = scmp.eq.s32.totalorder %s89, 0
      %p300 = por %p298, %p299
      %s302 = sadd.s32 %s301, 1
      %p305 = scmp.eq.s32.totalorder %s83, 4
      %p306 = scmp.ne.s32.totalorder %s301, %s303
      %p307 = scmp.eq.s32.totalorder %s83, 0
      %p308 = por %p306, %p307
      %p309 = scmp.ne.s32.totalorder %s301, %s303
      %p310 = scmp.eq.s32.totalorder %s88, 4
      %p311 = por %p309, %p310
      %p312 = scmp.ne.s32.totalorder %s303, %s304
      %p313 = scmp.eq.s32.totalorder %s88, 0
      %p314 = por %p312, %p313
      %p315 = scmp.ne.s32.totalorder %s303, %s304
      %p316 = scmp.eq.s32.totalorder %s89, 4
      %p317 = por %p315, %p316
      %p319 = scmp.ne.s32.totalorder %s304, %s318
      %p320 = scmp.eq.s32.totalorder %s89, 0
      %p321 = por %p319, %p320
      %s323 = sadd.s32 %s322, 1
      %p326 = scmp.eq.s32.totalorder %s83, 4
      %p327 = scmp.ne.s32.totalorder %s322, %s324
      %p328 = scmp.eq.s32.totalorder %s83, 0
      %p329 = por %p327, %p328
      %p330 = scmp.ne.s32.totalorder %s322, %s324
      %p331 = scmp.eq.s32.totalorder %s88, 4
      %p332 = por %p330, %p331
      %p333 = scmp.ne.s32.totalorder %s324, %s325
      %p334 = scmp.eq.s32.totalorder %s88, 0
      %p335 = por %p333, %p334
      %p336 = scmp.ne.s32.totalorder %s324, %s325
      %p337 = scmp.eq.s32.totalorder %s89, 4
      %p338 = por %p336, %p337
      %p340 = scmp.ne.s32.totalorder %s325, %s339
      %p341 = scmp.eq.s32.totalorder %s89, 0
      %p342 = por %p340, %p341
      %s344 = sadd.s32 %s343, 1
      %p347 = scmp.eq.s32.totalorder %s83, 4
      %p348 = scmp.ne.s32.totalorder %s343, %s345
      %p349 = scmp.eq.s32.totalorder %s83, 0
      %p350 = por %p348, %p349
      %p351 = scmp.ne.s32.totalorder %s343, %s345
      %p352 = scmp.eq.s32.totalorder %s88, 4
      %p353 = por %p351, %p352
      %p354 = scmp.ne.s32.totalorder %s345, %s346
      %p355 = scmp.eq.s32.totalorder %s88, 0
      %p356 = por %p354, %p355
      %p357 = scmp.ne.s32.totalorder %s345, %s346
      %p358 = scmp.eq.s32.totalorder %s89, 4
      %p359 = por %p357, %p358
      %p361 = scmp.ne.s32.totalorder %s346, %s360
      %p362 = scmp.eq.s32.totalorder %s89, 0
      %p363 = por %p361, %p362
      %s365 = sadd.s32 %s364, 1
      %p368 = scmp.eq.s32.totalorder %s83, 4
      %p369 = scmp.ne.s32.totalorder %s364, %s366
      %p370 = scmp.eq.s32.totalorder %s83, 0
      %p371 = por %p369, %p370
      %p372 = scmp.ne.s32.totalorder %s364, %s366
      %p373 = scmp.eq.s32.totalorder %s88, 4
      %p374 = por %p372, %p373
      %p375 = scmp.ne.s32.totalorder %s366, %s367
      %p376 = scmp.eq.s32.totalorder %s88, 0
      %p377 = por %p375, %p376
      %p378 = scmp.ne.s32.totalorder %s366, %s367
      %p379 = scmp.eq.s32.totalorder %s89, 4
      %p380 = por %p378, %p379
      %p382 = scmp.ne.s32.totalorder %s367, %s381
      %p383 = scmp.eq.s32.totalorder %s89, 0
      %p384 = por %p382, %p383
      %s386 = sadd.s32 %s385, 1
      %p389 = scmp.eq.s32.totalorder %s83, 4
      %p390 = scmp.ne.s32.totalorder %s385, %s387
      %p391 = scmp.eq.s32.totalorder %s83, 0
      %p392 = por %p390, %p391
      %p393 = scmp.ne.s32.totalorder %s385, %s387
      %p394 = scmp.eq.s32.totalorder %s88, 4
      %p395 = por %p393, %p394
      %p396 = scmp.ne.s32.totalorder %s387, %s388
      %p397 = scmp.eq.s32.totalorder %s88, 0
      %p398 = por %p396, %p397
      %p399 = scmp.ne.s32.totalorder %s387, %s388
      %p400 = scmp.eq.s32.totalorder %s89, 4
      %p401 = por %p399, %p400
      %p403 = scmp.ne.s32.totalorder %s388, %s402
      %p404 = scmp.eq.s32.totalorder %s89, 0
      %p405 = por %p403, %p404
      %s407 = sadd.s32 %s406, 1
      %p410 = scmp.eq.s32.totalorder %s83, 4
      %p411 = scmp.ne.s32.totalorder %s406, %s408
      %p412 = scmp.eq.s32.totalorder %s83, 0
      %p413 = por %p411, %p412
      %p414 = scmp.ne.s32.totalorder %s406, %s408
      %p415 = scmp.eq.s32.totalorder %s88, 4
      %p416 = por %p414, %p415
      %p417 = scmp.ne.s32.totalorder %s408, %s409
      %p418 = scmp.eq.s32.totalorder %s88, 0
      %p419 = por %p417, %p418
      %p420 = scmp.ne.s32.totalorder %s408, %s409
      %p421 = scmp.eq.s32.totalorder %s89, 4
      %p422 = por %p420, %p421
      %p424 = scmp.ne.s32.totalorder %s409, %s423
      %p425 = scmp.eq.s32.totalorder %s89, 0
      %p426 = por %p424, %p425
      %s428 = sadd.s32 %s427, 1
      %p431 = scmp.eq.s32.totalorder %s83, 4
      %p432 = scmp.ne.s32.totalorder %s427, %s429
      %p433 = scmp.eq.s32.totalorder %s83, 0
      %p434 = por %p432, %p433
      %p435 = scmp.ne.s32.totalorder %s427, %s429
      %p436 = scmp.eq.s32.totalorder %s88, 4
      %p437 = por %p435, %p436
      %p438 = scmp.ne.s32.totalorder %s429, %s430
      %p439 = scmp.eq.s32.totalorder %s88, 0
      %p440 = por %p438, %p439
      %p441 = scmp.ne.s32.totalorder %s429, %s430
      %p442 = scmp.eq.s32.totalorder %s89, 4
      %p443 = por %p441, %p442
      %p445 = scmp.ne.s32.totalorder %s430, %s444
      %p446 = scmp.eq.s32.totalorder %s89, 0
      %p447 = por %p445, %p446
      %s449 = sadd.s32 %s448, 1
      %p452 = scmp.eq.s32.totalorder %s83, 4
      %p453 = scmp.ne.s32.totalorder %s448, %s450
      %p454 = scmp.eq.s32.totalorder %s83, 0
      %p455 = por %p453, %p454
      %p456 = scmp.ne.s32.totalorder %s448, %s450
      %p457 = scmp.eq.s32.totalorder %s88, 4
      %p458 = por %p456, %p457
      %p459 = scmp.ne.s32.totalorder %s450, %s451
      %p460 = scmp.eq.s32.totalorder %s88, 0
      %p461 = por %p459, %p460
      %p462 = scmp.ne.s32.totalorder %s450, %s451
      %p463 = scmp.eq.s32.totalorder %s89, 4
      %p464 = por %p462, %p463
      %p466 = scmp.ne.s32.totalorder %s451, %s465
      %p467 = scmp.eq.s32.totalorder %s89, 0
      %p468 = por %p466, %p467
      %s470 = sadd.s32 %s469, 1
      %p473 = scmp.eq.s32.totalorder %s83, 4
      %p474 = scmp.ne.s32.totalorder %s469, %s471
      %p475 = scmp.eq.s32.totalorder %s83, 0
      %p476 = por %p474, %p475
      %p477 = scmp.ne.s32.totalorder %s469, %s471
      %p478 = scmp.eq.s32.totalorder %s88, 4
      %p479 = por %p477, %p478
      %p480 = scmp.ne.s32.totalorder %s471, %s472
      %p481 = scmp.eq.s32.totalorder %s88, 0
      %p482 = por %p480, %p481
      %p483 = scmp.ne.s32.totalorder %s471, %s472
      %p484 = scmp.eq.s32.totalorder %s89, 4
      %p485 = por %p483, %p484
      %p487 = scmp.ne.s32.totalorder %s472, %s486
      %p488 = scmp.eq.s32.totalorder %s89, 0
      %p489 = por %p487, %p488
      %s491 = sadd.s32 %s490, 1
      %p494 = scmp.eq.s32.totalorder %s83, 4
      %p495 = scmp.ne.s32.totalorder %s490, %s492
      %p496 = scmp.eq.s32.totalorder %s83, 0
      %p497 = por %p495, %p496
      %p498 = scmp.ne.s32.totalorder %s490, %s492
      %p499 = scmp.eq.s32.totalorder %s88, 4
      %p500 = por %p498, %p499
      %p501 = scmp.ne.s32.totalorder %s492, %s493
      %p502 = scmp.eq.s32.totalorder %s88, 0
      %p503 = por %p501, %p502
      %p504 = scmp.ne.s32.totalorder %s492, %s493
      %p505 = scmp.eq.s32.totalorder %s89, 4
      %p506 = por %p504, %p505
      %p508 = scmp.ne.s32.totalorder %s493, %s507
      %p509 = scmp.eq.s32.totalorder %s89, 0
      %p510 = por %p508, %p509
      %s512 = sadd.s32 %s511, 1
      %p515 = scmp.eq.s32.totalorder %s83, 4
      %p516 = scmp.ne.s32.totalorder %s511, %s513
      %p517 = scmp.eq.s32.totalorder %s83, 0
      %p518 = por %p516, %p517
      %p519 = scmp.ne.s32.totalorder %s511, %s513
      %p520 = scmp.eq.s32.totalorder %s88, 4
      %p521 = por %p519, %p520
      %p522 = scmp.ne.s32.totalorder %s513, %s514
      %p523 = scmp.eq.s32.totalorder %s88, 0
      %p524 = por %p522, %p523
      %p525 = scmp.ne.s32.totalorder %s513, %s514
      %p526 = scmp.eq.s32.totalorder %s89, 4
      %p527 = por %p525, %p526
      %p529 = scmp.ne.s32.totalorder %s514, %s528
      %p530 = scmp.eq.s32.totalorder %s89, 0
      %p531 = por %p529, %p530
      %s533 = sadd.s32 %s532, 1
      %p536 = scmp.eq.s32.totalorder %s83, 4
      %p537 = scmp.ne.s32.totalorder %s532, %s534
      %p538 = scmp.eq.s32.totalorder %s83, 0
      %p539 = por %p537, %p538
      %p540 = scmp.ne.s32.totalorder %s532, %s534
      %p541 = scmp.eq.s32.totalorder %s88, 4
      %p542 = por %p540, %p541
      %p543 = scmp.ne.s32.totalorder %s534, %s535
      %p544 = scmp.eq.s32.totalorder %s88, 0
      %p545 = por %p543, %p544
      %p546 = scmp.ne.s32.totalorder %s534, %s535
      %p547 = scmp.eq.s32.totalorder %s89, 4
      %p548 = por %p546, %p547
      %p550 = scmp.ne.s32.totalorder %s535, %s549
      %p551 = scmp.eq.s32.totalorder %s89, 0
      %p552 = por %p550, %p551
      %s554 = sadd.s32 %s553, 1
      %p557 = scmp.eq.s32.totalorder %s83, 4
      %p558 = scmp.ne.s32.totalorder %s553, %s555
      %p559 = scmp.eq.s32.totalorder %s83, 0
      %p560 = por %p558, %p559
      %p561 = scmp.ne.s32.totalorder %s553, %s555
      %p562 = scmp.eq.s32.totalorder %s88, 4
      %p563 = por %p561, %p562
      %p564 = scmp.ne.s32.totalorder %s555, %s556
      %p565 = scmp.eq.s32.totalorder %s88, 0
      %p566 = por %p564, %p565
      %p567 = scmp.ne.s32.totalorder %s555, %s556
      %p568 = scmp.eq.s32.totalorder %s89, 4
      %p569 = por %p567, %p568
      %p571 = scmp.ne.s32.totalorder %s556, %s570
      %p572 = scmp.eq.s32.totalorder %s89, 0
      %p573 = por %p571, %p572
      %s575 = sadd.s32 %s574, 1
      %p578 = scmp.eq.s32.totalorder %s83, 4
      %p579 = scmp.ne.s32.totalorder %s574, %s576
      %p580 = scmp.eq.s32.totalorder %s83, 0
      %p581 = por %p579, %p580
      %p582 = scmp.ne.s32.totalorder %s574, %s576
      %p583 = scmp.eq.s32.totalorder %s88, 4
      %p584 = por %p582, %p583
      %p585 = scmp.ne.s32.totalorder %s576, %s577
      %p586 = scmp.eq.s32.totalorder %s88, 0
      %p587 = por %p585, %p586
      %p588 = scmp.ne.s32.totalorder %s576, %s577
      %p589 = scmp.eq.s32.totalorder %s89, 4
      %p590 = por %p588, %p589
      %p592 = scmp.ne.s32.totalorder %s577, %s591
      %p593 = scmp.eq.s32.totalorder %s89, 0
      %p594 = por %p592, %p593
      %s596 = sadd.s32 %s595, 1
      %p599 = scmp.eq.s32.totalorder %s83, 4
      %p600 = scmp.ne.s32.totalorder %s595, %s597
      %p601 = scmp.eq.s32.totalorder %s83, 0
      %p602 = por %p600, %p601
      %p603 = scmp.ne.s32.totalorder %s595, %s597
      %p604 = scmp.eq.s32.totalorder %s88, 4
      %p605 = por %p603, %p604
      %p606 = scmp.ne.s32.totalorder %s597, %s598
      %p607 = scmp.eq.s32.totalorder %s88, 0
      %p608 = por %p606, %p607
      %p609 = scmp.ne.s32.totalorder %s597, %s598
      %p610 = scmp.eq.s32.totalorder %s89, 4
      %p611 = por %p609, %p610
      %p613 = scmp.ne.s32.totalorder %s598, %s612
      %p614 = scmp.eq.s32.totalorder %s89, 0
      %p615 = por %p613, %p614
      %s617 = sadd.s32 %s616, 1
      %p620 = scmp.eq.s32.totalorder %s83, 4
      %p621 = scmp.ne.s32.totalorder %s616, %s618
      %p622 = scmp.eq.s32.totalorder %s83, 0
      %p623 = por %p621, %p622
      %p624 = scmp.ne.s32.totalorder %s616, %s618
      %p625 = scmp.eq.s32.totalorder %s88, 4
      %p626 = por %p624, %p625
      %p627 = scmp.ne.s32.totalorder %s618, %s619
      %p628 = scmp.eq.s32.totalorder %s88, 0
      %p629 = por %p627, %p628
      %p630 = scmp.ne.s32.totalorder %s618, %s619
      %p631 = scmp.eq.s32.totalorder %s89, 4
      %p632 = por %p630, %p631
      %p634 = scmp.ne.s32.totalorder %s619, %s633
      %p635 = scmp.eq.s32.totalorder %s89, 0
      %p636 = por %p634, %p635
      %s638 = sadd.s32 %s637, 1
      %p641 = scmp.eq.s32.totalorder %s83, 4
      %p642 = scmp.ne.s32.totalorder %s637, %s639
      %p643 = scmp.eq.s32.totalorder %s83, 0
      %p644 = por %p642, %p643
      %p645 = scmp.ne.s32.totalorder %s637, %s639
      %p646 = scmp.eq.s32.totalorder %s88, 4
      %p647 = por %p645, %p646
      %p648 = scmp.ne.s32.totalorder %s639, %s640
      %p649 = scmp.eq.s32.totalorder %s88, 0
      %p650 = por %p648, %p649
      %p651 = scmp.ne.s32.totalorder %s639, %s640
      %p652 = scmp.eq.s32.totalorder %s89, 4
      %p653 = por %p651, %p652
      %p655 = scmp.ne.s32.totalorder %s640, %s654
      %p656 = scmp.eq.s32.totalorder %s89, 0
      %p657 = por %p655, %p656
      %s659 = sadd.s32 %s658, 1
      %p662 = scmp.eq.s32.totalorder %s83, 4
      %p663 = scmp.ne.s32.totalorder %s658, %s660
      %p664 = scmp.eq.s32.totalorder %s83, 0
      %p665 = por %p663, %p664
      %p666 = scmp.ne.s32.totalorder %s658, %s660
      %p667 = scmp.eq.s32.totalorder %s88, 4
      %p668 = por %p666, %p667
      %p669 = scmp.ne.s32.totalorder %s660, %s661
      %p670 = scmp.eq.s32.totalorder %s88, 0
      %p671 = por %p669, %p670
      %p672 = scmp.ne.s32.totalorder %s660, %s661
      %p673 = scmp.eq.s32.totalorder %s89, 4
      %p674 = por %p672, %p673
      %p676 = scmp.ne.s32.totalorder %s661, %s675
      %p677 = scmp.eq.s32.totalorder %s89, 0
      %p678 = por %p676, %p677
      %s680 = sadd.s32 %s679, 1
      %p683 = scmp.eq.s32.totalorder %s83, 4
      %p684 = scmp.ne.s32.totalorder %s679, %s681
      %p685 = scmp.eq.s32.totalorder %s83, 0
      %p686 = por %p684, %p685
      %p687 = scmp.ne.s32.totalorder %s679, %s681
      %p688 = scmp.eq.s32.totalorder %s88, 4
      %p689 = por %p687, %p688
      %p690 = scmp.ne.s32.totalorder %s681, %s682
      %p691 = scmp.eq.s32.totalorder %s88, 0
      %p692 = por %p690, %p691
      %p693 = scmp.ne.s32.totalorder %s681, %s682
      %p694 = scmp.eq.s32.totalorder %s89, 4
      %p695 = por %p693, %p694
      %p697 = scmp.ne.s32.totalorder %s682, %s696
      %p698 = scmp.eq.s32.totalorder %s89, 0
      %p699 = por %p697, %p698
      %s701 = sadd.s32 %s700, 1
      %p704 = scmp.eq.s32.totalorder %s83, 4
      %p705 = scmp.ne.s32.totalorder %s700, %s702
      %p706 = scmp.eq.s32.totalorder %s83, 0
      %p707 = por %p705, %p706
      %p708 = scmp.ne.s32.totalorder %s700, %s702
      %p709 = scmp.eq.s32.totalorder %s88, 4
      %p710 = por %p708, %p709
      %p711 = scmp.ne.s32.totalorder %s702, %s703
      %p712 = scmp.eq.s32.totalorder %s88, 0
      %p713 = por %p711, %p712
      %p714 = scmp.ne.s32.totalorder %s702, %s703
      %p715 = scmp.eq.s32.totalorder %s89, 4
      %p716 = por %p714, %p715
      %p718 = scmp.ne.s32.totalorder %s703, %s717
      %p719 = scmp.eq.s32.totalorder %s89, 0
      %p720 = por %p718, %p719
      %s722 = sadd.s32 %s721, 1
      %p725 = scmp.eq.s32.totalorder %s83, 4
      %p726 = scmp.ne.s32.totalorder %s721, %s723
      %p727 = scmp.eq.s32.totalorder %s83, 0
      %p728 = por %p726, %p727
      %p729 = scmp.ne.s32.totalorder %s721, %s723
      %p730 = scmp.eq.s32.totalorder %s88, 4
      %p731 = por %p729, %p730
      %p732 = scmp.ne.s32.totalorder %s723, %s724
      %p733 = scmp.eq.s32.totalorder %s88, 0
      %p734 = por %p732, %p733
      %p735 = scmp.ne.s32.totalorder %s723, %s724
      %p736 = scmp.eq.s32.totalorder %s89, 4
      %p737 = por %p735, %p736
      %p739 = scmp.ne.s32.totalorder %s724, %s738
      %p740 = scmp.eq.s32.totalorder %s89, 0
      %p741 = por %p739, %p740
      %s743 = sadd.s32 %s742, 1
      %p746 = scmp.eq.s32.totalorder %s83, 4
      %p747 = scmp.ne.s32.totalorder %s742, %s744
      %p748 = scmp.eq.s32.totalorder %s83, 0
      %p749 = por %p747, %p748
      %p750 = scmp.ne.s32.totalorder %s742, %s744
      %p751 = scmp.eq.s32.totalorder %s88, 4
      %p752 = por %p750, %p751
      %p753 = scmp.ne.s32.totalorder %s744, %s745
      %p754 = scmp.eq.s32.totalorder %s88, 0
      %p755 = por %p753, %p754
      %p756 = scmp.ne.s32.totalorder %s744, %s745
      %p757 = scmp.eq.s32.totalorder %s89, 4
      %p758 = por %p756, %p757
      %p760 = scmp.ne.s32.totalorder %s745, %s759
      %p761 = scmp.eq.s32.totalorder %s89, 0
      %p762 = por %p760, %p761
      %s764 = sadd.s32 %s763, 1
      %p767 = scmp.eq.s32.totalorder %s83, 4
      %p768 = scmp.ne.s32.totalorder %s763, %s765
      %p769 = scmp.eq.s32.totalorder %s83, 0
      %p770 = por %p768, %p769
      %p771 = scmp.ne.s32.totalorder %s763, %s765
      %p772 = scmp.eq.s32.totalorder %s88, 4
      %p773 = por %p771, %p772
      %p774 = scmp.ne.s32.totalorder %s765, %s766
      %p775 = scmp.eq.s32.totalorder %s88, 0
      %p776 = por %p774, %p775
      %p777 = scmp.ne.s32.totalorder %s765, %s766
      %p778 = scmp.eq.s32.totalorder %s89, 4
      %p779 = por %p777, %p778
      %p781 = scmp.ne.s32.totalorder %s766, %s780
      %p782 = scmp.eq.s32.totalorder %s89, 0
      %p783 = por %p781, %p782
      %s785 = sadd.s32 %s784, 1
      %p788 = scmp.eq.s32.totalorder %s83, 4
      %p789 = scmp.ne.s32.totalorder %s784, %s786
      %p790 = scmp.eq.s32.totalorder %s83, 0
      %p791 = por %p789, %p790
      %p792 = scmp.ne.s32.totalorder %s784, %s786
      %p793 = scmp.eq.s32.totalorder %s88, 4
      %p794 = por %p792, %p793
      %p795 = scmp.ne.s32.totalorder %s786, %s787
      %p796 = scmp.eq.s32.totalorder %s88, 0
      %p797 = por %p795, %p796
      %p798 = scmp.ne.s32.totalorder %s786, %s787
      %p799 = scmp.eq.s32.totalorder %s89, 4
      %p800 = por %p798, %p799
      %p802 = scmp.ne.s32.totalorder %s787, %s801
      %p803 = scmp.eq.s32.totalorder %s89, 0
      %p804 = por %p802, %p803
      %s806 = sadd.s32 %s805, 1
      %p809 = scmp.eq.s32.totalorder %s83, 4
      %p810 = scmp.ne.s32.totalorder %s805, %s807
      %p811 = scmp.eq.s32.totalorder %s83, 0
      %p812 = por %p810, %p811
      %p813 = scmp.ne.s32.totalorder %s805, %s807
      %p814 = scmp.eq.s32.totalorder %s88, 4
      %p815 = por %p813, %p814
      %p816 = scmp.ne.s32.totalorder %s807, %s808
      %p817 = scmp.eq.s32.totalorder %s88, 0
      %p818 = por %p816, %p817
      %p819 = scmp.ne.s32.totalorder %s807, %s808
      %p820 = scmp.eq.s32.totalorder %s89, 4
      %p821 = por %p819, %p820
      %p823 = scmp.ne.s32.totalorder %s808, %s822
      %p824 = scmp.eq.s32.totalorder %s89, 0
      %p825 = por %p823, %p824
      %s827 = sadd.s32 %s826, 1
      %p830 = scmp.eq.s32.totalorder %s83, 4
      %p831 = scmp.ne.s32.totalorder %s826, %s828
      %p832 = scmp.eq.s32.totalorder %s83, 0
      %p833 = por %p831, %p832
      %p834 = scmp.ne.s32.totalorder %s826, %s828
      %p835 = scmp.eq.s32.totalorder %s88, 4
      %p836 = por %p834, %p835
      %p837 = scmp.ne.s32.totalorder %s828, %s829
      %p838 = scmp.eq.s32.totalorder %s88, 0
      %p839 = por %p837, %p838
      %p840 = scmp.ne.s32.totalorder %s828, %s829
      %p841 = scmp.eq.s32.totalorder %s89, 4
      %p842 = por %p840, %p841
      %p844 = scmp.ne.s32.totalorder %s829, %s843
      %p845 = scmp.eq.s32.totalorder %s89, 0
      %p846 = por %p844, %p845
      %p847 = scmp.le.s32.totalorder 1, %s83
      %p848 = scmp.lt.s32.totalorder %s83, 6
      %p849 = pnand %p847, %p848
      %p850 = pneg %p849
      // Predicated region
      $region9: #{_lambda_.1} parent=5 // pred_check
        _
      $region10: #{_lambda_.1} parent=5 // pred_check_branch
        %852 = sbr.rel (%p849) target = $region12
      $region11: #{_lambda_.1} parent=5 // pred_region
        %s853 = ssub.s32 %s83, 1
        // Predicated region
        $region13: #{_lambda_.1} parent=11 // pred_check
          %p854 = pneg %p104
        $region14: #{_lambda_.1} parent=11 // pred_check_branch
          %856 = sbr.rel (%p854) target = $region16
        $region15: #{_lambda_.1} parent=11 // pred_region
          %s858 = ssub.s32 64, 64
          %859 = vsyncadd [#allocation8], %s858
          %s861 = sshll.u32 [#allocation7], 4
          %s862 = int_to_ptr.vmem [resolvable:$true] %s861
          %864 = dma.hbm_to_vmem [thread:$0]  %s1, 64, %s862, [#allocation8]
        $region16: #{_lambda_.1} parent=11 // pred_fallthru
          _
        // Predicated region
        $region17: #{_lambda_.1} parent=11 // pred_check
          %p865 = pneg %p125
        $region18: #{_lambda_.1} parent=11 // pred_check_branch
          %867 = sbr.rel (%p865) target = $region20
        $region19: #{_lambda_.1} parent=11 // pred_region
          %s869 = ssub.s32 64, 64
          %870 = vsyncadd [#allocation11], %s869
          %s872 = sshll.u32 [#allocation10], 4
          %s873 = int_to_ptr.vmem [resolvable:$true] %s872
          %875 = dma.hbm_to_vmem [thread:$0]  %s3, 64, %s873, [#allocation11]
        $region20: #{_lambda_.1} parent=11 // pred_fallthru
          _
        // Predicated region
        $region21: #{_lambda_.1} parent=11 // pred_check
          %p876 = pneg %p146
        $region22: #{_lambda_.1} parent=11 // pred_check_branch
          %878 = sbr.rel (%p876) target = $region24
        $region23: #{_lambda_.1} parent=11 // pred_region
          _
        $region24: #{_lambda_.1} parent=11 // pred_fallthru
          _
        // Predicated region
        $region25: #{_lambda_.1} parent=11 // pred_check
          %p879 = pneg %p167
        $region26: #{_lambda_.1} parent=11 // pred_check_branch
          %881 = sbr.rel (%p879) target = $region28
        $region27: #{_lambda_.1} parent=11 // pred_region
          _
        $region28: #{_lambda_.1} parent=11 // pred_fallthru
          _
        // Predicated region
        $region29: #{_lambda_.1} parent=11 // pred_check
          %p882 = pneg %p188
        $region30: #{_lambda_.1} parent=11 // pred_check_branch
          %884 = sbr.rel (%p882) target = $region32
        $region31: #{_lambda_.1} parent=11 // pred_region
          _
        $region32: #{_lambda_.1} parent=11 // pred_fallthru
          _
        // Predicated region
        $region33: #{_lambda_.1} parent=11 // pred_check
          %p885 = pneg %p209
        $region34: #{_lambda_.1} parent=11 // pred_check_branch
          %887 = sbr.rel (%p885) target = $region36
        $region35: #{_lambda_.1} parent=11 // pred_region
          _
        $region36: #{_lambda_.1} parent=11 // pred_fallthru
          _
        // Predicated region
        $region37: #{_lambda_.1} parent=11 // pred_check
          %p888 = pneg %p230
        $region38: #{_lambda_.1} parent=11 // pred_check_branch
          %890 = sbr.rel (%p888) target = $region40
        $region39: #{_lambda_.1} parent=11 // pred_region
          _
        $region40: #{_lambda_.1} parent=11 // pred_fallthru
          _
        // Predicated region
        $region41: #{_lambda_.1} parent=11 // pred_check
          %p891 = pneg %p251
        $region42: #{_lambda_.1} parent=11 // pred_check_branch
          %893 = sbr.rel (%p891) target = $region44
        $region43: #{_lambda_.1} parent=11 // pred_region
          _
        $region44: #{_lambda_.1} parent=11 // pred_fallthru
          _
        // Predicated region
        $region45: #{_lambda_.1} parent=11 // pred_check
          %p894 = pneg %p272
        $region46: #{_lambda_.1} parent=11 // pred_check_branch
          %896 = sbr.rel (%p894) target = $region48
        $region47: #{_lambda_.1} parent=11 // pred_region
          _
        $region48: #{_lambda_.1} parent=11 // pred_fallthru
          _
        // Predicated region
        $region49: #{_lambda_.1} parent=11 // pred_check
          %p897 = pneg %p293
        $region50: #{_lambda_.1} parent=11 // pred_check_branch
          %899 = sbr.rel (%p897) target = $region52
        $region51: #{_lambda_.1} parent=11 // pred_region
          _
        $region52: #{_lambda_.1} parent=11 // pred_fallthru
          _
        // Predicated region
        $region53: #{_lambda_.1} parent=11 // pred_check
          %p900 = pneg %p314
        $region54: #{_lambda_.1} parent=11 // pred_check_branch
          %902 = sbr.rel (%p900) target = $region56
        $region55: #{_lambda_.1} parent=11 // pred_region
          _
        $region56: #{_lambda_.1} parent=11 // pred_fallthru
          _
        // Predicated region
        $region57: #{_lambda_.1} parent=11 // pred_check
          %p903 = pneg %p335
        $region58: #{_lambda_.1} parent=11 // pred_check_branch
          %905 = sbr.rel (%p903) target = $region60
        $region59: #{_lambda_.1} parent=11 // pred_region
          %s907 = ssub.s32 32, 32
          %908 = vsyncadd [#allocation11], %s907
          %s910 = sshll.u32 [#allocation12], 4
          %s911 = int_to_ptr.vmem [resolvable:$true] %s910
          %913 = dma.hbm_to_vmem [thread:$0]  %s23, 32, %s911, [#allocation11]
        $region60: #{_lambda_.1} parent=11 // pred_fallthru
          _
        // Predicated region
        $region61: #{_lambda_.1} parent=11 // pred_check
          %p914 = pneg %p356
        $region62: #{_lambda_.1} parent=11 // pred_check_branch
          %916 = sbr.rel (%p914) target = $region64
        $region63: #{_lambda_.1} parent=11 // pred_region
          %s918 = ssub.s32 16, 16
          %919 = vsyncadd [#allocation14], %s918
          %s921 = sshll.u32 [#allocation13], 4
          %s922 = int_to_ptr.vmem [resolvable:$true] %s921
          %924 = dma.hbm_to_vmem [thread:$0]  %s25, 16, %s922, [#allocation14]
        $region64: #{_lambda_.1} parent=11 // pred_fallthru
          _
        // Predicated region
        $region65: #{_lambda_.1} parent=11 // pred_check
          %p925 = pneg %p377
        $region66: #{_lambda_.1} parent=11 // pred_check_branch
          %927 = sbr.rel (%p925) target = $region68
        $region67: #{_lambda_.1} parent=11 // pred_region
          _
        $region68: #{_lambda_.1} parent=11 // pred_fallthru
          _
        // Predicated region
        $region69: #{_lambda_.1} parent=11 // pred_check
          %p928 = pneg %p398
        $region70: #{_lambda_.1} parent=11 // pred_check_branch
          %930 = sbr.rel (%p928) target = $region72
        $region71: #{_lambda_.1} parent=11 // pred_region
          _
        $region72: #{_lambda_.1} parent=11 // pred_fallthru
          _
        // Predicated region
        $region73: #{_lambda_.1} parent=11 // pred_check
          %p931 = pneg %p419
        $region74: #{_lambda_.1} parent=11 // pred_check_branch
          %933 = sbr.rel (%p931) target = $region76
        $region75: #{_lambda_.1} parent=11 // pred_region
          _
        $region76: #{_lambda_.1} parent=11 // pred_fallthru
          _
        // Predicated region
        $region77: #{_lambda_.1} parent=11 // pred_check
          %p934 = pneg %p440
        $region78: #{_lambda_.1} parent=11 // pred_check_branch
          %936 = sbr.rel (%p934) target = $region80
        $region79: #{_lambda_.1} parent=11 // pred_region
          _
        $region80: #{_lambda_.1} parent=11 // pred_fallthru
          _
        // Predicated region
        $region81: #{_lambda_.1} parent=11 // pred_check
          %p937 = pneg %p461
        $region82: #{_lambda_.1} parent=11 // pred_check_branch
          %939 = sbr.rel (%p937) target = $region84
        $region83: #{_lambda_.1} parent=11 // pred_region
          _
        $region84: #{_lambda_.1} parent=11 // pred_fallthru
          _
        // Predicated region
        $region85: #{_lambda_.1} parent=11 // pred_check
          %p940 = pneg %p482
        $region86: #{_lambda_.1} parent=11 // pred_check_branch
          %942 = sbr.rel (%p940) target = $region88
        $region87: #{_lambda_.1} parent=11 // pred_region
          _
        $region88: #{_lambda_.1} parent=11 // pred_fallthru
          _
        // Predicated region
        $region89: #{_lambda_.1} parent=11 // pred_check
          %p943 = pneg %p503
        $region90: #{_lambda_.1} parent=11 // pred_check_branch
          %945 = sbr.rel (%p943) target = $region92
        $region91: #{_lambda_.1} parent=11 // pred_region
          _
        $region92: #{_lambda_.1} parent=11 // pred_fallthru
          _
        // Predicated region
        $region93: #{_lambda_.1} parent=11 // pred_check
          %p946 = pneg %p524
        $region94: #{_lambda_.1} parent=11 // pred_check_branch
          %948 = sbr.rel (%p946) target = $region96
        $region95: #{_lambda_.1} parent=11 // pred_region
          _
        $region96: #{_lambda_.1} parent=11 // pred_fallthru
          _
        // Predicated region
        $region97: #{_lambda_.1} parent=11 // pred_check
          %p949 = pneg %p545
        $region98: #{_lambda_.1} parent=11 // pred_check_branch
          %951 = sbr.rel (%p949) target = $region100
        $region99: #{_lambda_.1} parent=11 // pred_region
          _
        $region100: #{_lambda_.1} parent=11 // pred_fallthru
          _
        // Predicated region
        $region101: #{_lambda_.1} parent=11 // pred_check
          %p952 = pneg %p566
        $region102: #{_lambda_.1} parent=11 // pred_check_branch
          %954 = sbr.rel (%p952) target = $region104
        $region103: #{_lambda_.1} parent=11 // pred_region
          _
        $region104: #{_lambda_.1} parent=11 // pred_fallthru
          _
        // Predicated region
        $region105: #{_lambda_.1} parent=11 // pred_check
          %p955 = pneg %p587
        $region106: #{_lambda_.1} parent=11 // pred_check_branch
          %957 = sbr.rel (%p955) target = $region108
        $region107: #{_lambda_.1} parent=11 // pred_region
          _
        $region108: #{_lambda_.1} parent=11 // pred_fallthru
          _
        // Predicated region
        $region109: #{_lambda_.1} parent=11 // pred_check
          %p958 = pneg %p608
        $region110: #{_lambda_.1} parent=11 // pred_check_branch
          %960 = sbr.rel (%p958) target = $region112
        $region111: #{_lambda_.1} parent=11 // pred_region
          %s962 = ssub.s32 16, 16
          %963 = vsyncadd [#allocation14], %s962
          %s965 = sshll.u32 [#allocation15], 4
          %s966 = int_to_ptr.vmem [resolvable:$true] %s965
          %968 = dma.hbm_to_vmem [thread:$0]  %s49, 16, %s966, [#allocation14]
        $region112: #{_lambda_.1} parent=11 // pred_fallthru
          _
        // Predicated region
        $region113: #{_lambda_.1} parent=11 // pred_check
          %p969 = pneg %p629
        $region114: #{_lambda_.1} parent=11 // pred_check_branch
          %971 = sbr.rel (%p969) target = $region116
        $region115: #{_lambda_.1} parent=11 // pred_region
          %s973 = ssub.s32 256, 256
          %974 = vsyncadd [#allocation17], %s973
          %s975 = sshll.u32 [#allocation16], 4
          %s976 = int_to_ptr.vmem [resolvable:$true] %s975
          %981 = dma.hbm_to_vmem [thread:$0]  %s51, 256, %s976, [#allocation17], 128, 128, 8
        $region116: #{_lambda_.1} parent=11 // pred_fallthru
          _
        // Predicated region
        $region117: #{_lambda_.1} parent=11 // pred_check
          %p982 = pneg %p650
        $region118: #{_lambda_.1} parent=11 // pred_check_branch
          %984 = sbr.rel (%p982) target = $region120
        $region119: #{_lambda_.1} parent=11 // pred_region
          %s986 = ssub.s32 128, 128
          %987 = vsyncadd [#allocation17], %s986
          %s989 = sshll.u32 [#allocation18], 4
          %s990 = int_to_ptr.vmem [resolvable:$true] %s989
          %992 = dma.hbm_to_vmem [thread:$0]  %s53, 128, %s990, [#allocation17]
        $region120: #{_lambda_.1} parent=11 // pred_fallthru
          _
        // Predicated region
        $region121: #{_lambda_.1} parent=11 // pred_check
          %p993 = pneg %p671
        $region122: #{_lambda_.1} parent=11 // pred_check_branch
          %995 = sbr.rel (%p993) target = $region124
        $region123: #{_lambda_.1} parent=11 // pred_region
          _
        $region124: #{_lambda_.1} parent=11 // pred_fallthru
          _
        // Predicated region
        $region125: #{_lambda_.1} parent=11 // pred_check
          %p996 = pneg %p692
        $region126: #{_lambda_.1} parent=11 // pred_check_branch
          %998 = sbr.rel (%p996) target = $region128
        $region127: #{_lambda_.1} parent=11 // pred_region
          _
        $region128: #{_lambda_.1} parent=11 // pred_fallthru
          _
        // Predicated region
        $region129: #{_lambda_.1} parent=11 // pred_check
          %p999 = pneg %p713
        $region130: #{_lambda_.1} parent=11 // pred_check_branch
          %1001 = sbr.rel (%p999) target = $region132
        $region131: #{_lambda_.1} parent=11 // pred_region
          _
        $region132: #{_lambda_.1} parent=11 // pred_fallthru
          _
        // Predicated region
        $region133: #{_lambda_.1} parent=11 // pred_check
          %p1002 = pneg %p734
        $region134: #{_lambda_.1} parent=11 // pred_check_branch
          %1004 = sbr.rel (%p1002) target = $region136
        $region135: #{_lambda_.1} parent=11 // pred_region
          _
        $region136: #{_lambda_.1} parent=11 // pred_fallthru
          _
        // Predicated region
        $region137: #{_lambda_.1} parent=11 // pred_check
          %p1005 = pneg %p755
        $region138: #{_lambda_.1} parent=11 // pred_check_branch
          %1007 = sbr.rel (%p1005) target = $region140
        $region139: #{_lambda_.1} parent=11 // pred_region
          _
        $region140: #{_lambda_.1} parent=11 // pred_fallthru
          _
        // Predicated region
        $region141: #{_lambda_.1} parent=11 // pred_check
          %p1008 = pneg %p776
        $region142: #{_lambda_.1} parent=11 // pred_check_branch
          %1010 = sbr.rel (%p1008) target = $region144
        $region143: #{_lambda_.1} parent=11 // pred_region
          _
        $region144: #{_lambda_.1} parent=11 // pred_fallthru
          _
        // Predicated region
        $region145: #{_lambda_.1} parent=11 // pred_check
          %p1011 = pneg %p797
        $region146: #{_lambda_.1} parent=11 // pred_check_branch
          %1013 = sbr.rel (%p1011) target = $region148
        $region147: #{_lambda_.1} parent=11 // pred_region
          _
        $region148: #{_lambda_.1} parent=11 // pred_fallthru
          _
      $region12: #{_lambda_.1} parent=5 // pred_fallthru
        _
      %p1014 = scmp.lt.s32.totalorder %s83, 5
      // Predicated region
      $region149: #{_lambda_.1} parent=5 // pred_check
        %p1015 = pneg %p1014
      $region150: #{_lambda_.1} parent=5 // pred_check_branch
        %1017 = sbr.rel (%p1015) target = $region152
      $region151: #{_lambda_.1} parent=5 // pred_region
        _
      $region152: #{_lambda_.1} parent=5 // pred_fallthru
        _
      %p1018 = scmp.le.s32.totalorder 1, %s83
      %p1019 = scmp.lt.s32.totalorder %s83, 6
      %p1020 = pnand %p1018, %p1019
      %p1021 = pneg %p1020
      // Predicated region
      $region153: #{_lambda_.1} parent=5 // pred_check
        _
      $region154: #{_lambda_.1} parent=5 // pred_check_branch
        %1023 = sbr.rel (%p1020) target = $region156
      $region155: #{_lambda_.1} parent=5 // pred_region
        %s1024 = ssub.s32 %s83, 1
        // Predicated region
        $region157: #{_lambda_.1} parent=155 // pred_check
          %p1025 = pneg %p104
        $region158: #{_lambda_.1} parent=155 // pred_check_branch
          %1027 = sbr.rel (%p1025) target = $region160
        $region159: #{_lambda_.1} parent=155 // pred_region
          %1028 = dma.done [#allocation8], 64
        $region160: #{_lambda_.1} parent=155 // pred_fallthru
          _
        // Predicated region
        $region161: #{_lambda_.1} parent=155 // pred_check
          %p1029 = pneg %p125
        $region162: #{_lambda_.1} parent=155 // pred_check_branch
          %1031 = sbr.rel (%p1029) target = $region164
        $region163: #{_lambda_.1} parent=155 // pred_region
          %1032 = dma.done [#allocation11], 64
        $region164: #{_lambda_.1} parent=155 // pred_fallthru
          _
        // Predicated region
        $region165: #{_lambda_.1} parent=155 // pred_check
          %p1033 = pneg %p335
        $region166: #{_lambda_.1} parent=155 // pred_check_branch
          %1035 = sbr.rel (%p1033) target = $region168
        $region167: #{_lambda_.1} parent=155 // pred_region
          %1036 = dma.done [#allocation11], 32
        $region168: #{_lambda_.1} parent=155 // pred_fallthru
          _
        // Predicated region
        $region169: #{_lambda_.1} parent=155 // pred_check
          %p1037 = pneg %p356
        $region170: #{_lambda_.1} parent=155 // pred_check_branch
          %1039 = sbr.rel (%p1037) target = $region172
        $region171: #{_lambda_.1} parent=155 // pred_region
          %1040 = dma.done [#allocation14], 16
        $region172: #{_lambda_.1} parent=155 // pred_fallthru
          _
        // Predicated region
        $region173: #{_lambda_.1} parent=155 // pred_check
          %p1041 = pneg %p608
        $region174: #{_lambda_.1} parent=155 // pred_check_branch
          %1043 = sbr.rel (%p1041) target = $region176
        $region175: #{_lambda_.1} parent=155 // pred_region
          %1044 = dma.done [#allocation14], 16
        $region176: #{_lambda_.1} parent=155 // pred_fallthru
          _
        // Predicated region
        $region177: #{_lambda_.1} parent=155 // pred_check
          %p1045 = pneg %p629
        $region178: #{_lambda_.1} parent=155 // pred_check_branch
          %1047 = sbr.rel (%p1045) target = $region180
        $region179: #{_lambda_.1} parent=155 // pred_region
          %1048 = dma.done [#allocation17], 256
        $region180: #{_lambda_.1} parent=155 // pred_fallthru
          _
        // Predicated region
        $region181: #{_lambda_.1} parent=155 // pred_check
          %p1049 = pneg %p650
        $region182: #{_lambda_.1} parent=155 // pred_check_branch
          %1051 = sbr.rel (%p1049) target = $region184
        $region183: #{_lambda_.1} parent=155 // pred_region
          %1052 = dma.done [#allocation17], 128
        $region184: #{_lambda_.1} parent=155 // pred_fallthru
          _
        %p1053 = pneg %p104
        %p1054 = pneg %p101
        %p1055 = pneg %p125
        %p1056 = pneg %p122
        %p1057 = pneg %p146
        %p1058 = pneg %p143
        %p1059 = pneg %p167
        %p1060 = pneg %p164
        %p1061 = pneg %p188
        %p1062 = pneg %p185
        %p1063 = pneg %p209
        %p1064 = pneg %p206
        %p1065 = pneg %p230
        %p1066 = pneg %p227
        %p1067 = pneg %p251
        %p1068 = pneg %p248
        %p1069 = pneg %p272
        %p1070 = pneg %p269
        %p1071 = pneg %p293
        %p1072 = pneg %p290
        %p1073 = pneg %p314
        %p1074 = pneg %p311
        %p1075 = pneg %p335
        %p1076 = pneg %p332
        %p1077 = pneg %p356
        %p1078 = pneg %p353
        %p1079 = pneg %p377
        %p1080 = pneg %p374
        %p1081 = pneg %p398
        %p1082 = pneg %p395
        %p1083 = pneg %p419
        %p1084 = pneg %p416
        %p1085 = pneg %p440
        %p1086 = pneg %p437
        %p1087 = pneg %p461
        %p1088 = pneg %p458
        %p1089 = pneg %p482
        %p1090 = pneg %p479
        %p1091 = pneg %p503
        %p1092 = pneg %p500
        %p1093 = pneg %p524
        %p1094 = pneg %p521
        %p1095 = pneg %p545
        %p1096 = pneg %p542
        %p1097 = pneg %p566
        %p1098 = pneg %p563
        %p1099 = pneg %p587
        %p1100 = pneg %p584
        %p1101 = pneg %p608
        %p1102 = pneg %p605
        %p1103 = pneg %p629
        %p1104 = pneg %p626
        %p1105 = pneg %p650
        %p1106 = pneg %p647
        %p1107 = pneg %p671
        %p1108 = pneg %p668
        %p1109 = pneg %p692
        %p1110 = pneg %p689
        %p1111 = pneg %p713
        %p1112 = pneg %p710
        %p1113 = pneg %p734
        %p1114 = pneg %p731
        %p1115 = pneg %p755
        %p1116 = pneg %p752
        %p1117 = pneg %p776
        %p1118 = pneg %p773
        %p1119 = pneg %p797
        %p1120 = pneg %p794
        %p1121 = pneg %p818
        %p1122 = pneg %p815
        %p1123 = pneg %p839
        %p1124 = pneg %p836
        %p1125 = scmp.eq.s32.totalorder %s88, 0
        // Predicated region
        $region185: #{_lambda_.1} parent=155 // pred_check
          %p1126 = pneg %p1125
        $region186: #{_lambda_.1} parent=155 // pred_check_branch
          %1128 = sbr.rel (%p1126) target = $region188
        $region187: #{_lambda_.1} parent=155 // pred_region
          %v1129 = vld [vmem:[#allocation7] sm:$0xf]
          %v1130 = vsub.f32 %v1129, 0.3
          %v1131 = vrcp.pop 1.7
          %v1132 = vmul.f32 %v1130, %v1131
          %v1133 = vld [vmem:[#allocation10] sm:$0xf]
          %v1134 = vsub.f32 %v1133, -10.0
          %v1135 = vrcp.pop 40.0
          %v1136 = vmul.f32 %v1134, %v1135
          %v1137 = vld [vmem:[%s5] sm:$0xff]
          %v1138 = vld [vmem:[%s5 + $0x8] sm:$0xff]
          %v1139 = vld [vmem:[%s5 + $0x10] sm:$0xff]
          %v1140 = vld [vmem:[%s5 + $0x18] sm:$0xff]
          %v1141 = vld [vmem:[%s5 + $0x20] sm:$0xff]
          %v1142 = vld [vmem:[%s7] sm:$0x1]
          %v1144 = vlaneseq
          %v1145 = vshrl.u32 %v1144, 7
          %v1146 = vsub.s32 0, %v1145
          %v1147 = vrot.slane %v1142, %v1146
          %vm1149 = vcmask 326656
          %v1151 = vsel %vm1149, %v1136, 0
          %1153 = vmatprep.subr.mxu0 0.0
          %1154 = vmatpush1.msra.mxu0 %v1137
          %1155 = vmatprep.subr.mxu0 0.0
          %1156 = vmatpush1.msra.mxu0 %v1138
          %1157 = vmatprep.subr.mxu0 0.0
          %1158 = vmatpush1.msra.mxu0 %v1139
          %1159 = vmatprep.subr.mxu0 0.0
          %1160 = vmatpush1.msra.mxu0 %v1140
          %1161 = vmatprep.subr.mxu0 0.0
          %1162 = vmatpush1.msra.mxu0 %v1141
          %1163 = vmatprep.subr.mxu0 0.0
          %1164 = vmatpush1.msra.mxu0 0.0
          %1165 = vmatprep.subr.mxu0 0.0
          %1166 = vmatpush1.msra.mxu0 0.0
          %1167 = vmatprep.subr.mxu0 0.0
          %1168 = vmatpush1.msra.mxu0 0.0
          %1169 = vmatprep.subr.mxu0 0.0
          %1170 = vmatpush1.msra.mxu0 0.0
          %1171 = vmatprep.subr.mxu0 0.0
          %1172 = vmatpush1.msra.mxu0 0.0
          %1173 = vmatprep.subr.mxu0 0.0
          %1174 = vmatpush1.msra.mxu0 0.0
          %1175 = vmatprep.subr.mxu0 0.0
          %1176 = vmatpush1.msra.mxu0 0.0
          %1177 = vmatprep.subr.mxu0 0.0
          %1178 = vmatpush1.msra.mxu0 0.0
          %1179 = vmatprep.subr.mxu0 0.0
          %1180 = vmatpush1.msra.mxu0 0.0
          %1181 = vmatprep.subr.mxu0 0.0
          %1182 = vmatpush1.msra.mxu0 0.0
          %1183 = vmatprep.subr.mxu0 0.0
          %1184 = vmatpush1.msra.mxu0 0.0
          %1185 = vmatprep.subr.mxu0 0.0
          %1186 = vmatpush1.msra.mxu0 0.0
          %1187 = vmatprep.subr.mxu0 0.0
          %1188 = vmatpush1.msra.mxu0 0.0
          %1189 = vmatprep.subr.mxu0 0.0
          %1190 = vmatpush1.msra.mxu0 0.0
          %1191 = vmatprep.subr.mxu0 0.0
          %1192 = vmatpush1.msra.mxu0 0.0
          %1193 = vmatprep.subr.mxu0 0.0
          %1194 = vmatpush1.msra.mxu0 0.0
          %1195 = vmatprep.subr.mxu0 0.0
          %1196 = vmatpush1.msra.mxu0 0.0
          %1197 = vmatprep.subr.mxu0 0.0
          %1198 = vmatpush1.msra.mxu0 0.0
          %1199 = vmatprep.subr.mxu0 0.0
          %1200 = vmatpush1.msra.mxu0 0.0
          %1201 = vmatprep.subr.mxu0 0.0
          %1202 = vmatpush1.msra.mxu0 0.0
          %1203 = vmatprep.subr.mxu0 0.0
          %1204 = vmatpush1.msra.mxu0 0.0
          %1205 = vmatprep.subr.mxu0 0.0
          %1206 = vmatpush1.msra.mxu0 0.0
          %1207 = vmatprep.subr.mxu0 0.0
          %1208 = vmatpush1.msra.mxu0 0.0
          %1209 = vmatprep.subr.mxu0 0.0
          %1210 = vmatpush1.msra.mxu0 0.0
          %1211 = vmatprep.subr.mxu0 0.0
          %1212 = vmatpush1.msra.mxu0 0.0
          %1213 = vmatprep.subr.mxu0 0.0
          %1214 = vmatpush1.msra.mxu0 0.0
          %1215 = vmatprep.subr.mxu0 0.0
          %1216 = vmatpush1.msra.mxu0 0.0
          %1217 = vmatprep.mubr.f32.mxu0 0.0
          %1218 = vmatmul.mubr.f32.gmra.mrb[0].mxu0 %v1151
          %v1219 = vpop.f32.mrb[0].mxu0
          %v1220 = vadd.f32 %v1147, %v1219
          %v1221 = vpop.f32.mrb[0].mxu0
          %1222 = vdwg.mxu0
          %v1223 = vmax.f32 %v1220, 0.0
          %v1224 = vld [vmem:[%s9] sm:$0xff]
          %v1225 = vld [vmem:[%s9 + $0x8] sm:$0xff]
          %v1226 = vld [vmem:[%s9 + $0x10] sm:$0xff]
          %v1227 = vld [vmem:[%s9 + $0x18] sm:$0xff]
          %v1228 = vld [vmem:[%s9 + $0x20] sm:$0xff]
          %v1229 = vld [vmem:[%s9 + $0x28] sm:$0xff]
          %v1230 = vld [vmem:[%s9 + $0x30] sm:$0xff]
          %v1231 = vld [vmem:[%s9 + $0x38] sm:$0xff]
          %v1232 = vld [vmem:[%s11] sm:$0x1]
          %v1234 = vlaneseq
          %v1235 = vshrl.u32 %v1234, 7
          %v1236 = vsub.s32 0, %v1235
          %v1237 = vrot.slane %v1232, %v1236
          %vm1239 = vcmask 523264
          %v1241 = vsel %vm1239, %v1223, 0
          %1243 = vmatprep.subr.mxu0 0.0
          %1244 = vmatpush1.msra.mxu0 %v1224
          %1245 = vmatprep.subr.mxu0 0.0
          %1246 = vmatpush1.msra.mxu0 %v1225
          %1247 = vmatprep.subr.mxu0 0.0
          %1248 = vmatpush1.msra.mxu0 %v1226
          %1249 = vmatprep.subr.mxu0 0.0
          %1250 = vmatpush1.msra.mxu0 %v1227
          %1251 = vmatprep.subr.mxu0 0.0
          %1252 = vmatpush1.msra.mxu0 %v1228
          %1253 = vmatprep.subr.mxu0 0.0
          %1254 = vmatpush1.msra.mxu0 %v1229
          %1255 = vmatprep.subr.mxu0 0.0
          %1256 = vmatpush1.msra.mxu0 %v1230
          %1257 = vmatprep.subr.mxu0 0.0
          %1258 = vmatpush1.msra.mxu0 %v1231
          %1259 = vmatprep.subr.mxu0 0.0
          %1260 = vmatpush1.msra.mxu0 0.0
          %1261 = vmatprep.subr.mxu0 0.0
          %1262 = vmatpush1.msra.mxu0 0.0
          %1263 = vmatprep.subr.mxu0 0.0
          %1264 = vmatpush1.msra.mxu0 0.0
          %1265 = vmatprep.subr.mxu0 0.0
          %1266 = vmatpush1.msra.mxu0 0.0
          %1267 = vmatprep.subr.mxu0 0.0
          %1268 = vmatpush1.msra.mxu0 0.0
          %1269 = vmatprep.subr.mxu0 0.0
          %1270 = vmatpush1.msra.mxu0 0.0
          %1271 = vmatprep.subr.mxu0 0.0
          %1272 = vmatpush1.msra.mxu0 0.0
          %1273 = vmatprep.subr.mxu0 0.0
          %1274 = vmatpush1.msra.mxu0 0.0
          %1275 = vmatprep.subr.mxu0 0.0
          %1276 = vmatpush1.msra.mxu0 0.0
          %1277 = vmatprep.subr.mxu0 0.0
          %1278 = vmatpush1.msra.mxu0 0.0
          %1279 = vmatprep.subr.mxu0 0.0
          %1280 = vmatpush1.msra.mxu0 0.0
          %1281 = vmatprep.subr.mxu0 0.0
          %1282 = vmatpush1.msra.mxu0 0.0
          %1283 = vmatprep.subr.mxu0 0.0
          %1284 = vmatpush1.msra.mxu0 0.0
          %1285 = vmatprep.subr.mxu0 0.0
          %1286 = vmatpush1.msra.mxu0 0.0
          %1287 = vmatprep.subr.mxu0 0.0
          %1288 = vmatpush1.msra.mxu0 0.0
          %1289 = vmatprep.subr.mxu0 0.0
          %1290 = vmatpush1.msra.mxu0 0.0
          %1291 = vmatprep.subr.mxu0 0.0
          %1292 = vmatpush1.msra.mxu0 0.0
          %1293 = vmatprep.subr.mxu0 0.0
          %1294 = vmatpush1.msra.mxu0 0.0
          %1295 = vmatprep.subr.mxu0 0.0
          %1296 = vmatpush1.msra.mxu0 0.0
          %1297 = vmatprep.subr.mxu0 0.0
          %1298 = vmatpush1.msra.mxu0 0.0
          %1299 = vmatprep.subr.mxu0 0.0
          %1300 = vmatpush1.msra.mxu0 0.0
          %1301 = vmatprep.subr.mxu0 0.0
          %1302 = vmatpush1.msra.mxu0 0.0
          %1303 = vmatprep.subr.mxu0 0.0
          %1304 = vmatpush1.msra.mxu0 0.0
          %1305 = vmatprep.subr.mxu0 0.0
          %1306 = vmatpush1.msra.mxu0 0.0
          %1307 = vmatprep.mubr.f32.mxu0 0.0
          %1308 = vmatmul.mubr.f32.gmra.mrb[0].mxu0 %v1241
          %v1309 = vpop.f32.mrb[0].mxu0
          %v1310 = vadd.f32 %v1237, %v1309
          %v1311 = vpop.f32.mrb[0].mxu0
          %1312 = vdwg.mxu0
          %v1313 = vmax.f32 %v1310, 0.0
          %v1314 = vld [vmem:[%s13] sm:$0xff]
          %v1315 = vld [vmem:[%s13 + $0x8] sm:$0xff]
          %v1316 = vld [vmem:[%s15] sm:$0xff]
          %v1317 = vld [vmem:[%s15 + $0x8] sm:$0xff]
          %v1318 = vld [vmem:[%s15 + $0x10] sm:$0xff]
          %v1319 = vld [vmem:[%s15 + $0x18] sm:$0xff]
          %vm1320 = vcmask 261120
          %v1322 = vsel %vm1320, %v1313, 0
          %1324 = vmatprep.subr.mxu0 0.0
          %1325 = vmatpush1.msra.mxu0 %v1316
          %1326 = vmatprep.subr.mxu0 0.0
          %1327 = vmatpush1.msra.mxu0 %v1317
          %1328 = vmatprep.subr.mxu0 0.0
          %1329 = vmatpush1.msra.mxu0 %v1318
          %1330 = vmatprep.subr.mxu0 0.0
          %1331 = vmatpush1.msra.mxu0 %v1319
          %1332 = vmatprep.subr.mxu0 0.0
          %1333 = vmatpush1.msra.mxu0 0.0
          %1334 = vmatprep.subr.mxu0 0.0
          %1335 = vmatpush1.msra.mxu0 0.0
          %1336 = vmatprep.subr.mxu0 0.0
          %1337 = vmatpush1.msra.mxu0 0.0
          %1338 = vmatprep.subr.mxu0 0.0
          %1339 = vmatpush1.msra.mxu0 0.0
          %1340 = vmatprep.subr.mxu0 0.0
          %1341 = vmatpush1.msra.mxu0 0.0
          %1342 = vmatprep.subr.mxu0 0.0
          %1343 = vmatpush1.msra.mxu0 0.0
          %1344 = vmatprep.subr.mxu0 0.0
          %1345 = vmatpush1.msra.mxu0 0.0
          %1346 = vmatprep.subr.mxu0 0.0
          %1347 = vmatpush1.msra.mxu0 0.0
          %1348 = vmatprep.subr.mxu0 0.0
          %1349 = vmatpush1.msra.mxu0 0.0
          %1350 = vmatprep.subr.mxu0 0.0
          %1351 = vmatpush1.msra.mxu0 0.0
          %1352 = vmatprep.subr.mxu0 0.0
          %1353 = vmatpush1.msra.mxu0 0.0
          %1354 = vmatprep.subr.mxu0 0.0
          %1355 = vmatpush1.msra.mxu0 0.0
          %1356 = vmatprep.subr.mxu0 0.0
          %1357 = vmatpush1.msra.mxu0 0.0
          %1358 = vmatprep.subr.mxu0 0.0
          %1359 = vmatpush1.msra.mxu0 0.0
          %1360 = vmatprep.subr.mxu0 0.0
          %1361 = vmatpush1.msra.mxu0 0.0
          %1362 = vmatprep.subr.mxu0 0.0
          %1363 = vmatpush1.msra.mxu0 0.0
          %1364 = vmatprep.subr.mxu0 0.0
          %1365 = vmatpush1.msra.mxu0 0.0
          %1366 = vmatprep.subr.mxu0 0.0
          %1367 = vmatpush1.msra.mxu0 0.0
          %1368 = vmatprep.subr.mxu0 0.0
          %1369 = vmatpush1.msra.mxu0 0.0
          %1370 = vmatprep.subr.mxu0 0.0
          %1371 = vmatpush1.msra.mxu0 0.0
          %1372 = vmatprep.subr.mxu0 0.0
          %1373 = vmatpush1.msra.mxu0 0.0
          %1374 = vmatprep.subr.mxu0 0.0
          %1375 = vmatpush1.msra.mxu0 0.0
          %1376 = vmatprep.subr.mxu0 0.0
          %1377 = vmatpush1.msra.mxu0 0.0
          %1378 = vmatprep.subr.mxu0 0.0
          %1379 = vmatpush1.msra.mxu0 0.0
          %1380 = vmatprep.subr.mxu0 0.0
          %1381 = vmatpush1.msra.mxu0 0.0
          %1382 = vmatprep.subr.mxu0 0.0
          %1383 = vmatpush1.msra.mxu0 0.0
          %1384 = vmatprep.subr.mxu0 0.0
          %1385 = vmatpush1.msra.mxu0 0.0
          %1386 = vmatprep.subr.mxu0 0.0
          %1387 = vmatpush1.msra.mxu0 0.0
          %1388 = vmatprep.mubr.f32.mxu0 0.0
          %1389 = vmatmul.mubr.f32.gmra.mrb[0].mxu0 %v1322
          %v1390 = vpop.f32.mrb[0].mxu0
          %v1391 = vadd.f32 0.0, %v1390
          %v1392 = vpop.f32.mrb[0].mxu0
          %1393 = vdwg.mxu0
          %vm1394 = vcmask 130048
          %v1396 = vsel %vm1394, %v1132, 0
          %1398 = vmatprep.subr.mxu0 0.0
          %1399 = vmatpush1.msra.mxu0 %v1314
          %1400 = vmatprep.subr.mxu0 0.0
          %1401 = vmatpush1.msra.mxu0 %v1315
          %1402 = vmatprep.subr.mxu0 0.0
          %1403 = vmatpush1.msra.mxu0 0.0
          %1404 = vmatprep.subr.mxu0 0.0
          %1405 = vmatpush1.msra.mxu0 0.0
          %1406 = vmatprep.subr.mxu0 0.0
          %1407 = vmatpush1.msra.mxu0 0.0
          %1408 = vmatprep.subr.mxu0 0.0
          %1409 = vmatpush1.msra.mxu0 0.0
          %1410 = vmatprep.subr.mxu0 0.0
          %1411 = vmatpush1.msra.mxu0 0.0
          %1412 = vmatprep.subr.mxu0 0.0
          %1413 = vmatpush1.msra.mxu0 0.0
          %1414 = vmatprep.subr.mxu0 0.0
          %1415 = vmatpush1.msra.mxu0 0.0
          %1416 = vmatprep.subr.mxu0 0.0
          %1417 = vmatpush1.msra.mxu0 0.0
          %1418 = vmatprep.subr.mxu0 0.0
          %1419 = vmatpush1.msra.mxu0 0.0
          %1420 = vmatprep.subr.mxu0 0.0
          %1421 = vmatpush1.msra.mxu0 0.0
          %1422 = vmatprep.subr.mxu0 0.0
          %1423 = vmatpush1.msra.mxu0 0.0
          %1424 = vmatprep.subr.mxu0 0.0
          %1425 = vmatpush1.msra.mxu0 0.0
          %1426 = vmatprep.subr.mxu0 0.0
          %1427 = vmatpush1.msra.mxu0 0.0
          %1428 = vmatprep.subr.mxu0 0.0
          %1429 = vmatpush1.msra.mxu0 0.0
          %1430 = vmatprep.subr.mxu0 0.0
          %1431 = vmatpush1.msra.mxu0 0.0
          %1432 = vmatprep.subr.mxu0 0.0
          %1433 = vmatpush1.msra.mxu0 0.0
          %1434 = vmatprep.subr.mxu0 0.0
          %1435 = vmatpush1.msra.mxu0 0.0
          %1436 = vmatprep.subr.mxu0 0.0
          %1437 = vmatpush1.msra.mxu0 0.0
          %1438 = vmatprep.subr.mxu0 0.0
          %1439 = vmatpush1.msra.mxu0 0.0
          %1440 = vmatprep.subr.mxu0 0.0
          %1441 = vmatpush1.msra.mxu0 0.0
          %1442 = vmatprep.subr.mxu0 0.0
          %1443 = vmatpush1.msra.mxu0 0.0
          %1444 = vmatprep.subr.mxu0 0.0
          %1445 = vmatpush1.msra.mxu0 0.0
          %1446 = vmatprep.subr.mxu0 0.0
          %1447 = vmatpush1.msra.mxu0 0.0
          %1448 = vmatprep.subr.mxu0 0.0
          %1449 = vmatpush1.msra.mxu0 0.0
          %1450 = vmatprep.subr.mxu0 0.0
          %1451 = vmatpush1.msra.mxu0 0.0
          %1452 = vmatprep.subr.mxu0 0.0
          %1453 = vmatpush1.msra.mxu0 0.0
          %1454 = vmatprep.subr.mxu0 0.0
          %1455 = vmatpush1.msra.mxu0 0.0
          %1456 = vmatprep.subr.mxu0 0.0
          %1457 = vmatpush1.msra.mxu0 0.0
          %1458 = vmatprep.subr.mxu0 0.0
          %1459 = vmatpush1.msra.mxu0 0.0
          %1460 = vmatprep.subr.mxu0 0.0
          %1461 = vmatpush1.msra.mxu0 0.0
          %1462 = vmatprep.mubr.f32.mxu0 0.0
          %1463 = vmatmul.mubr.f32.gmra.mrb[0].mxu0 %v1396
          %v1464 = vpop.f32.mrb[0].mxu0
          %v1465 = vadd.f32 %v1391, %v1464
          %v1466 = vpop.f32.mrb[0].mxu0
          %1467 = vdwg.mxu0
          %v1468 = vld [vmem:[%s17] sm:$0x1]
          %v1470 = vlaneseq
          %v1471 = vshrl.u32 %v1470, 7
          %v1472 = vsub.s32 0, %v1471
          %v1473 = vrot.slane %v1468, %v1472
          %v1475 = vadd.f32 %v1465, %v1473
          %v1476 = vmax.f32 %v1475, 0.0
          %v1477 = vld [vmem:[%s19] sm:$0xff]
          %v1478 = vld [vmem:[%s19 + $0x8] sm:$0xff]
          %v1479 = vld [vmem:[%s19 + $0x10] sm:$0xff]
          %v1480 = vld [vmem:[%s19 + $0x18] sm:$0xff]
          %v1481 = vld [vmem:[%s19 + $0x20] sm:$0xff]
          %v1482 = vld [vmem:[%s19 + $0x28] sm:$0xff]
          %v1483 = vld [vmem:[%s19 + $0x30] sm:$0xff]
          %v1484 = vld [vmem:[%s19 + $0x38] sm:$0xff]
          %v1485 = vld [vmem:[%s19 + $0x40] sm:$0xff]
          %v1486 = vld [vmem:[%s19 + $0x48] sm:$0xff]
          %v1487 = vld [vmem:[%s19 + $0x50] sm:$0xff]
          %v1488 = vld [vmem:[%s19 + $0x58] sm:$0xff]
          %v1489 = vld [vmem:[%s19 + $0x60] sm:$0xff]
          %v1490 = vld [vmem:[%s19 + $0x68] sm:$0xff]
          %v1491 = vld [vmem:[%s19 + $0x70] sm:$0xff]
          %v1492 = vld [vmem:[%s19 + $0x78] sm:$0xff]
          %v1493 = vld [vmem:[%s19 + $0x80] sm:$0xff]
          %v1494 = vld [vmem:[%s19 + $0x88] sm:$0xff]
          %v1495 = vld [vmem:[%s19 + $0x90] sm:$0xff]
          %v1496 = vld [vmem:[%s19 + $0x98] sm:$0xff]
          %v1497 = vld [vmem:[%s19 + $0xa0] sm:$0xff]
          %v1498 = vld [vmem:[%s19 + $0xa8] sm:$0xff]
          %v1499 = vld [vmem:[%s19 + $0xb0] sm:$0xff]
          %v1500 = vld [vmem:[%s19 + $0xb8] sm:$0xff]
          %v1501 = vld [vmem:[%s19 + $0xc0] sm:$0xff]
          %v1502 = vld [vmem:[%s19 + $0xc8] sm:$0xff]
          %v1503 = vld [vmem:[%s19 + $0xd0] sm:$0xff]
          %v1504 = vld [vmem:[%s19 + $0xd8] sm:$0xff]
          %v1505 = vld [vmem:[%s19 + $0xe0] sm:$0xff]
          %v1506 = vld [vmem:[%s19 + $0xe8] sm:$0xff]
          %v1507 = vld [vmem:[%s19 + $0xf0] sm:$0xff]
          %v1508 = vld [vmem:[%s19 + $0xf8] sm:$0xff]
          %v1509 = vld [vmem:[#allocation12] sm:$0x3]
          %v1511 = vlaneseq
          %v1512 = vshrl.u32 %v1511, 7
          %v1513 = vsub.s32 0, %v1512
          %v1514 = vrot.slane %v1509, %v1513
          %v1515 = vlaneseq
          %v1516 = vshrl.u32 %v1515, 7
          %v1517 = vsub.s32 1, %v1516
          %v1518 = vrot.slane %v1509, %v1517
          %1521 = vmatprep.subr.mxu0 %v1478
          %1522 = vmatpush1.msra.mxu0 %v1477
          %1523 = vmatprep.subr.mxu0 %v1480
          %1524 = vmatpush1.msra.mxu0 %v1479
          %1525 = vmatprep.subr.mxu0 %v1482
          %1526 = vmatpush1.msra.mxu0 %v1481
          %1527 = vmatprep.subr.mxu0 %v1484
          %1528 = vmatpush1.msra.mxu0 %v1483
          %1529 = vmatprep.subr.mxu0 %v1486
          %1530 = vmatpush1.msra.mxu0 %v1485
          %1531 = vmatprep.subr.mxu0 %v1488
          %1532 = vmatpush1.msra.mxu0 %v1487
          %1533 = vmatprep.subr.mxu0 %v1490
          %1534 = vmatpush1.msra.mxu0 %v1489
          %1535 = vmatprep.subr.mxu0 %v1492
          %1536 = vmatpush1.msra.mxu0 %v1491
          %1537 = vmatprep.subr.mxu0 %v1494
          %1538 = vmatpush1.msra.mxu0 %v1493
          %1539 = vmatprep.subr.mxu0 %v1496
          %1540 = vmatpush1.msra.mxu0 %v1495
          %1541 = vmatprep.subr.mxu0 %v1498
          %1542 = vmatpush1.msra.mxu0 %v1497
          %1543 = vmatprep.subr.mxu0 %v1500
          %1544 = vmatpush1.msra.mxu0 %v1499
          %1545 = vmatprep.subr.mxu0 %v1502
          %1546 = vmatpush1.msra.mxu0 %v1501
          %1547 = vmatprep.subr.mxu0 %v1504
          %1548 = vmatpush1.msra.mxu0 %v1503
          %1549 = vmatprep.subr.mxu0 %v1506
          %1550 = vmatpush1.msra.mxu0 %v1505
          %1551 = vmatprep.subr.mxu0 %v1508
          %1552 = vmatpush1.msra.mxu0 %v1507
          %1553 = vmatprep.subr.mxu0 0.0
          %1554 = vmatpush1.msra.mxu0 0.0
          %1555 = vmatprep.subr.mxu0 0.0
          %1556 = vmatpush1.msra.mxu0 0.0
          %1557 = vmatprep.subr.mxu0 0.0
          %1558 = vmatpush1.msra.mxu0 0.0
          %1559 = vmatprep.subr.mxu0 0.0
          %1560 = vmatpush1.msra.mxu0 0.0
          %1561 = vmatprep.subr.mxu0 0.0
          %1562 = vmatpush1.msra.mxu0 0.0
          %1563 = vmatprep.subr.mxu0 0.0
          %1564 = vmatpush1.msra.mxu0 0.0
          %1565 = vmatprep.subr.mxu0 0.0
          %1566 = vmatpush1.msra.mxu0 0.0
          %1567 = vmatprep.subr.mxu0 0.0
          %1568 = vmatpush1.msra.mxu0 0.0
          %1569 = vmatprep.subr.mxu0 0.0
          %1570 = vmatpush1.msra.mxu0 0.0
          %1571 = vmatprep.subr.mxu0 0.0
          %1572 = vmatpush1.msra.mxu0 0.0
          %1573 = vmatprep.subr.mxu0 0.0
          %1574 = vmatpush1.msra.mxu0 0.0
          %1575 = vmatprep.subr.mxu0 0.0
          %1576 = vmatpush1.msra.mxu0 0.0
          %1577 = vmatprep.subr.mxu0 0.0
          %1578 = vmatpush1.msra.mxu0 0.0
          %1579 = vmatprep.subr.mxu0 0.0
          %1580 = vmatpush1.msra.mxu0 0.0
          %1581 = vmatprep.subr.mxu0 0.0
          %1582 = vmatpush1.msra.mxu0 0.0
          %1583 = vmatprep.subr.mxu0 0.0
          %1584 = vmatpush1.msra.mxu0 0.0
          %1585 = vmatprep.mubr.f32.mxu0 0.0
          %1586 = vmatmul.mubr.f32.gmra.mrb[0].mxu0 %v1476
          %v1587 = vpop.f32.mrb[0].mxu0
          %v1588 = vadd.f32 %v1514, %v1587
          %v1589 = vpop.f32.mrb[0].mxu0
          %v1590 = vadd.f32 %v1518, %v1589
          %1591 = vdwg.mxu0
          %v1594 = vcombine.low %v1588, %v1590
          %1596 = vst [vmem:[#allocation2] sm:$0xff] %v1594
          %v1597 = vld [vmem:[%s21] sm:$0xff]
          %v1598 = vld [vmem:[%s21 + $0x8] sm:$0xff]
          %v1599 = vld [vmem:[%s21 + $0x10] sm:$0xff]
          %v1600 = vld [vmem:[%s21 + $0x18] sm:$0xff]
          %v1601 = vld [vmem:[%s21 + $0x20] sm:$0xff]
          %v1602 = vld [vmem:[%s21 + $0x28] sm:$0xff]
          %v1603 = vld [vmem:[%s21 + $0x30] sm:$0xff]
          %v1604 = vld [vmem:[%s21 + $0x38] sm:$0xff]
          %v1605 = vld [vmem:[%s21 + $0x40] sm:$0xff]
          %v1606 = vld [vmem:[%s21 + $0x48] sm:$0xff]
          %v1607 = vld [vmem:[%s21 + $0x50] sm:$0xff]
          %v1608 = vld [vmem:[%s21 + $0x58] sm:$0xff]
          %v1609 = vld [vmem:[%s21 + $0x60] sm:$0xff]
          %v1610 = vld [vmem:[%s21 + $0x68] sm:$0xff]
          %v1611 = vld [vmem:[%s21 + $0x70] sm:$0xff]
          %v1612 = vld [vmem:[%s21 + $0x78] sm:$0xff]
          %v1613 = vld [vmem:[#allocation13] sm:$0x1]
          %v1615 = vlaneseq
          %v1616 = vshrl.u32 %v1615, 7
          %v1617 = vsub.s32 0, %v1616
          %v1618 = vrot.slane %v1613, %v1617
          %1620 = vmatprep.subr.mxu0 0.0
          %1621 = vmatpush1.msra.mxu0 %v1597
          %1622 = vmatprep.subr.mxu0 0.0
          %1623 = vmatpush1.msra.mxu0 %v1598
          %1624 = vmatprep.subr.mxu0 0.0
          %1625 = vmatpush1.msra.mxu0 %v1599
          %1626 = vmatprep.subr.mxu0 0.0
          %1627 = vmatpush1.msra.mxu0 %v1600
          %1628 = vmatprep.subr.mxu0 0.0
          %1629 = vmatpush1.msra.mxu0 %v1601
          %1630 = vmatprep.subr.mxu0 0.0
          %1631 = vmatpush1.msra.mxu0 %v1602
          %1632 = vmatprep.subr.mxu0 0.0
          %1633 = vmatpush1.msra.mxu0 %v1603
          %1634 = vmatprep.subr.mxu0 0.0
          %1635 = vmatpush1.msra.mxu0 %v1604
          %1636 = vmatprep.subr.mxu0 0.0
          %1637 = vmatpush1.msra.mxu0 %v1605
          %1638 = vmatprep.subr.mxu0 0.0
          %1639 = vmatpush1.msra.mxu0 %v1606
          %1640 = vmatprep.subr.mxu0 0.0
          %1641 = vmatpush1.msra.mxu0 %v1607
          %1642 = vmatprep.subr.mxu0 0.0
          %1643 = vmatpush1.msra.mxu0 %v1608
          %1644 = vmatprep.subr.mxu0 0.0
          %1645 = vmatpush1.msra.mxu0 %v1609
          %1646 = vmatprep.subr.mxu0 0.0
          %1647 = vmatpush1.msra.mxu0 %v1610
          %1648 = vmatprep.subr.mxu0 0.0
          %1649 = vmatpush1.msra.mxu0 %v1611
          %1650 = vmatprep.subr.mxu0 0.0
          %1651 = vmatpush1.msra.mxu0 %v1612
          %1652 = vmatprep.subr.mxu0 0.0
          %1653 = vmatpush1.msra.mxu0 0.0
          %1654 = vmatprep.subr.mxu0 0.0
          %1655 = vmatpush1.msra.mxu0 0.0
          %1656 = vmatprep.subr.mxu0 0.0
          %1657 = vmatpush1.msra.mxu0 0.0
          %1658 = vmatprep.subr.mxu0 0.0
          %1659 = vmatpush1.msra.mxu0 0.0
          %1660 = vmatprep.subr.mxu0 0.0
          %1661 = vmatpush1.msra.mxu0 0.0
          %1662 = vmatprep.subr.mxu0 0.0
          %1663 = vmatpush1.msra.mxu0 0.0
          %1664 = vmatprep.subr.mxu0 0.0
          %1665 = vmatpush1.msra.mxu0 0.0
          %1666 = vmatprep.subr.mxu0 0.0
          %1667 = vmatpush1.msra.mxu0 0.0
          %1668 = vmatprep.subr.mxu0 0.0
          %1669 = vmatpush1.msra.mxu0 0.0
          %1670 = vmatprep.subr.mxu0 0.0
          %1671 = vmatpush1.msra.mxu0 0.0
          %1672 = vmatprep.subr.mxu0 0.0
          %1673 = vmatpush1.msra.mxu0 0.0
          %1674 = vmatprep.subr.mxu0 0.0
          %1675 = vmatpush1.msra.mxu0 0.0
          %1676 = vmatprep.subr.mxu0 0.0
          %1677 = vmatpush1.msra.mxu0 0.0
          %1678 = vmatprep.subr.mxu0 0.0
          %1679 = vmatpush1.msra.mxu0 0.0
          %1680 = vmatprep.subr.mxu0 0.0
          %1681 = vmatpush1.msra.mxu0 0.0
          %1682 = vmatprep.subr.mxu0 0.0
          %1683 = vmatpush1.msra.mxu0 0.0
          %1684 = vmatprep.mubr.f32.mxu0 0.0
          %1685 = vmatmul.mubr.f32.gmra.mrb[0].mxu0 %v1476
          %v1686 = vpop.f32.mrb[0].mxu0
          %v1687 = vadd.f32 %v1618, %v1686
          %v1688 = vpop.f32.mrb[0].mxu0
          %1689 = vdwg.mxu0
          %vm1690 = vcmask 125952
          %1691 = vst.msk [vmem:[#allocation3] sm:$0xf] %vm1690, %v1687
          %v1692 = vld [vmem:[%s27] sm:$0xff]
          %v1693 = vld [vmem:[%s27 + $0x8] sm:$0xff]
          %v1694 = vld [vmem:[%s29] sm:$0xff]
          %v1695 = vld [vmem:[%s29 + $0x8] sm:$0xff]
          %v1696 = vld [vmem:[%s29 + $0x10] sm:$0xff]
          %v1697 = vld [vmem:[%s29 + $0x18] sm:$0xff]
          %1698 = vmatprep.subr.mxu0 0.0
          %1699 = vmatpush1.msra.mxu0 %v1694
          %1700 = vmatprep.subr.mxu0 0.0
          %1701 = vmatpush1.msra.mxu0 %v1695
          %1702 = vmatprep.subr.mxu0 0.0
          %1703 = vmatpush1.msra.mxu0 %v1696
          %1704 = vmatprep.subr.mxu0 0.0
          %1705 = vmatpush1.msra.mxu0 %v1697
          %1706 = vmatprep.subr.mxu0 0.0
          %1707 = vmatpush1.msra.mxu0 0.0
          %1708 = vmatprep.subr.mxu0 0.0
          %1709 = vmatpush1.msra.mxu0 0.0
          %1710 = vmatprep.subr.mxu0 0.0
          %1711 = vmatpush1.msra.mxu0 0.0
          %1712 = vmatprep.subr.mxu0 0.0
          %1713 = vmatpush1.msra.mxu0 0.0
          %1714 = vmatprep.subr.mxu0 0.0
          %1715 = vmatpush1.msra.mxu0 0.0
          %1716 = vmatprep.subr.mxu0 0.0
          %1717 = vmatpush1.msra.mxu0 0.0
          %1718 = vmatprep.subr.mxu0 0.0
          %1719 = vmatpush1.msra.mxu0 0.0
          %1720 = vmatprep.subr.mxu0 0.0
          %1721 = vmatpush1.msra.mxu0 0.0
          %1722 = vmatprep.subr.mxu0 0.0
          %1723 = vmatpush1.msra.mxu0 0.0
          %1724 = vmatprep.subr.mxu0 0.0
          %1725 = vmatpush1.msra.mxu0 0.0
          %1726 = vmatprep.subr.mxu0 0.0
          %1727 = vmatpush1.msra.mxu0 0.0
          %1728 = vmatprep.subr.mxu0 0.0
          %1729 = vmatpush1.msra.mxu0 0.0
          %1730 = vmatprep.subr.mxu0 0.0
          %1731 = vmatpush1.msra.mxu0 0.0
          %1732 = vmatprep.subr.mxu0 0.0
          %1733 = vmatpush1.msra.mxu0 0.0
          %1734 = vmatprep.subr.mxu0 0.0
          %1735 = vmatpush1.msra.mxu0 0.0
          %1736 = vmatprep.subr.mxu0 0.0
          %1737 = vmatpush1.msra.mxu0 0.0
          %1738 = vmatprep.subr.mxu0 0.0
          %1739 = vmatpush1.msra.mxu0 0.0
          %1740 = vmatprep.subr.mxu0 0.0
          %1741 = vmatpush1.msra.mxu0 0.0
          %1742 = vmatprep.subr.mxu0 0.0
          %1743 = vmatpush1.msra.mxu0 0.0
          %1744 = vmatprep.subr.mxu0 0.0
          %1745 = vmatpush1.msra.mxu0 0.0
          %1746 = vmatprep.subr.mxu0 0.0
          %1747 = vmatpush1.msra.mxu0 0.0
          %1748 = vmatprep.subr.mxu0 0.0
          %1749 = vmatpush1.msra.mxu0 0.0
          %1750 = vmatprep.subr.mxu0 0.0
          %1751 = vmatpush1.msra.mxu0 0.0
          %1752 = vmatprep.subr.mxu0 0.0
          %1753 = vmatpush1.msra.mxu0 0.0
          %1754 = vmatprep.subr.mxu0 0.0
          %1755 = vmatpush1.msra.mxu0 0.0
          %1756 = vmatprep.subr.mxu0 0.0
          %1757 = vmatpush1.msra.mxu0 0.0
          %1758 = vmatprep.subr.mxu0 0.0
          %1759 = vmatpush1.msra.mxu0 0.0
          %1760 = vmatprep.subr.mxu0 0.0
          %1761 = vmatpush1.msra.mxu0 0.0
          %1762 = vmatprep.mubr.f32.mxu0 0.0
          %1763 = vmatmul.mubr.f32.gmra.mrb[0].mxu0 %v1322
          %v1764 = vpop.f32.mrb[0].mxu0
          %v1765 = vadd.f32 0.0, %v1764
          %v1766 = vpop.f32.mrb[0].mxu0
          %1767 = vdwg.mxu0
          %1768 = vmatprep.subr.mxu0 0.0
          %1769 = vmatpush1.msra.mxu0 %v1692
          %1770 = vmatprep.subr.mxu0 0.0
          %1771 = vmatpush1.msra.mxu0 %v1693
          %1772 = vmatprep.subr.mxu0 0.0
          %1773 = vmatpush1.msra.mxu0 0.0
          %1774 = vmatprep.subr.mxu0 0.0
          %1775 = vmatpush1.msra.mxu0 0.0
          %1776 = vmatprep.subr.mxu0 0.0
          %1777 = vmatpush1.msra.mxu0 0.0
          %1778 = vmatprep.subr.mxu0 0.0
          %1779 = vmatpush1.msra.mxu0 0.0
          %1780 = vmatprep.subr.mxu0 0.0
          %1781 = vmatpush1.msra.mxu0 0.0
          %1782 = vmatprep.subr.mxu0 0.0
          %1783 = vmatpush1.msra.mxu0 0.0
          %1784 = vmatprep.subr.mxu0 0.0
          %1785 = vmatpush1.msra.mxu0 0.0
          %1786 = vmatprep.subr.mxu0 0.0
          %1787 = vmatpush1.msra.mxu0 0.0
          %1788 = vmatprep.subr.mxu0 0.0
          %1789 = vmatpush1.msra.mxu0 0.0
          %1790 = vmatprep.subr.mxu0 0.0
          %1791 = vmatpush1.msra.mxu0 0.0
          %1792 = vmatprep.subr.mxu0 0.0
          %1793 = vmatpush1.msra.mxu0 0.0
          %1794 = vmatprep.subr.mxu0 0.0
          %1795 = vmatpush1.msra.mxu0 0.0
          %1796 = vmatprep.subr.mxu0 0.0
          %1797 = vmatpush1.msra.mxu0 0.0
          %1798 = vmatprep.subr.mxu0 0.0
          %1799 = vmatpush1.msra.mxu0 0.0
          %1800 = vmatprep.subr.mxu0 0.0
          %1801 = vmatpush1.msra.mxu0 0.0
          %1802 = vmatprep.subr.mxu0 0.0
          %1803 = vmatpush1.msra.mxu0 0.0
          %1804 = vmatprep.subr.mxu0 0.0
          %1805 = vmatpush1.msra.mxu0 0.0
          %1806 = vmatprep.subr.mxu0 0.0
          %1807 = vmatpush1.msra.mxu0 0.0
          %1808 = vmatprep.subr.mxu0 0.0
          %1809 = vmatpush1.msra.mxu0 0.0
          %1810 = vmatprep.subr.mxu0 0.0
          %1811 = vmatpush1.msra.mxu0 0.0
          %1812 = vmatprep.subr.mxu0 0.0
          %1813 = vmatpush1.msra.mxu0 0.0
          %1814 = vmatprep.subr.mxu0 0.0
          %1815 = vmatpush1.msra.mxu0 0.0
          %1816 = vmatprep.subr.mxu0 0.0
          %1817 = vmatpush1.msra.mxu0 0.0
          %1818 = vmatprep.subr.mxu0 0.0
          %1819 = vmatpush1.msra.mxu0 0.0
          %1820 = vmatprep.subr.mxu0 0.0
          %1821 = vmatpush1.msra.mxu0 0.0
          %1822 = vmatprep.subr.mxu0 0.0
          %1823 = vmatpush1.msra.mxu0 0.0
          %1824 = vmatprep.subr.mxu0 0.0
          %1825 = vmatpush1.msra.mxu0 0.0
          %1826 = vmatprep.subr.mxu0 0.0
          %1827 = vmatpush1.msra.mxu0 0.0
          %1828 = vmatprep.subr.mxu0 0.0
          %1829 = vmatpush1.msra.mxu0 0.0
          %1830 = vmatprep.subr.mxu0 0.0
          %1831 = vmatpush1.msra.mxu0 0.0
          %1832 = vmatprep.mubr.f32.mxu0 0.0
          %1833 = vmatmul.mubr.f32.gmra.mrb[0].mxu0 %v1396
          %v1834 = vpop.f32.mrb[0].mxu0
          %v1835 = vadd.f32 %v1765, %v1834
          %v1836 = vpop.f32.mrb[0].mxu0
          %1837 = vdwg.mxu0
          %v1838 = vld [vmem:[%s31] sm:$0x1]
          %v1840 = vlaneseq
          %v1841 = vshrl.u32 %v1840, 7
          %v1842 = vsub.s32 0, %v1841
          %v1843 = vrot.slane %v1838, %v1842
          %v1845 = vadd.f32 %v1835, %v1843
          %v1846 = vtanh.pop %v1845
          %1847 = vst [vmem:[#allocation4] sm:$0xf] %v1846
          %v1848 = vld [vmem:[%s67] sm:$0xff]
          %v1849 = vld [vmem:[%s67 + $0x8] sm:$0xff]
          %v1850 = vld [vmem:[%s67 + $0x10] sm:$0xff]
          %v1851 = vld [vmem:[%s67 + $0x18] sm:$0x3]
          %v1852 = vld [vmem:[%s67 + $0x20] sm:$0xff]
          %v1853 = vld [vmem:[%s67 + $0x28] sm:$0xff]
          %v1854 = vld [vmem:[%s67 + $0x30] sm:$0xff]
          %v1855 = vld [vmem:[%s67 + $0x38] sm:$0x3]
          %v1856 = vld [vmem:[%s67 + $0x40] sm:$0xff]
          %v1857 = vld [vmem:[%s67 + $0x48] sm:$0xff]
          %v1858 = vld [vmem:[%s67 + $0x50] sm:$0xff]
          %v1859 = vld [vmem:[%s67 + $0x58] sm:$0x3]
          %v1860 = vld [vmem:[%s67 + $0x60] sm:$0xff]
          %v1861 = vld [vmem:[%s67 + $0x68] sm:$0xff]
          %v1862 = vld [vmem:[%s67 + $0x70] sm:$0xff]
          %v1863 = vld [vmem:[%s67 + $0x78] sm:$0x3]
          %vm1864 = vcmask 203776
          %1865 = vst.msk [vmem:[#allocation6] sm:$0xff] %vm1864, %v1848
          %1866 = vst.msk [vmem:[#allocation6 + $0x8] sm:$0xff] %vm1864, %v1849
          %1867 = vst.msk [vmem:[#allocation6 + $0x10] sm:$0xff] %vm1864, %v1850
          %vm1868 = vcmask 197632
          %1869 = vst.msk [vmem:[#allocation6 + $0x18] sm:$0x3] %vm1868, %v1851
          %1870 = vst.msk [vmem:[#allocation6 + $0x20] sm:$0xff] %vm1864, %v1852
          %1871 = vst.msk [vmem:[#allocation6 + $0x28] sm:$0xff] %vm1864, %v1853
          %1872 = vst.msk [vmem:[#allocation6 + $0x30] sm:$0xff] %vm1864, %v1854
          %1873 = vst.msk [vmem:[#allocation6 + $0x38] sm:$0x3] %vm1868, %v1855
          %1874 = vst.msk [vmem:[#allocation6 + $0x40] sm:$0xff] %vm1864, %v1856
          %1875 = vst.msk [vmem:[#allocation6 + $0x48] sm:$0xff] %vm1864, %v1857
          %1876 = vst.msk [vmem:[#allocation6 + $0x50] sm:$0xff] %vm1864, %v1858
          %1877 = vst.msk [vmem:[#allocation6 + $0x58] sm:$0x3] %vm1868, %v1859
          %1878 = vst.msk [vmem:[#allocation6 + $0x60] sm:$0xff] %vm1864, %v1860
          %1879 = vst.msk [vmem:[#allocation6 + $0x68] sm:$0xff] %vm1864, %v1861
          %1880 = vst.msk [vmem:[#allocation6 + $0x70] sm:$0xff] %vm1864, %v1862
          %1881 = vst.msk [vmem:[#allocation6 + $0x78] sm:$0x3] %vm1868, %v1863
          %vm1882 = vcmask 3072
          %1883 = vst.msk [vmem:[%s71] sm:$0xf] %vm1882, 0.0
        $region188: #{_lambda_.1} parent=155 // pred_fallthru
          _
        %v1884 = vld [vmem:[#allocation2] sm:$0xff]
        %v1885 = vld [vmem:[#allocation3] sm:$0xf]
        %v1886 = vld [vmem:[#allocation4] sm:$0xf]
        %v1889 = vunpack.c.l.s4 1966171168
        %v1890 = vunpack.c.0.s8 %v1889
        %v1891 = vlaneseq
        %v1892 = vshrl.u32 %v1891, 7
        %v1893 = vsub.s32 %v1890, %v1892
        %v1894 = vrot.slane %v1884, %v1893
        %v1895 = vcombine.high %v1894, %v1894
        %v1897 = vunpack.c.l.s4 1966171168
        %v1898 = vunpack.c.0.s8 %v1897
        %v1899 = vlaneseq
        %v1900 = vshrl.u32 %v1899, 7
        %v1901 = vsub.s32 %v1898, %v1900
        %v1902 = vrot.slane %v1894, %v1901
        %v1904 = vunpack.c.l.s4 1966171168
        %v1905 = vunpack.c.0.s8 %v1904
        %v1906 = vlaneseq
        %v1907 = vshrl.u32 %v1906, 7
        %v1908 = vsub.s32 %v1905, %v1907
        %v1909 = vrot.slane %v1895, %v1908
        %v1910 = vcombine.high %v1902, %v1902
        %v1911 = vcombine.high %v1909, %v1909
        %vm1916 = vcmask 122880
        %1917 = vst.msk [vmem:[#allocation5] sm:$0x1] %vm1916, %v1902
        %1918 = vst.msk [vmem:[#allocation5 + $0x10] sm:$0x1] %vm1916, %v1909
        %1919 = vst.msk [vmem:[#allocation5 + $0x20] sm:$0x1] %vm1916, %v1910
        %1920 = vst.msk [vmem:[#allocation5 + $0x30] sm:$0x1] %vm1916, %v1911
        %v1921 = vlaneseq
        %v1922 = vshrl.u32 %v1921, 7
        %v1923 = vsub.s32 0, %v1922
        %v1924 = vrot.slane %v1902, %v1923
        %v1925 = vlaneseq
        %v1926 = vshrl.u32 %v1925, 7
        %v1927 = vsub.s32 0, %v1926
        %v1928 = vrot.slane %v1909, %v1927
        %v1929 = vlaneseq
        %v1930 = vshrl.u32 %v1929, 7
        %v1931 = vsub.s32 0, %v1930
        %v1932 = vrot.slane %v1910, %v1931
        %v1933 = vlaneseq
        %v1934 = vshrl.u32 %v1933, 7
        %v1935 = vsub.s32 0, %v1934
        %v1936 = vrot.slane %v1911, %v1935
        %1937 = vrot.lane.b32.xlu0 %v1924, 112
        %v1938 = vpop.permute.xlu0 %1937
        %1939 = vrot.lane.b32.xlu0 %v1928, 112
        %v1940 = vpop.permute.xlu0 %1939
        %1941 = vrot.lane.b32.xlu0 %v1932, 112
        %v1942 = vpop.permute.xlu0 %1941
        %1943 = vrot.lane.b32.xlu0 %v1936, 112
        %v1944 = vpop.permute.xlu0 %1943
        %1949 = vst.msk [vmem:[#allocation5 + $0x1] sm:$0x1] %vm1916, %v1938
        %1950 = vst.msk [vmem:[#allocation5 + $0x11] sm:$0x1] %vm1916, %v1940
        %1951 = vst.msk [vmem:[#allocation5 + $0x21] sm:$0x1] %vm1916, %v1942
        %1952 = vst.msk [vmem:[#allocation5 + $0x31] sm:$0x1] %vm1916, %v1944
        %1953 = vrot.lane.b32.xlu0 %v1924, 96
        %v1954 = vpop.permute.xlu0 %1953
        %1955 = vrot.lane.b32.xlu0 %v1928, 96
        %v1956 = vpop.permute.xlu0 %1955
        %1957 = vrot.lane.b32.xlu0 %v1932, 96
        %v1958 = vpop.permute.xlu0 %1957
        %1959 = vrot.lane.b32.xlu0 %v1936, 96
        %v1960 = vpop.permute.xlu0 %1959
        %1965 = vst.msk [vmem:[#allocation5 + $0x2] sm:$0x1] %vm1916, %v1954
        %1966 = vst.msk [vmem:[#allocation5 + $0x12] sm:$0x1] %vm1916, %v1956
        %1967 = vst.msk [vmem:[#allocation5 + $0x22] sm:$0x1] %vm1916, %v1958
        %1968 = vst.msk [vmem:[#allocation5 + $0x32] sm:$0x1] %vm1916, %v1960
        %1969 = vrot.lane.b32.xlu0 %v1924, 80
        %v1970 = vpop.permute.xlu0 %1969
        %1971 = vrot.lane.b32.xlu0 %v1928, 80
        %v1972 = vpop.permute.xlu0 %1971
        %1973 = vrot.lane.b32.xlu0 %v1932, 80
        %v1974 = vpop.permute.xlu0 %1973
        %1975 = vrot.lane.b32.xlu0 %v1936, 80
        %v1976 = vpop.permute.xlu0 %1975
        %1981 = vst.msk [vmem:[#allocation5 + $0x3] sm:$0x1] %vm1916, %v1970
        %1982 = vst.msk [vmem:[#allocation5 + $0x13] sm:$0x1] %vm1916, %v1972
        %1983 = vst.msk [vmem:[#allocation5 + $0x23] sm:$0x1] %vm1916, %v1974
        %1984 = vst.msk [vmem:[#allocation5 + $0x33] sm:$0x1] %vm1916, %v1976
        %1985 = vrot.lane.b32.xlu0 %v1924, 64
        %v1986 = vpop.permute.xlu0 %1985
        %1987 = vrot.lane.b32.xlu0 %v1928, 64
        %v1988 = vpop.permute.xlu0 %1987
        %1989 = vrot.lane.b32.xlu0 %v1932, 64
        %v1990 = vpop.permute.xlu0 %1989
        %1991 = vrot.lane.b32.xlu0 %v1936, 64
        %v1992 = vpop.permute.xlu0 %1991
        %1997 = vst.msk [vmem:[#allocation5 + $0x4] sm:$0x1] %vm1916, %v1986
        %1998 = vst.msk [vmem:[#allocation5 + $0x14] sm:$0x1] %vm1916, %v1988
        %1999 = vst.msk [vmem:[#allocation5 + $0x24] sm:$0x1] %vm1916, %v1990
        %2000 = vst.msk [vmem:[#allocation5 + $0x34] sm:$0x1] %vm1916, %v1992
        %2001 = vrot.lane.b32.xlu0 %v1924, 48
        %v2002 = vpop.permute.xlu0 %2001
        %2003 = vrot.lane.b32.xlu0 %v1928, 48
        %v2004 = vpop.permute.xlu0 %2003
        %2005 = vrot.lane.b32.xlu0 %v1932, 48
        %v2006 = vpop.permute.xlu0 %2005
        %2007 = vrot.lane.b32.xlu0 %v1936, 48
        %v2008 = vpop.permute.xlu0 %2007
        %2013 = vst.msk [vmem:[#allocation5 + $0x5] sm:$0x1] %vm1916, %v2002
        %2014 = vst.msk [vmem:[#allocation5 + $0x15] sm:$0x1] %vm1916, %v2004
        %2015 = vst.msk [vmem:[#allocation5 + $0x25] sm:$0x1] %vm1916, %v2006
        %2016 = vst.msk [vmem:[#allocation5 + $0x35] sm:$0x1] %vm1916, %v2008
        %2017 = vrot.lane.b32.xlu0 %v1924, 32
        %v2018 = vpop.permute.xlu0 %2017
        %2019 = vrot.lane.b32.xlu0 %v1928, 32
        %v2020 = vpop.permute.xlu0 %2019
        %2021 = vrot.lane.b32.xlu0 %v1932, 32
        %v2022 = vpop.permute.xlu0 %2021
        %2023 = vrot.lane.b32.xlu0 %v1936, 32
        %v2024 = vpop.permute.xlu0 %2023
        %2029 = vst.msk [vmem:[#allocation5 + $0x6] sm:$0x1] %vm1916, %v2018
        %2030 = vst.msk [vmem:[#allocation5 + $0x16] sm:$0x1] %vm1916, %v2020
        %2031 = vst.msk [vmem:[#allocation5 + $0x26] sm:$0x1] %vm1916, %v2022
        %2032 = vst.msk [vmem:[#allocation5 + $0x36] sm:$0x1] %vm1916, %v2024
        %2033 = vrot.lane.b32.xlu0 %v1924, 16
        %v2034 = vpop.permute.xlu0 %2033
        %2035 = vrot.lane.b32.xlu0 %v1928, 16
        %v2036 = vpop.permute.xlu0 %2035
        %2037 = vrot.lane.b32.xlu0 %v1932, 16
        %v2038 = vpop.permute.xlu0 %2037
        %2039 = vrot.lane.b32.xlu0 %v1936, 16
        %v2040 = vpop.permute.xlu0 %2039
        %2045 = vst.msk [vmem:[#allocation5 + $0x7] sm:$0x1] %vm1916, %v2034
        %2046 = vst.msk [vmem:[#allocation5 + $0x17] sm:$0x1] %vm1916, %v2036
        %2047 = vst.msk [vmem:[#allocation5 + $0x27] sm:$0x1] %vm1916, %v2038
        %2048 = vst.msk [vmem:[#allocation5 + $0x37] sm:$0x1] %vm1916, %v2040
        %v2049 = vrot.slane %v1902, 1
        %v2050 = vrot.slane %v1909, 1
        %v2051 = vrot.slane %v1910, 1
        %v2052 = vrot.slane %v1911, 1
        %2057 = vst.msk [vmem:[#allocation5 + $0x8] sm:$0x1] %vm1916, %v2049
        %2058 = vst.msk [vmem:[#allocation5 + $0x18] sm:$0x1] %vm1916, %v2050
        %2059 = vst.msk [vmem:[#allocation5 + $0x28] sm:$0x1] %vm1916, %v2051
        %2060 = vst.msk [vmem:[#allocation5 + $0x38] sm:$0x1] %vm1916, %v2052
        %2061 = vrot.lane.b32.xlu0 %v1902, 112
        %v2062 = vpop.permute.xlu0 %2061
        %2063 = vrot.lane.b32.xlu0 %v1909, 112
        %v2064 = vpop.permute.xlu0 %2063
        %2065 = vrot.lane.b32.xlu0 %v1910, 112
        %v2066 = vpop.permute.xlu0 %2065
        %2067 = vrot.lane.b32.xlu0 %v1911, 112
        %v2068 = vpop.permute.xlu0 %2067
        %v2069 = vrot.slane %v2062, 1
        %v2070 = vrot.slane %v2064, 1
        %v2071 = vrot.slane %v2066, 1
        %v2072 = vrot.slane %v2068, 1
        %2077 = vst.msk [vmem:[#allocation5 + $0x9] sm:$0x1] %vm1916, %v2069
        %2078 = vst.msk [vmem:[#allocation5 + $0x19] sm:$0x1] %vm1916, %v2070
        %2079 = vst.msk [vmem:[#allocation5 + $0x29] sm:$0x1] %vm1916, %v2071
        %2080 = vst.msk [vmem:[#allocation5 + $0x39] sm:$0x1] %vm1916, %v2072
        %2081 = vrot.lane.b32.xlu0 %v1902, 96
        %v2082 = vpop.permute.xlu0 %2081
        %2083 = vrot.lane.b32.xlu0 %v1909, 96
        %v2084 = vpop.permute.xlu0 %2083
        %2085 = vrot.lane.b32.xlu0 %v1910, 96
        %v2086 = vpop.permute.xlu0 %2085
        %2087 = vrot.lane.b32.xlu0 %v1911, 96
        %v2088 = vpop.permute.xlu0 %2087
        %v2089 = vrot.slane %v2082, 1
        %v2090 = vrot.slane %v2084, 1
        %v2091 = vrot.slane %v2086, 1
        %v2092 = vrot.slane %v2088, 1
        %2097 = vst.msk [vmem:[#allocation5 + $0xa] sm:$0x1] %vm1916, %v2089
        %2098 = vst.msk [vmem:[#allocation5 + $0x1a] sm:$0x1] %vm1916, %v2090
        %2099 = vst.msk [vmem:[#allocation5 + $0x2a] sm:$0x1] %vm1916, %v2091
        %2100 = vst.msk [vmem:[#allocation5 + $0x3a] sm:$0x1] %vm1916, %v2092
        %2101 = vrot.lane.b32.xlu0 %v1902, 80
        %v2102 = vpop.permute.xlu0 %2101
        %2103 = vrot.lane.b32.xlu0 %v1909, 80
        %v2104 = vpop.permute.xlu0 %2103
        %2105 = vrot.lane.b32.xlu0 %v1910, 80
        %v2106 = vpop.permute.xlu0 %2105
        %2107 = vrot.lane.b32.xlu0 %v1911, 80
        %v2108 = vpop.permute.xlu0 %2107
        %v2109 = vrot.slane %v2102, 1
        %v2110 = vrot.slane %v2104, 1
        %v2111 = vrot.slane %v2106, 1
        %v2112 = vrot.slane %v2108, 1
        %2117 = vst.msk [vmem:[#allocation5 + $0xb] sm:$0x1] %vm1916, %v2109
        %2118 = vst.msk [vmem:[#allocation5 + $0x1b] sm:$0x1] %vm1916, %v2110
        %2119 = vst.msk [vmem:[#allocation5 + $0x2b] sm:$0x1] %vm1916, %v2111
        %2120 = vst.msk [vmem:[#allocation5 + $0x3b] sm:$0x1] %vm1916, %v2112
        %2121 = vrot.lane.b32.xlu0 %v1902, 64
        %v2122 = vpop.permute.xlu0 %2121
        %2123 = vrot.lane.b32.xlu0 %v1909, 64
        %v2124 = vpop.permute.xlu0 %2123
        %2125 = vrot.lane.b32.xlu0 %v1910, 64
        %v2126 = vpop.permute.xlu0 %2125
        %2127 = vrot.lane.b32.xlu0 %v1911, 64
        %v2128 = vpop.permute.xlu0 %2127
        %v2129 = vrot.slane %v2122, 1
        %v2130 = vrot.slane %v2124, 1
        %v2131 = vrot.slane %v2126, 1
        %v2132 = vrot.slane %v2128, 1
        %2137 = vst.msk [vmem:[#allocation5 + $0xc] sm:$0x1] %vm1916, %v2129
        %2138 = vst.msk [vmem:[#allocation5 + $0x1c] sm:$0x1] %vm1916, %v2130
        %2139 = vst.msk [vmem:[#allocation5 + $0x2c] sm:$0x1] %vm1916, %v2131
        %2140 = vst.msk [vmem:[#allocation5 + $0x3c] sm:$0x1] %vm1916, %v2132
        %2141 = vrot.lane.b32.xlu0 %v1902, 48
        %v2142 = vpop.permute.xlu0 %2141
        %2143 = vrot.lane.b32.xlu0 %v1909, 48
        %v2144 = vpop.permute.xlu0 %2143
        %2145 = vrot.lane.b32.xlu0 %v1910, 48
        %v2146 = vpop.permute.xlu0 %2145
        %2147 = vrot.lane.b32.xlu0 %v1911, 48
        %v2148 = vpop.permute.xlu0 %2147
        %v2149 = vrot.slane %v2142, 1
        %v2150 = vrot.slane %v2144, 1
        %v2151 = vrot.slane %v2146, 1
        %v2152 = vrot.slane %v2148, 1
        %2157 = vst.msk [vmem:[#allocation5 + $0xd] sm:$0x1] %vm1916, %v2149
        %2158 = vst.msk [vmem:[#allocation5 + $0x1d] sm:$0x1] %vm1916, %v2150
        %2159 = vst.msk [vmem:[#allocation5 + $0x2d] sm:$0x1] %vm1916, %v2151
        %2160 = vst.msk [vmem:[#allocation5 + $0x3d] sm:$0x1] %vm1916, %v2152
        %2161 = vrot.lane.b32.xlu0 %v1902, 32
        %v2162 = vpop.permute.xlu0 %2161
        %2163 = vrot.lane.b32.xlu0 %v1909, 32
        %v2164 = vpop.permute.xlu0 %2163
        %2165 = vrot.lane.b32.xlu0 %v1910, 32
        %v2166 = vpop.permute.xlu0 %2165
        %2167 = vrot.lane.b32.xlu0 %v1911, 32
        %v2168 = vpop.permute.xlu0 %2167
        %v2169 = vrot.slane %v2162, 1
        %v2170 = vrot.slane %v2164, 1
        %v2171 = vrot.slane %v2166, 1
        %v2172 = vrot.slane %v2168, 1
        %2177 = vst.msk [vmem:[#allocation5 + $0xe] sm:$0x1] %vm1916, %v2169
        %2178 = vst.msk [vmem:[#allocation5 + $0x1e] sm:$0x1] %vm1916, %v2170
        %2179 = vst.msk [vmem:[#allocation5 + $0x2e] sm:$0x1] %vm1916, %v2171
        %2180 = vst.msk [vmem:[#allocation5 + $0x3e] sm:$0x1] %vm1916, %v2172
        %2181 = vrot.lane.b32.xlu0 %v1902, 16
        %v2182 = vpop.permute.xlu0 %2181
        %2183 = vrot.lane.b32.xlu0 %v1909, 16
        %v2184 = vpop.permute.xlu0 %2183
        %2185 = vrot.lane.b32.xlu0 %v1910, 16
        %v2186 = vpop.permute.xlu0 %2185
        %2187 = vrot.lane.b32.xlu0 %v1911, 16
        %v2188 = vpop.permute.xlu0 %2187
        %v2189 = vrot.slane %v2182, 1
        %v2190 = vrot.slane %v2184, 1
        %v2191 = vrot.slane %v2186, 1
        %v2192 = vrot.slane %v2188, 1
        %2197 = vst.msk [vmem:[#allocation5 + $0xf] sm:$0x1] %vm1916, %v2189
        %2198 = vst.msk [vmem:[#allocation5 + $0x1f] sm:$0x1] %vm1916, %v2190
        %2199 = vst.msk [vmem:[#allocation5 + $0x2f] sm:$0x1] %vm1916, %v2191
        %2200 = vst.msk [vmem:[#allocation5 + $0x3f] sm:$0x1] %vm1916, %v2192
        %v2201 = vld [vmem:[#allocation5] sm:$0xff]
        %v2202 = vld [vmem:[#allocation5 + $0x8] sm:$0xff]
        %v2203 = vld [vmem:[#allocation5 + $0x10] sm:$0xff]
        %v2204 = vld [vmem:[#allocation5 + $0x18] sm:$0xff]
        %v2205 = vld [vmem:[#allocation5 + $0x20] sm:$0xff]
        %v2206 = vld [vmem:[#allocation5 + $0x28] sm:$0xff]
        %v2207 = vld [vmem:[#allocation5 + $0x30] sm:$0xff]
        %v2208 = vld [vmem:[#allocation5 + $0x38] sm:$0xff]
        %v2209 = vld [vmem:[%s67] sm:$0xff]
        %v2210 = vld [vmem:[%s67 + $0x8] sm:$0xff]
        %v2211 = vld [vmem:[%s67 + $0x20] sm:$0xff]
        %v2212 = vld [vmem:[%s67 + $0x28] sm:$0xff]
        %v2213 = vld [vmem:[%s67 + $0x40] sm:$0xff]
        %v2214 = vld [vmem:[%s67 + $0x48] sm:$0xff]
        %v2215 = vld [vmem:[%s67 + $0x60] sm:$0xff]
        %v2216 = vld [vmem:[%s67 + $0x68] sm:$0xff]
        %vm2217 = vcmask 130048
        %v2219 = vsel %vm2217, %v2201, 0
        %v2222 = vsel %vm2217, %v2202, 0
        %2224 = vmatprep.subr.mxu0 0.0
        %2225 = vmatpush1.xpose.msra.mxu0 %v2219
        %2226 = vmatprep.subr.mxu0 0.0
        %2227 = vmatpush1.xpose.msra.mxu0 %v2222
        %2228 = vmatprep.subr.mxu0 0.0
        %2229 = vmatpush1.xpose.msra.mxu0 0.0
        %2230 = vmatprep.subr.mxu0 0.0
        %2231 = vmatpush1.xpose.msra.mxu0 0.0
        %2232 = vmatprep.subr.mxu0 0.0
        %2233 = vmatpush1.xpose.msra.mxu0 0.0
        %2234 = vmatprep.subr.mxu0 0.0
        %2235 = vmatpush1.xpose.msra.mxu0 0.0
        %2236 = vmatprep.subr.mxu0 0.0
        %2237 = vmatpush1.xpose.msra.mxu0 0.0
        %2238 = vmatprep.subr.mxu0 0.0
        %2239 = vmatpush1.xpose.msra.mxu0 0.0
        %2240 = vmatprep.subr.mxu0 0.0
        %2241 = vmatpush1.xpose.msra.mxu0 0.0
        %2242 = vmatprep.subr.mxu0 0.0
        %2243 = vmatpush1.xpose.msra.mxu0 0.0
        %2244 = vmatprep.subr.mxu0 0.0
        %2245 = vmatpush1.xpose.msra.mxu0 0.0
        %2246 = vmatprep.subr.mxu0 0.0
        %2247 = vmatpush1.xpose.msra.mxu0 0.0
        %2248 = vmatprep.subr.mxu0 0.0
        %2249 = vmatpush1.xpose.msra.mxu0 0.0
        %2250 = vmatprep.subr.mxu0 0.0
        %2251 = vmatpush1.xpose.msra.mxu0 0.0
        %2252 = vmatprep.subr.mxu0 0.0
        %2253 = vmatpush1.xpose.msra.mxu0 0.0
        %2254 = vmatprep.subr.mxu0 0.0
        %2255 = vmatpush1.xpose.msra.mxu0 0.0
        %2256 = vmatprep.subr.mxu0 0.0
        %2257 = vmatpush1.xpose.msra.mxu0 0.0
        %2258 = vmatprep.subr.mxu0 0.0
        %2259 = vmatpush1.xpose.msra.mxu0 0.0
        %2260 = vmatprep.subr.mxu0 0.0
        %2261 = vmatpush1.xpose.msra.mxu0 0.0
        %2262 = vmatprep.subr.mxu0 0.0
        %2263 = vmatpush1.xpose.msra.mxu0 0.0
        %2264 = vmatprep.subr.mxu0 0.0
        %2265 = vmatpush1.xpose.msra.mxu0 0.0
        %2266 = vmatprep.subr.mxu0 0.0
        %2267 = vmatpush1.xpose.msra.mxu0 0.0
        %2268 = vmatprep.subr.mxu0 0.0
        %2269 = vmatpush1.xpose.msra.mxu0 0.0
        %2270 = vmatprep.subr.mxu0 0.0
        %2271 = vmatpush1.xpose.msra.mxu0 0.0
        %2272 = vmatprep.subr.mxu0 0.0
        %2273 = vmatpush1.xpose.msra.mxu0 0.0
        %2274 = vmatprep.subr.mxu0 0.0
        %2275 = vmatpush1.xpose.msra.mxu0 0.0
        %2276 = vmatprep.subr.mxu0 0.0
        %2277 = vmatpush1.xpose.msra.mxu0 0.0
        %2278 = vmatprep.subr.mxu0 0.0
        %2279 = vmatpush1.xpose.msra.mxu0 0.0
        %2280 = vmatprep.subr.mxu0 0.0
        %2281 = vmatpush1.xpose.msra.mxu0 0.0
        %2282 = vmatprep.subr.mxu0 0.0
        %2283 = vmatpush1.xpose.msra.mxu0 0.0
        %2284 = vmatprep.subr.mxu0 0.0
        %2285 = vmatpush1.xpose.msra.mxu0 0.0
        %2286 = vmatprep.subr.mxu0 0.0
        %2287 = vmatpush1.xpose.msra.mxu0 0.0
        %2288 = vmatprep.mubr.f32.mxu0 0.0
        %2289 = vmatmul.mubr.f32.gmra.mrb[0].mxu0 %v2219
        %v2290 = vpop.f32.mrb[0].mxu0
        %v2291 = vadd.f32 %v2209, %v2290
        %v2292 = vpop.f32.mrb[0].mxu0
        %2293 = vmatprep.mubr.f32.mxu0 0.0
        %2294 = vmatmul.mubr.f32.gmra.mrb[0].mxu0 %v2222
        %v2295 = vpop.f32.mrb[0].mxu0
        %v2296 = vadd.f32 %v2210, %v2295
        %v2297 = vpop.f32.mrb[0].mxu0
        %2298 = vdwg.mxu0
        %v2300 = vsel %vm2217, %v2203, 0
        %v2303 = vsel %vm2217, %v2204, 0
        %2305 = vmatprep.subr.mxu0 0.0
        %2306 = vmatpush1.xpose.msra.mxu0 %v2300
        %2307 = vmatprep.subr.mxu0 0.0
        %2308 = vmatpush1.xpose.msra.mxu0 %v2303
        %2309 = vmatprep.subr.mxu0 0.0
        %2310 = vmatpush1.xpose.msra.mxu0 0.0
        %2311 = vmatprep.subr.mxu0 0.0
        %2312 = vmatpush1.xpose.msra.mxu0 0.0
        %2313 = vmatprep.subr.mxu0 0.0
        %2314 = vmatpush1.xpose.msra.mxu0 0.0
        %2315 = vmatprep.subr.mxu0 0.0
        %2316 = vmatpush1.xpose.msra.mxu0 0.0
        %2317 = vmatprep.subr.mxu0 0.0
        %2318 = vmatpush1.xpose.msra.mxu0 0.0
        %2319 = vmatprep.subr.mxu0 0.0
        %2320 = vmatpush1.xpose.msra.mxu0 0.0
        %2321 = vmatprep.subr.mxu0 0.0
        %2322 = vmatpush1.xpose.msra.mxu0 0.0
        %2323 = vmatprep.subr.mxu0 0.0
        %2324 = vmatpush1.xpose.msra.mxu0 0.0
        %2325 = vmatprep.subr.mxu0 0.0
        %2326 = vmatpush1.xpose.msra.mxu0 0.0
        %2327 = vmatprep.subr.mxu0 0.0
        %2328 = vmatpush1.xpose.msra.mxu0 0.0
        %2329 = vmatprep.subr.mxu0 0.0
        %2330 = vmatpush1.xpose.msra.mxu0 0.0
        %2331 = vmatprep.subr.mxu0 0.0
        %2332 = vmatpush1.xpose.msra.mxu0 0.0
        %2333 = vmatprep.subr.mxu0 0.0
        %2334 = vmatpush1.xpose.msra.mxu0 0.0
        %2335 = vmatprep.subr.mxu0 0.0
        %2336 = vmatpush1.xpose.msra.mxu0 0.0
        %2337 = vmatprep.subr.mxu0 0.0
        %2338 = vmatpush1.xpose.msra.mxu0 0.0
        %2339 = vmatprep.subr.mxu0 0.0
        %2340 = vmatpush1.xpose.msra.mxu0 0.0
        %2341 = vmatprep.subr.mxu0 0.0
        %2342 = vmatpush1.xpose.msra.mxu0 0.0
        %2343 = vmatprep.subr.mxu0 0.0
        %2344 = vmatpush1.xpose.msra.mxu0 0.0
        %2345 = vmatprep.subr.mxu0 0.0
        %2346 = vmatpush1.xpose.msra.mxu0 0.0
        %2347 = vmatprep.subr.mxu0 0.0
        %2348 = vmatpush1.xpose.msra.mxu0 0.0
        %2349 = vmatprep.subr.mxu0 0.0
        %2350 = vmatpush1.xpose.msra.mxu0 0.0
        %2351 = vmatprep.subr.mxu0 0.0
        %2352 = vmatpush1.xpose.msra.mxu0 0.0
        %2353 = vmatprep.subr.mxu0 0.0
        %2354 = vmatpush1.xpose.msra.mxu0 0.0
        %2355 = vmatprep.subr.mxu0 0.0
        %2356 = vmatpush1.xpose.msra.mxu0 0.0
        %2357 = vmatprep.subr.mxu0 0.0
        %2358 = vmatpush1.xpose.msra.mxu0 0.0
        %2359 = vmatprep.subr.mxu0 0.0
        %2360 = vmatpush1.xpose.msra.mxu0 0.0
        %2361 = vmatprep.subr.mxu0 0.0
        %2362 = vmatpush1.xpose.msra.mxu0 0.0
        %2363 = vmatprep.subr.mxu0 0.0
        %2364 = vmatpush1.xpose.msra.mxu0 0.0
        %2365 = vmatprep.subr.mxu0 0.0
        %2366 = vmatpush1.xpose.msra.mxu0 0.0
        %2367 = vmatprep.subr.mxu0 0.0
        %2368 = vmatpush1.xpose.msra.mxu0 0.0
        %2369 = vmatprep.mubr.f32.mxu0 0.0
        %2370 = vmatmul.mubr.f32.gmra.mrb[0].mxu0 %v2300
        %v2371 = vpop.f32.mrb[0].mxu0
        %v2372 = vadd.f32 %v2211, %v2371
        %v2373 = vpop.f32.mrb[0].mxu0
        %2374 = vmatprep.mubr.f32.mxu0 0.0
        %2375 = vmatmul.mubr.f32.gmra.mrb[0].mxu0 %v2303
        %v2376 = vpop.f32.mrb[0].mxu0
        %v2377 = vadd.f32 %v2212, %v2376
        %v2378 = vpop.f32.mrb[0].mxu0
        %2379 = vdwg.mxu0
        %v2381 = vsel %vm2217, %v2205, 0
        %v2384 = vsel %vm2217, %v2206, 0
        %2386 = vmatprep.subr.mxu0 0.0
        %2387 = vmatpush1.xpose.msra.mxu0 %v2381
        %2388 = vmatprep.subr.mxu0 0.0
        %2389 = vmatpush1.xpose.msra.mxu0 %v2384
        %2390 = vmatprep.subr.mxu0 0.0
        %2391 = vmatpush1.xpose.msra.mxu0 0.0
        %2392 = vmatprep.subr.mxu0 0.0
        %2393 = vmatpush1.xpose.msra.mxu0 0.0
        %2394 = vmatprep.subr.mxu0 0.0
        %2395 = vmatpush1.xpose.msra.mxu0 0.0
        %2396 = vmatprep.subr.mxu0 0.0
        %2397 = vmatpush1.xpose.msra.mxu0 0.0
        %2398 = vmatprep.subr.mxu0 0.0
        %2399 = vmatpush1.xpose.msra.mxu0 0.0
        %2400 = vmatprep.subr.mxu0 0.0
        %2401 = vmatpush1.xpose.msra.mxu0 0.0
        %2402 = vmatprep.subr.mxu0 0.0
        %2403 = vmatpush1.xpose.msra.mxu0 0.0
        %2404 = vmatprep.subr.mxu0 0.0
        %2405 = vmatpush1.xpose.msra.mxu0 0.0
        %2406 = vmatprep.subr.mxu0 0.0
        %2407 = vmatpush1.xpose.msra.mxu0 0.0
        %2408 = vmatprep.subr.mxu0 0.0
        %2409 = vmatpush1.xpose.msra.mxu0 0.0
        %2410 = vmatprep.subr.mxu0 0.0
        %2411 = vmatpush1.xpose.msra.mxu0 0.0
        %2412 = vmatprep.subr.mxu0 0.0
        %2413 = vmatpush1.xpose.msra.mxu0 0.0
        %2414 = vmatprep.subr.mxu0 0.0
        %2415 = vmatpush1.xpose.msra.mxu0 0.0
        %2416 = vmatprep.subr.mxu0 0.0
        %2417 = vmatpush1.xpose.msra.mxu0 0.0
        %2418 = vmatprep.subr.mxu0 0.0
        %2419 = vmatpush1.xpose.msra.mxu0 0.0
        %2420 = vmatprep.subr.mxu0 0.0
        %2421 = vmatpush1.xpose.msra.mxu0 0.0
        %2422 = vmatprep.subr.mxu0 0.0
        %2423 = vmatpush1.xpose.msra.mxu0 0.0
        %2424 = vmatprep.subr.mxu0 0.0
        %2425 = vmatpush1.xpose.msra.mxu0 0.0
        %2426 = vmatprep.subr.mxu0 0.0
        %2427 = vmatpush1.xpose.msra.mxu0 0.0
        %2428 = vmatprep.subr.mxu0 0.0
        %2429 = vmatpush1.xpose.msra.mxu0 0.0
        %2430 = vmatprep.subr.mxu0 0.0
        %2431 = vmatpush1.xpose.msra.mxu0 0.0
        %2432 = vmatprep.subr.mxu0 0.0
        %2433 = vmatpush1.xpose.msra.mxu0 0.0
        %2434 = vmatprep.subr.mxu0 0.0
        %2435 = vmatpush1.xpose.msra.mxu0 0.0
        %2436 = vmatprep.subr.mxu0 0.0
        %2437 = vmatpush1.xpose.msra.mxu0 0.0
        %2438 = vmatprep.subr.mxu0 0.0
        %2439 = vmatpush1.xpose.msra.mxu0 0.0
        %2440 = vmatprep.subr.mxu0 0.0
        %2441 = vmatpush1.xpose.msra.mxu0 0.0
        %2442 = vmatprep.subr.mxu0 0.0
        %2443 = vmatpush1.xpose.msra.mxu0 0.0
        %2444 = vmatprep.subr.mxu0 0.0
        %2445 = vmatpush1.xpose.msra.mxu0 0.0
        %2446 = vmatprep.subr.mxu0 0.0
        %2447 = vmatpush1.xpose.msra.mxu0 0.0
        %2448 = vmatprep.subr.mxu0 0.0
        %2449 = vmatpush1.xpose.msra.mxu0 0.0
        %2450 = vmatprep.mubr.f32.mxu0 0.0
        %2451 = vmatmul.mubr.f32.gmra.mrb[0].mxu0 %v2381
        %v2452 = vpop.f32.mrb[0].mxu0
        %v2453 = vadd.f32 %v2213, %v2452
        %v2454 = vpop.f32.mrb[0].mxu0
        %2455 = vmatprep.mubr.f32.mxu0 0.0
        %2456 = vmatmul.mubr.f32.gmra.mrb[0].mxu0 %v2384
        %v2457 = vpop.f32.mrb[0].mxu0
        %v2458 = vadd.f32 %v2214, %v2457
        %v2459 = vpop.f32.mrb[0].mxu0
        %2460 = vdwg.mxu0
        %v2462 = vsel %vm2217, %v2207, 0
        %v2465 = vsel %vm2217, %v2208, 0
        %2467 = vmatprep.subr.mxu0 0.0
        %2468 = vmatpush1.xpose.msra.mxu0 %v2462
        %2469 = vmatprep.subr.mxu0 0.0
        %2470 = vmatpush1.xpose.msra.mxu0 %v2465
        %2471 = vmatprep.subr.mxu0 0.0
        %2472 = vmatpush1.xpose.msra.mxu0 0.0
        %2473 = vmatprep.subr.mxu0 0.0
        %2474 = vmatpush1.xpose.msra.mxu0 0.0
        %2475 = vmatprep.subr.mxu0 0.0
        %2476 = vmatpush1.xpose.msra.mxu0 0.0
        %2477 = vmatprep.subr.mxu0 0.0
        %2478 = vmatpush1.xpose.msra.mxu0 0.0
        %2479 = vmatprep.subr.mxu0 0.0
        %2480 = vmatpush1.xpose.msra.mxu0 0.0
        %2481 = vmatprep.subr.mxu0 0.0
        %2482 = vmatpush1.xpose.msra.mxu0 0.0
        %2483 = vmatprep.subr.mxu0 0.0
        %2484 = vmatpush1.xpose.msra.mxu0 0.0
        %2485 = vmatprep.subr.mxu0 0.0
        %2486 = vmatpush1.xpose.msra.mxu0 0.0
        %2487 = vmatprep.subr.mxu0 0.0
        %2488 = vmatpush1.xpose.msra.mxu0 0.0
        %2489 = vmatprep.subr.mxu0 0.0
        %2490 = vmatpush1.xpose.msra.mxu0 0.0
        %2491 = vmatprep.subr.mxu0 0.0
        %2492 = vmatpush1.xpose.msra.mxu0 0.0
        %2493 = vmatprep.subr.mxu0 0.0
        %2494 = vmatpush1.xpose.msra.mxu0 0.0
        %2495 = vmatprep.subr.mxu0 0.0
        %2496 = vmatpush1.xpose.msra.mxu0 0.0
        %2497 = vmatprep.subr.mxu0 0.0
        %2498 = vmatpush1.xpose.msra.mxu0 0.0
        %2499 = vmatprep.subr.mxu0 0.0
        %2500 = vmatpush1.xpose.msra.mxu0 0.0
        %2501 = vmatprep.subr.mxu0 0.0
        %2502 = vmatpush1.xpose.msra.mxu0 0.0
        %2503 = vmatprep.subr.mxu0 0.0
        %2504 = vmatpush1.xpose.msra.mxu0 0.0
        %2505 = vmatprep.subr.mxu0 0.0
        %2506 = vmatpush1.xpose.msra.mxu0 0.0
        %2507 = vmatprep.subr.mxu0 0.0
        %2508 = vmatpush1.xpose.msra.mxu0 0.0
        %2509 = vmatprep.subr.mxu0 0.0
        %2510 = vmatpush1.xpose.msra.mxu0 0.0
        %2511 = vmatprep.subr.mxu0 0.0
        %2512 = vmatpush1.xpose.msra.mxu0 0.0
        %2513 = vmatprep.subr.mxu0 0.0
        %2514 = vmatpush1.xpose.msra.mxu0 0.0
        %2515 = vmatprep.subr.mxu0 0.0
        %2516 = vmatpush1.xpose.msra.mxu0 0.0
        %2517 = vmatprep.subr.mxu0 0.0
        %2518 = vmatpush1.xpose.msra.mxu0 0.0
        %2519 = vmatprep.subr.mxu0 0.0
        %2520 = vmatpush1.xpose.msra.mxu0 0.0
        %2521 = vmatprep.subr.mxu0 0.0
        %2522 = vmatpush1.xpose.msra.mxu0 0.0
        %2523 = vmatprep.subr.mxu0 0.0
        %2524 = vmatpush1.xpose.msra.mxu0 0.0
        %2525 = vmatprep.subr.mxu0 0.0
        %2526 = vmatpush1.xpose.msra.mxu0 0.0
        %2527 = vmatprep.subr.mxu0 0.0
        %2528 = vmatpush1.xpose.msra.mxu0 0.0
        %2529 = vmatprep.subr.mxu0 0.0
        %2530 = vmatpush1.xpose.msra.mxu0 0.0
        %2531 = vmatprep.mubr.f32.mxu0 0.0
        %2532 = vmatmul.mubr.f32.gmra.mrb[0].mxu0 %v2462
        %v2533 = vpop.f32.mrb[0].mxu0
        %v2534 = vadd.f32 %v2215, %v2533
        %v2535 = vpop.f32.mrb[0].mxu0
        %2536 = vmatprep.mubr.f32.mxu0 0.0
        %2537 = vmatmul.mubr.f32.gmra.mrb[0].mxu0 %v2465
        %v2538 = vpop.f32.mrb[0].mxu0
        %v2539 = vadd.f32 %v2216, %v2538
        %v2540 = vpop.f32.mrb[0].mxu0
        %2541 = vdwg.mxu0
        %2542 = vst.msk [vmem:[#allocation6] sm:$0xff] %vm2217, %v2291
        %2543 = vst.msk [vmem:[#allocation6 + $0x8] sm:$0xff] %vm2217, %v2296
        %2544 = vst.msk [vmem:[#allocation6 + $0x20] sm:$0xff] %vm2217, %v2372
        %2545 = vst.msk [vmem:[#allocation6 + $0x28] sm:$0xff] %vm2217, %v2377
        %2546 = vst.msk [vmem:[#allocation6 + $0x40] sm:$0xff] %vm2217, %v2453
        %2547 = vst.msk [vmem:[#allocation6 + $0x48] sm:$0xff] %vm2217, %v2458
        %2548 = vst.msk [vmem:[#allocation6 + $0x60] sm:$0xff] %vm2217, %v2534
        %2549 = vst.msk [vmem:[#allocation6 + $0x68] sm:$0xff] %vm2217, %v2539
        %v2552 = vunpack.c.l.s4 1966171168
        %v2553 = vunpack.c.0.s8 %v2552
        %v2554 = vlaneseq
        %v2555 = vshrl.u32 %v2554, 7
        %v2556 = vsub.s32 %v2553, %v2555
        %v2557 = vrot.slane %v1885, %v2556
        %v2558 = vcombine.high %v2557, %v2557
        %v2560 = vunpack.c.l.s4 1966171168
        %v2561 = vunpack.c.0.s8 %v2560
        %v2562 = vlaneseq
        %v2563 = vshrl.u32 %v2562, 7
        %v2564 = vsub.s32 %v2561, %v2563
        %v2565 = vrot.slane %v2557, %v2564
        %v2567 = vunpack.c.l.s4 1966171168
        %v2568 = vunpack.c.0.s8 %v2567
        %v2569 = vlaneseq
        %v2570 = vshrl.u32 %v2569, 7
        %v2571 = vsub.s32 %v2568, %v2570
        %v2572 = vrot.slane %v2558, %v2571
        %v2573 = vcombine.high %v2565, %v2565
        %v2574 = vcombine.high %v2572, %v2572
        %v2575 = vsel %vm2217, %v2565, 0
        %2577 = vmatprep.subr.mxu0 0.0
        %2578 = vmatpush1.xpose.msra.mxu0 %v2219
        %2579 = vmatprep.subr.mxu0 0.0
        %2580 = vmatpush1.xpose.msra.mxu0 %v2222
        %2581 = vmatprep.subr.mxu0 0.0
        %2582 = vmatpush1.xpose.msra.mxu0 0.0
        %2583 = vmatprep.subr.mxu0 0.0
        %2584 = vmatpush1.xpose.msra.mxu0 0.0
        %2585 = vmatprep.subr.mxu0 0.0
        %2586 = vmatpush1.xpose.msra.mxu0 0.0
        %2587 = vmatprep.subr.mxu0 0.0
        %2588 = vmatpush1.xpose.msra.mxu0 0.0
        %2589 = vmatprep.subr.mxu0 0.0
        %2590 = vmatpush1.xpose.msra.mxu0 0.0
        %2591 = vmatprep.subr.mxu0 0.0
        %2592 = vmatpush1.xpose.msra.mxu0 0.0
        %2593 = vmatprep.subr.mxu0 0.0
        %2594 = vmatpush1.xpose.msra.mxu0 0.0
        %2595 = vmatprep.subr.mxu0 0.0
        %2596 = vmatpush1.xpose.msra.mxu0 0.0
        %2597 = vmatprep.subr.mxu0 0.0
        %2598 = vmatpush1.xpose.msra.mxu0 0.0
        %2599 = vmatprep.subr.mxu0 0.0
        %2600 = vmatpush1.xpose.msra.mxu0 0.0
        %2601 = vmatprep.subr.mxu0 0.0
        %2602 = vmatpush1.xpose.msra.mxu0 0.0
        %2603 = vmatprep.subr.mxu0 0.0
        %2604 = vmatpush1.xpose.msra.mxu0 0.0
        %2605 = vmatprep.subr.mxu0 0.0
        %2606 = vmatpush1.xpose.msra.mxu0 0.0
        %2607 = vmatprep.subr.mxu0 0.0
        %2608 = vmatpush1.xpose.msra.mxu0 0.0
        %2609 = vmatprep.subr.mxu0 0.0
        %2610 = vmatpush1.xpose.msra.mxu0 0.0
        %2611 = vmatprep.subr.mxu0 0.0
        %2612 = vmatpush1.xpose.msra.mxu0 0.0
        %2613 = vmatprep.subr.mxu0 0.0
        %2614 = vmatpush1.xpose.msra.mxu0 0.0
        %2615 = vmatprep.subr.mxu0 0.0
        %2616 = vmatpush1.xpose.msra.mxu0 0.0
        %2617 = vmatprep.subr.mxu0 0.0
        %2618 = vmatpush1.xpose.msra.mxu0 0.0
        %2619 = vmatprep.subr.mxu0 0.0
        %2620 = vmatpush1.xpose.msra.mxu0 0.0
        %2621 = vmatprep.subr.mxu0 0.0
        %2622 = vmatpush1.xpose.msra.mxu0 0.0
        %2623 = vmatprep.subr.mxu0 0.0
        %2624 = vmatpush1.xpose.msra.mxu0 0.0
        %2625 = vmatprep.subr.mxu0 0.0
        %2626 = vmatpush1.xpose.msra.mxu0 0.0
        %2627 = vmatprep.subr.mxu0 0.0
        %2628 = vmatpush1.xpose.msra.mxu0 0.0
        %2629 = vmatprep.subr.mxu0 0.0
        %2630 = vmatpush1.xpose.msra.mxu0 0.0
        %2631 = vmatprep.subr.mxu0 0.0
        %2632 = vmatpush1.xpose.msra.mxu0 0.0
        %2633 = vmatprep.subr.mxu0 0.0
        %2634 = vmatpush1.xpose.msra.mxu0 0.0
        %2635 = vmatprep.subr.mxu0 0.0
        %2636 = vmatpush1.xpose.msra.mxu0 0.0
        %2637 = vmatprep.subr.mxu0 0.0
        %2638 = vmatpush1.xpose.msra.mxu0 0.0
        %2639 = vmatprep.subr.mxu0 0.0
        %2640 = vmatpush1.xpose.msra.mxu0 0.0
        %2641 = vmatprep.mubr.f32.mxu0 0.0
        %2642 = vmatmul.mubr.f32.gmra.mrb[0].mxu0 %v2575
        %v2643 = vpop.f32.mrb[0].mxu0
        %v2644 = vadd.f32 0.0, %v2643
        %v2645 = vpop.f32.mrb[0].mxu0
        %2646 = vdwg.mxu0
        %v2647 = vsel %vm2217, %v2572, 0
        %2649 = vmatprep.subr.mxu0 0.0
        %2650 = vmatpush1.xpose.msra.mxu0 %v2300
        %2651 = vmatprep.subr.mxu0 0.0
        %2652 = vmatpush1.xpose.msra.mxu0 %v2303
        %2653 = vmatprep.subr.mxu0 0.0
        %2654 = vmatpush1.xpose.msra.mxu0 0.0
        %2655 = vmatprep.subr.mxu0 0.0
        %2656 = vmatpush1.xpose.msra.mxu0 0.0
        %2657 = vmatprep.subr.mxu0 0.0
        %2658 = vmatpush1.xpose.msra.mxu0 0.0
        %2659 = vmatprep.subr.mxu0 0.0
        %2660 = vmatpush1.xpose.msra.mxu0 0.0
        %2661 = vmatprep.subr.mxu0 0.0
        %2662 = vmatpush1.xpose.msra.mxu0 0.0
        %2663 = vmatprep.subr.mxu0 0.0
        %2664 = vmatpush1.xpose.msra.mxu0 0.0
        %2665 = vmatprep.subr.mxu0 0.0
        %2666 = vmatpush1.xpose.msra.mxu0 0.0
        %2667 = vmatprep.subr.mxu0 0.0
        %2668 = vmatpush1.xpose.msra.mxu0 0.0
        %2669 = vmatprep.subr.mxu0 0.0
        %2670 = vmatpush1.xpose.msra.mxu0 0.0
        %2671 = vmatprep.subr.mxu0 0.0
        %2672 = vmatpush1.xpose.msra.mxu0 0.0
        %2673 = vmatprep.subr.mxu0 0.0
        %2674 = vmatpush1.xpose.msra.mxu0 0.0
        %2675 = vmatprep.subr.mxu0 0.0
        %2676 = vmatpush1.xpose.msra.mxu0 0.0
        %2677 = vmatprep.subr.mxu0 0.0
        %2678 = vmatpush1.xpose.msra.mxu0 0.0
        %2679 = vmatprep.subr.mxu0 0.0
        %2680 = vmatpush1.xpose.msra.mxu0 0.0
        %2681 = vmatprep.subr.mxu0 0.0
        %2682 = vmatpush1.xpose.msra.mxu0 0.0
        %2683 = vmatprep.subr.mxu0 0.0
        %2684 = vmatpush1.xpose.msra.mxu0 0.0
        %2685 = vmatprep.subr.mxu0 0.0
        %2686 = vmatpush1.xpose.msra.mxu0 0.0
        %2687 = vmatprep.subr.mxu0 0.0
        %2688 = vmatpush1.xpose.msra.mxu0 0.0
        %2689 = vmatprep.subr.mxu0 0.0
        %2690 = vmatpush1.xpose.msra.mxu0 0.0
        %2691 = vmatprep.subr.mxu0 0.0
        %2692 = vmatpush1.xpose.msra.mxu0 0.0
        %2693 = vmatprep.subr.mxu0 0.0
        %2694 = vmatpush1.xpose.msra.mxu0 0.0
        %2695 = vmatprep.subr.mxu0 0.0
        %2696 = vmatpush1.xpose.msra.mxu0 0.0
        %2697 = vmatprep.subr.mxu0 0.0
        %2698 = vmatpush1.xpose.msra.mxu0 0.0
        %2699 = vmatprep.subr.mxu0 0.0
        %2700 = vmatpush1.xpose.msra.mxu0 0.0
        %2701 = vmatprep.subr.mxu0 0.0
        %2702 = vmatpush1.xpose.msra.mxu0 0.0
        %2703 = vmatprep.subr.mxu0 0.0
        %2704 = vmatpush1.xpose.msra.mxu0 0.0
        %2705 = vmatprep.subr.mxu0 0.0
        %2706 = vmatpush1.xpose.msra.mxu0 0.0
        %2707 = vmatprep.subr.mxu0 0.0
        %2708 = vmatpush1.xpose.msra.mxu0 0.0
        %2709 = vmatprep.subr.mxu0 0.0
        %2710 = vmatpush1.xpose.msra.mxu0 0.0
        %2711 = vmatprep.subr.mxu0 0.0
        %2712 = vmatpush1.xpose.msra.mxu0 0.0
        %2713 = vmatprep.mubr.f32.mxu0 0.0
        %2714 = vmatmul.mubr.f32.gmra.mrb[0].mxu0 %v2647
        %v2715 = vpop.f32.mrb[0].mxu0
        %v2716 = vadd.f32 0.0, %v2715
        %v2717 = vpop.f32.mrb[0].mxu0
        %2718 = vdwg.mxu0
        %v2719 = vsel %vm2217, %v2573, 0
        %2721 = vmatprep.subr.mxu0 0.0
        %2722 = vmatpush1.xpose.msra.mxu0 %v2381
        %2723 = vmatprep.subr.mxu0 0.0
        %2724 = vmatpush1.xpose.msra.mxu0 %v2384
        %2725 = vmatprep.subr.mxu0 0.0
        %2726 = vmatpush1.xpose.msra.mxu0 0.0
        %2727 = vmatprep.subr.mxu0 0.0
        %2728 = vmatpush1.xpose.msra.mxu0 0.0
        %2729 = vmatprep.subr.mxu0 0.0
        %2730 = vmatpush1.xpose.msra.mxu0 0.0
        %2731 = vmatprep.subr.mxu0 0.0
        %2732 = vmatpush1.xpose.msra.mxu0 0.0
        %2733 = vmatprep.subr.mxu0 0.0
        %2734 = vmatpush1.xpose.msra.mxu0 0.0
        %2735 = vmatprep.subr.mxu0 0.0
        %2736 = vmatpush1.xpose.msra.mxu0 0.0
        %2737 = vmatprep.subr.mxu0 0.0
        %2738 = vmatpush1.xpose.msra.mxu0 0.0
        %2739 = vmatprep.subr.mxu0 0.0
        %2740 = vmatpush1.xpose.msra.mxu0 0.0
        %2741 = vmatprep.subr.mxu0 0.0
        %2742 = vmatpush1.xpose.msra.mxu0 0.0
        %2743 = vmatprep.subr.mxu0 0.0
        %2744 = vmatpush1.xpose.msra.mxu0 0.0
        %2745 = vmatprep.subr.mxu0 0.0
        %2746 = vmatpush1.xpose.msra.mxu0 0.0
        %2747 = vmatprep.subr.mxu0 0.0
        %2748 = vmatpush1.xpose.msra.mxu0 0.0
        %2749 = vmatprep.subr.mxu0 0.0
        %2750 = vmatpush1.xpose.msra.mxu0 0.0
        %2751 = vmatprep.subr.mxu0 0.0
        %2752 = vmatpush1.xpose.msra.mxu0 0.0
        %2753 = vmatprep.subr.mxu0 0.0
        %2754 = vmatpush1.xpose.msra.mxu0 0.0
        %2755 = vmatprep.subr.mxu0 0.0
        %2756 = vmatpush1.xpose.msra.mxu0 0.0
        %2757 = vmatprep.subr.mxu0 0.0
        %2758 = vmatpush1.xpose.msra.mxu0 0.0
        %2759 = vmatprep.subr.mxu0 0.0
        %2760 = vmatpush1.xpose.msra.mxu0 0.0
        %2761 = vmatprep.subr.mxu0 0.0
        %2762 = vmatpush1.xpose.msra.mxu0 0.0
        %2763 = vmatprep.subr.mxu0 0.0
        %2764 = vmatpush1.xpose.msra.mxu0 0.0
        %2765 = vmatprep.subr.mxu0 0.0
        %2766 = vmatpush1.xpose.msra.mxu0 0.0
        %2767 = vmatprep.subr.mxu0 0.0
        %2768 = vmatpush1.xpose.msra.mxu0 0.0
        %2769 = vmatprep.subr.mxu0 0.0
        %2770 = vmatpush1.xpose.msra.mxu0 0.0
        %2771 = vmatprep.subr.mxu0 0.0
        %2772 = vmatpush1.xpose.msra.mxu0 0.0
        %2773 = vmatprep.subr.mxu0 0.0
        %2774 = vmatpush1.xpose.msra.mxu0 0.0
        %2775 = vmatprep.subr.mxu0 0.0
        %2776 = vmatpush1.xpose.msra.mxu0 0.0
        %2777 = vmatprep.subr.mxu0 0.0
        %2778 = vmatpush1.xpose.msra.mxu0 0.0
        %2779 = vmatprep.subr.mxu0 0.0
        %2780 = vmatpush1.xpose.msra.mxu0 0.0
        %2781 = vmatprep.subr.mxu0 0.0
        %2782 = vmatpush1.xpose.msra.mxu0 0.0
        %2783 = vmatprep.subr.mxu0 0.0
        %2784 = vmatpush1.xpose.msra.mxu0 0.0
        %2785 = vmatprep.mubr.f32.mxu0 0.0
        %2786 = vmatmul.mubr.f32.gmra.mrb[0].mxu0 %v2719
        %v2787 = vpop.f32.mrb[0].mxu0
        %v2788 = vadd.f32 0.0, %v2787
        %v2789 = vpop.f32.mrb[0].mxu0
        %2790 = vdwg.mxu0
        %v2791 = vsel %vm2217, %v2574, 0
        %2793 = vmatprep.subr.mxu0 0.0
        %2794 = vmatpush1.xpose.msra.mxu0 %v2462
        %2795 = vmatprep.subr.mxu0 0.0
        %2796 = vmatpush1.xpose.msra.mxu0 %v2465
        %2797 = vmatprep.subr.mxu0 0.0
        %2798 = vmatpush1.xpose.msra.mxu0 0.0
        %2799 = vmatprep.subr.mxu0 0.0
        %2800 = vmatpush1.xpose.msra.mxu0 0.0
        %2801 = vmatprep.subr.mxu0 0.0
        %2802 = vmatpush1.xpose.msra.mxu0 0.0
        %2803 = vmatprep.subr.mxu0 0.0
        %2804 = vmatpush1.xpose.msra.mxu0 0.0
        %2805 = vmatprep.subr.mxu0 0.0
        %2806 = vmatpush1.xpose.msra.mxu0 0.0
        %2807 = vmatprep.subr.mxu0 0.0
        %2808 = vmatpush1.xpose.msra.mxu0 0.0
        %2809 = vmatprep.subr.mxu0 0.0
        %2810 = vmatpush1.xpose.msra.mxu0 0.0
        %2811 = vmatprep.subr.mxu0 0.0
        %2812 = vmatpush1.xpose.msra.mxu0 0.0
        %2813 = vmatprep.subr.mxu0 0.0
        %2814 = vmatpush1.xpose.msra.mxu0 0.0
        %2815 = vmatprep.subr.mxu0 0.0
        %2816 = vmatpush1.xpose.msra.mxu0 0.0
        %2817 = vmatprep.subr.mxu0 0.0
        %2818 = vmatpush1.xpose.msra.mxu0 0.0
        %2819 = vmatprep.subr.mxu0 0.0
        %2820 = vmatpush1.xpose.msra.mxu0 0.0
        %2821 = vmatprep.subr.mxu0 0.0
        %2822 = vmatpush1.xpose.msra.mxu0 0.0
        %2823 = vmatprep.subr.mxu0 0.0
        %2824 = vmatpush1.xpose.msra.mxu0 0.0
        %2825 = vmatprep.subr.mxu0 0.0
        %2826 = vmatpush1.xpose.msra.mxu0 0.0
        %2827 = vmatprep.subr.mxu0 0.0
        %2828 = vmatpush1.xpose.msra.mxu0 0.0
        %2829 = vmatprep.subr.mxu0 0.0
        %2830 = vmatpush1.xpose.msra.mxu0 0.0
        %2831 = vmatprep.subr.mxu0 0.0
        %2832 = vmatpush1.xpose.msra.mxu0 0.0
        %2833 = vmatprep.subr.mxu0 0.0
        %2834 = vmatpush1.xpose.msra.mxu0 0.0
        %2835 = vmatprep.subr.mxu0 0.0
        %2836 = vmatpush1.xpose.msra.mxu0 0.0
        %2837 = vmatprep.subr.mxu0 0.0
        %2838 = vmatpush1.xpose.msra.mxu0 0.0
        %2839 = vmatprep.subr.mxu0 0.0
        %2840 = vmatpush1.xpose.msra.mxu0 0.0
        %2841 = vmatprep.subr.mxu0 0.0
        %2842 = vmatpush1.xpose.msra.mxu0 0.0
        %2843 = vmatprep.subr.mxu0 0.0
        %2844 = vmatpush1.xpose.msra.mxu0 0.0
        %2845 = vmatprep.subr.mxu0 0.0
        %2846 = vmatpush1.xpose.msra.mxu0 0.0
        %2847 = vmatprep.subr.mxu0 0.0
        %2848 = vmatpush1.xpose.msra.mxu0 0.0
        %2849 = vmatprep.subr.mxu0 0.0
        %2850 = vmatpush1.xpose.msra.mxu0 0.0
        %2851 = vmatprep.subr.mxu0 0.0
        %2852 = vmatpush1.xpose.msra.mxu0 0.0
        %2853 = vmatprep.subr.mxu0 0.0
        %2854 = vmatpush1.xpose.msra.mxu0 0.0
        %2855 = vmatprep.subr.mxu0 0.0
        %2856 = vmatpush1.xpose.msra.mxu0 0.0
        %2857 = vmatprep.mubr.f32.mxu0 0.0
        %2858 = vmatmul.mubr.f32.gmra.mrb[0].mxu0 %v2791
        %v2859 = vpop.f32.mrb[0].mxu0
        %v2860 = vadd.f32 0.0, %v2859
        %v2861 = vpop.f32.mrb[0].mxu0
        %2862 = vdwg.mxu0
        %2863 = vst.msk [vmem:[#allocation6 + $0x19] sm:$0x1] %vm1916, %v2644
        %2864 = vst.msk [vmem:[#allocation6 + $0x39] sm:$0x1] %vm1916, %v2716
        %2865 = vst.msk [vmem:[#allocation6 + $0x59] sm:$0x1] %vm1916, %v2788
        %2866 = vst.msk [vmem:[#allocation6 + $0x79] sm:$0x1] %vm1916, %v2860
        %v2867 = vlaneseq
        %v2868 = vand.u32 %v2867, 127
        %v2869 = vld [vmem:[#allocation6] sm:$0xff]
        %v2870 = vld [vmem:[#allocation6 + $0x8] sm:$0xff]
        %v2871 = vld [vmem:[#allocation6 + $0x10] sm:$0xff]
        %v2872 = vld [vmem:[#allocation6 + $0x18] sm:$0x3]
        %v2873 = vld [vmem:[#allocation6 + $0x20] sm:$0xff]
        %v2874 = vld [vmem:[#allocation6 + $0x28] sm:$0xff]
        %v2875 = vld [vmem:[#allocation6 + $0x30] sm:$0xff]
        %v2876 = vld [vmem:[#allocation6 + $0x38] sm:$0x3]
        %v2877 = vld [vmem:[#allocation6 + $0x40] sm:$0xff]
        %v2878 = vld [vmem:[#allocation6 + $0x48] sm:$0xff]
        %v2879 = vld [vmem:[#allocation6 + $0x50] sm:$0xff]
        %v2880 = vld [vmem:[#allocation6 + $0x58] sm:$0x3]
        %v2881 = vld [vmem:[#allocation6 + $0x60] sm:$0xff]
        %v2882 = vld [vmem:[#allocation6 + $0x68] sm:$0xff]
        %v2883 = vld [vmem:[#allocation6 + $0x70] sm:$0xff]
        %v2884 = vld [vmem:[#allocation6 + $0x78] sm:$0x3]
        %v2885 = vrcp.pop %v2869
        %v2886 = vmul.f32 1.0, %v2885
        %v2887 = vrcp.pop %v2873
        %v2888 = vmul.f32 1.0, %v2887
        %v2889 = vrcp.pop %v2877
        %v2890 = vmul.f32 1.0, %v2889
        %v2891 = vrcp.pop %v2881
        %v2892 = vmul.f32 1.0, %v2891
        %v2893 = vlaneseq
        %v2894 = vshrl.u32 %v2893, 7
        %v2895 = vsub.s32 0, %v2894
        %v2896 = vrot.slane %v2886, %v2895
        %v2897 = vlaneseq
        %v2898 = vshrl.u32 %v2897, 7
        %v2899 = vsub.s32 0, %v2898
        %v2900 = vrot.slane %v2888, %v2899
        %v2901 = vlaneseq
        %v2902 = vshrl.u32 %v2901, 7
        %v2903 = vsub.s32 0, %v2902
        %v2904 = vrot.slane %v2890, %v2903
        %v2905 = vlaneseq
        %v2906 = vshrl.u32 %v2905, 7
        %v2907 = vsub.s32 0, %v2906
        %v2908 = vrot.slane %v2892, %v2907
        %v2909 = vmul.f32 %v2869, %v2896
        %v2910 = vmul.f32 %v2870, %v2896
        %v2911 = vmul.f32 %v2871, %v2896
        %v2912 = vmul.f32 %v2872, %v2896
        %v2913 = vmul.f32 %v2873, %v2900
        %v2914 = vmul.f32 %v2874, %v2900
        %v2915 = vmul.f32 %v2875, %v2900
        %v2916 = vmul.f32 %v2876, %v2900
        %v2917 = vmul.f32 %v2877, %v2904
        %v2918 = vmul.f32 %v2878, %v2904
        %v2919 = vmul.f32 %v2879, %v2904
        %v2920 = vmul.f32 %v2880, %v2904
        %v2921 = vmul.f32 %v2881, %v2908
        %v2922 = vmul.f32 %v2882, %v2908
        %v2923 = vmul.f32 %v2883, %v2908
        %v2924 = vmul.f32 %v2884, %v2908
        %vm2925 = vcmp.eq.s32.totalorder %v2868, 0
        %v2926 = vsub.f32 %v2869, 1.0
        %v2927 = vsub.f32 %v2873, 1.0
        %v2928 = vsub.f32 %v2877, 1.0
        %v2929 = vsub.f32 %v2881, 1.0
        %v2930 = vsel %vm2925, 1, 0
        %vm2931 = vcmp.eq.s32.totalorder %v2930, 1
        %2933 = vset.pattern.permute.xlu0 0
        %2934 = vperm.xlu0 %2933, %v2926
        %v2935 = vpop.permute.xlu0 %2934
        %2938 = vset.pattern.permute.xlu0 0
        %2939 = vperm.xlu0 %2938, %v2927
        %v2940 = vpop.permute.xlu0 %2939
        %2943 = vset.pattern.permute.xlu0 0
        %2944 = vperm.xlu0 %2943, %v2928
        %v2945 = vpop.permute.xlu0 %2944
        %2948 = vset.pattern.permute.xlu0 0
        %2949 = vperm.xlu0 %2948, %v2929
        %v2950 = vpop.permute.xlu0 %2949
        %v2952 = vsel %vm2931, %v2935, %v2869
        %v2953 = vsel %vm2931, %v2940, %v2873
        %v2954 = vsel %vm2931, %v2945, %v2877
        %v2955 = vsel %vm2931, %v2950, %v2881
        %2957 = vset.pattern.permute.xlu0 0
        %2958 = vperm.xlu0 %2957, %v2909
        %v2959 = vpop.permute.xlu0 %2958
        %2962 = vset.pattern.permute.xlu0 0
        %2963 = vperm.xlu0 %2962, %v2910
        %v2964 = vpop.permute.xlu0 %2963
        %2967 = vset.pattern.permute.xlu0 0
        %2968 = vperm.xlu0 %2967, %v2911
        %v2969 = vpop.permute.xlu0 %2968
        %2972 = vset.pattern.permute.xlu0 0
        %2973 = vperm.xlu0 %2972, %v2912
        %v2974 = vpop.permute.xlu0 %2973
        %2977 = vset.pattern.permute.xlu0 0
        %2978 = vperm.xlu0 %2977, %v2913
        %v2979 = vpop.permute.xlu0 %2978
        %2982 = vset.pattern.permute.xlu0 0
        %2983 = vperm.xlu0 %2982, %v2914
        %v2984 = vpop.permute.xlu0 %2983
        %2987 = vset.pattern.permute.xlu0 0
        %2988 = vperm.xlu0 %2987, %v2915
        %v2989 = vpop.permute.xlu0 %2988
        %2992 = vset.pattern.permute.xlu0 0
        %2993 = vperm.xlu0 %2992, %v2916
        %v2994 = vpop.permute.xlu0 %2993
        %2997 = vset.pattern.permute.xlu0 0
        %2998 = vperm.xlu0 %2997, %v2917
        %v2999 = vpop.permute.xlu0 %2998
        %3002 = vset.pattern.permute.xlu0 0
        %3003 = vperm.xlu0 %3002, %v2918
        %v3004 = vpop.permute.xlu0 %3003
        %3007 = vset.pattern.permute.xlu0 0
        %3008 = vperm.xlu0 %3007, %v2919
        %v3009 = vpop.permute.xlu0 %3008
        %3012 = vset.pattern.permute.xlu0 0
        %3013 = vperm.xlu0 %3012, %v2920
        %v3014 = vpop.permute.xlu0 %3013
        %3017 = vset.pattern.permute.xlu0 0
        %3018 = vperm.xlu0 %3017, %v2921
        %v3019 = vpop.permute.xlu0 %3018
        %3022 = vset.pattern.permute.xlu0 0
        %3023 = vperm.xlu0 %3022, %v2922
        %v3024 = vpop.permute.xlu0 %3023
        %3027 = vset.pattern.permute.xlu0 0
        %3028 = vperm.xlu0 %3027, %v2923
        %v3029 = vpop.permute.xlu0 %3028
        %3032 = vset.pattern.permute.xlu0 0
        %3033 = vperm.xlu0 %3032, %v2924
        %v3034 = vpop.permute.xlu0 %3033
        %v3036 = vlaneseq
        %v3037 = vshrl.u32 %v3036, 7
        %v3038 = vsub.s32 0, %v3037
        %v3039 = vrot.slane %v2952, %v3038
        %v3040 = vlaneseq
        %v3041 = vshrl.u32 %v3040, 7
        %v3042 = vsub.s32 0, %v3041
        %v3043 = vrot.slane %v2953, %v3042
        %v3044 = vlaneseq
        %v3045 = vshrl.u32 %v3044, 7
        %v3046 = vsub.s32 0, %v3045
        %v3047 = vrot.slane %v2954, %v3046
        %v3048 = vlaneseq
        %v3049 = vshrl.u32 %v3048, 7
        %v3050 = vsub.s32 0, %v3049
        %v3051 = vrot.slane %v2955, %v3050
        %v3052 = vmul.f32 %v2959, %v3039
        %v3053 = vmul.f32 %v2964, %v3039
        %v3054 = vmul.f32 %v2969, %v3039
        %v3055 = vmul.f32 %v2974, %v3039
        %v3056 = vmul.f32 %v2979, %v3043
        %v3057 = vmul.f32 %v2984, %v3043
        %v3058 = vmul.f32 %v2989, %v3043
        %v3059 = vmul.f32 %v2994, %v3043
        %v3060 = vmul.f32 %v2999, %v3047
        %v3061 = vmul.f32 %v3004, %v3047
        %v3062 = vmul.f32 %v3009, %v3047
        %v3063 = vmul.f32 %v3014, %v3047
        %v3064 = vmul.f32 %v3019, %v3051
        %v3065 = vmul.f32 %v3024, %v3051
        %v3066 = vmul.f32 %v3029, %v3051
        %v3067 = vmul.f32 %v3034, %v3051
        %v3068 = vsub.f32 %v2869, %v3052
        %v3069 = vsub.f32 %v2870, %v3053
        %v3070 = vsub.f32 %v2871, %v3054
        %v3071 = vsub.f32 %v2872, %v3055
        %v3072 = vsub.f32 %v2873, %v3056
        %v3073 = vsub.f32 %v2874, %v3057
        %v3074 = vsub.f32 %v2875, %v3058
        %v3075 = vsub.f32 %v2876, %v3059
        %v3076 = vsub.f32 %v2877, %v3060
        %v3077 = vsub.f32 %v2878, %v3061
        %v3078 = vsub.f32 %v2879, %v3062
        %v3079 = vsub.f32 %v2880, %v3063
        %v3080 = vsub.f32 %v2881, %v3064
        %v3081 = vsub.f32 %v2882, %v3065
        %v3082 = vsub.f32 %v2883, %v3066
        %v3083 = vsub.f32 %v2884, %v3067
        %v3084 = vrcp.pop %v3068
        %v3085 = vmul.f32 1.0, %v3084
        %v3086 = vrcp.pop %v3072
        %v3087 = vmul.f32 1.0, %v3086
        %v3088 = vrcp.pop %v3076
        %v3089 = vmul.f32 1.0, %v3088
        %v3090 = vrcp.pop %v3080
        %v3091 = vmul.f32 1.0, %v3090
        %v3092 = vlaneseq
        %v3093 = vshrl.u32 %v3092, 7
        %v3094 = vsub.s32 1, %v3093
        %v3095 = vrot.slane %v3085, %v3094
        %v3096 = vlaneseq
        %v3097 = vshrl.u32 %v3096, 7
        %v3098 = vsub.s32 1, %v3097
        %v3099 = vrot.slane %v3087, %v3098
        %v3100 = vlaneseq
        %v3101 = vshrl.u32 %v3100, 7
        %v3102 = vsub.s32 1, %v3101
        %v3103 = vrot.slane %v3089, %v3102
        %v3104 = vlaneseq
        %v3105 = vshrl.u32 %v3104, 7
        %v3106 = vsub.s32 1, %v3105
        %v3107 = vrot.slane %v3091, %v3106
        %v3108 = vmul.f32 %v3068, %v3095
        %v3109 = vmul.f32 %v3069, %v3095
        %v3110 = vmul.f32 %v3070, %v3095
        %v3111 = vmul.f32 %v3071, %v3095
        %v3112 = vmul.f32 %v3072, %v3099
        %v3113 = vmul.f32 %v3073, %v3099
        %v3114 = vmul.f32 %v3074, %v3099
        %v3115 = vmul.f32 %v3075, %v3099
        %v3116 = vmul.f32 %v3076, %v3103
        %v3117 = vmul.f32 %v3077, %v3103
        %v3118 = vmul.f32 %v3078, %v3103
        %v3119 = vmul.f32 %v3079, %v3103
        %v3120 = vmul.f32 %v3080, %v3107
        %v3121 = vmul.f32 %v3081, %v3107
        %v3122 = vmul.f32 %v3082, %v3107
        %v3123 = vmul.f32 %v3083, %v3107
        %vm3124 = vcmp.eq.s32.totalorder %v2868, 1
        %v3125 = vsub.f32 %v3068, 1.0
        %v3126 = vsub.f32 %v3072, 1.0
        %v3127 = vsub.f32 %v3076, 1.0
        %v3128 = vsub.f32 %v3080, 1.0
        %v3129 = vsel %vm3124, 1, 0
        %vm3130 = vcmp.eq.s32.totalorder %v3129, 1
        %3132 = vset.pattern.permute.xlu0 1
        %3133 = vperm.xlu0 %3132, %v3125
        %v3134 = vpop.permute.xlu0 %3133
        %3137 = vset.pattern.permute.xlu0 1
        %3138 = vperm.xlu0 %3137, %v3126
        %v3139 = vpop.permute.xlu0 %3138
        %3142 = vset.pattern.permute.xlu0 1
        %3143 = vperm.xlu0 %3142, %v3127
        %v3144 = vpop.permute.xlu0 %3143
        %3147 = vset.pattern.permute.xlu0 1
        %3148 = vperm.xlu0 %3147, %v3128
        %v3149 = vpop.permute.xlu0 %3148
        %v3151 = vsel %vm3130, %v3134, %v3068
        %v3152 = vsel %vm3130, %v3139, %v3072
        %v3153 = vsel %vm3130, %v3144, %v3076
        %v3154 = vsel %vm3130, %v3149, %v3080
        %3156 = vset.pattern.permute.xlu0 1
        %3157 = vperm.xlu0 %3156, %v3108
        %v3158 = vpop.permute.xlu0 %3157
        %3161 = vset.pattern.permute.xlu0 1
        %3162 = vperm.xlu0 %3161, %v3109
        %v3163 = vpop.permute.xlu0 %3162
        %3166 = vset.pattern.permute.xlu0 1
        %3167 = vperm.xlu0 %3166, %v3110
        %v3168 = vpop.permute.xlu0 %3167
        %3171 = vset.pattern.permute.xlu0 1
        %3172 = vperm.xlu0 %3171, %v3111
        %v3173 = vpop.permute.xlu0 %3172
        %3176 = vset.pattern.permute.xlu0 1
        %3177 = vperm.xlu0 %3176, %v3112
        %v3178 = vpop.permute.xlu0 %3177
        %3181 = vset.pattern.permute.xlu0 1
        %3182 = vperm.xlu0 %3181, %v3113
        %v3183 = vpop.permute.xlu0 %3182
        %3186 = vset.pattern.permute.xlu0 1
        %3187 = vperm.xlu0 %3186, %v3114
        %v3188 = vpop.permute.xlu0 %3187
        %3191 = vset.pattern.permute.xlu0 1
        %3192 = vperm.xlu0 %3191, %v3115
        %v3193 = vpop.permute.xlu0 %3192
        %3196 = vset.pattern.permute.xlu0 1
        %3197 = vperm.xlu0 %3196, %v3116
        %v3198 = vpop.permute.xlu0 %3197
        %3201 = vset.pattern.permute.xlu0 1
        %3202 = vperm.xlu0 %3201, %v3117
        %v3203 = vpop.permute.xlu0 %3202
        %3206 = vset.pattern.permute.xlu0 1
        %3207 = vperm.xlu0 %3206, %v3118
        %v3208 = vpop.permute.xlu0 %3207
        %3211 = vset.pattern.permute.xlu0 1
        %3212 = vperm.xlu0 %3211, %v3119
        %v3213 = vpop.permute.xlu0 %3212
        %3216 = vset.pattern.permute.xlu0 1
        %3217 = vperm.xlu0 %3216, %v3120
        %v3218 = vpop.permute.xlu0 %3217
        %3221 = vset.pattern.permute.xlu0 1
        %3222 = vperm.xlu0 %3221, %v3121
        %v3223 = vpop.permute.xlu0 %3222
        %3226 = vset.pattern.permute.xlu0 1
        %3227 = vperm.xlu0 %3226, %v3122
        %v3228 = vpop.permute.xlu0 %3227
        %3231 = vset.pattern.permute.xlu0 1
        %3232 = vperm.xlu0 %3231, %v3123
        %v3233 = vpop.permute.xlu0 %3232
        %v3235 = vlaneseq
        %v3236 = vshrl.u32 %v3235, 7
        %v3237 = vsub.s32 1, %v3236
        %v3238 = vrot.slane %v3151, %v3237
        %v3239 = vlaneseq
        %v3240 = vshrl.u32 %v3239, 7
        %v3241 = vsub.s32 1, %v3240
        %v3242 = vrot.slane %v3152, %v3241
        %v3243 = vlaneseq
        %v3244 = vshrl.u32 %v3243, 7
        %v3245 = vsub.s32 1, %v3244
        %v3246 = vrot.slane %v3153, %v3245
        %v3247 = vlaneseq
        %v3248 = vshrl.u32 %v3247, 7
        %v3249 = vsub.s32 1, %v3248
        %v3250 = vrot.slane %v3154, %v3249
        %v3251 = vmul.f32 %v3158, %v3238
        %v3252 = vmul.f32 %v3163, %v3238
        %v3253 = vmul.f32 %v3168, %v3238
        %v3254 = vmul.f32 %v3173, %v3238
        %v3255 = vmul.f32 %v3178, %v3242
        %v3256 = vmul.f32 %v3183, %v3242
        %v3257 = vmul.f32 %v3188, %v3242
        %v3258 = vmul.f32 %v3193, %v3242
        %v3259 = vmul.f32 %v3198, %v3246
        %v3260 = vmul.f32 %v3203, %v3246
        %v3261 = vmul.f32 %v3208, %v3246
        %v3262 = vmul.f32 %v3213, %v3246
        %v3263 = vmul.f32 %v3218, %v3250
        %v3264 = vmul.f32 %v3223, %v3250
        %v3265 = vmul.f32 %v3228, %v3250
        %v3266 = vmul.f32 %v3233, %v3250
        %v3267 = vsub.f32 %v3068, %v3251
        %v3268 = vsub.f32 %v3069, %v3252
        %v3269 = vsub.f32 %v3070, %v3253
        %v3270 = vsub.f32 %v3071, %v3254
        %v3271 = vsub.f32 %v3072, %v3255
        %v3272 = vsub.f32 %v3073, %v3256
        %v3273 = vsub.f32 %v3074, %v3257
        %v3274 = vsub.f32 %v3075, %v3258
        %v3275 = vsub.f32 %v3076, %v3259
        %v3276 = vsub.f32 %v3077, %v3260
        %v3277 = vsub.f32 %v3078, %v3261
        %v3278 = vsub.f32 %v3079, %v3262
        %v3279 = vsub.f32 %v3080, %v3263
        %v3280 = vsub.f32 %v3081, %v3264
        %v3281 = vsub.f32 %v3082, %v3265
        %v3282 = vsub.f32 %v3083, %v3266
        %v3283 = vrcp.pop %v3267
        %v3284 = vmul.f32 1.0, %v3283
        %v3285 = vrcp.pop %v3271
        %v3286 = vmul.f32 1.0, %v3285
        %v3287 = vrcp.pop %v3275
        %v3288 = vmul.f32 1.0, %v3287
        %v3289 = vrcp.pop %v3279
        %v3290 = vmul.f32 1.0, %v3289
        %v3291 = vlaneseq
        %v3292 = vshrl.u32 %v3291, 7
        %v3293 = vsub.s32 2, %v3292
        %v3294 = vrot.slane %v3284, %v3293
        %v3295 = vlaneseq
        %v3296 = vshrl.u32 %v3295, 7
        %v3297 = vsub.s32 2, %v3296
        %v3298 = vrot.slane %v3286, %v3297
        %v3299 = vlaneseq
        %v3300 = vshrl.u32 %v3299, 7
        %v3301 = vsub.s32 2, %v3300
        %v3302 = vrot.slane %v3288, %v3301
        %v3303 = vlaneseq
        %v3304 = vshrl.u32 %v3303, 7
        %v3305 = vsub.s32 2, %v3304
        %v3306 = vrot.slane %v3290, %v3305
        %v3307 = vmul.f32 %v3267, %v3294
        %v3308 = vmul.f32 %v3268, %v3294
        %v3309 = vmul.f32 %v3269, %v3294
        %v3310 = vmul.f32 %v3270, %v3294
        %v3311 = vmul.f32 %v3271, %v3298
        %v3312 = vmul.f32 %v3272, %v3298
        %v3313 = vmul.f32 %v3273, %v3298
        %v3314 = vmul.f32 %v3274, %v3298
        %v3315 = vmul.f32 %v3275, %v3302
        %v3316 = vmul.f32 %v3276, %v3302
        %v3317 = vmul.f32 %v3277, %v3302
        %v3318 = vmul.f32 %v3278, %v3302
        %v3319 = vmul.f32 %v3279, %v3306
        %v3320 = vmul.f32 %v3280, %v3306
        %v3321 = vmul.f32 %v3281, %v3306
        %v3322 = vmul.f32 %v3282, %v3306
        %vm3323 = vcmp.eq.s32.totalorder %v2868, 2
        %v3324 = vsub.f32 %v3267, 1.0
        %v3325 = vsub.f32 %v3271, 1.0
        %v3326 = vsub.f32 %v3275, 1.0
        %v3327 = vsub.f32 %v3279, 1.0
        %v3328 = vsel %vm3323, 1, 0
        %vm3329 = vcmp.eq.s32.totalorder %v3328, 1
        %3331 = vset.pattern.permute.xlu0 2
        %3332 = vperm.xlu0 %3331, %v3324
        %v3333 = vpop.permute.xlu0 %3332
        %3336 = vset.pattern.permute.xlu0 2
        %3337 = vperm.xlu0 %3336, %v3325
        %v3338 = vpop.permute.xlu0 %3337
        %3341 = vset.pattern.permute.xlu0 2
        %3342 = vperm.xlu0 %3341, %v3326
        %v3343 = vpop.permute.xlu0 %3342
        %3346 = vset.pattern.permute.xlu0 2
        %3347 = vperm.xlu0 %3346, %v3327
        %v3348 = vpop.permute.xlu0 %3347
        %v3350 = vsel %vm3329, %v3333, %v3267
        %v3351 = vsel %vm3329, %v3338, %v3271
        %v3352 = vsel %vm3329, %v3343, %v3275
        %v3353 = vsel %vm3329, %v3348, %v3279
        %3355 = vset.pattern.permute.xlu0 2
        %3356 = vperm.xlu0 %3355, %v3307
        %v3357 = vpop.permute.xlu0 %3356
        %3360 = vset.pattern.permute.xlu0 2
        %3361 = vperm.xlu0 %3360, %v3308
        %v3362 = vpop.permute.xlu0 %3361
        %3365 = vset.pattern.permute.xlu0 2
        %3366 = vperm.xlu0 %3365, %v3309
        %v3367 = vpop.permute.xlu0 %3366
        %3370 = vset.pattern.permute.xlu0 2
        %3371 = vperm.xlu0 %3370, %v3310
        %v3372 = vpop.permute.xlu0 %3371
        %3375 = vset.pattern.permute.xlu0 2
        %3376 = vperm.xlu0 %3375, %v3311
        %v3377 = vpop.permute.xlu0 %3376
        %3380 = vset.pattern.permute.xlu0 2
        %3381 = vperm.xlu0 %3380, %v3312
        %v3382 = vpop.permute.xlu0 %3381
        %3385 = vset.pattern.permute.xlu0 2
        %3386 = vperm.xlu0 %3385, %v3313
        %v3387 = vpop.permute.xlu0 %3386
        %3390 = vset.pattern.permute.xlu0 2
        %3391 = vperm.xlu0 %3390, %v3314
        %v3392 = vpop.permute.xlu0 %3391
        %3395 = vset.pattern.permute.xlu0 2
        %3396 = vperm.xlu0 %3395, %v3315
        %v3397 = vpop.permute.xlu0 %3396
        %3400 = vset.pattern.permute.xlu0 2
        %3401 = vperm.xlu0 %3400, %v3316
        %v3402 = vpop.permute.xlu0 %3401
        %3405 = vset.pattern.permute.xlu0 2
        %3406 = vperm.xlu0 %3405, %v3317
        %v3407 = vpop.permute.xlu0 %3406
        %3410 = vset.pattern.permute.xlu0 2
        %3411 = vperm.xlu0 %3410, %v3318
        %v3412 = vpop.permute.xlu0 %3411
        %3415 = vset.pattern.permute.xlu0 2
        %3416 = vperm.xlu0 %3415, %v3319
        %v3417 = vpop.permute.xlu0 %3416
        %3420 = vset.pattern.permute.xlu0 2
        %3421 = vperm.xlu0 %3420, %v3320
        %v3422 = vpop.permute.xlu0 %3421
        %3425 = vset.pattern.permute.xlu0 2
        %3426 = vperm.xlu0 %3425, %v3321
        %v3427 = vpop.permute.xlu0 %3426
        %3430 = vset.pattern.permute.xlu0 2
        %3431 = vperm.xlu0 %3430, %v3322
        %v3432 = vpop.permute.xlu0 %3431
        %v3434 = vlaneseq
        %v3435 = vshrl.u32 %v3434, 7
        %v3436 = vsub.s32 2, %v3435
        %v3437 = vrot.slane %v3350, %v3436
        %v3438 = vlaneseq
        %v3439 = vshrl.u32 %v3438, 7
        %v3440 = vsub.s32 2, %v3439
        %v3441 = vrot.slane %v3351, %v3440
        %v3442 = vlaneseq
        %v3443 = vshrl.u32 %v3442, 7
        %v3444 = vsub.s32 2, %v3443
        %v3445 = vrot.slane %v3352, %v3444
        %v3446 = vlaneseq
        %v3447 = vshrl.u32 %v3446, 7
        %v3448 = vsub.s32 2, %v3447
        %v3449 = vrot.slane %v3353, %v3448
        %v3450 = vmul.f32 %v3357, %v3437
        %v3451 = vmul.f32 %v3362, %v3437
        %v3452 = vmul.f32 %v3367, %v3437
        %v3453 = vmul.f32 %v3372, %v3437
        %v3454 = vmul.f32 %v3377, %v3441
        %v3455 = vmul.f32 %v3382, %v3441
        %v3456 = vmul.f32 %v3387, %v3441
        %v3457 = vmul.f32 %v3392, %v3441
        %v3458 = vmul.f32 %v3397, %v3445
        %v3459 = vmul.f32 %v3402, %v3445
        %v3460 = vmul.f32 %v3407, %v3445
        %v3461 = vmul.f32 %v3412, %v3445
        %v3462 = vmul.f32 %v3417, %v3449
        %v3463 = vmul.f32 %v3422, %v3449
        %v3464 = vmul.f32 %v3427, %v3449
        %v3465 = vmul.f32 %v3432, %v3449
        %v3466 = vsub.f32 %v3267, %v3450
        %v3467 = vsub.f32 %v3268, %v3451
        %v3468 = vsub.f32 %v3269, %v3452
        %v3469 = vsub.f32 %v3270, %v3453
        %v3470 = vsub.f32 %v3271, %v3454
        %v3471 = vsub.f32 %v3272, %v3455
        %v3472 = vsub.f32 %v3273, %v3456
        %v3473 = vsub.f32 %v3274, %v3457
        %v3474 = vsub.f32 %v3275, %v3458
        %v3475 = vsub.f32 %v3276, %v3459
        %v3476 = vsub.f32 %v3277, %v3460
        %v3477 = vsub.f32 %v3278, %v3461
        %v3478 = vsub.f32 %v3279, %v3462
        %v3479 = vsub.f32 %v3280, %v3463
        %v3480 = vsub.f32 %v3281, %v3464
        %v3481 = vsub.f32 %v3282, %v3465
        %v3482 = vrcp.pop %v3466
        %v3483 = vmul.f32 1.0, %v3482
        %v3484 = vrcp.pop %v3470
        %v3485 = vmul.f32 1.0, %v3484
        %v3486 = vrcp.pop %v3474
        %v3487 = vmul.f32 1.0, %v3486
        %v3488 = vrcp.pop %v3478
        %v3489 = vmul.f32 1.0, %v3488
        %v3490 = vlaneseq
        %v3491 = vshrl.u32 %v3490, 7
        %v3492 = vsub.s32 3, %v3491
        %v3493 = vrot.slane %v3483, %v3492
        %v3494 = vlaneseq
        %v3495 = vshrl.u32 %v3494, 7
        %v3496 = vsub.s32 3, %v3495
        %v3497 = vrot.slane %v3485, %v3496
        %v3498 = vlaneseq
        %v3499 = vshrl.u32 %v3498, 7
        %v3500 = vsub.s32 3, %v3499
        %v3501 = vrot.slane %v3487, %v3500
        %v3502 = vlaneseq
        %v3503 = vshrl.u32 %v3502, 7
        %v3504 = vsub.s32 3, %v3503
        %v3505 = vrot.slane %v3489, %v3504
        %v3506 = vmul.f32 %v3466, %v3493
        %v3507 = vmul.f32 %v3467, %v3493
        %v3508 = vmul.f32 %v3468, %v3493
        %v3509 = vmul.f32 %v3469, %v3493
        %v3510 = vmul.f32 %v3470, %v3497
        %v3511 = vmul.f32 %v3471, %v3497
        %v3512 = vmul.f32 %v3472, %v3497
        %v3513 = vmul.f32 %v3473, %v3497
        %v3514 = vmul.f32 %v3474, %v3501
        %v3515 = vmul.f32 %v3475, %v3501
        %v3516 = vmul.f32 %v3476, %v3501
        %v3517 = vmul.f32 %v3477, %v3501
        %v3518 = vmul.f32 %v3478, %v3505
        %v3519 = vmul.f32 %v3479, %v3505
        %v3520 = vmul.f32 %v3480, %v3505
        %v3521 = vmul.f32 %v3481, %v3505
        %vm3522 = vcmp.eq.s32.totalorder %v2868, 3
        %v3523 = vsub.f32 %v3466, 1.0
        %v3524 = vsub.f32 %v3470, 1.0
        %v3525 = vsub.f32 %v3474, 1.0
        %v3526 = vsub.f32 %v3478, 1.0
        %v3527 = vsel %vm3522, 1, 0
        %vm3528 = vcmp.eq.s32.totalorder %v3527, 1
        %3530 = vset.pattern.permute.xlu0 3
        %3531 = vperm.xlu0 %3530, %v3523
        %v3532 = vpop.permute.xlu0 %3531
        %3535 = vset.pattern.permute.xlu0 3
        %3536 = vperm.xlu0 %3535, %v3524
        %v3537 = vpop.permute.xlu0 %3536
        %3540 = vset.pattern.permute.xlu0 3
        %3541 = vperm.xlu0 %3540, %v3525
        %v3542 = vpop.permute.xlu0 %3541
        %3545 = vset.pattern.permute.xlu0 3
        %3546 = vperm.xlu0 %3545, %v3526
        %v3547 = vpop.permute.xlu0 %3546
        %v3549 = vsel %vm3528, %v3532, %v3466
        %v3550 = vsel %vm3528, %v3537, %v3470
        %v3551 = vsel %vm3528, %v3542, %v3474
        %v3552 = vsel %vm3528, %v3547, %v3478
        %3554 = vset.pattern.permute.xlu0 3
        %3555 = vperm.xlu0 %3554, %v3506
        %v3556 = vpop.permute.xlu0 %3555
        %3559 = vset.pattern.permute.xlu0 3
        %3560 = vperm.xlu0 %3559, %v3507
        %v3561 = vpop.permute.xlu0 %3560
        %3564 = vset.pattern.permute.xlu0 3
        %3565 = vperm.xlu0 %3564, %v3508
        %v3566 = vpop.permute.xlu0 %3565
        %3569 = vset.pattern.permute.xlu0 3
        %3570 = vperm.xlu0 %3569, %v3509
        %v3571 = vpop.permute.xlu0 %3570
        %3574 = vset.pattern.permute.xlu0 3
        %3575 = vperm.xlu0 %3574, %v3510
        %v3576 = vpop.permute.xlu0 %3575
        %3579 = vset.pattern.permute.xlu0 3
        %3580 = vperm.xlu0 %3579, %v3511
        %v3581 = vpop.permute.xlu0 %3580
        %3584 = vset.pattern.permute.xlu0 3
        %3585 = vperm.xlu0 %3584, %v3512
        %v3586 = vpop.permute.xlu0 %3585
        %3589 = vset.pattern.permute.xlu0 3
        %3590 = vperm.xlu0 %3589, %v3513
        %v3591 = vpop.permute.xlu0 %3590
        %3594 = vset.pattern.permute.xlu0 3
        %3595 = vperm.xlu0 %3594, %v3514
        %v3596 = vpop.permute.xlu0 %3595
        %3599 = vset.pattern.permute.xlu0 3
        %3600 = vperm.xlu0 %3599, %v3515
        %v3601 = vpop.permute.xlu0 %3600
        %3604 = vset.pattern.permute.xlu0 3
        %3605 = vperm.xlu0 %3604, %v3516
        %v3606 = vpop.permute.xlu0 %3605
        %3609 = vset.pattern.permute.xlu0 3
        %3610 = vperm.xlu0 %3609, %v3517
        %v3611 = vpop.permute.xlu0 %3610
        %3614 = vset.pattern.permute.xlu0 3
        %3615 = vperm.xlu0 %3614, %v3518
        %v3616 = vpop.permute.xlu0 %3615
        %3619 = vset.pattern.permute.xlu0 3
        %3620 = vperm.xlu0 %3619, %v3519
        %v3621 = vpop.permute.xlu0 %3620
        %3624 = vset.pattern.permute.xlu0 3
        %3625 = vperm.xlu0 %3624, %v3520
        %v3626 = vpop.permute.xlu0 %3625
        %3629 = vset.pattern.permute.xlu0 3
        %3630 = vperm.xlu0 %3629, %v3521
        %v3631 = vpop.permute.xlu0 %3630
        %v3633 = vlaneseq
        %v3634 = vshrl.u32 %v3633, 7
        %v3635 = vsub.s32 3, %v3634
        %v3636 = vrot.slane %v3549, %v3635
        %v3637 = vlaneseq
        %v3638 = vshrl.u32 %v3637, 7
        %v3639 = vsub.s32 3, %v3638
        %v3640 = vrot.slane %v3550, %v3639
        %v3641 = vlaneseq
        %v3642 = vshrl.u32 %v3641, 7
        %v3643 = vsub.s32 3, %v3642
        %v3644 = vrot.slane %v3551, %v3643
        %v3645 = vlaneseq
        %v3646 = vshrl.u32 %v3645, 7
        %v3647 = vsub.s32 3, %v3646
        %v3648 = vrot.slane %v3552, %v3647
        %v3649 = vmul.f32 %v3556, %v3636
        %v3650 = vmul.f32 %v3561, %v3636
        %v3651 = vmul.f32 %v3566, %v3636
        %v3652 = vmul.f32 %v3571, %v3636
        %v3653 = vmul.f32 %v3576, %v3640
        %v3654 = vmul.f32 %v3581, %v3640
        %v3655 = vmul.f32 %v3586, %v3640
        %v3656 = vmul.f32 %v3591, %v3640
        %v3657 = vmul.f32 %v3596, %v3644
        %v3658 = vmul.f32 %v3601, %v3644
        %v3659 = vmul.f32 %v3606, %v3644
        %v3660 = vmul.f32 %v3611, %v3644
        %v3661 = vmul.f32 %v3616, %v3648
        %v3662 = vmul.f32 %v3621, %v3648
        %v3663 = vmul.f32 %v3626, %v3648
        %v3664 = vmul.f32 %v3631, %v3648
        %v3665 = vsub.f32 %v3466, %v3649
        %v3666 = vsub.f32 %v3467, %v3650
        %v3667 = vsub.f32 %v3468, %v3651
        %v3668 = vsub.f32 %v3469, %v3652
        %v3669 = vsub.f32 %v3470, %v3653
        %v3670 = vsub.f32 %v3471, %v3654
        %v3671 = vsub.f32 %v3472, %v3655
        %v3672 = vsub.f32 %v3473, %v3656
        %v3673 = vsub.f32 %v3474, %v3657
        %v3674 = vsub.f32 %v3475, %v3658
        %v3675 = vsub.f32 %v3476, %v3659
        %v3676 = vsub.f32 %v3477, %v3660
        %v3677 = vsub.f32 %v3478, %v3661
        %v3678 = vsub.f32 %v3479, %v3662
        %v3679 = vsub.f32 %v3480, %v3663
        %v3680 = vsub.f32 %v3481, %v3664
        %v3681 = vrcp.pop %v3665
        %v3682 = vmul.f32 1.0, %v3681
        %v3683 = vrcp.pop %v3669
        %v3684 = vmul.f32 1.0, %v3683
        %v3685 = vrcp.pop %v3673
        %v3686 = vmul.f32 1.0, %v3685
        %v3687 = vrcp.pop %v3677
        %v3688 = vmul.f32 1.0, %v3687
        %v3689 = vlaneseq
        %v3690 = vshrl.u32 %v3689, 7
        %v3691 = vsub.s32 4, %v3690
        %v3692 = vrot.slane %v3682, %v3691
        %v3693 = vlaneseq
        %v3694 = vshrl.u32 %v3693, 7
        %v3695 = vsub.s32 4, %v3694
        %v3696 = vrot.slane %v3684, %v3695
        %v3697 = vlaneseq
        %v3698 = vshrl.u32 %v3697, 7
        %v3699 = vsub.s32 4, %v3698
        %v3700 = vrot.slane %v3686, %v3699
        %v3701 = vlaneseq
        %v3702 = vshrl.u32 %v3701, 7
        %v3703 = vsub.s32 4, %v3702
        %v3704 = vrot.slane %v3688, %v3703
        %v3705 = vmul.f32 %v3665, %v3692
        %v3706 = vmul.f32 %v3666, %v3692
        %v3707 = vmul.f32 %v3667, %v3692
        %v3708 = vmul.f32 %v3668, %v3692
        %v3709 = vmul.f32 %v3669, %v3696
        %v3710 = vmul.f32 %v3670, %v3696
        %v3711 = vmul.f32 %v3671, %v3696
        %v3712 = vmul.f32 %v3672, %v3696
        %v3713 = vmul.f32 %v3673, %v3700
        %v3714 = vmul.f32 %v3674, %v3700
        %v3715 = vmul.f32 %v3675, %v3700
        %v3716 = vmul.f32 %v3676, %v3700
        %v3717 = vmul.f32 %v3677, %v3704
        %v3718 = vmul.f32 %v3678, %v3704
        %v3719 = vmul.f32 %v3679, %v3704
        %v3720 = vmul.f32 %v3680, %v3704
        %vm3721 = vcmp.eq.s32.totalorder %v2868, 4
        %v3722 = vsub.f32 %v3665, 1.0
        %v3723 = vsub.f32 %v3669, 1.0
        %v3724 = vsub.f32 %v3673, 1.0
        %v3725 = vsub.f32 %v3677, 1.0
        %v3726 = vsel %vm3721, 1, 0
        %vm3727 = vcmp.eq.s32.totalorder %v3726, 1
        %3729 = vset.pattern.permute.xlu0 4
        %3730 = vperm.xlu0 %3729, %v3722
        %v3731 = vpop.permute.xlu0 %3730
        %3734 = vset.pattern.permute.xlu0 4
        %3735 = vperm.xlu0 %3734, %v3723
        %v3736 = vpop.permute.xlu0 %3735
        %3739 = vset.pattern.permute.xlu0 4
        %3740 = vperm.xlu0 %3739, %v3724
        %v3741 = vpop.permute.xlu0 %3740
        %3744 = vset.pattern.permute.xlu0 4
        %3745 = vperm.xlu0 %3744, %v3725
        %v3746 = vpop.permute.xlu0 %3745
        %v3748 = vsel %vm3727, %v3731, %v3665
        %v3749 = vsel %vm3727, %v3736, %v3669
        %v3750 = vsel %vm3727, %v3741, %v3673
        %v3751 = vsel %vm3727, %v3746, %v3677
        %3753 = vset.pattern.permute.xlu0 4
        %3754 = vperm.xlu0 %3753, %v3705
        %v3755 = vpop.permute.xlu0 %3754
        %3758 = vset.pattern.permute.xlu0 4
        %3759 = vperm.xlu0 %3758, %v3706
        %v3760 = vpop.permute.xlu0 %3759
        %3763 = vset.pattern.permute.xlu0 4
        %3764 = vperm.xlu0 %3763, %v3707
        %v3765 = vpop.permute.xlu0 %3764
        %3768 = vset.pattern.permute.xlu0 4
        %3769 = vperm.xlu0 %3768, %v3708
        %v3770 = vpop.permute.xlu0 %3769
        %3773 = vset.pattern.permute.xlu0 4
        %3774 = vperm.xlu0 %3773, %v3709
        %v3775 = vpop.permute.xlu0 %3774
        %3778 = vset.pattern.permute.xlu0 4
        %3779 = vperm.xlu0 %3778, %v3710
        %v3780 = vpop.permute.xlu0 %3779
        %3783 = vset.pattern.permute.xlu0 4
        %3784 = vperm.xlu0 %3783, %v3711
        %v3785 = vpop.permute.xlu0 %3784
        %3788 = vset.pattern.permute.xlu0 4
        %3789 = vperm.xlu0 %3788, %v3712
        %v3790 = vpop.permute.xlu0 %3789
        %3793 = vset.pattern.permute.xlu0 4
        %3794 = vperm.xlu0 %3793, %v3713
        %v3795 = vpop.permute.xlu0 %3794
        %3798 = vset.pattern.permute.xlu0 4
        %3799 = vperm.xlu0 %3798, %v3714
        %v3800 = vpop.permute.xlu0 %3799
        %3803 = vset.pattern.permute.xlu0 4
        %3804 = vperm.xlu0 %3803, %v3715
        %v3805 = vpop.permute.xlu0 %3804
        %3808 = vset.pattern.permute.xlu0 4
        %3809 = vperm.xlu0 %3808, %v3716
        %v3810 = vpop.permute.xlu0 %3809
        %3813 = vset.pattern.permute.xlu0 4
        %3814 = vperm.xlu0 %3813, %v3717
        %v3815 = vpop.permute.xlu0 %3814
        %3818 = vset.pattern.permute.xlu0 4
        %3819 = vperm.xlu0 %3818, %v3718
        %v3820 = vpop.permute.xlu0 %3819
        %3823 = vset.pattern.permute.xlu0 4
        %3824 = vperm.xlu0 %3823, %v3719
        %v3825 = vpop.permute.xlu0 %3824
        %3828 = vset.pattern.permute.xlu0 4
        %3829 = vperm.xlu0 %3828, %v3720
        %v3830 = vpop.permute.xlu0 %3829
        %v3832 = vlaneseq
        %v3833 = vshrl.u32 %v3832, 7
        %v3834 = vsub.s32 4, %v3833
        %v3835 = vrot.slane %v3748, %v3834
        %v3836 = vlaneseq
        %v3837 = vshrl.u32 %v3836, 7
        %v3838 = vsub.s32 4, %v3837
        %v3839 = vrot.slane %v3749, %v3838
        %v3840 = vlaneseq
        %v3841 = vshrl.u32 %v3840, 7
        %v3842 = vsub.s32 4, %v3841
        %v3843 = vrot.slane %v3750, %v3842
        %v3844 = vlaneseq
        %v3845 = vshrl.u32 %v3844, 7
        %v3846 = vsub.s32 4, %v3845
        %v3847 = vrot.slane %v3751, %v3846
        %v3848 = vmul.f32 %v3755, %v3835
        %v3849 = vmul.f32 %v3760, %v3835
        %v3850 = vmul.f32 %v3765, %v3835
        %v3851 = vmul.f32 %v3770, %v3835
        %v3852 = vmul.f32 %v3775, %v3839
        %v3853 = vmul.f32 %v3780, %v3839
        %v3854 = vmul.f32 %v3785, %v3839
        %v3855 = vmul.f32 %v3790, %v3839
        %v3856 = vmul.f32 %v3795, %v3843
        %v3857 = vmul.f32 %v3800, %v3843
        %v3858 = vmul.f32 %v3805, %v3843
        %v3859 = vmul.f32 %v3810, %v3843
        %v3860 = vmul.f32 %v3815, %v3847
        %v3861 = vmul.f32 %v3820, %v3847
        %v3862 = vmul.f32 %v3825, %v3847
        %v3863 = vmul.f32 %v3830, %v3847
        %v3864 = vsub.f32 %v3665, %v3848
        %v3865 = vsub.f32 %v3666, %v3849
        %v3866 = vsub.f32 %v3667, %v3850
        %v3867 = vsub.f32 %v3668, %v3851
        %v3868 = vsub.f32 %v3669, %v3852
        %v3869 = vsub.f32 %v3670, %v3853
        %v3870 = vsub.f32 %v3671, %v3854
        %v3871 = vsub.f32 %v3672, %v3855
        %v3872 = vsub.f32 %v3673, %v3856
        %v3873 = vsub.f32 %v3674, %v3857
        %v3874 = vsub.f32 %v3675, %v3858
        %v3875 = vsub.f32 %v3676, %v3859
        %v3876 = vsub.f32 %v3677, %v3860
        %v3877 = vsub.f32 %v3678, %v3861
        %v3878 = vsub.f32 %v3679, %v3862
        %v3879 = vsub.f32 %v3680, %v3863
        %v3880 = vrcp.pop %v3864
        %v3881 = vmul.f32 1.0, %v3880
        %v3882 = vrcp.pop %v3868
        %v3883 = vmul.f32 1.0, %v3882
        %v3884 = vrcp.pop %v3872
        %v3885 = vmul.f32 1.0, %v3884
        %v3886 = vrcp.pop %v3876
        %v3887 = vmul.f32 1.0, %v3886
        %v3888 = vlaneseq
        %v3889 = vshrl.u32 %v3888, 7
        %v3890 = vsub.s32 5, %v3889
        %v3891 = vrot.slane %v3881, %v3890
        %v3892 = vlaneseq
        %v3893 = vshrl.u32 %v3892, 7
        %v3894 = vsub.s32 5, %v3893
        %v3895 = vrot.slane %v3883, %v3894
        %v3896 = vlaneseq
        %v3897 = vshrl.u32 %v3896, 7
        %v3898 = vsub.s32 5, %v3897
        %v3899 = vrot.slane %v3885, %v3898
        %v3900 = vlaneseq
        %v3901 = vshrl.u32 %v3900, 7
        %v3902 = vsub.s32 5, %v3901
        %v3903 = vrot.slane %v3887, %v3902
        %v3904 = vmul.f32 %v3864, %v3891
        %v3905 = vmul.f32 %v3865, %v3891
        %v3906 = vmul.f32 %v3866, %v3891
        %v3907 = vmul.f32 %v3867, %v3891
        %v3908 = vmul.f32 %v3868, %v3895
        %v3909 = vmul.f32 %v3869, %v3895
        %v3910 = vmul.f32 %v3870, %v3895
        %v3911 = vmul.f32 %v3871, %v3895
        %v3912 = vmul.f32 %v3872, %v3899
        %v3913 = vmul.f32 %v3873, %v3899
        %v3914 = vmul.f32 %v3874, %v3899
        %v3915 = vmul.f32 %v3875, %v3899
        %v3916 = vmul.f32 %v3876, %v3903
        %v3917 = vmul.f32 %v3877, %v3903
        %v3918 = vmul.f32 %v3878, %v3903
        %v3919 = vmul.f32 %v3879, %v3903
        %vm3920 = vcmp.eq.s32.totalorder %v2868, 5
        %v3921 = vsub.f32 %v3864, 1.0
        %v3922 = vsub.f32 %v3868, 1.0
        %v3923 = vsub.f32 %v3872, 1.0
        %v3924 = vsub.f32 %v3876, 1.0
        %v3925 = vsel %vm3920, 1, 0
        %vm3926 = vcmp.eq.s32.totalorder %v3925, 1
        %3928 = vset.pattern.permute.xlu0 5
        %3929 = vperm.xlu0 %3928, %v3921
        %v3930 = vpop.permute.xlu0 %3929
        %3933 = vset.pattern.permute.xlu0 5
        %3934 = vperm.xlu0 %3933, %v3922
        %v3935 = vpop.permute.xlu0 %3934
        %3938 = vset.pattern.permute.xlu0 5
        %3939 = vperm.xlu0 %3938, %v3923
        %v3940 = vpop.permute.xlu0 %3939
        %3943 = vset.pattern.permute.xlu0 5
        %3944 = vperm.xlu0 %3943, %v3924
        %v3945 = vpop.permute.xlu0 %3944
        %v3947 = vsel %vm3926, %v3930, %v3864
        %v3948 = vsel %vm3926, %v3935, %v3868
        %v3949 = vsel %vm3926, %v3940, %v3872
        %v3950 = vsel %vm3926, %v3945, %v3876
        %3952 = vset.pattern.permute.xlu0 5
        %3953 = vperm.xlu0 %3952, %v3904
        %v3954 = vpop.permute.xlu0 %3953
        %3957 = vset.pattern.permute.xlu0 5
        %3958 = vperm.xlu0 %3957, %v3905
        %v3959 = vpop.permute.xlu0 %3958
        %3962 = vset.pattern.permute.xlu0 5
        %3963 = vperm.xlu0 %3962, %v3906
        %v3964 = vpop.permute.xlu0 %3963
        %3967 = vset.pattern.permute.xlu0 5
        %3968 = vperm.xlu0 %3967, %v3907
        %v3969 = vpop.permute.xlu0 %3968
        %3972 = vset.pattern.permute.xlu0 5
        %3973 = vperm.xlu0 %3972, %v3908
        %v3974 = vpop.permute.xlu0 %3973
        %3977 = vset.pattern.permute.xlu0 5
        %3978 = vperm.xlu0 %3977, %v3909
        %v3979 = vpop.permute.xlu0 %3978
        %3982 = vset.pattern.permute.xlu0 5
        %3983 = vperm.xlu0 %3982, %v3910
        %v3984 = vpop.permute.xlu0 %3983
        %3987 = vset.pattern.permute.xlu0 5
        %3988 = vperm.xlu0 %3987, %v3911
        %v3989 = vpop.permute.xlu0 %3988
        %3992 = vset.pattern.permute.xlu0 5
        %3993 = vperm.xlu0 %3992, %v3912
        %v3994 = vpop.permute.xlu0 %3993
        %3997 = vset.pattern.permute.xlu0 5
        %3998 = vperm.xlu0 %3997, %v3913
        %v3999 = vpop.permute.xlu0 %3998
        %4002 = vset.pattern.permute.xlu0 5
        %4003 = vperm.xlu0 %4002, %v3914
        %v4004 = vpop.permute.xlu0 %4003
        %4007 = vset.pattern.permute.xlu0 5
        %4008 = vperm.xlu0 %4007, %v3915
        %v4009 = vpop.permute.xlu0 %4008
        %4012 = vset.pattern.permute.xlu0 5
        %4013 = vperm.xlu0 %4012, %v3916
        %v4014 = vpop.permute.xlu0 %4013
        %4017 = vset.pattern.permute.xlu0 5
        %4018 = vperm.xlu0 %4017, %v3917
        %v4019 = vpop.permute.xlu0 %4018
        %4022 = vset.pattern.permute.xlu0 5
        %4023 = vperm.xlu0 %4022, %v3918
        %v4024 = vpop.permute.xlu0 %4023
        %4027 = vset.pattern.permute.xlu0 5
        %4028 = vperm.xlu0 %4027, %v3919
        %v4029 = vpop.permute.xlu0 %4028
        %v4031 = vlaneseq
        %v4032 = vshrl.u32 %v4031, 7
        %v4033 = vsub.s32 5, %v4032
        %v4034 = vrot.slane %v3947, %v4033
        %v4035 = vlaneseq
        %v4036 = vshrl.u32 %v4035, 7
        %v4037 = vsub.s32 5, %v4036
        %v4038 = vrot.slane %v3948, %v4037
        %v4039 = vlaneseq
        %v4040 = vshrl.u32 %v4039, 7
        %v4041 = vsub.s32 5, %v4040
        %v4042 = vrot.slane %v3949, %v4041
        %v4043 = vlaneseq
        %v4044 = vshrl.u32 %v4043, 7
        %v4045 = vsub.s32 5, %v4044
        %v4046 = vrot.slane %v3950, %v4045
        %v4047 = vmul.f32 %v3954, %v4034
        %v4048 = vmul.f32 %v3959, %v4034
        %v4049 = vmul.f32 %v3964, %v4034
        %v4050 = vmul.f32 %v3969, %v4034
        %v4051 = vmul.f32 %v3974, %v4038
        %v4052 = vmul.f32 %v3979, %v4038
        %v4053 = vmul.f32 %v3984, %v4038
        %v4054 = vmul.f32 %v3989, %v4038
        %v4055 = vmul.f32 %v3994, %v4042
        %v4056 = vmul.f32 %v3999, %v4042
        %v4057 = vmul.f32 %v4004, %v4042
        %v4058 = vmul.f32 %v4009, %v4042
        %v4059 = vmul.f32 %v4014, %v4046
        %v4060 = vmul.f32 %v4019, %v4046
        %v4061 = vmul.f32 %v4024, %v4046
        %v4062 = vmul.f32 %v4029, %v4046
        %v4063 = vsub.f32 %v3864, %v4047
        %v4064 = vsub.f32 %v3865, %v4048
        %v4065 = vsub.f32 %v3866, %v4049
        %v4066 = vsub.f32 %v3867, %v4050
        %v4067 = vsub.f32 %v3868, %v4051
        %v4068 = vsub.f32 %v3869, %v4052
        %v4069 = vsub.f32 %v3870, %v4053
        %v4070 = vsub.f32 %v3871, %v4054
        %v4071 = vsub.f32 %v3872, %v4055
        %v4072 = vsub.f32 %v3873, %v4056
        %v4073 = vsub.f32 %v3874, %v4057
        %v4074 = vsub.f32 %v3875, %v4058
        %v4075 = vsub.f32 %v3876, %v4059
        %v4076 = vsub.f32 %v3877, %v4060
        %v4077 = vsub.f32 %v3878, %v4061
        %v4078 = vsub.f32 %v3879, %v4062
        %v4079 = vrcp.pop %v4063
        %v4080 = vmul.f32 1.0, %v4079
        %v4081 = vrcp.pop %v4067
        %v4082 = vmul.f32 1.0, %v4081
        %v4083 = vrcp.pop %v4071
        %v4084 = vmul.f32 1.0, %v4083
        %v4085 = vrcp.pop %v4075
        %v4086 = vmul.f32 1.0, %v4085
        %v4087 = vlaneseq
        %v4088 = vshrl.u32 %v4087, 7
        %v4089 = vsub.s32 6, %v4088
        %v4090 = vrot.slane %v4080, %v4089
        %v4091 = vlaneseq
        %v4092 = vshrl.u32 %v4091, 7
        %v4093 = vsub.s32 6, %v4092
        %v4094 = vrot.slane %v4082, %v4093
        %v4095 = vlaneseq
        %v4096 = vshrl.u32 %v4095, 7
        %v4097 = vsub.s32 6, %v4096
        %v4098 = vrot.slane %v4084, %v4097
        %v4099 = vlaneseq
        %v4100 = vshrl.u32 %v4099, 7
        %v4101 = vsub.s32 6, %v4100
        %v4102 = vrot.slane %v4086, %v4101
        %v4103 = vmul.f32 %v4063, %v4090
        %v4104 = vmul.f32 %v4064, %v4090
        %v4105 = vmul.f32 %v4065, %v4090
        %v4106 = vmul.f32 %v4066, %v4090
        %v4107 = vmul.f32 %v4067, %v4094
        %v4108 = vmul.f32 %v4068, %v4094
        %v4109 = vmul.f32 %v4069, %v4094
        %v4110 = vmul.f32 %v4070, %v4094
        %v4111 = vmul.f32 %v4071, %v4098
        %v4112 = vmul.f32 %v4072, %v4098
        %v4113 = vmul.f32 %v4073, %v4098
        %v4114 = vmul.f32 %v4074, %v4098
        %v4115 = vmul.f32 %v4075, %v4102
        %v4116 = vmul.f32 %v4076, %v4102
        %v4117 = vmul.f32 %v4077, %v4102
        %v4118 = vmul.f32 %v4078, %v4102
        %vm4119 = vcmp.eq.s32.totalorder %v2868, 6
        %v4120 = vsub.f32 %v4063, 1.0
        %v4121 = vsub.f32 %v4067, 1.0
        %v4122 = vsub.f32 %v4071, 1.0
        %v4123 = vsub.f32 %v4075, 1.0
        %v4124 = vsel %vm4119, 1, 0
        %vm4125 = vcmp.eq.s32.totalorder %v4124, 1
        %4127 = vset.pattern.permute.xlu0 6
        %4128 = vperm.xlu0 %4127, %v4120
        %v4129 = vpop.permute.xlu0 %4128
        %4132 = vset.pattern.permute.xlu0 6
        %4133 = vperm.xlu0 %4132, %v4121
        %v4134 = vpop.permute.xlu0 %4133
        %4137 = vset.pattern.permute.xlu0 6
        %4138 = vperm.xlu0 %4137, %v4122
        %v4139 = vpop.permute.xlu0 %4138
        %4142 = vset.pattern.permute.xlu0 6
        %4143 = vperm.xlu0 %4142, %v4123
        %v4144 = vpop.permute.xlu0 %4143
        %v4146 = vsel %vm4125, %v4129, %v4063
        %v4147 = vsel %vm4125, %v4134, %v4067
        %v4148 = vsel %vm4125, %v4139, %v4071
        %v4149 = vsel %vm4125, %v4144, %v4075
        %4151 = vset.pattern.permute.xlu0 6
        %4152 = vperm.xlu0 %4151, %v4103
        %v4153 = vpop.permute.xlu0 %4152
        %4156 = vset.pattern.permute.xlu0 6
        %4157 = vperm.xlu0 %4156, %v4104
        %v4158 = vpop.permute.xlu0 %4157
        %4161 = vset.pattern.permute.xlu0 6
        %4162 = vperm.xlu0 %4161, %v4105
        %v4163 = vpop.permute.xlu0 %4162
        %4166 = vset.pattern.permute.xlu0 6
        %4167 = vperm.xlu0 %4166, %v4106
        %v4168 = vpop.permute.xlu0 %4167
        %4171 = vset.pattern.permute.xlu0 6
        %4172 = vperm.xlu0 %4171, %v4107
        %v4173 = vpop.permute.xlu0 %4172
        %4176 = vset.pattern.permute.xlu0 6
        %4177 = vperm.xlu0 %4176, %v4108
        %v4178 = vpop.permute.xlu0 %4177
        %4181 = vset.pattern.permute.xlu0 6
        %4182 = vperm.xlu0 %4181, %v4109
        %v4183 = vpop.permute.xlu0 %4182
        %4186 = vset.pattern.permute.xlu0 6
        %4187 = vperm.xlu0 %4186, %v4110
        %v4188 = vpop.permute.xlu0 %4187
        %4191 = vset.pattern.permute.xlu0 6
        %4192 = vperm.xlu0 %4191, %v4111
        %v4193 = vpop.permute.xlu0 %4192
        %4196 = vset.pattern.permute.xlu0 6
        %4197 = vperm.xlu0 %4196, %v4112
        %v4198 = vpop.permute.xlu0 %4197
        %4201 = vset.pattern.permute.xlu0 6
        %4202 = vperm.xlu0 %4201, %v4113
        %v4203 = vpop.permute.xlu0 %4202
        %4206 = vset.pattern.permute.xlu0 6
        %4207 = vperm.xlu0 %4206, %v4114
        %v4208 = vpop.permute.xlu0 %4207
        %4211 = vset.pattern.permute.xlu0 6
        %4212 = vperm.xlu0 %4211, %v4115
        %v4213 = vpop.permute.xlu0 %4212
        %4216 = vset.pattern.permute.xlu0 6
        %4217 = vperm.xlu0 %4216, %v4116
        %v4218 = vpop.permute.xlu0 %4217
        %4221 = vset.pattern.permute.xlu0 6
        %4222 = vperm.xlu0 %4221, %v4117
        %v4223 = vpop.permute.xlu0 %4222
        %4226 = vset.pattern.permute.xlu0 6
        %4227 = vperm.xlu0 %4226, %v4118
        %v4228 = vpop.permute.xlu0 %4227
        %v4230 = vlaneseq
        %v4231 = vshrl.u32 %v4230, 7
        %v4232 = vsub.s32 6, %v4231
        %v4233 = vrot.slane %v4146, %v4232
        %v4234 = vlaneseq
        %v4235 = vshrl.u32 %v4234, 7
        %v4236 = vsub.s32 6, %v4235
        %v4237 = vrot.slane %v4147, %v4236
        %v4238 = vlaneseq
        %v4239 = vshrl.u32 %v4238, 7
        %v4240 = vsub.s32 6, %v4239
        %v4241 = vrot.slane %v4148, %v4240
        %v4242 = vlaneseq
        %v4243 = vshrl.u32 %v4242, 7
        %v4244 = vsub.s32 6, %v4243
        %v4245 = vrot.slane %v4149, %v4244
        %v4246 = vmul.f32 %v4153, %v4233
        %v4247 = vmul.f32 %v4158, %v4233
        %v4248 = vmul.f32 %v4163, %v4233
        %v4249 = vmul.f32 %v4168, %v4233
        %v4250 = vmul.f32 %v4173, %v4237
        %v4251 = vmul.f32 %v4178, %v4237
        %v4252 = vmul.f32 %v4183, %v4237
        %v4253 = vmul.f32 %v4188, %v4237
        %v4254 = vmul.f32 %v4193, %v4241
        %v4255 = vmul.f32 %v4198, %v4241
        %v4256 = vmul.f32 %v4203, %v4241
        %v4257 = vmul.f32 %v4208, %v4241
        %v4258 = vmul.f32 %v4213, %v4245
        %v4259 = vmul.f32 %v4218, %v4245
        %v4260 = vmul.f32 %v4223, %v4245
        %v4261 = vmul.f32 %v4228, %v4245
        %v4262 = vsub.f32 %v4063, %v4246
        %v4263 = vsub.f32 %v4064, %v4247
        %v4264 = vsub.f32 %v4065, %v4248
        %v4265 = vsub.f32 %v4066, %v4249
        %v4266 = vsub.f32 %v4067, %v4250
        %v4267 = vsub.f32 %v4068, %v4251
        %v4268 = vsub.f32 %v4069, %v4252
        %v4269 = vsub.f32 %v4070, %v4253
        %v4270 = vsub.f32 %v4071, %v4254
        %v4271 = vsub.f32 %v4072, %v4255
        %v4272 = vsub.f32 %v4073, %v4256
        %v4273 = vsub.f32 %v4074, %v4257
        %v4274 = vsub.f32 %v4075, %v4258
        %v4275 = vsub.f32 %v4076, %v4259
        %v4276 = vsub.f32 %v4077, %v4260
        %v4277 = vsub.f32 %v4078, %v4261
        %v4278 = vrcp.pop %v4262
        %v4279 = vmul.f32 1.0, %v4278
        %v4280 = vrcp.pop %v4266
        %v4281 = vmul.f32 1.0, %v4280
        %v4282 = vrcp.pop %v4270
        %v4283 = vmul.f32 1.0, %v4282
        %v4284 = vrcp.pop %v4274
        %v4285 = vmul.f32 1.0, %v4284
        %v4286 = vlaneseq
        %v4287 = vshrl.u32 %v4286, 7
        %v4288 = vsub.s32 7, %v4287
        %v4289 = vrot.slane %v4279, %v4288
        %v4290 = vlaneseq
        %v4291 = vshrl.u32 %v4290, 7
        %v4292 = vsub.s32 7, %v4291
        %v4293 = vrot.slane %v4281, %v4292
        %v4294 = vlaneseq
        %v4295 = vshrl.u32 %v4294, 7
        %v4296 = vsub.s32 7, %v4295
        %v4297 = vrot.slane %v4283, %v4296
        %v4298 = vlaneseq
        %v4299 = vshrl.u32 %v4298, 7
        %v4300 = vsub.s32 7, %v4299
        %v4301 = vrot.slane %v4285, %v4300
        %v4302 = vmul.f32 %v4263, %v4289
        %v4303 = vmul.f32 %v4264, %v4289
        %v4304 = vmul.f32 %v4265, %v4289
        %v4305 = vmul.f32 %v4267, %v4293
        %v4306 = vmul.f32 %v4268, %v4293
        %v4307 = vmul.f32 %v4269, %v4293
        %v4308 = vmul.f32 %v4271, %v4297
        %v4309 = vmul.f32 %v4272, %v4297
        %v4310 = vmul.f32 %v4273, %v4297
        %v4311 = vmul.f32 %v4275, %v4301
        %v4312 = vmul.f32 %v4276, %v4301
        %v4313 = vmul.f32 %v4277, %v4301
        %vm4314 = vcmp.eq.s32.totalorder %v2868, 7
        %v4315 = vsub.f32 %v4262, 1.0
        %v4316 = vsub.f32 %v4266, 1.0
        %v4317 = vsub.f32 %v4270, 1.0
        %v4318 = vsub.f32 %v4274, 1.0
        %v4319 = vsel %vm4314, 1, 0
        %vm4320 = vcmp.eq.s32.totalorder %v4319, 1
        %4322 = vset.pattern.permute.xlu0 7
        %4323 = vperm.xlu0 %4322, %v4315
        %v4324 = vpop.permute.xlu0 %4323
        %4327 = vset.pattern.permute.xlu0 7
        %4328 = vperm.xlu0 %4327, %v4316
        %v4329 = vpop.permute.xlu0 %4328
        %4332 = vset.pattern.permute.xlu0 7
        %4333 = vperm.xlu0 %4332, %v4317
        %v4334 = vpop.permute.xlu0 %4333
        %4337 = vset.pattern.permute.xlu0 7
        %4338 = vperm.xlu0 %4337, %v4318
        %v4339 = vpop.permute.xlu0 %4338
        %v4341 = vsel %vm4320, %v4324, %v4262
        %v4342 = vsel %vm4320, %v4329, %v4266
        %v4343 = vsel %vm4320, %v4334, %v4270
        %v4344 = vsel %vm4320, %v4339, %v4274
        %4346 = vset.pattern.permute.xlu0 7
        %4347 = vperm.xlu0 %4346, %v4302
        %v4348 = vpop.permute.xlu0 %4347
        %4351 = vset.pattern.permute.xlu0 7
        %4352 = vperm.xlu0 %4351, %v4303
        %v4353 = vpop.permute.xlu0 %4352
        %4356 = vset.pattern.permute.xlu0 7
        %4357 = vperm.xlu0 %4356, %v4304
        %v4358 = vpop.permute.xlu0 %4357
        %4361 = vset.pattern.permute.xlu0 7
        %4362 = vperm.xlu0 %4361, %v4305
        %v4363 = vpop.permute.xlu0 %4362
        %4366 = vset.pattern.permute.xlu0 7
        %4367 = vperm.xlu0 %4366, %v4306
        %v4368 = vpop.permute.xlu0 %4367
        %4371 = vset.pattern.permute.xlu0 7
        %4372 = vperm.xlu0 %4371, %v4307
        %v4373 = vpop.permute.xlu0 %4372
        %4376 = vset.pattern.permute.xlu0 7
        %4377 = vperm.xlu0 %4376, %v4308
        %v4378 = vpop.permute.xlu0 %4377
        %4381 = vset.pattern.permute.xlu0 7
        %4382 = vperm.xlu0 %4381, %v4309
        %v4383 = vpop.permute.xlu0 %4382
        %4386 = vset.pattern.permute.xlu0 7
        %4387 = vperm.xlu0 %4386, %v4310
        %v4388 = vpop.permute.xlu0 %4387
        %4391 = vset.pattern.permute.xlu0 7
        %4392 = vperm.xlu0 %4391, %v4311
        %v4393 = vpop.permute.xlu0 %4392
        %4396 = vset.pattern.permute.xlu0 7
        %4397 = vperm.xlu0 %4396, %v4312
        %v4398 = vpop.permute.xlu0 %4397
        %4401 = vset.pattern.permute.xlu0 7
        %4402 = vperm.xlu0 %4401, %v4313
        %v4403 = vpop.permute.xlu0 %4402
        %v4405 = vlaneseq
        %v4406 = vshrl.u32 %v4405, 7
        %v4407 = vsub.s32 7, %v4406
        %v4408 = vrot.slane %v4341, %v4407
        %v4409 = vlaneseq
        %v4410 = vshrl.u32 %v4409, 7
        %v4411 = vsub.s32 7, %v4410
        %v4412 = vrot.slane %v4342, %v4411
        %v4413 = vlaneseq
        %v4414 = vshrl.u32 %v4413, 7
        %v4415 = vsub.s32 7, %v4414
        %v4416 = vrot.slane %v4343, %v4415
        %v4417 = vlaneseq
        %v4418 = vshrl.u32 %v4417, 7
        %v4419 = vsub.s32 7, %v4418
        %v4420 = vrot.slane %v4344, %v4419
        %v4421 = vmul.f32 %v4348, %v4408
        %v4422 = vmul.f32 %v4353, %v4408
        %v4423 = vmul.f32 %v4358, %v4408
        %v4424 = vmul.f32 %v4363, %v4412
        %v4425 = vmul.f32 %v4368, %v4412
        %v4426 = vmul.f32 %v4373, %v4412
        %v4427 = vmul.f32 %v4378, %v4416
        %v4428 = vmul.f32 %v4383, %v4416
        %v4429 = vmul.f32 %v4388, %v4416
        %v4430 = vmul.f32 %v4393, %v4420
        %v4431 = vmul.f32 %v4398, %v4420
        %v4432 = vmul.f32 %v4403, %v4420
        %v4433 = vsub.f32 %v4263, %v4421
        %v4434 = vsub.f32 %v4264, %v4422
        %v4435 = vsub.f32 %v4265, %v4423
        %v4436 = vsub.f32 %v4267, %v4424
        %v4437 = vsub.f32 %v4268, %v4425
        %v4438 = vsub.f32 %v4269, %v4426
        %v4439 = vsub.f32 %v4271, %v4427
        %v4440 = vsub.f32 %v4272, %v4428
        %v4441 = vsub.f32 %v4273, %v4429
        %v4442 = vsub.f32 %v4275, %v4430
        %v4443 = vsub.f32 %v4276, %v4431
        %v4444 = vsub.f32 %v4277, %v4432
        %v4445 = vrcp.pop %v4433
        %v4446 = vmul.f32 1.0, %v4445
        %v4447 = vrcp.pop %v4436
        %v4448 = vmul.f32 1.0, %v4447
        %v4449 = vrcp.pop %v4439
        %v4450 = vmul.f32 1.0, %v4449
        %v4451 = vrcp.pop %v4442
        %v4452 = vmul.f32 1.0, %v4451
        %v4453 = vlaneseq
        %v4454 = vshrl.u32 %v4453, 7
        %v4455 = vsub.s32 0, %v4454
        %v4456 = vrot.slane %v4446, %v4455
        %v4457 = vlaneseq
        %v4458 = vshrl.u32 %v4457, 7
        %v4459 = vsub.s32 0, %v4458
        %v4460 = vrot.slane %v4448, %v4459
        %v4461 = vlaneseq
        %v4462 = vshrl.u32 %v4461, 7
        %v4463 = vsub.s32 0, %v4462
        %v4464 = vrot.slane %v4450, %v4463
        %v4465 = vlaneseq
        %v4466 = vshrl.u32 %v4465, 7
        %v4467 = vsub.s32 0, %v4466
        %v4468 = vrot.slane %v4452, %v4467
        %v4469 = vmul.f32 %v4433, %v4456
        %v4470 = vmul.f32 %v4434, %v4456
        %v4471 = vmul.f32 %v4435, %v4456
        %v4472 = vmul.f32 %v4436, %v4460
        %v4473 = vmul.f32 %v4437, %v4460
        %v4474 = vmul.f32 %v4438, %v4460
        %v4475 = vmul.f32 %v4439, %v4464
        %v4476 = vmul.f32 %v4440, %v4464
        %v4477 = vmul.f32 %v4441, %v4464
        %v4478 = vmul.f32 %v4442, %v4468
        %v4479 = vmul.f32 %v4443, %v4468
        %v4480 = vmul.f32 %v4444, %v4468
        %vm4481 = vcmp.eq.s32.totalorder %v2868, 8
        %v4482 = vsub.f32 %v4433, 1.0
        %v4483 = vsub.f32 %v4436, 1.0
        %v4484 = vsub.f32 %v4439, 1.0
        %v4485 = vsub.f32 %v4442, 1.0
        %v4486 = vsel %vm4481, 1, 0
        %vm4487 = vcmp.eq.s32.totalorder %v4486, 1
        %4489 = vset.pattern.permute.xlu0 8
        %4490 = vperm.xlu0 %4489, %v4482
        %v4491 = vpop.permute.xlu0 %4490
        %4494 = vset.pattern.permute.xlu0 8
        %4495 = vperm.xlu0 %4494, %v4483
        %v4496 = vpop.permute.xlu0 %4495
        %4499 = vset.pattern.permute.xlu0 8
        %4500 = vperm.xlu0 %4499, %v4484
        %v4501 = vpop.permute.xlu0 %4500
        %4504 = vset.pattern.permute.xlu0 8
        %4505 = vperm.xlu0 %4504, %v4485
        %v4506 = vpop.permute.xlu0 %4505
        %v4508 = vsel %vm4487, %v4491, %v4433
        %v4509 = vsel %vm4487, %v4496, %v4436
        %v4510 = vsel %vm4487, %v4501, %v4439
        %v4511 = vsel %vm4487, %v4506, %v4442
        %4513 = vset.pattern.permute.xlu0 8
        %4514 = vperm.xlu0 %4513, %v4469
        %v4515 = vpop.permute.xlu0 %4514
        %4518 = vset.pattern.permute.xlu0 8
        %4519 = vperm.xlu0 %4518, %v4470
        %v4520 = vpop.permute.xlu0 %4519
        %4523 = vset.pattern.permute.xlu0 8
        %4524 = vperm.xlu0 %4523, %v4471
        %v4525 = vpop.permute.xlu0 %4524
        %4528 = vset.pattern.permute.xlu0 8
        %4529 = vperm.xlu0 %4528, %v4472
        %v4530 = vpop.permute.xlu0 %4529
        %4533 = vset.pattern.permute.xlu0 8
        %4534 = vperm.xlu0 %4533, %v4473
        %v4535 = vpop.permute.xlu0 %4534
        %4538 = vset.pattern.permute.xlu0 8
        %4539 = vperm.xlu0 %4538, %v4474
        %v4540 = vpop.permute.xlu0 %4539
        %4543 = vset.pattern.permute.xlu0 8
        %4544 = vperm.xlu0 %4543, %v4475
        %v4545 = vpop.permute.xlu0 %4544
        %4548 = vset.pattern.permute.xlu0 8
        %4549 = vperm.xlu0 %4548, %v4476
        %v4550 = vpop.permute.xlu0 %4549
        %4553 = vset.pattern.permute.xlu0 8
        %4554 = vperm.xlu0 %4553, %v4477
        %v4555 = vpop.permute.xlu0 %4554
        %4558 = vset.pattern.permute.xlu0 8
        %4559 = vperm.xlu0 %4558, %v4478
        %v4560 = vpop.permute.xlu0 %4559
        %4563 = vset.pattern.permute.xlu0 8
        %4564 = vperm.xlu0 %4563, %v4479
        %v4565 = vpop.permute.xlu0 %4564
        %4568 = vset.pattern.permute.xlu0 8
        %4569 = vperm.xlu0 %4568, %v4480
        %v4570 = vpop.permute.xlu0 %4569
        %v4572 = vlaneseq
        %v4573 = vshrl.u32 %v4572, 7
        %v4574 = vsub.s32 0, %v4573
        %v4575 = vrot.slane %v4508, %v4574
        %v4576 = vlaneseq
        %v4577 = vshrl.u32 %v4576, 7
        %v4578 = vsub.s32 0, %v4577
        %v4579 = vrot.slane %v4509, %v4578
        %v4580 = vlaneseq
        %v4581 = vshrl.u32 %v4580, 7
        %v4582 = vsub.s32 0, %v4581
        %v4583 = vrot.slane %v4510, %v4582
        %v4584 = vlaneseq
        %v4585 = vshrl.u32 %v4584, 7
        %v4586 = vsub.s32 0, %v4585
        %v4587 = vrot.slane %v4511, %v4586
        %v4588 = vmul.f32 %v4515, %v4575
        %v4589 = vmul.f32 %v4520, %v4575
        %v4590 = vmul.f32 %v4525, %v4575
        %v4591 = vmul.f32 %v4530, %v4579
        %v4592 = vmul.f32 %v4535, %v4579
        %v4593 = vmul.f32 %v4540, %v4579
        %v4594 = vmul.f32 %v4545, %v4583
        %v4595 = vmul.f32 %v4550, %v4583
        %v4596 = vmul.f32 %v4555, %v4583
        %v4597 = vmul.f32 %v4560, %v4587
        %v4598 = vmul.f32 %v4565, %v4587
        %v4599 = vmul.f32 %v4570, %v4587
        %v4600 = vsub.f32 %v4433, %v4588
        %v4601 = vsub.f32 %v4434, %v4589
        %v4602 = vsub.f32 %v4435, %v4590
        %v4603 = vsub.f32 %v4436, %v4591
        %v4604 = vsub.f32 %v4437, %v4592
        %v4605 = vsub.f32 %v4438, %v4593
        %v4606 = vsub.f32 %v4439, %v4594
        %v4607 = vsub.f32 %v4440, %v4595
        %v4608 = vsub.f32 %v4441, %v4596
        %v4609 = vsub.f32 %v4442, %v4597
        %v4610 = vsub.f32 %v4443, %v4598
        %v4611 = vsub.f32 %v4444, %v4599
        %v4612 = vrcp.pop %v4600
        %v4613 = vmul.f32 1.0, %v4612
        %v4614 = vrcp.pop %v4603
        %v4615 = vmul.f32 1.0, %v4614
        %v4616 = vrcp.pop %v4606
        %v4617 = vmul.f32 1.0, %v4616
        %v4618 = vrcp.pop %v4609
        %v4619 = vmul.f32 1.0, %v4618
        %v4620 = vlaneseq
        %v4621 = vshrl.u32 %v4620, 7
        %v4622 = vsub.s32 1, %v4621
        %v4623 = vrot.slane %v4613, %v4622
        %v4624 = vlaneseq
        %v4625 = vshrl.u32 %v4624, 7
        %v4626 = vsub.s32 1, %v4625
        %v4627 = vrot.slane %v4615, %v4626
        %v4628 = vlaneseq
        %v4629 = vshrl.u32 %v4628, 7
        %v4630 = vsub.s32 1, %v4629
        %v4631 = vrot.slane %v4617, %v4630
        %v4632 = vlaneseq
        %v4633 = vshrl.u32 %v4632, 7
        %v4634 = vsub.s32 1, %v4633
        %v4635 = vrot.slane %v4619, %v4634
        %v4636 = vmul.f32 %v4600, %v4623
        %v4637 = vmul.f32 %v4601, %v4623
        %v4638 = vmul.f32 %v4602, %v4623
        %v4639 = vmul.f32 %v4603, %v4627
        %v4640 = vmul.f32 %v4604, %v4627
        %v4641 = vmul.f32 %v4605, %v4627
        %v4642 = vmul.f32 %v4606, %v4631
        %v4643 = vmul.f32 %v4607, %v4631
        %v4644 = vmul.f32 %v4608, %v4631
        %v4645 = vmul.f32 %v4609, %v4635
        %v4646 = vmul.f32 %v4610, %v4635
        %v4647 = vmul.f32 %v4611, %v4635
        %vm4648 = vcmp.eq.s32.totalorder %v2868, 9
        %v4649 = vsub.f32 %v4600, 1.0
        %v4650 = vsub.f32 %v4603, 1.0
        %v4651 = vsub.f32 %v4606, 1.0
        %v4652 = vsub.f32 %v4609, 1.0
        %v4653 = vsel %vm4648, 1, 0
        %vm4654 = vcmp.eq.s32.totalorder %v4653, 1
        %4656 = vset.pattern.permute.xlu0 9
        %4657 = vperm.xlu0 %4656, %v4649
        %v4658 = vpop.permute.xlu0 %4657
        %4661 = vset.pattern.permute.xlu0 9
        %4662 = vperm.xlu0 %4661, %v4650
        %v4663 = vpop.permute.xlu0 %4662
        %4666 = vset.pattern.permute.xlu0 9
        %4667 = vperm.xlu0 %4666, %v4651
        %v4668 = vpop.permute.xlu0 %4667
        %4671 = vset.pattern.permute.xlu0 9
        %4672 = vperm.xlu0 %4671, %v4652
        %v4673 = vpop.permute.xlu0 %4672
        %v4675 = vsel %vm4654, %v4658, %v4600
        %v4676 = vsel %vm4654, %v4663, %v4603
        %v4677 = vsel %vm4654, %v4668, %v4606
        %v4678 = vsel %vm4654, %v4673, %v4609
        %4680 = vset.pattern.permute.xlu0 9
        %4681 = vperm.xlu0 %4680, %v4636
        %v4682 = vpop.permute.xlu0 %4681
        %4685 = vset.pattern.permute.xlu0 9
        %4686 = vperm.xlu0 %4685, %v4637
        %v4687 = vpop.permute.xlu0 %4686
        %4690 = vset.pattern.permute.xlu0 9
        %4691 = vperm.xlu0 %4690, %v4638
        %v4692 = vpop.permute.xlu0 %4691
        %4695 = vset.pattern.permute.xlu0 9
        %4696 = vperm.xlu0 %4695, %v4639
        %v4697 = vpop.permute.xlu0 %4696
        %4700 = vset.pattern.permute.xlu0 9
        %4701 = vperm.xlu0 %4700, %v4640
        %v4702 = vpop.permute.xlu0 %4701
        %4705 = vset.pattern.permute.xlu0 9
        %4706 = vperm.xlu0 %4705, %v4641
        %v4707 = vpop.permute.xlu0 %4706
        %4710 = vset.pattern.permute.xlu0 9
        %4711 = vperm.xlu0 %4710, %v4642
        %v4712 = vpop.permute.xlu0 %4711
        %4715 = vset.pattern.permute.xlu0 9
        %4716 = vperm.xlu0 %4715, %v4643
        %v4717 = vpop.permute.xlu0 %4716
        %4720 = vset.pattern.permute.xlu0 9
        %4721 = vperm.xlu0 %4720, %v4644
        %v4722 = vpop.permute.xlu0 %4721
        %4725 = vset.pattern.permute.xlu0 9
        %4726 = vperm.xlu0 %4725, %v4645
        %v4727 = vpop.permute.xlu0 %4726
        %4730 = vset.pattern.permute.xlu0 9
        %4731 = vperm.xlu0 %4730, %v4646
        %v4732 = vpop.permute.xlu0 %4731
        %4735 = vset.pattern.permute.xlu0 9
        %4736 = vperm.xlu0 %4735, %v4647
        %v4737 = vpop.permute.xlu0 %4736
        %v4739 = vlaneseq
        %v4740 = vshrl.u32 %v4739, 7
        %v4741 = vsub.s32 1, %v4740
        %v4742 = vrot.slane %v4675, %v4741
        %v4743 = vlaneseq
        %v4744 = vshrl.u32 %v4743, 7
        %v4745 = vsub.s32 1, %v4744
        %v4746 = vrot.slane %v4676, %v4745
        %v4747 = vlaneseq
        %v4748 = vshrl.u32 %v4747, 7
        %v4749 = vsub.s32 1, %v4748
        %v4750 = vrot.slane %v4677, %v4749
        %v4751 = vlaneseq
        %v4752 = vshrl.u32 %v4751, 7
        %v4753 = vsub.s32 1, %v4752
        %v4754 = vrot.slane %v4678, %v4753
        %v4755 = vmul.f32 %v4682, %v4742
        %v4756 = vmul.f32 %v4687, %v4742
        %v4757 = vmul.f32 %v4692, %v4742
        %v4758 = vmul.f32 %v4697, %v4746
        %v4759 = vmul.f32 %v4702, %v4746
        %v4760 = vmul.f32 %v4707, %v4746
        %v4761 = vmul.f32 %v4712, %v4750
        %v4762 = vmul.f32 %v4717, %v4750
        %v4763 = vmul.f32 %v4722, %v4750
        %v4764 = vmul.f32 %v4727, %v4754
        %v4765 = vmul.f32 %v4732, %v4754
        %v4766 = vmul.f32 %v4737, %v4754
        %v4767 = vsub.f32 %v4600, %v4755
        %v4768 = vsub.f32 %v4601, %v4756
        %v4769 = vsub.f32 %v4602, %v4757
        %v4770 = vsub.f32 %v4603, %v4758
        %v4771 = vsub.f32 %v4604, %v4759
        %v4772 = vsub.f32 %v4605, %v4760
        %v4773 = vsub.f32 %v4606, %v4761
        %v4774 = vsub.f32 %v4607, %v4762
        %v4775 = vsub.f32 %v4608, %v4763
        %v4776 = vsub.f32 %v4609, %v4764
        %v4777 = vsub.f32 %v4610, %v4765
        %v4778 = vsub.f32 %v4611, %v4766
        %v4779 = vrcp.pop %v4767
        %v4780 = vmul.f32 1.0, %v4779
        %v4781 = vrcp.pop %v4770
        %v4782 = vmul.f32 1.0, %v4781
        %v4783 = vrcp.pop %v4773
        %v4784 = vmul.f32 1.0, %v4783
        %v4785 = vrcp.pop %v4776
        %v4786 = vmul.f32 1.0, %v4785
        %v4787 = vlaneseq
        %v4788 = vshrl.u32 %v4787, 7
        %v4789 = vsub.s32 2, %v4788
        %v4790 = vrot.slane %v4780, %v4789
        %v4791 = vlaneseq
        %v4792 = vshrl.u32 %v4791, 7
        %v4793 = vsub.s32 2, %v4792
        %v4794 = vrot.slane %v4782, %v4793
        %v4795 = vlaneseq
        %v4796 = vshrl.u32 %v4795, 7
        %v4797 = vsub.s32 2, %v4796
        %v4798 = vrot.slane %v4784, %v4797
        %v4799 = vlaneseq
        %v4800 = vshrl.u32 %v4799, 7
        %v4801 = vsub.s32 2, %v4800
        %v4802 = vrot.slane %v4786, %v4801
        %v4803 = vmul.f32 %v4767, %v4790
        %v4804 = vmul.f32 %v4768, %v4790
        %v4805 = vmul.f32 %v4769, %v4790
        %v4806 = vmul.f32 %v4770, %v4794
        %v4807 = vmul.f32 %v4771, %v4794
        %v4808 = vmul.f32 %v4772, %v4794
        %v4809 = vmul.f32 %v4773, %v4798
        %v4810 = vmul.f32 %v4774, %v4798
        %v4811 = vmul.f32 %v4775, %v4798
        %v4812 = vmul.f32 %v4776, %v4802
        %v4813 = vmul.f32 %v4777, %v4802
        %v4814 = vmul.f32 %v4778, %v4802
        %vm4815 = vcmp.eq.s32.totalorder %v2868, 10
        %v4816 = vsub.f32 %v4767, 1.0
        %v4817 = vsub.f32 %v4770, 1.0
        %v4818 = vsub.f32 %v4773, 1.0
        %v4819 = vsub.f32 %v4776, 1.0
        %v4820 = vsel %vm4815, 1, 0
        %vm4821 = vcmp.eq.s32.totalorder %v4820, 1
        %4823 = vset.pattern.permute.xlu0 10
        %4824 = vperm.xlu0 %4823, %v4816
        %v4825 = vpop.permute.xlu0 %4824
        %4828 = vset.pattern.permute.xlu0 10
        %4829 = vperm.xlu0 %4828, %v4817
        %v4830 = vpop.permute.xlu0 %4829
        %4833 = vset.pattern.permute.xlu0 10
        %4834 = vperm.xlu0 %4833, %v4818
        %v4835 = vpop.permute.xlu0 %4834
        %4838 = vset.pattern.permute.xlu0 10
        %4839 = vperm.xlu0 %4838, %v4819
        %v4840 = vpop.permute.xlu0 %4839
        %v4842 = vsel %vm4821, %v4825, %v4767
        %v4843 = vsel %vm4821, %v4830, %v4770
        %v4844 = vsel %vm4821, %v4835, %v4773
        %v4845 = vsel %vm4821, %v4840, %v4776
        %4847 = vset.pattern.permute.xlu0 10
        %4848 = vperm.xlu0 %4847, %v4803
        %v4849 = vpop.permute.xlu0 %4848
        %4852 = vset.pattern.permute.xlu0 10
        %4853 = vperm.xlu0 %4852, %v4804
        %v4854 = vpop.permute.xlu0 %4853
        %4857 = vset.pattern.permute.xlu0 10
        %4858 = vperm.xlu0 %4857, %v4805
        %v4859 = vpop.permute.xlu0 %4858
        %4862 = vset.pattern.permute.xlu0 10
        %4863 = vperm.xlu0 %4862, %v4806
        %v4864 = vpop.permute.xlu0 %4863
        %4867 = vset.pattern.permute.xlu0 10
        %4868 = vperm.xlu0 %4867, %v4807
        %v4869 = vpop.permute.xlu0 %4868
        %4872 = vset.pattern.permute.xlu0 10
        %4873 = vperm.xlu0 %4872, %v4808
        %v4874 = vpop.permute.xlu0 %4873
        %4877 = vset.pattern.permute.xlu0 10
        %4878 = vperm.xlu0 %4877, %v4809
        %v4879 = vpop.permute.xlu0 %4878
        %4882 = vset.pattern.permute.xlu0 10
        %4883 = vperm.xlu0 %4882, %v4810
        %v4884 = vpop.permute.xlu0 %4883
        %4887 = vset.pattern.permute.xlu0 10
        %4888 = vperm.xlu0 %4887, %v4811
        %v4889 = vpop.permute.xlu0 %4888
        %4892 = vset.pattern.permute.xlu0 10
        %4893 = vperm.xlu0 %4892, %v4812
        %v4894 = vpop.permute.xlu0 %4893
        %4897 = vset.pattern.permute.xlu0 10
        %4898 = vperm.xlu0 %4897, %v4813
        %v4899 = vpop.permute.xlu0 %4898
        %4902 = vset.pattern.permute.xlu0 10
        %4903 = vperm.xlu0 %4902, %v4814
        %v4904 = vpop.permute.xlu0 %4903
        %v4906 = vlaneseq
        %v4907 = vshrl.u32 %v4906, 7
        %v4908 = vsub.s32 2, %v4907
        %v4909 = vrot.slane %v4842, %v4908
        %v4910 = vlaneseq
        %v4911 = vshrl.u32 %v4910, 7
        %v4912 = vsub.s32 2, %v4911
        %v4913 = vrot.slane %v4843, %v4912
        %v4914 = vlaneseq
        %v4915 = vshrl.u32 %v4914, 7
        %v4916 = vsub.s32 2, %v4915
        %v4917 = vrot.slane %v4844, %v4916
        %v4918 = vlaneseq
        %v4919 = vshrl.u32 %v4918, 7
        %v4920 = vsub.s32 2, %v4919
        %v4921 = vrot.slane %v4845, %v4920
        %v4922 = vmul.f32 %v4849, %v4909
        %v4923 = vmul.f32 %v4854, %v4909
        %v4924 = vmul.f32 %v4859, %v4909
        %v4925 = vmul.f32 %v4864, %v4913
        %v4926 = vmul.f32 %v4869, %v4913
        %v4927 = vmul.f32 %v4874, %v4913
        %v4928 = vmul.f32 %v4879, %v4917
        %v4929 = vmul.f32 %v4884, %v4917
        %v4930 = vmul.f32 %v4889, %v4917
        %v4931 = vmul.f32 %v4894, %v4921
        %v4932 = vmul.f32 %v4899, %v4921
        %v4933 = vmul.f32 %v4904, %v4921
        %v4934 = vsub.f32 %v4767, %v4922
        %v4935 = vsub.f32 %v4768, %v4923
        %v4936 = vsub.f32 %v4769, %v4924
        %v4937 = vsub.f32 %v4770, %v4925
        %v4938 = vsub.f32 %v4771, %v4926
        %v4939 = vsub.f32 %v4772, %v4927
        %v4940 = vsub.f32 %v4773, %v4928
        %v4941 = vsub.f32 %v4774, %v4929
        %v4942 = vsub.f32 %v4775, %v4930
        %v4943 = vsub.f32 %v4776, %v4931
        %v4944 = vsub.f32 %v4777, %v4932
        %v4945 = vsub.f32 %v4778, %v4933
        %v4946 = vrcp.pop %v4934
        %v4947 = vmul.f32 1.0, %v4946
        %v4948 = vrcp.pop %v4937
        %v4949 = vmul.f32 1.0, %v4948
        %v4950 = vrcp.pop %v4940
        %v4951 = vmul.f32 1.0, %v4950
        %v4952 = vrcp.pop %v4943
        %v4953 = vmul.f32 1.0, %v4952
        %v4954 = vlaneseq
        %v4955 = vshrl.u32 %v4954, 7
        %v4956 = vsub.s32 3, %v4955
        %v4957 = vrot.slane %v4947, %v4956
        %v4958 = vlaneseq
        %v4959 = vshrl.u32 %v4958, 7
        %v4960 = vsub.s32 3, %v4959
        %v4961 = vrot.slane %v4949, %v4960
        %v4962 = vlaneseq
        %v4963 = vshrl.u32 %v4962, 7
        %v4964 = vsub.s32 3, %v4963
        %v4965 = vrot.slane %v4951, %v4964
        %v4966 = vlaneseq
        %v4967 = vshrl.u32 %v4966, 7
        %v4968 = vsub.s32 3, %v4967
        %v4969 = vrot.slane %v4953, %v4968
        %v4970 = vmul.f32 %v4934, %v4957
        %v4971 = vmul.f32 %v4935, %v4957
        %v4972 = vmul.f32 %v4936, %v4957
        %v4973 = vmul.f32 %v4937, %v4961
        %v4974 = vmul.f32 %v4938, %v4961
        %v4975 = vmul.f32 %v4939, %v4961
        %v4976 = vmul.f32 %v4940, %v4965
        %v4977 = vmul.f32 %v4941, %v4965
        %v4978 = vmul.f32 %v4942, %v4965
        %v4979 = vmul.f32 %v4943, %v4969
        %v4980 = vmul.f32 %v4944, %v4969
        %v4981 = vmul.f32 %v4945, %v4969
        %vm4982 = vcmp.eq.s32.totalorder %v2868, 11
        %v4983 = vsub.f32 %v4934, 1.0
        %v4984 = vsub.f32 %v4937, 1.0
        %v4985 = vsub.f32 %v4940, 1.0
        %v4986 = vsub.f32 %v4943, 1.0
        %v4987 = vsel %vm4982, 1, 0
        %vm4988 = vcmp.eq.s32.totalorder %v4987, 1
        %4990 = vset.pattern.permute.xlu0 11
        %4991 = vperm.xlu0 %4990, %v4983
        %v4992 = vpop.permute.xlu0 %4991
        %4995 = vset.pattern.permute.xlu0 11
        %4996 = vperm.xlu0 %4995, %v4984
        %v4997 = vpop.permute.xlu0 %4996
        %5000 = vset.pattern.permute.xlu0 11
        %5001 = vperm.xlu0 %5000, %v4985
        %v5002 = vpop.permute.xlu0 %5001
        %5005 = vset.pattern.permute.xlu0 11
        %5006 = vperm.xlu0 %5005, %v4986
        %v5007 = vpop.permute.xlu0 %5006
        %v5009 = vsel %vm4988, %v4992, %v4934
        %v5010 = vsel %vm4988, %v4997, %v4937
        %v5011 = vsel %vm4988, %v5002, %v4940
        %v5012 = vsel %vm4988, %v5007, %v4943
        %5014 = vset.pattern.permute.xlu0 11
        %5015 = vperm.xlu0 %5014, %v4970
        %v5016 = vpop.permute.xlu0 %5015
        %5019 = vset.pattern.permute.xlu0 11
        %5020 = vperm.xlu0 %5019, %v4971
        %v5021 = vpop.permute.xlu0 %5020
        %5024 = vset.pattern.permute.xlu0 11
        %5025 = vperm.xlu0 %5024, %v4972
        %v5026 = vpop.permute.xlu0 %5025
        %5029 = vset.pattern.permute.xlu0 11
        %5030 = vperm.xlu0 %5029, %v4973
        %v5031 = vpop.permute.xlu0 %5030
        %5034 = vset.pattern.permute.xlu0 11
        %5035 = vperm.xlu0 %5034, %v4974
        %v5036 = vpop.permute.xlu0 %5035
        %5039 = vset.pattern.permute.xlu0 11
        %5040 = vperm.xlu0 %5039, %v4975
        %v5041 = vpop.permute.xlu0 %5040
        %5044 = vset.pattern.permute.xlu0 11
        %5045 = vperm.xlu0 %5044, %v4976
        %v5046 = vpop.permute.xlu0 %5045
        %5049 = vset.pattern.permute.xlu0 11
        %5050 = vperm.xlu0 %5049, %v4977
        %v5051 = vpop.permute.xlu0 %5050
        %5054 = vset.pattern.permute.xlu0 11
        %5055 = vperm.xlu0 %5054, %v4978
        %v5056 = vpop.permute.xlu0 %5055
        %5059 = vset.pattern.permute.xlu0 11
        %5060 = vperm.xlu0 %5059, %v4979
        %v5061 = vpop.permute.xlu0 %5060
        %5064 = vset.pattern.permute.xlu0 11
        %5065 = vperm.xlu0 %5064, %v4980
        %v5066 = vpop.permute.xlu0 %5065
        %5069 = vset.pattern.permute.xlu0 11
        %5070 = vperm.xlu0 %5069, %v4981
        %v5071 = vpop.permute.xlu0 %5070
        %v5073 = vlaneseq
        %v5074 = vshrl.u32 %v5073, 7
        %v5075 = vsub.s32 3, %v5074
        %v5076 = vrot.slane %v5009, %v5075
        %v5077 = vlaneseq
        %v5078 = vshrl.u32 %v5077, 7
        %v5079 = vsub.s32 3, %v5078
        %v5080 = vrot.slane %v5010, %v5079
        %v5081 = vlaneseq
        %v5082 = vshrl.u32 %v5081, 7
        %v5083 = vsub.s32 3, %v5082
        %v5084 = vrot.slane %v5011, %v5083
        %v5085 = vlaneseq
        %v5086 = vshrl.u32 %v5085, 7
        %v5087 = vsub.s32 3, %v5086
        %v5088 = vrot.slane %v5012, %v5087
        %v5089 = vmul.f32 %v5016, %v5076
        %v5090 = vmul.f32 %v5021, %v5076
        %v5091 = vmul.f32 %v5026, %v5076
        %v5092 = vmul.f32 %v5031, %v5080
        %v5093 = vmul.f32 %v5036, %v5080
        %v5094 = vmul.f32 %v5041, %v5080
        %v5095 = vmul.f32 %v5046, %v5084
        %v5096 = vmul.f32 %v5051, %v5084
        %v5097 = vmul.f32 %v5056, %v5084
        %v5098 = vmul.f32 %v5061, %v5088
        %v5099 = vmul.f32 %v5066, %v5088
        %v5100 = vmul.f32 %v5071, %v5088
        %v5101 = vsub.f32 %v4934, %v5089
        %v5102 = vsub.f32 %v4935, %v5090
        %v5103 = vsub.f32 %v4936, %v5091
        %v5104 = vsub.f32 %v4937, %v5092
        %v5105 = vsub.f32 %v4938, %v5093
        %v5106 = vsub.f32 %v4939, %v5094
        %v5107 = vsub.f32 %v4940, %v5095
        %v5108 = vsub.f32 %v4941, %v5096
        %v5109 = vsub.f32 %v4942, %v5097
        %v5110 = vsub.f32 %v4943, %v5098
        %v5111 = vsub.f32 %v4944, %v5099
        %v5112 = vsub.f32 %v4945, %v5100
        %v5113 = vrcp.pop %v5101
        %v5114 = vmul.f32 1.0, %v5113
        %v5115 = vrcp.pop %v5104
        %v5116 = vmul.f32 1.0, %v5115
        %v5117 = vrcp.pop %v5107
        %v5118 = vmul.f32 1.0, %v5117
        %v5119 = vrcp.pop %v5110
        %v5120 = vmul.f32 1.0, %v5119
        %v5121 = vlaneseq
        %v5122 = vshrl.u32 %v5121, 7
        %v5123 = vsub.s32 4, %v5122
        %v5124 = vrot.slane %v5114, %v5123
        %v5125 = vlaneseq
        %v5126 = vshrl.u32 %v5125, 7
        %v5127 = vsub.s32 4, %v5126
        %v5128 = vrot.slane %v5116, %v5127
        %v5129 = vlaneseq
        %v5130 = vshrl.u32 %v5129, 7
        %v5131 = vsub.s32 4, %v5130
        %v5132 = vrot.slane %v5118, %v5131
        %v5133 = vlaneseq
        %v5134 = vshrl.u32 %v5133, 7
        %v5135 = vsub.s32 4, %v5134
        %v5136 = vrot.slane %v5120, %v5135
        %v5137 = vmul.f32 %v5101, %v5124
        %v5138 = vmul.f32 %v5102, %v5124
        %v5139 = vmul.f32 %v5103, %v5124
        %v5140 = vmul.f32 %v5104, %v5128
        %v5141 = vmul.f32 %v5105, %v5128
        %v5142 = vmul.f32 %v5106, %v5128
        %v5143 = vmul.f32 %v5107, %v5132
        %v5144 = vmul.f32 %v5108, %v5132
        %v5145 = vmul.f32 %v5109, %v5132
        %v5146 = vmul.f32 %v5110, %v5136
        %v5147 = vmul.f32 %v5111, %v5136
        %v5148 = vmul.f32 %v5112, %v5136
        %vm5149 = vcmp.eq.s32.totalorder %v2868, 12
        %v5150 = vsub.f32 %v5101, 1.0
        %v5151 = vsub.f32 %v5104, 1.0
        %v5152 = vsub.f32 %v5107, 1.0
        %v5153 = vsub.f32 %v5110, 1.0
        %v5154 = vsel %vm5149, 1, 0
        %vm5155 = vcmp.eq.s32.totalorder %v5154, 1
        %5157 = vset.pattern.permute.xlu0 12
        %5158 = vperm.xlu0 %5157, %v5150
        %v5159 = vpop.permute.xlu0 %5158
        %5162 = vset.pattern.permute.xlu0 12
        %5163 = vperm.xlu0 %5162, %v5151
        %v5164 = vpop.permute.xlu0 %5163
        %5167 = vset.pattern.permute.xlu0 12
        %5168 = vperm.xlu0 %5167, %v5152
        %v5169 = vpop.permute.xlu0 %5168
        %5172 = vset.pattern.permute.xlu0 12
        %5173 = vperm.xlu0 %5172, %v5153
        %v5174 = vpop.permute.xlu0 %5173
        %v5176 = vsel %vm5155, %v5159, %v5101
        %v5177 = vsel %vm5155, %v5164, %v5104
        %v5178 = vsel %vm5155, %v5169, %v5107
        %v5179 = vsel %vm5155, %v5174, %v5110
        %5181 = vset.pattern.permute.xlu0 12
        %5182 = vperm.xlu0 %5181, %v5137
        %v5183 = vpop.permute.xlu0 %5182
        %5186 = vset.pattern.permute.xlu0 12
        %5187 = vperm.xlu0 %5186, %v5138
        %v5188 = vpop.permute.xlu0 %5187
        %5191 = vset.pattern.permute.xlu0 12
        %5192 = vperm.xlu0 %5191, %v5139
        %v5193 = vpop.permute.xlu0 %5192
        %5196 = vset.pattern.permute.xlu0 12
        %5197 = vperm.xlu0 %5196, %v5140
        %v5198 = vpop.permute.xlu0 %5197
        %5201 = vset.pattern.permute.xlu0 12
        %5202 = vperm.xlu0 %5201, %v5141
        %v5203 = vpop.permute.xlu0 %5202
        %5206 = vset.pattern.permute.xlu0 12
        %5207 = vperm.xlu0 %5206, %v5142
        %v5208 = vpop.permute.xlu0 %5207
        %5211 = vset.pattern.permute.xlu0 12
        %5212 = vperm.xlu0 %5211, %v5143
        %v5213 = vpop.permute.xlu0 %5212
        %5216 = vset.pattern.permute.xlu0 12
        %5217 = vperm.xlu0 %5216, %v5144
        %v5218 = vpop.permute.xlu0 %5217
        %5221 = vset.pattern.permute.xlu0 12
        %5222 = vperm.xlu0 %5221, %v5145
        %v5223 = vpop.permute.xlu0 %5222
        %5226 = vset.pattern.permute.xlu0 12
        %5227 = vperm.xlu0 %5226, %v5146
        %v5228 = vpop.permute.xlu0 %5227
        %5231 = vset.pattern.permute.xlu0 12
        %5232 = vperm.xlu0 %5231, %v5147
        %v5233 = vpop.permute.xlu0 %5232
        %5236 = vset.pattern.permute.xlu0 12
        %5237 = vperm.xlu0 %5236, %v5148
        %v5238 = vpop.permute.xlu0 %5237
        %v5240 = vlaneseq
        %v5241 = vshrl.u32 %v5240, 7
        %v5242 = vsub.s32 4, %v5241
        %v5243 = vrot.slane %v5176, %v5242
        %v5244 = vlaneseq
        %v5245 = vshrl.u32 %v5244, 7
        %v5246 = vsub.s32 4, %v5245
        %v5247 = vrot.slane %v5177, %v5246
        %v5248 = vlaneseq
        %v5249 = vshrl.u32 %v5248, 7
        %v5250 = vsub.s32 4, %v5249
        %v5251 = vrot.slane %v5178, %v5250
        %v5252 = vlaneseq
        %v5253 = vshrl.u32 %v5252, 7
        %v5254 = vsub.s32 4, %v5253
        %v5255 = vrot.slane %v5179, %v5254
        %v5256 = vmul.f32 %v5183, %v5243
        %v5257 = vmul.f32 %v5188, %v5243
        %v5258 = vmul.f32 %v5193, %v5243
        %v5259 = vmul.f32 %v5198, %v5247
        %v5260 = vmul.f32 %v5203, %v5247
        %v5261 = vmul.f32 %v5208, %v5247
        %v5262 = vmul.f32 %v5213, %v5251
        %v5263 = vmul.f32 %v5218, %v5251
        %v5264 = vmul.f32 %v5223, %v5251
        %v5265 = vmul.f32 %v5228, %v5255
        %v5266 = vmul.f32 %v5233, %v5255
        %v5267 = vmul.f32 %v5238, %v5255
        %v5268 = vsub.f32 %v5101, %v5256
        %v5269 = vsub.f32 %v5102, %v5257
        %v5270 = vsub.f32 %v5103, %v5258
        %v5271 = vsub.f32 %v5104, %v5259
        %v5272 = vsub.f32 %v5105, %v5260
        %v5273 = vsub.f32 %v5106, %v5261
        %v5274 = vsub.f32 %v5107, %v5262
        %v5275 = vsub.f32 %v5108, %v5263
        %v5276 = vsub.f32 %v5109, %v5264
        %v5277 = vsub.f32 %v5110, %v5265
        %v5278 = vsub.f32 %v5111, %v5266
        %v5279 = vsub.f32 %v5112, %v5267
        %v5280 = vrcp.pop %v5268
        %v5281 = vmul.f32 1.0, %v5280
        %v5282 = vrcp.pop %v5271
        %v5283 = vmul.f32 1.0, %v5282
        %v5284 = vrcp.pop %v5274
        %v5285 = vmul.f32 1.0, %v5284
        %v5286 = vrcp.pop %v5277
        %v5287 = vmul.f32 1.0, %v5286
        %v5288 = vlaneseq
        %v5289 = vshrl.u32 %v5288, 7
        %v5290 = vsub.s32 5, %v5289
        %v5291 = vrot.slane %v5281, %v5290
        %v5292 = vlaneseq
        %v5293 = vshrl.u32 %v5292, 7
        %v5294 = vsub.s32 5, %v5293
        %v5295 = vrot.slane %v5283, %v5294
        %v5296 = vlaneseq
        %v5297 = vshrl.u32 %v5296, 7
        %v5298 = vsub.s32 5, %v5297
        %v5299 = vrot.slane %v5285, %v5298
        %v5300 = vlaneseq
        %v5301 = vshrl.u32 %v5300, 7
        %v5302 = vsub.s32 5, %v5301
        %v5303 = vrot.slane %v5287, %v5302
        %v5304 = vmul.f32 %v5268, %v5291
        %v5305 = vmul.f32 %v5269, %v5291
        %v5306 = vmul.f32 %v5270, %v5291
        %v5307 = vmul.f32 %v5271, %v5295
        %v5308 = vmul.f32 %v5272, %v5295
        %v5309 = vmul.f32 %v5273, %v5295
        %v5310 = vmul.f32 %v5274, %v5299
        %v5311 = vmul.f32 %v5275, %v5299
        %v5312 = vmul.f32 %v5276, %v5299
        %v5313 = vmul.f32 %v5277, %v5303
        %v5314 = vmul.f32 %v5278, %v5303
        %v5315 = vmul.f32 %v5279, %v5303
        %vm5316 = vcmp.eq.s32.totalorder %v2868, 13
        %v5317 = vsub.f32 %v5268, 1.0
        %v5318 = vsub.f32 %v5271, 1.0
        %v5319 = vsub.f32 %v5274, 1.0
        %v5320 = vsub.f32 %v5277, 1.0
        %v5321 = vsel %vm5316, 1, 0
        %vm5322 = vcmp.eq.s32.totalorder %v5321, 1
        %5324 = vset.pattern.permute.xlu0 13
        %5325 = vperm.xlu0 %5324, %v5317
        %v5326 = vpop.permute.xlu0 %5325
        %5329 = vset.pattern.permute.xlu0 13
        %5330 = vperm.xlu0 %5329, %v5318
        %v5331 = vpop.permute.xlu0 %5330
        %5334 = vset.pattern.permute.xlu0 13
        %5335 = vperm.xlu0 %5334, %v5319
        %v5336 = vpop.permute.xlu0 %5335
        %5339 = vset.pattern.permute.xlu0 13
        %5340 = vperm.xlu0 %5339, %v5320
        %v5341 = vpop.permute.xlu0 %5340
        %v5343 = vsel %vm5322, %v5326, %v5268
        %v5344 = vsel %vm5322, %v5331, %v5271
        %v5345 = vsel %vm5322, %v5336, %v5274
        %v5346 = vsel %vm5322, %v5341, %v5277
        %5348 = vset.pattern.permute.xlu0 13
        %5349 = vperm.xlu0 %5348, %v5304
        %v5350 = vpop.permute.xlu0 %5349
        %5353 = vset.pattern.permute.xlu0 13
        %5354 = vperm.xlu0 %5353, %v5305
        %v5355 = vpop.permute.xlu0 %5354
        %5358 = vset.pattern.permute.xlu0 13
        %5359 = vperm.xlu0 %5358, %v5306
        %v5360 = vpop.permute.xlu0 %5359
        %5363 = vset.pattern.permute.xlu0 13
        %5364 = vperm.xlu0 %5363, %v5307
        %v5365 = vpop.permute.xlu0 %5364
        %5368 = vset.pattern.permute.xlu0 13
        %5369 = vperm.xlu0 %5368, %v5308
        %v5370 = vpop.permute.xlu0 %5369
        %5373 = vset.pattern.permute.xlu0 13
        %5374 = vperm.xlu0 %5373, %v5309
        %v5375 = vpop.permute.xlu0 %5374
        %5378 = vset.pattern.permute.xlu0 13
        %5379 = vperm.xlu0 %5378, %v5310
        %v5380 = vpop.permute.xlu0 %5379
        %5383 = vset.pattern.permute.xlu0 13
        %5384 = vperm.xlu0 %5383, %v5311
        %v5385 = vpop.permute.xlu0 %5384
        %5388 = vset.pattern.permute.xlu0 13
        %5389 = vperm.xlu0 %5388, %v5312
        %v5390 = vpop.permute.xlu0 %5389
        %5393 = vset.pattern.permute.xlu0 13
        %5394 = vperm.xlu0 %5393, %v5313
        %v5395 = vpop.permute.xlu0 %5394
        %5398 = vset.pattern.permute.xlu0 13
        %5399 = vperm.xlu0 %5398, %v5314
        %v5400 = vpop.permute.xlu0 %5399
        %5403 = vset.pattern.permute.xlu0 13
        %5404 = vperm.xlu0 %5403, %v5315
        %v5405 = vpop.permute.xlu0 %5404
        %v5407 = vlaneseq
        %v5408 = vshrl.u32 %v5407, 7
        %v5409 = vsub.s32 5, %v5408
        %v5410 = vrot.slane %v5343, %v5409
        %v5411 = vlaneseq
        %v5412 = vshrl.u32 %v5411, 7
        %v5413 = vsub.s32 5, %v5412
        %v5414 = vrot.slane %v5344, %v5413
        %v5415 = vlaneseq
        %v5416 = vshrl.u32 %v5415, 7
        %v5417 = vsub.s32 5, %v5416
        %v5418 = vrot.slane %v5345, %v5417
        %v5419 = vlaneseq
        %v5420 = vshrl.u32 %v5419, 7
        %v5421 = vsub.s32 5, %v5420
        %v5422 = vrot.slane %v5346, %v5421
        %v5423 = vmul.f32 %v5350, %v5410
        %v5424 = vmul.f32 %v5355, %v5410
        %v5425 = vmul.f32 %v5360, %v5410
        %v5426 = vmul.f32 %v5365, %v5414
        %v5427 = vmul.f32 %v5370, %v5414
        %v5428 = vmul.f32 %v5375, %v5414
        %v5429 = vmul.f32 %v5380, %v5418
        %v5430 = vmul.f32 %v5385, %v5418
        %v5431 = vmul.f32 %v5390, %v5418
        %v5432 = vmul.f32 %v5395, %v5422
        %v5433 = vmul.f32 %v5400, %v5422
        %v5434 = vmul.f32 %v5405, %v5422
        %v5435 = vsub.f32 %v5268, %v5423
        %v5436 = vsub.f32 %v5269, %v5424
        %v5437 = vsub.f32 %v5270, %v5425
        %v5438 = vsub.f32 %v5271, %v5426
        %v5439 = vsub.f32 %v5272, %v5427
        %v5440 = vsub.f32 %v5273, %v5428
        %v5441 = vsub.f32 %v5274, %v5429
        %v5442 = vsub.f32 %v5275, %v5430
        %v5443 = vsub.f32 %v5276, %v5431
        %v5444 = vsub.f32 %v5277, %v5432
        %v5445 = vsub.f32 %v5278, %v5433
        %v5446 = vsub.f32 %v5279, %v5434
        %v5447 = vrcp.pop %v5435
        %v5448 = vmul.f32 1.0, %v5447
        %v5449 = vrcp.pop %v5438
        %v5450 = vmul.f32 1.0, %v5449
        %v5451 = vrcp.pop %v5441
        %v5452 = vmul.f32 1.0, %v5451
        %v5453 = vrcp.pop %v5444
        %v5454 = vmul.f32 1.0, %v5453
        %v5455 = vlaneseq
        %v5456 = vshrl.u32 %v5455, 7
        %v5457 = vsub.s32 6, %v5456
        %v5458 = vrot.slane %v5448, %v5457
        %v5459 = vlaneseq
        %v5460 = vshrl.u32 %v5459, 7
        %v5461 = vsub.s32 6, %v5460
        %v5462 = vrot.slane %v5450, %v5461
        %v5463 = vlaneseq
        %v5464 = vshrl.u32 %v5463, 7
        %v5465 = vsub.s32 6, %v5464
        %v5466 = vrot.slane %v5452, %v5465
        %v5467 = vlaneseq
        %v5468 = vshrl.u32 %v5467, 7
        %v5469 = vsub.s32 6, %v5468
        %v5470 = vrot.slane %v5454, %v5469
        %v5471 = vmul.f32 %v5435, %v5458
        %v5472 = vmul.f32 %v5436, %v5458
        %v5473 = vmul.f32 %v5437, %v5458
        %v5474 = vmul.f32 %v5438, %v5462
        %v5475 = vmul.f32 %v5439, %v5462
        %v5476 = vmul.f32 %v5440, %v5462
        %v5477 = vmul.f32 %v5441, %v5466
        %v5478 = vmul.f32 %v5442, %v5466
        %v5479 = vmul.f32 %v5443, %v5466
        %v5480 = vmul.f32 %v5444, %v5470
        %v5481 = vmul.f32 %v5445, %v5470
        %v5482 = vmul.f32 %v5446, %v5470
        %vm5483 = vcmp.eq.s32.totalorder %v2868, 14
        %v5484 = vsub.f32 %v5435, 1.0
        %v5485 = vsub.f32 %v5438, 1.0
        %v5486 = vsub.f32 %v5441, 1.0
        %v5487 = vsub.f32 %v5444, 1.0
        %v5488 = vsel %vm5483, 1, 0
        %vm5489 = vcmp.eq.s32.totalorder %v5488, 1
        %5491 = vset.pattern.permute.xlu0 14
        %5492 = vperm.xlu0 %5491, %v5484
        %v5493 = vpop.permute.xlu0 %5492
        %5496 = vset.pattern.permute.xlu0 14
        %5497 = vperm.xlu0 %5496, %v5485
        %v5498 = vpop.permute.xlu0 %5497
        %5501 = vset.pattern.permute.xlu0 14
        %5502 = vperm.xlu0 %5501, %v5486
        %v5503 = vpop.permute.xlu0 %5502
        %5506 = vset.pattern.permute.xlu0 14
        %5507 = vperm.xlu0 %5506, %v5487
        %v5508 = vpop.permute.xlu0 %5507
        %v5510 = vsel %vm5489, %v5493, %v5435
        %v5511 = vsel %vm5489, %v5498, %v5438
        %v5512 = vsel %vm5489, %v5503, %v5441
        %v5513 = vsel %vm5489, %v5508, %v5444
        %5515 = vset.pattern.permute.xlu0 14
        %5516 = vperm.xlu0 %5515, %v5471
        %v5517 = vpop.permute.xlu0 %5516
        %5520 = vset.pattern.permute.xlu0 14
        %5521 = vperm.xlu0 %5520, %v5472
        %v5522 = vpop.permute.xlu0 %5521
        %5525 = vset.pattern.permute.xlu0 14
        %5526 = vperm.xlu0 %5525, %v5473
        %v5527 = vpop.permute.xlu0 %5526
        %5530 = vset.pattern.permute.xlu0 14
        %5531 = vperm.xlu0 %5530, %v5474
        %v5532 = vpop.permute.xlu0 %5531
        %5535 = vset.pattern.permute.xlu0 14
        %5536 = vperm.xlu0 %5535, %v5475
        %v5537 = vpop.permute.xlu0 %5536
        %5540 = vset.pattern.permute.xlu0 14
        %5541 = vperm.xlu0 %5540, %v5476
        %v5542 = vpop.permute.xlu0 %5541
        %5545 = vset.pattern.permute.xlu0 14
        %5546 = vperm.xlu0 %5545, %v5477
        %v5547 = vpop.permute.xlu0 %5546
        %5550 = vset.pattern.permute.xlu0 14
        %5551 = vperm.xlu0 %5550, %v5478
        %v5552 = vpop.permute.xlu0 %5551
        %5555 = vset.pattern.permute.xlu0 14
        %5556 = vperm.xlu0 %5555, %v5479
        %v5557 = vpop.permute.xlu0 %5556
        %5560 = vset.pattern.permute.xlu0 14
        %5561 = vperm.xlu0 %5560, %v5480
        %v5562 = vpop.permute.xlu0 %5561
        %5565 = vset.pattern.permute.xlu0 14
        %5566 = vperm.xlu0 %5565, %v5481
        %v5567 = vpop.permute.xlu0 %5566
        %5570 = vset.pattern.permute.xlu0 14
        %5571 = vperm.xlu0 %5570, %v5482
        %v5572 = vpop.permute.xlu0 %5571
        %v5574 = vlaneseq
        %v5575 = vshrl.u32 %v5574, 7
        %v5576 = vsub.s32 6, %v5575
        %v5577 = vrot.slane %v5510, %v5576
        %v5578 = vlaneseq
        %v5579 = vshrl.u32 %v5578, 7
        %v5580 = vsub.s32 6, %v5579
        %v5581 = vrot.slane %v5511, %v5580
        %v5582 = vlaneseq
        %v5583 = vshrl.u32 %v5582, 7
        %v5584 = vsub.s32 6, %v5583
        %v5585 = vrot.slane %v5512, %v5584
        %v5586 = vlaneseq
        %v5587 = vshrl.u32 %v5586, 7
        %v5588 = vsub.s32 6, %v5587
        %v5589 = vrot.slane %v5513, %v5588
        %v5590 = vmul.f32 %v5517, %v5577
        %v5591 = vmul.f32 %v5522, %v5577
        %v5592 = vmul.f32 %v5527, %v5577
        %v5593 = vmul.f32 %v5532, %v5581
        %v5594 = vmul.f32 %v5537, %v5581
        %v5595 = vmul.f32 %v5542, %v5581
        %v5596 = vmul.f32 %v5547, %v5585
        %v5597 = vmul.f32 %v5552, %v5585
        %v5598 = vmul.f32 %v5557, %v5585
        %v5599 = vmul.f32 %v5562, %v5589
        %v5600 = vmul.f32 %v5567, %v5589
        %v5601 = vmul.f32 %v5572, %v5589
        %v5602 = vsub.f32 %v5435, %v5590
        %v5603 = vsub.f32 %v5436, %v5591
        %v5604 = vsub.f32 %v5437, %v5592
        %v5605 = vsub.f32 %v5438, %v5593
        %v5606 = vsub.f32 %v5439, %v5594
        %v5607 = vsub.f32 %v5440, %v5595
        %v5608 = vsub.f32 %v5441, %v5596
        %v5609 = vsub.f32 %v5442, %v5597
        %v5610 = vsub.f32 %v5443, %v5598
        %v5611 = vsub.f32 %v5444, %v5599
        %v5612 = vsub.f32 %v5445, %v5600
        %v5613 = vsub.f32 %v5446, %v5601
        %v5614 = vrcp.pop %v5602
        %v5615 = vmul.f32 1.0, %v5614
        %v5616 = vrcp.pop %v5605
        %v5617 = vmul.f32 1.0, %v5616
        %v5618 = vrcp.pop %v5608
        %v5619 = vmul.f32 1.0, %v5618
        %v5620 = vrcp.pop %v5611
        %v5621 = vmul.f32 1.0, %v5620
        %v5622 = vlaneseq
        %v5623 = vshrl.u32 %v5622, 7
        %v5624 = vsub.s32 7, %v5623
        %v5625 = vrot.slane %v5615, %v5624
        %v5626 = vlaneseq
        %v5627 = vshrl.u32 %v5626, 7
        %v5628 = vsub.s32 7, %v5627
        %v5629 = vrot.slane %v5617, %v5628
        %v5630 = vlaneseq
        %v5631 = vshrl.u32 %v5630, 7
        %v5632 = vsub.s32 7, %v5631
        %v5633 = vrot.slane %v5619, %v5632
        %v5634 = vlaneseq
        %v5635 = vshrl.u32 %v5634, 7
        %v5636 = vsub.s32 7, %v5635
        %v5637 = vrot.slane %v5621, %v5636
        %v5638 = vmul.f32 %v5603, %v5625
        %v5639 = vmul.f32 %v5604, %v5625
        %v5640 = vmul.f32 %v5606, %v5629
        %v5641 = vmul.f32 %v5607, %v5629
        %v5642 = vmul.f32 %v5609, %v5633
        %v5643 = vmul.f32 %v5610, %v5633
        %v5644 = vmul.f32 %v5612, %v5637
        %v5645 = vmul.f32 %v5613, %v5637
        %vm5646 = vcmp.eq.s32.totalorder %v2868, 15
        %v5647 = vsub.f32 %v5602, 1.0
        %v5648 = vsub.f32 %v5605, 1.0
        %v5649 = vsub.f32 %v5608, 1.0
        %v5650 = vsub.f32 %v5611, 1.0
        %v5651 = vsel %vm5646, 1, 0
        %vm5652 = vcmp.eq.s32.totalorder %v5651, 1
        %5654 = vset.pattern.permute.xlu0 15
        %5655 = vperm.xlu0 %5654, %v5647
        %v5656 = vpop.permute.xlu0 %5655
        %5659 = vset.pattern.permute.xlu0 15
        %5660 = vperm.xlu0 %5659, %v5648
        %v5661 = vpop.permute.xlu0 %5660
        %5664 = vset.pattern.permute.xlu0 15
        %5665 = vperm.xlu0 %5664, %v5649
        %v5666 = vpop.permute.xlu0 %5665
        %5669 = vset.pattern.permute.xlu0 15
        %5670 = vperm.xlu0 %5669, %v5650
        %v5671 = vpop.permute.xlu0 %5670
        %v5673 = vsel %vm5652, %v5656, %v5602
        %v5674 = vsel %vm5652, %v5661, %v5605
        %v5675 = vsel %vm5652, %v5666, %v5608
        %v5676 = vsel %vm5652, %v5671, %v5611
        %5678 = vset.pattern.permute.xlu0 15
        %5679 = vperm.xlu0 %5678, %v5638
        %v5680 = vpop.permute.xlu0 %5679
        %5683 = vset.pattern.permute.xlu0 15
        %5684 = vperm.xlu0 %5683, %v5639
        %v5685 = vpop.permute.xlu0 %5684
        %5688 = vset.pattern.permute.xlu0 15
        %5689 = vperm.xlu0 %5688, %v5640
        %v5690 = vpop.permute.xlu0 %5689
        %5693 = vset.pattern.permute.xlu0 15
        %5694 = vperm.xlu0 %5693, %v5641
        %v5695 = vpop.permute.xlu0 %5694
        %5698 = vset.pattern.permute.xlu0 15
        %5699 = vperm.xlu0 %5698, %v5642
        %v5700 = vpop.permute.xlu0 %5699
        %5703 = vset.pattern.permute.xlu0 15
        %5704 = vperm.xlu0 %5703, %v5643
        %v5705 = vpop.permute.xlu0 %5704
        %5708 = vset.pattern.permute.xlu0 15
        %5709 = vperm.xlu0 %5708, %v5644
        %v5710 = vpop.permute.xlu0 %5709
        %5713 = vset.pattern.permute.xlu0 15
        %5714 = vperm.xlu0 %5713, %v5645
        %v5715 = vpop.permute.xlu0 %5714
        %v5717 = vlaneseq
        %v5718 = vshrl.u32 %v5717, 7
        %v5719 = vsub.s32 7, %v5718
        %v5720 = vrot.slane %v5673, %v5719
        %v5721 = vlaneseq
        %v5722 = vshrl.u32 %v5721, 7
        %v5723 = vsub.s32 7, %v5722
        %v5724 = vrot.slane %v5674, %v5723
        %v5725 = vlaneseq
        %v5726 = vshrl.u32 %v5725, 7
        %v5727 = vsub.s32 7, %v5726
        %v5728 = vrot.slane %v5675, %v5727
        %v5729 = vlaneseq
        %v5730 = vshrl.u32 %v5729, 7
        %v5731 = vsub.s32 7, %v5730
        %v5732 = vrot.slane %v5676, %v5731
        %v5733 = vmul.f32 %v5680, %v5720
        %v5734 = vmul.f32 %v5685, %v5720
        %v5735 = vmul.f32 %v5690, %v5724
        %v5736 = vmul.f32 %v5695, %v5724
        %v5737 = vmul.f32 %v5700, %v5728
        %v5738 = vmul.f32 %v5705, %v5728
        %v5739 = vmul.f32 %v5710, %v5732
        %v5740 = vmul.f32 %v5715, %v5732
        %v5741 = vsub.f32 %v5603, %v5733
        %v5742 = vsub.f32 %v5604, %v5734
        %v5743 = vsub.f32 %v5606, %v5735
        %v5744 = vsub.f32 %v5607, %v5736
        %v5745 = vsub.f32 %v5609, %v5737
        %v5746 = vsub.f32 %v5610, %v5738
        %v5747 = vsub.f32 %v5612, %v5739
        %v5748 = vsub.f32 %v5613, %v5740
        %v5749 = vrcp.pop %v5741
        %v5750 = vmul.f32 1.0, %v5749
        %v5751 = vrcp.pop %v5743
        %v5752 = vmul.f32 1.0, %v5751
        %v5753 = vrcp.pop %v5745
        %v5754 = vmul.f32 1.0, %v5753
        %v5755 = vrcp.pop %v5747
        %v5756 = vmul.f32 1.0, %v5755
        %v5757 = vlaneseq
        %v5758 = vshrl.u32 %v5757, 7
        %v5759 = vsub.s32 0, %v5758
        %v5760 = vrot.slane %v5750, %v5759
        %v5761 = vlaneseq
        %v5762 = vshrl.u32 %v5761, 7
        %v5763 = vsub.s32 0, %v5762
        %v5764 = vrot.slane %v5752, %v5763
        %v5765 = vlaneseq
        %v5766 = vshrl.u32 %v5765, 7
        %v5767 = vsub.s32 0, %v5766
        %v5768 = vrot.slane %v5754, %v5767
        %v5769 = vlaneseq
        %v5770 = vshrl.u32 %v5769, 7
        %v5771 = vsub.s32 0, %v5770
        %v5772 = vrot.slane %v5756, %v5771
        %v5773 = vmul.f32 %v5741, %v5760
        %v5774 = vmul.f32 %v5742, %v5760
        %v5775 = vmul.f32 %v5743, %v5764
        %v5776 = vmul.f32 %v5744, %v5764
        %v5777 = vmul.f32 %v5745, %v5768
        %v5778 = vmul.f32 %v5746, %v5768
        %v5779 = vmul.f32 %v5747, %v5772
        %v5780 = vmul.f32 %v5748, %v5772
        %vm5781 = vcmp.eq.s32.totalorder %v2868, 16
        %v5782 = vsub.f32 %v5741, 1.0
        %v5783 = vsub.f32 %v5743, 1.0
        %v5784 = vsub.f32 %v5745, 1.0
        %v5785 = vsub.f32 %v5747, 1.0
        %v5786 = vsel %vm5781, 1, 0
        %vm5787 = vcmp.eq.s32.totalorder %v5786, 1
        %5789 = vset.pattern.permute.xlu0 16
        %5790 = vperm.xlu0 %5789, %v5782
        %v5791 = vpop.permute.xlu0 %5790
        %5794 = vset.pattern.permute.xlu0 16
        %5795 = vperm.xlu0 %5794, %v5783
        %v5796 = vpop.permute.xlu0 %5795
        %5799 = vset.pattern.permute.xlu0 16
        %5800 = vperm.xlu0 %5799, %v5784
        %v5801 = vpop.permute.xlu0 %5800
        %5804 = vset.pattern.permute.xlu0 16
        %5805 = vperm.xlu0 %5804, %v5785
        %v5806 = vpop.permute.xlu0 %5805
        %v5808 = vsel %vm5787, %v5791, %v5741
        %v5809 = vsel %vm5787, %v5796, %v5743
        %v5810 = vsel %vm5787, %v5801, %v5745
        %v5811 = vsel %vm5787, %v5806, %v5747
        %5813 = vset.pattern.permute.xlu0 16
        %5814 = vperm.xlu0 %5813, %v5773
        %v5815 = vpop.permute.xlu0 %5814
        %5818 = vset.pattern.permute.xlu0 16
        %5819 = vperm.xlu0 %5818, %v5774
        %v5820 = vpop.permute.xlu0 %5819
        %5823 = vset.pattern.permute.xlu0 16
        %5824 = vperm.xlu0 %5823, %v5775
        %v5825 = vpop.permute.xlu0 %5824
        %5828 = vset.pattern.permute.xlu0 16
        %5829 = vperm.xlu0 %5828, %v5776
        %v5830 = vpop.permute.xlu0 %5829
        %5833 = vset.pattern.permute.xlu0 16
        %5834 = vperm.xlu0 %5833, %v5777
        %v5835 = vpop.permute.xlu0 %5834
        %5838 = vset.pattern.permute.xlu0 16
        %5839 = vperm.xlu0 %5838, %v5778
        %v5840 = vpop.permute.xlu0 %5839
        %5843 = vset.pattern.permute.xlu0 16
        %5844 = vperm.xlu0 %5843, %v5779
        %v5845 = vpop.permute.xlu0 %5844
        %5848 = vset.pattern.permute.xlu0 16
        %5849 = vperm.xlu0 %5848, %v5780
        %v5850 = vpop.permute.xlu0 %5849
        %v5852 = vlaneseq
        %v5853 = vshrl.u32 %v5852, 7
        %v5854 = vsub.s32 0, %v5853
        %v5855 = vrot.slane %v5808, %v5854
        %v5856 = vlaneseq
        %v5857 = vshrl.u32 %v5856, 7
        %v5858 = vsub.s32 0, %v5857
        %v5859 = vrot.slane %v5809, %v5858
        %v5860 = vlaneseq
        %v5861 = vshrl.u32 %v5860, 7
        %v5862 = vsub.s32 0, %v5861
        %v5863 = vrot.slane %v5810, %v5862
        %v5864 = vlaneseq
        %v5865 = vshrl.u32 %v5864, 7
        %v5866 = vsub.s32 0, %v5865
        %v5867 = vrot.slane %v5811, %v5866
        %v5868 = vmul.f32 %v5815, %v5855
        %v5869 = vmul.f32 %v5820, %v5855
        %v5870 = vmul.f32 %v5825, %v5859
        %v5871 = vmul.f32 %v5830, %v5859
        %v5872 = vmul.f32 %v5835, %v5863
        %v5873 = vmul.f32 %v5840, %v5863
        %v5874 = vmul.f32 %v5845, %v5867
        %v5875 = vmul.f32 %v5850, %v5867
        %v5876 = vsub.f32 %v5741, %v5868
        %v5877 = vsub.f32 %v5742, %v5869
        %v5878 = vsub.f32 %v5743, %v5870
        %v5879 = vsub.f32 %v5744, %v5871
        %v5880 = vsub.f32 %v5745, %v5872
        %v5881 = vsub.f32 %v5746, %v5873
        %v5882 = vsub.f32 %v5747, %v5874
        %v5883 = vsub.f32 %v5748, %v5875
        %v5884 = vrcp.pop %v5876
        %v5885 = vmul.f32 1.0, %v5884
        %v5886 = vrcp.pop %v5878
        %v5887 = vmul.f32 1.0, %v5886
        %v5888 = vrcp.pop %v5880
        %v5889 = vmul.f32 1.0, %v5888
        %v5890 = vrcp.pop %v5882
        %v5891 = vmul.f32 1.0, %v5890
        %v5892 = vlaneseq
        %v5893 = vshrl.u32 %v5892, 7
        %v5894 = vsub.s32 1, %v5893
        %v5895 = vrot.slane %v5885, %v5894
        %v5896 = vlaneseq
        %v5897 = vshrl.u32 %v5896, 7
        %v5898 = vsub.s32 1, %v5897
        %v5899 = vrot.slane %v5887, %v5898
        %v5900 = vlaneseq
        %v5901 = vshrl.u32 %v5900, 7
        %v5902 = vsub.s32 1, %v5901
        %v5903 = vrot.slane %v5889, %v5902
        %v5904 = vlaneseq
        %v5905 = vshrl.u32 %v5904, 7
        %v5906 = vsub.s32 1, %v5905
        %v5907 = vrot.slane %v5891, %v5906
        %v5908 = vmul.f32 %v5876, %v5895
        %v5909 = vmul.f32 %v5877, %v5895
        %v5910 = vmul.f32 %v5878, %v5899
        %v5911 = vmul.f32 %v5879, %v5899
        %v5912 = vmul.f32 %v5880, %v5903
        %v5913 = vmul.f32 %v5881, %v5903
        %v5914 = vmul.f32 %v5882, %v5907
        %v5915 = vmul.f32 %v5883, %v5907
        %vm5916 = vcmp.eq.s32.totalorder %v2868, 17
        %v5917 = vsub.f32 %v5876, 1.0
        %v5918 = vsub.f32 %v5878, 1.0
        %v5919 = vsub.f32 %v5880, 1.0
        %v5920 = vsub.f32 %v5882, 1.0
        %v5921 = vsel %vm5916, 1, 0
        %vm5922 = vcmp.eq.s32.totalorder %v5921, 1
        %5924 = vset.pattern.permute.xlu0 17
        %5925 = vperm.xlu0 %5924, %v5917
        %v5926 = vpop.permute.xlu0 %5925
        %5929 = vset.pattern.permute.xlu0 17
        %5930 = vperm.xlu0 %5929, %v5918
        %v5931 = vpop.permute.xlu0 %5930
        %5934 = vset.pattern.permute.xlu0 17
        %5935 = vperm.xlu0 %5934, %v5919
        %v5936 = vpop.permute.xlu0 %5935
        %5939 = vset.pattern.permute.xlu0 17
        %5940 = vperm.xlu0 %5939, %v5920
        %v5941 = vpop.permute.xlu0 %5940
        %v5943 = vsel %vm5922, %v5926, %v5876
        %v5944 = vsel %vm5922, %v5931, %v5878
        %v5945 = vsel %vm5922, %v5936, %v5880
        %v5946 = vsel %vm5922, %v5941, %v5882
        %5948 = vset.pattern.permute.xlu0 17
        %5949 = vperm.xlu0 %5948, %v5908
        %v5950 = vpop.permute.xlu0 %5949
        %5953 = vset.pattern.permute.xlu0 17
        %5954 = vperm.xlu0 %5953, %v5909
        %v5955 = vpop.permute.xlu0 %5954
        %5958 = vset.pattern.permute.xlu0 17
        %5959 = vperm.xlu0 %5958, %v5910
        %v5960 = vpop.permute.xlu0 %5959
        %5963 = vset.pattern.permute.xlu0 17
        %5964 = vperm.xlu0 %5963, %v5911
        %v5965 = vpop.permute.xlu0 %5964
        %5968 = vset.pattern.permute.xlu0 17
        %5969 = vperm.xlu0 %5968, %v5912
        %v5970 = vpop.permute.xlu0 %5969
        %5973 = vset.pattern.permute.xlu0 17
        %5974 = vperm.xlu0 %5973, %v5913
        %v5975 = vpop.permute.xlu0 %5974
        %5978 = vset.pattern.permute.xlu0 17
        %5979 = vperm.xlu0 %5978, %v5914
        %v5980 = vpop.permute.xlu0 %5979
        %5983 = vset.pattern.permute.xlu0 17
        %5984 = vperm.xlu0 %5983, %v5915
        %v5985 = vpop.permute.xlu0 %5984
        %v5987 = vlaneseq
        %v5988 = vshrl.u32 %v5987, 7
        %v5989 = vsub.s32 1, %v5988
        %v5990 = vrot.slane %v5943, %v5989
        %v5991 = vlaneseq
        %v5992 = vshrl.u32 %v5991, 7
        %v5993 = vsub.s32 1, %v5992
        %v5994 = vrot.slane %v5944, %v5993
        %v5995 = vlaneseq
        %v5996 = vshrl.u32 %v5995, 7
        %v5997 = vsub.s32 1, %v5996
        %v5998 = vrot.slane %v5945, %v5997
        %v5999 = vlaneseq
        %v6000 = vshrl.u32 %v5999, 7
        %v6001 = vsub.s32 1, %v6000
        %v6002 = vrot.slane %v5946, %v6001
        %v6003 = vmul.f32 %v5950, %v5990
        %v6004 = vmul.f32 %v5955, %v5990
        %v6005 = vmul.f32 %v5960, %v5994
        %v6006 = vmul.f32 %v5965, %v5994
        %v6007 = vmul.f32 %v5970, %v5998
        %v6008 = vmul.f32 %v5975, %v5998
        %v6009 = vmul.f32 %v5980, %v6002
        %v6010 = vmul.f32 %v5985, %v6002
        %v6011 = vsub.f32 %v5876, %v6003
        %v6012 = vsub.f32 %v5877, %v6004
        %v6013 = vsub.f32 %v5878, %v6005
        %v6014 = vsub.f32 %v5879, %v6006
        %v6015 = vsub.f32 %v5880, %v6007
        %v6016 = vsub.f32 %v5881, %v6008
        %v6017 = vsub.f32 %v5882, %v6009
        %v6018 = vsub.f32 %v5883, %v6010
        %v6019 = vrcp.pop %v6011
        %v6020 = vmul.f32 1.0, %v6019
        %v6021 = vrcp.pop %v6013
        %v6022 = vmul.f32 1.0, %v6021
        %v6023 = vrcp.pop %v6015
        %v6024 = vmul.f32 1.0, %v6023
        %v6025 = vrcp.pop %v6017
        %v6026 = vmul.f32 1.0, %v6025
        %v6027 = vlaneseq
        %v6028 = vshrl.u32 %v6027, 7
        %v6029 = vsub.s32 2, %v6028
        %v6030 = vrot.slane %v6020, %v6029
        %v6031 = vlaneseq
        %v6032 = vshrl.u32 %v6031, 7
        %v6033 = vsub.s32 2, %v6032
        %v6034 = vrot.slane %v6022, %v6033
        %v6035 = vlaneseq
        %v6036 = vshrl.u32 %v6035, 7
        %v6037 = vsub.s32 2, %v6036
        %v6038 = vrot.slane %v6024, %v6037
        %v6039 = vlaneseq
        %v6040 = vshrl.u32 %v6039, 7
        %v6041 = vsub.s32 2, %v6040
        %v6042 = vrot.slane %v6026, %v6041
        %v6043 = vmul.f32 %v6011, %v6030
        %v6044 = vmul.f32 %v6012, %v6030
        %v6045 = vmul.f32 %v6013, %v6034
        %v6046 = vmul.f32 %v6014, %v6034
        %v6047 = vmul.f32 %v6015, %v6038
        %v6048 = vmul.f32 %v6016, %v6038
        %v6049 = vmul.f32 %v6017, %v6042
        %v6050 = vmul.f32 %v6018, %v6042
        %vm6051 = vcmp.eq.s32.totalorder %v2868, 18
        %v6052 = vsub.f32 %v6011, 1.0
        %v6053 = vsub.f32 %v6013, 1.0
        %v6054 = vsub.f32 %v6015, 1.0
        %v6055 = vsub.f32 %v6017, 1.0
        %v6056 = vsel %vm6051, 1, 0
        %vm6057 = vcmp.eq.s32.totalorder %v6056, 1
        %6059 = vset.pattern.permute.xlu0 18
        %6060 = vperm.xlu0 %6059, %v6052
        %v6061 = vpop.permute.xlu0 %6060
        %6064 = vset.pattern.permute.xlu0 18
        %6065 = vperm.xlu0 %6064, %v6053
        %v6066 = vpop.permute.xlu0 %6065
        %6069 = vset.pattern.permute.xlu0 18
        %6070 = vperm.xlu0 %6069, %v6054
        %v6071 = vpop.permute.xlu0 %6070
        %6074 = vset.pattern.permute.xlu0 18
        %6075 = vperm.xlu0 %6074, %v6055
        %v6076 = vpop.permute.xlu0 %6075
        %v6078 = vsel %vm6057, %v6061, %v6011
        %v6079 = vsel %vm6057, %v6066, %v6013
        %v6080 = vsel %vm6057, %v6071, %v6015
        %v6081 = vsel %vm6057, %v6076, %v6017
        %6083 = vset.pattern.permute.xlu0 18
        %6084 = vperm.xlu0 %6083, %v6043
        %v6085 = vpop.permute.xlu0 %6084
        %6088 = vset.pattern.permute.xlu0 18
        %6089 = vperm.xlu0 %6088, %v6044
        %v6090 = vpop.permute.xlu0 %6089
        %6093 = vset.pattern.permute.xlu0 18
        %6094 = vperm.xlu0 %6093, %v6045
        %v6095 = vpop.permute.xlu0 %6094
        %6098 = vset.pattern.permute.xlu0 18
        %6099 = vperm.xlu0 %6098, %v6046
        %v6100 = vpop.permute.xlu0 %6099
        %6103 = vset.pattern.permute.xlu0 18
        %6104 = vperm.xlu0 %6103, %v6047
        %v6105 = vpop.permute.xlu0 %6104
        %6108 = vset.pattern.permute.xlu0 18
        %6109 = vperm.xlu0 %6108, %v6048
        %v6110 = vpop.permute.xlu0 %6109
        %6113 = vset.pattern.permute.xlu0 18
        %6114 = vperm.xlu0 %6113, %v6049
        %v6115 = vpop.permute.xlu0 %6114
        %6118 = vset.pattern.permute.xlu0 18
        %6119 = vperm.xlu0 %6118, %v6050
        %v6120 = vpop.permute.xlu0 %6119
        %v6122 = vlaneseq
        %v6123 = vshrl.u32 %v6122, 7
        %v6124 = vsub.s32 2, %v6123
        %v6125 = vrot.slane %v6078, %v6124
        %v6126 = vlaneseq
        %v6127 = vshrl.u32 %v6126, 7
        %v6128 = vsub.s32 2, %v6127
        %v6129 = vrot.slane %v6079, %v6128
        %v6130 = vlaneseq
        %v6131 = vshrl.u32 %v6130, 7
        %v6132 = vsub.s32 2, %v6131
        %v6133 = vrot.slane %v6080, %v6132
        %v6134 = vlaneseq
        %v6135 = vshrl.u32 %v6134, 7
        %v6136 = vsub.s32 2, %v6135
        %v6137 = vrot.slane %v6081, %v6136
        %v6138 = vmul.f32 %v6085, %v6125
        %v6139 = vmul.f32 %v6090, %v6125
        %v6140 = vmul.f32 %v6095, %v6129
        %v6141 = vmul.f32 %v6100, %v6129
        %v6142 = vmul.f32 %v6105, %v6133
        %v6143 = vmul.f32 %v6110, %v6133
        %v6144 = vmul.f32 %v6115, %v6137
        %v6145 = vmul.f32 %v6120, %v6137
        %v6146 = vsub.f32 %v6011, %v6138
        %v6147 = vsub.f32 %v6012, %v6139
        %v6148 = vsub.f32 %v6013, %v6140
        %v6149 = vsub.f32 %v6014, %v6141
        %v6150 = vsub.f32 %v6015, %v6142
        %v6151 = vsub.f32 %v6016, %v6143
        %v6152 = vsub.f32 %v6017, %v6144
        %v6153 = vsub.f32 %v6018, %v6145
        %v6154 = vrcp.pop %v6146
        %v6155 = vmul.f32 1.0, %v6154
        %v6156 = vrcp.pop %v6148
        %v6157 = vmul.f32 1.0, %v6156
        %v6158 = vrcp.pop %v6150
        %v6159 = vmul.f32 1.0, %v6158
        %v6160 = vrcp.pop %v6152
        %v6161 = vmul.f32 1.0, %v6160
        %v6162 = vlaneseq
        %v6163 = vshrl.u32 %v6162, 7
        %v6164 = vsub.s32 3, %v6163
        %v6165 = vrot.slane %v6155, %v6164
        %v6166 = vlaneseq
        %v6167 = vshrl.u32 %v6166, 7
        %v6168 = vsub.s32 3, %v6167
        %v6169 = vrot.slane %v6157, %v6168
        %v6170 = vlaneseq
        %v6171 = vshrl.u32 %v6170, 7
        %v6172 = vsub.s32 3, %v6171
        %v6173 = vrot.slane %v6159, %v6172
        %v6174 = vlaneseq
        %v6175 = vshrl.u32 %v6174, 7
        %v6176 = vsub.s32 3, %v6175
        %v6177 = vrot.slane %v6161, %v6176
        %v6178 = vmul.f32 %v6146, %v6165
        %v6179 = vmul.f32 %v6147, %v6165
        %v6180 = vmul.f32 %v6148, %v6169
        %v6181 = vmul.f32 %v6149, %v6169
        %v6182 = vmul.f32 %v6150, %v6173
        %v6183 = vmul.f32 %v6151, %v6173
        %v6184 = vmul.f32 %v6152, %v6177
        %v6185 = vmul.f32 %v6153, %v6177
        %vm6186 = vcmp.eq.s32.totalorder %v2868, 19
        %v6187 = vsub.f32 %v6146, 1.0
        %v6188 = vsub.f32 %v6148, 1.0
        %v6189 = vsub.f32 %v6150, 1.0
        %v6190 = vsub.f32 %v6152, 1.0
        %v6191 = vsel %vm6186, 1, 0
        %vm6192 = vcmp.eq.s32.totalorder %v6191, 1
        %6194 = vset.pattern.permute.xlu0 19
        %6195 = vperm.xlu0 %6194, %v6187
        %v6196 = vpop.permute.xlu0 %6195
        %6199 = vset.pattern.permute.xlu0 19
        %6200 = vperm.xlu0 %6199, %v6188
        %v6201 = vpop.permute.xlu0 %6200
        %6204 = vset.pattern.permute.xlu0 19
        %6205 = vperm.xlu0 %6204, %v6189
        %v6206 = vpop.permute.xlu0 %6205
        %6209 = vset.pattern.permute.xlu0 19
        %6210 = vperm.xlu0 %6209, %v6190
        %v6211 = vpop.permute.xlu0 %6210
        %v6213 = vsel %vm6192, %v6196, %v6146
        %v6214 = vsel %vm6192, %v6201, %v6148
        %v6215 = vsel %vm6192, %v6206, %v6150
        %v6216 = vsel %vm6192, %v6211, %v6152
        %6218 = vset.pattern.permute.xlu0 19
        %6219 = vperm.xlu0 %6218, %v6178
        %v6220 = vpop.permute.xlu0 %6219
        %6223 = vset.pattern.permute.xlu0 19
        %6224 = vperm.xlu0 %6223, %v6179
        %v6225 = vpop.permute.xlu0 %6224
        %6228 = vset.pattern.permute.xlu0 19
        %6229 = vperm.xlu0 %6228, %v6180
        %v6230 = vpop.permute.xlu0 %6229
        %6233 = vset.pattern.permute.xlu0 19
        %6234 = vperm.xlu0 %6233, %v6181
        %v6235 = vpop.permute.xlu0 %6234
        %6238 = vset.pattern.permute.xlu0 19
        %6239 = vperm.xlu0 %6238, %v6182
        %v6240 = vpop.permute.xlu0 %6239
        %6243 = vset.pattern.permute.xlu0 19
        %6244 = vperm.xlu0 %6243, %v6183
        %v6245 = vpop.permute.xlu0 %6244
        %6248 = vset.pattern.permute.xlu0 19
        %6249 = vperm.xlu0 %6248, %v6184
        %v6250 = vpop.permute.xlu0 %6249
        %6253 = vset.pattern.permute.xlu0 19
        %6254 = vperm.xlu0 %6253, %v6185
        %v6255 = vpop.permute.xlu0 %6254
        %v6257 = vlaneseq
        %v6258 = vshrl.u32 %v6257, 7
        %v6259 = vsub.s32 3, %v6258
        %v6260 = vrot.slane %v6213, %v6259
        %v6261 = vlaneseq
        %v6262 = vshrl.u32 %v6261, 7
        %v6263 = vsub.s32 3, %v6262
        %v6264 = vrot.slane %v6214, %v6263
        %v6265 = vlaneseq
        %v6266 = vshrl.u32 %v6265, 7
        %v6267 = vsub.s32 3, %v6266
        %v6268 = vrot.slane %v6215, %v6267
        %v6269 = vlaneseq
        %v6270 = vshrl.u32 %v6269, 7
        %v6271 = vsub.s32 3, %v6270
        %v6272 = vrot.slane %v6216, %v6271
        %v6273 = vmul.f32 %v6220, %v6260
        %v6274 = vmul.f32 %v6225, %v6260
        %v6275 = vmul.f32 %v6230, %v6264
        %v6276 = vmul.f32 %v6235, %v6264
        %v6277 = vmul.f32 %v6240, %v6268
        %v6278 = vmul.f32 %v6245, %v6268
        %v6279 = vmul.f32 %v6250, %v6272
        %v6280 = vmul.f32 %v6255, %v6272
        %v6281 = vsub.f32 %v6146, %v6273
        %v6282 = vsub.f32 %v6147, %v6274
        %v6283 = vsub.f32 %v6148, %v6275
        %v6284 = vsub.f32 %v6149, %v6276
        %v6285 = vsub.f32 %v6150, %v6277
        %v6286 = vsub.f32 %v6151, %v6278
        %v6287 = vsub.f32 %v6152, %v6279
        %v6288 = vsub.f32 %v6153, %v6280
        %v6289 = vrcp.pop %v6281
        %v6290 = vmul.f32 1.0, %v6289
        %v6291 = vrcp.pop %v6283
        %v6292 = vmul.f32 1.0, %v6291
        %v6293 = vrcp.pop %v6285
        %v6294 = vmul.f32 1.0, %v6293
        %v6295 = vrcp.pop %v6287
        %v6296 = vmul.f32 1.0, %v6295
        %v6297 = vlaneseq
        %v6298 = vshrl.u32 %v6297, 7
        %v6299 = vsub.s32 4, %v6298
        %v6300 = vrot.slane %v6290, %v6299
        %v6301 = vlaneseq
        %v6302 = vshrl.u32 %v6301, 7
        %v6303 = vsub.s32 4, %v6302
        %v6304 = vrot.slane %v6292, %v6303
        %v6305 = vlaneseq
        %v6306 = vshrl.u32 %v6305, 7
        %v6307 = vsub.s32 4, %v6306
        %v6308 = vrot.slane %v6294, %v6307
        %v6309 = vlaneseq
        %v6310 = vshrl.u32 %v6309, 7
        %v6311 = vsub.s32 4, %v6310
        %v6312 = vrot.slane %v6296, %v6311
        %v6313 = vmul.f32 %v6281, %v6300
        %v6314 = vmul.f32 %v6282, %v6300
        %v6315 = vmul.f32 %v6283, %v6304
        %v6316 = vmul.f32 %v6284, %v6304
        %v6317 = vmul.f32 %v6285, %v6308
        %v6318 = vmul.f32 %v6286, %v6308
        %v6319 = vmul.f32 %v6287, %v6312
        %v6320 = vmul.f32 %v6288, %v6312
        %vm6321 = vcmp.eq.s32.totalorder %v2868, 20
        %v6322 = vsub.f32 %v6281, 1.0
        %v6323 = vsub.f32 %v6283, 1.0
        %v6324 = vsub.f32 %v6285, 1.0
        %v6325 = vsub.f32 %v6287, 1.0
        %v6326 = vsel %vm6321, 1, 0
        %vm6327 = vcmp.eq.s32.totalorder %v6326, 1
        %6329 = vset.pattern.permute.xlu0 20
        %6330 = vperm.xlu0 %6329, %v6322
        %v6331 = vpop.permute.xlu0 %6330
        %6334 = vset.pattern.permute.xlu0 20
        %6335 = vperm.xlu0 %6334, %v6323
        %v6336 = vpop.permute.xlu0 %6335
        %6339 = vset.pattern.permute.xlu0 20
        %6340 = vperm.xlu0 %6339, %v6324
        %v6341 = vpop.permute.xlu0 %6340
        %6344 = vset.pattern.permute.xlu0 20
        %6345 = vperm.xlu0 %6344, %v6325
        %v6346 = vpop.permute.xlu0 %6345
        %v6348 = vsel %vm6327, %v6331, %v6281
        %v6349 = vsel %vm6327, %v6336, %v6283
        %v6350 = vsel %vm6327, %v6341, %v6285
        %v6351 = vsel %vm6327, %v6346, %v6287
        %6353 = vset.pattern.permute.xlu0 20
        %6354 = vperm.xlu0 %6353, %v6313
        %v6355 = vpop.permute.xlu0 %6354
        %6358 = vset.pattern.permute.xlu0 20
        %6359 = vperm.xlu0 %6358, %v6314
        %v6360 = vpop.permute.xlu0 %6359
        %6363 = vset.pattern.permute.xlu0 20
        %6364 = vperm.xlu0 %6363, %v6315
        %v6365 = vpop.permute.xlu0 %6364
        %6368 = vset.pattern.permute.xlu0 20
        %6369 = vperm.xlu0 %6368, %v6316
        %v6370 = vpop.permute.xlu0 %6369
        %6373 = vset.pattern.permute.xlu0 20
        %6374 = vperm.xlu0 %6373, %v6317
        %v6375 = vpop.permute.xlu0 %6374
        %6378 = vset.pattern.permute.xlu0 20
        %6379 = vperm.xlu0 %6378, %v6318
        %v6380 = vpop.permute.xlu0 %6379
        %6383 = vset.pattern.permute.xlu0 20
        %6384 = vperm.xlu0 %6383, %v6319
        %v6385 = vpop.permute.xlu0 %6384
        %6388 = vset.pattern.permute.xlu0 20
        %6389 = vperm.xlu0 %6388, %v6320
        %v6390 = vpop.permute.xlu0 %6389
        %v6392 = vlaneseq
        %v6393 = vshrl.u32 %v6392, 7
        %v6394 = vsub.s32 4, %v6393
        %v6395 = vrot.slane %v6348, %v6394
        %v6396 = vlaneseq
        %v6397 = vshrl.u32 %v6396, 7
        %v6398 = vsub.s32 4, %v6397
        %v6399 = vrot.slane %v6349, %v6398
        %v6400 = vlaneseq
        %v6401 = vshrl.u32 %v6400, 7
        %v6402 = vsub.s32 4, %v6401
        %v6403 = vrot.slane %v6350, %v6402
        %v6404 = vlaneseq
        %v6405 = vshrl.u32 %v6404, 7
        %v6406 = vsub.s32 4, %v6405
        %v6407 = vrot.slane %v6351, %v6406
        %v6408 = vmul.f32 %v6355, %v6395
        %v6409 = vmul.f32 %v6360, %v6395
        %v6410 = vmul.f32 %v6365, %v6399
        %v6411 = vmul.f32 %v6370, %v6399
        %v6412 = vmul.f32 %v6375, %v6403
        %v6413 = vmul.f32 %v6380, %v6403
        %v6414 = vmul.f32 %v6385, %v6407
        %v6415 = vmul.f32 %v6390, %v6407
        %v6416 = vsub.f32 %v6281, %v6408
        %v6417 = vsub.f32 %v6282, %v6409
        %v6418 = vsub.f32 %v6283, %v6410
        %v6419 = vsub.f32 %v6284, %v6411
        %v6420 = vsub.f32 %v6285, %v6412
        %v6421 = vsub.f32 %v6286, %v6413
        %v6422 = vsub.f32 %v6287, %v6414
        %v6423 = vsub.f32 %v6288, %v6415
        %v6424 = vrcp.pop %v6416
        %v6425 = vmul.f32 1.0, %v6424
        %v6426 = vrcp.pop %v6418
        %v6427 = vmul.f32 1.0, %v6426
        %v6428 = vrcp.pop %v6420
        %v6429 = vmul.f32 1.0, %v6428
        %v6430 = vrcp.pop %v6422
        %v6431 = vmul.f32 1.0, %v6430
        %v6432 = vlaneseq
        %v6433 = vshrl.u32 %v6432, 7
        %v6434 = vsub.s32 5, %v6433
        %v6435 = vrot.slane %v6425, %v6434
        %v6436 = vlaneseq
        %v6437 = vshrl.u32 %v6436, 7
        %v6438 = vsub.s32 5, %v6437
        %v6439 = vrot.slane %v6427, %v6438
        %v6440 = vlaneseq
        %v6441 = vshrl.u32 %v6440, 7
        %v6442 = vsub.s32 5, %v6441
        %v6443 = vrot.slane %v6429, %v6442
        %v6444 = vlaneseq
        %v6445 = vshrl.u32 %v6444, 7
        %v6446 = vsub.s32 5, %v6445
        %v6447 = vrot.slane %v6431, %v6446
        %v6448 = vmul.f32 %v6416, %v6435
        %v6449 = vmul.f32 %v6417, %v6435
        %v6450 = vmul.f32 %v6418, %v6439
        %v6451 = vmul.f32 %v6419, %v6439
        %v6452 = vmul.f32 %v6420, %v6443
        %v6453 = vmul.f32 %v6421, %v6443
        %v6454 = vmul.f32 %v6422, %v6447
        %v6455 = vmul.f32 %v6423, %v6447
        %vm6456 = vcmp.eq.s32.totalorder %v2868, 21
        %v6457 = vsub.f32 %v6416, 1.0
        %v6458 = vsub.f32 %v6418, 1.0
        %v6459 = vsub.f32 %v6420, 1.0
        %v6460 = vsub.f32 %v6422, 1.0
        %v6461 = vsel %vm6456, 1, 0
        %vm6462 = vcmp.eq.s32.totalorder %v6461, 1
        %6464 = vset.pattern.permute.xlu0 21
        %6465 = vperm.xlu0 %6464, %v6457
        %v6466 = vpop.permute.xlu0 %6465
        %6469 = vset.pattern.permute.xlu0 21
        %6470 = vperm.xlu0 %6469, %v6458
        %v6471 = vpop.permute.xlu0 %6470
        %6474 = vset.pattern.permute.xlu0 21
        %6475 = vperm.xlu0 %6474, %v6459
        %v6476 = vpop.permute.xlu0 %6475
        %6479 = vset.pattern.permute.xlu0 21
        %6480 = vperm.xlu0 %6479, %v6460
        %v6481 = vpop.permute.xlu0 %6480
        %v6483 = vsel %vm6462, %v6466, %v6416
        %v6484 = vsel %vm6462, %v6471, %v6418
        %v6485 = vsel %vm6462, %v6476, %v6420
        %v6486 = vsel %vm6462, %v6481, %v6422
        %6488 = vset.pattern.permute.xlu0 21
        %6489 = vperm.xlu0 %6488, %v6448
        %v6490 = vpop.permute.xlu0 %6489
        %6493 = vset.pattern.permute.xlu0 21
        %6494 = vperm.xlu0 %6493, %v6449
        %v6495 = vpop.permute.xlu0 %6494
        %6498 = vset.pattern.permute.xlu0 21
        %6499 = vperm.xlu0 %6498, %v6450
        %v6500 = vpop.permute.xlu0 %6499
        %6503 = vset.pattern.permute.xlu0 21
        %6504 = vperm.xlu0 %6503, %v6451
        %v6505 = vpop.permute.xlu0 %6504
        %6508 = vset.pattern.permute.xlu0 21
        %6509 = vperm.xlu0 %6508, %v6452
        %v6510 = vpop.permute.xlu0 %6509
        %6513 = vset.pattern.permute.xlu0 21
        %6514 = vperm.xlu0 %6513, %v6453
        %v6515 = vpop.permute.xlu0 %6514
        %6518 = vset.pattern.permute.xlu0 21
        %6519 = vperm.xlu0 %6518, %v6454
        %v6520 = vpop.permute.xlu0 %6519
        %6523 = vset.pattern.permute.xlu0 21
        %6524 = vperm.xlu0 %6523, %v6455
        %v6525 = vpop.permute.xlu0 %6524
        %v6527 = vlaneseq
        %v6528 = vshrl.u32 %v6527, 7
        %v6529 = vsub.s32 5, %v6528
        %v6530 = vrot.slane %v6483, %v6529
        %v6531 = vlaneseq
        %v6532 = vshrl.u32 %v6531, 7
        %v6533 = vsub.s32 5, %v6532
        %v6534 = vrot.slane %v6484, %v6533
        %v6535 = vlaneseq
        %v6536 = vshrl.u32 %v6535, 7
        %v6537 = vsub.s32 5, %v6536
        %v6538 = vrot.slane %v6485, %v6537
        %v6539 = vlaneseq
        %v6540 = vshrl.u32 %v6539, 7
        %v6541 = vsub.s32 5, %v6540
        %v6542 = vrot.slane %v6486, %v6541
        %v6543 = vmul.f32 %v6490, %v6530
        %v6544 = vmul.f32 %v6495, %v6530
        %v6545 = vmul.f32 %v6500, %v6534
        %v6546 = vmul.f32 %v6505, %v6534
        %v6547 = vmul.f32 %v6510, %v6538
        %v6548 = vmul.f32 %v6515, %v6538
        %v6549 = vmul.f32 %v6520, %v6542
        %v6550 = vmul.f32 %v6525, %v6542
        %v6551 = vsub.f32 %v6416, %v6543
        %v6552 = vsub.f32 %v6417, %v6544
        %v6553 = vsub.f32 %v6418, %v6545
        %v6554 = vsub.f32 %v6419, %v6546
        %v6555 = vsub.f32 %v6420, %v6547
        %v6556 = vsub.f32 %v6421, %v6548
        %v6557 = vsub.f32 %v6422, %v6549
        %v6558 = vsub.f32 %v6423, %v6550
        %v6559 = vrcp.pop %v6551
        %v6560 = vmul.f32 1.0, %v6559
        %v6561 = vrcp.pop %v6553
        %v6562 = vmul.f32 1.0, %v6561
        %v6563 = vrcp.pop %v6555
        %v6564 = vmul.f32 1.0, %v6563
        %v6565 = vrcp.pop %v6557
        %v6566 = vmul.f32 1.0, %v6565
        %v6567 = vlaneseq
        %v6568 = vshrl.u32 %v6567, 7
        %v6569 = vsub.s32 6, %v6568
        %v6570 = vrot.slane %v6560, %v6569
        %v6571 = vlaneseq
        %v6572 = vshrl.u32 %v6571, 7
        %v6573 = vsub.s32 6, %v6572
        %v6574 = vrot.slane %v6562, %v6573
        %v6575 = vlaneseq
        %v6576 = vshrl.u32 %v6575, 7
        %v6577 = vsub.s32 6, %v6576
        %v6578 = vrot.slane %v6564, %v6577
        %v6579 = vlaneseq
        %v6580 = vshrl.u32 %v6579, 7
        %v6581 = vsub.s32 6, %v6580
        %v6582 = vrot.slane %v6566, %v6581
        %v6583 = vmul.f32 %v6551, %v6570
        %v6584 = vmul.f32 %v6552, %v6570
        %v6585 = vmul.f32 %v6553, %v6574
        %v6586 = vmul.f32 %v6554, %v6574
        %v6587 = vmul.f32 %v6555, %v6578
        %v6588 = vmul.f32 %v6556, %v6578
        %v6589 = vmul.f32 %v6557, %v6582
        %v6590 = vmul.f32 %v6558, %v6582
        %vm6591 = vcmp.eq.s32.totalorder %v2868, 22
        %v6592 = vsub.f32 %v6551, 1.0
        %v6593 = vsub.f32 %v6553, 1.0
        %v6594 = vsub.f32 %v6555, 1.0
        %v6595 = vsub.f32 %v6557, 1.0
        %v6596 = vsel %vm6591, 1, 0
        %vm6597 = vcmp.eq.s32.totalorder %v6596, 1
        %6599 = vset.pattern.permute.xlu0 22
        %6600 = vperm.xlu0 %6599, %v6592
        %v6601 = vpop.permute.xlu0 %6600
        %6604 = vset.pattern.permute.xlu0 22
        %6605 = vperm.xlu0 %6604, %v6593
        %v6606 = vpop.permute.xlu0 %6605
        %6609 = vset.pattern.permute.xlu0 22
        %6610 = vperm.xlu0 %6609, %v6594
        %v6611 = vpop.permute.xlu0 %6610
        %6614 = vset.pattern.permute.xlu0 22
        %6615 = vperm.xlu0 %6614, %v6595
        %v6616 = vpop.permute.xlu0 %6615
        %v6618 = vsel %vm6597, %v6601, %v6551
        %v6619 = vsel %vm6597, %v6606, %v6553
        %v6620 = vsel %vm6597, %v6611, %v6555
        %v6621 = vsel %vm6597, %v6616, %v6557
        %6623 = vset.pattern.permute.xlu0 22
        %6624 = vperm.xlu0 %6623, %v6583
        %v6625 = vpop.permute.xlu0 %6624
        %6628 = vset.pattern.permute.xlu0 22
        %6629 = vperm.xlu0 %6628, %v6584
        %v6630 = vpop.permute.xlu0 %6629
        %6633 = vset.pattern.permute.xlu0 22
        %6634 = vperm.xlu0 %6633, %v6585
        %v6635 = vpop.permute.xlu0 %6634
        %6638 = vset.pattern.permute.xlu0 22
        %6639 = vperm.xlu0 %6638, %v6586
        %v6640 = vpop.permute.xlu0 %6639
        %6643 = vset.pattern.permute.xlu0 22
        %6644 = vperm.xlu0 %6643, %v6587
        %v6645 = vpop.permute.xlu0 %6644
        %6648 = vset.pattern.permute.xlu0 22
        %6649 = vperm.xlu0 %6648, %v6588
        %v6650 = vpop.permute.xlu0 %6649
        %6653 = vset.pattern.permute.xlu0 22
        %6654 = vperm.xlu0 %6653, %v6589
        %v6655 = vpop.permute.xlu0 %6654
        %6658 = vset.pattern.permute.xlu0 22
        %6659 = vperm.xlu0 %6658, %v6590
        %v6660 = vpop.permute.xlu0 %6659
        %v6662 = vlaneseq
        %v6663 = vshrl.u32 %v6662, 7
        %v6664 = vsub.s32 6, %v6663
        %v6665 = vrot.slane %v6618, %v6664
        %v6666 = vlaneseq
        %v6667 = vshrl.u32 %v6666, 7
        %v6668 = vsub.s32 6, %v6667
        %v6669 = vrot.slane %v6619, %v6668
        %v6670 = vlaneseq
        %v6671 = vshrl.u32 %v6670, 7
        %v6672 = vsub.s32 6, %v6671
        %v6673 = vrot.slane %v6620, %v6672
        %v6674 = vlaneseq
        %v6675 = vshrl.u32 %v6674, 7
        %v6676 = vsub.s32 6, %v6675
        %v6677 = vrot.slane %v6621, %v6676
        %v6678 = vmul.f32 %v6625, %v6665
        %v6679 = vmul.f32 %v6630, %v6665
        %v6680 = vmul.f32 %v6635, %v6669
        %v6681 = vmul.f32 %v6640, %v6669
        %v6682 = vmul.f32 %v6645, %v6673
        %v6683 = vmul.f32 %v6650, %v6673
        %v6684 = vmul.f32 %v6655, %v6677
        %v6685 = vmul.f32 %v6660, %v6677
        %v6686 = vsub.f32 %v6551, %v6678
        %v6687 = vsub.f32 %v6552, %v6679
        %v6688 = vsub.f32 %v6553, %v6680
        %v6689 = vsub.f32 %v6554, %v6681
        %v6690 = vsub.f32 %v6555, %v6682
        %v6691 = vsub.f32 %v6556, %v6683
        %v6692 = vsub.f32 %v6557, %v6684
        %v6693 = vsub.f32 %v6558, %v6685
        %v6694 = vrcp.pop %v6686
        %v6695 = vmul.f32 1.0, %v6694
        %v6696 = vrcp.pop %v6688
        %v6697 = vmul.f32 1.0, %v6696
        %v6698 = vrcp.pop %v6690
        %v6699 = vmul.f32 1.0, %v6698
        %v6700 = vrcp.pop %v6692
        %v6701 = vmul.f32 1.0, %v6700
        %v6702 = vlaneseq
        %v6703 = vshrl.u32 %v6702, 7
        %v6704 = vsub.s32 7, %v6703
        %v6705 = vrot.slane %v6695, %v6704
        %v6706 = vlaneseq
        %v6707 = vshrl.u32 %v6706, 7
        %v6708 = vsub.s32 7, %v6707
        %v6709 = vrot.slane %v6697, %v6708
        %v6710 = vlaneseq
        %v6711 = vshrl.u32 %v6710, 7
        %v6712 = vsub.s32 7, %v6711
        %v6713 = vrot.slane %v6699, %v6712
        %v6714 = vlaneseq
        %v6715 = vshrl.u32 %v6714, 7
        %v6716 = vsub.s32 7, %v6715
        %v6717 = vrot.slane %v6701, %v6716
        %v6718 = vmul.f32 %v6687, %v6705
        %v6719 = vmul.f32 %v6689, %v6709
        %v6720 = vmul.f32 %v6691, %v6713
        %v6721 = vmul.f32 %v6693, %v6717
        %vm6722 = vcmp.eq.s32.totalorder %v2868, 23
        %v6723 = vsub.f32 %v6686, 1.0
        %v6724 = vsub.f32 %v6688, 1.0
        %v6725 = vsub.f32 %v6690, 1.0
        %v6726 = vsub.f32 %v6692, 1.0
        %v6727 = vsel %vm6722, 1, 0
        %vm6728 = vcmp.eq.s32.totalorder %v6727, 1
        %6730 = vset.pattern.permute.xlu0 23
        %6731 = vperm.xlu0 %6730, %v6723
        %v6732 = vpop.permute.xlu0 %6731
        %6735 = vset.pattern.permute.xlu0 23
        %6736 = vperm.xlu0 %6735, %v6724
        %v6737 = vpop.permute.xlu0 %6736
        %6740 = vset.pattern.permute.xlu0 23
        %6741 = vperm.xlu0 %6740, %v6725
        %v6742 = vpop.permute.xlu0 %6741
        %6745 = vset.pattern.permute.xlu0 23
        %6746 = vperm.xlu0 %6745, %v6726
        %v6747 = vpop.permute.xlu0 %6746
        %v6749 = vsel %vm6728, %v6732, %v6686
        %v6750 = vsel %vm6728, %v6737, %v6688
        %v6751 = vsel %vm6728, %v6742, %v6690
        %v6752 = vsel %vm6728, %v6747, %v6692
        %6754 = vset.pattern.permute.xlu0 23
        %6755 = vperm.xlu0 %6754, %v6718
        %v6756 = vpop.permute.xlu0 %6755
        %6759 = vset.pattern.permute.xlu0 23
        %6760 = vperm.xlu0 %6759, %v6719
        %v6761 = vpop.permute.xlu0 %6760
        %6764 = vset.pattern.permute.xlu0 23
        %6765 = vperm.xlu0 %6764, %v6720
        %v6766 = vpop.permute.xlu0 %6765
        %6769 = vset.pattern.permute.xlu0 23
        %6770 = vperm.xlu0 %6769, %v6721
        %v6771 = vpop.permute.xlu0 %6770
        %v6773 = vlaneseq
        %v6774 = vshrl.u32 %v6773, 7
        %v6775 = vsub.s32 7, %v6774
        %v6776 = vrot.slane %v6749, %v6775
        %v6777 = vlaneseq
        %v6778 = vshrl.u32 %v6777, 7
        %v6779 = vsub.s32 7, %v6778
        %v6780 = vrot.slane %v6750, %v6779
        %v6781 = vlaneseq
        %v6782 = vshrl.u32 %v6781, 7
        %v6783 = vsub.s32 7, %v6782
        %v6784 = vrot.slane %v6751, %v6783
        %v6785 = vlaneseq
        %v6786 = vshrl.u32 %v6785, 7
        %v6787 = vsub.s32 7, %v6786
        %v6788 = vrot.slane %v6752, %v6787
        %v6789 = vmul.f32 %v6756, %v6776
        %v6790 = vmul.f32 %v6761, %v6780
        %v6791 = vmul.f32 %v6766, %v6784
        %v6792 = vmul.f32 %v6771, %v6788
        %v6793 = vsub.f32 %v6687, %v6789
        %v6794 = vsub.f32 %v6689, %v6790
        %v6795 = vsub.f32 %v6691, %v6791
        %v6796 = vsub.f32 %v6693, %v6792
        %v6797 = vrcp.pop %v6793
        %v6798 = vmul.f32 1.0, %v6797
        %v6799 = vrcp.pop %v6794
        %v6800 = vmul.f32 1.0, %v6799
        %v6801 = vrcp.pop %v6795
        %v6802 = vmul.f32 1.0, %v6801
        %v6803 = vrcp.pop %v6796
        %v6804 = vmul.f32 1.0, %v6803
        %v6805 = vlaneseq
        %v6806 = vshrl.u32 %v6805, 7
        %v6807 = vsub.s32 0, %v6806
        %v6808 = vrot.slane %v6798, %v6807
        %v6809 = vlaneseq
        %v6810 = vshrl.u32 %v6809, 7
        %v6811 = vsub.s32 0, %v6810
        %v6812 = vrot.slane %v6800, %v6811
        %v6813 = vlaneseq
        %v6814 = vshrl.u32 %v6813, 7
        %v6815 = vsub.s32 0, %v6814
        %v6816 = vrot.slane %v6802, %v6815
        %v6817 = vlaneseq
        %v6818 = vshrl.u32 %v6817, 7
        %v6819 = vsub.s32 0, %v6818
        %v6820 = vrot.slane %v6804, %v6819
        %v6821 = vmul.f32 %v6793, %v6808
        %v6822 = vmul.f32 %v6794, %v6812
        %v6823 = vmul.f32 %v6795, %v6816
        %v6824 = vmul.f32 %v6796, %v6820
        %vm6825 = vcmp.eq.s32.totalorder %v2868, 24
        %v6826 = vsub.f32 %v6793, 1.0
        %v6827 = vsub.f32 %v6794, 1.0
        %v6828 = vsub.f32 %v6795, 1.0
        %v6829 = vsub.f32 %v6796, 1.0
        %v6830 = vsel %vm6825, 1, 0
        %vm6831 = vcmp.eq.s32.totalorder %v6830, 1
        %6833 = vset.pattern.permute.xlu0 24
        %6834 = vperm.xlu0 %6833, %v6826
        %v6835 = vpop.permute.xlu0 %6834
        %6838 = vset.pattern.permute.xlu0 24
        %6839 = vperm.xlu0 %6838, %v6827
        %v6840 = vpop.permute.xlu0 %6839
        %6843 = vset.pattern.permute.xlu0 24
        %6844 = vperm.xlu0 %6843, %v6828
        %v6845 = vpop.permute.xlu0 %6844
        %6848 = vset.pattern.permute.xlu0 24
        %6849 = vperm.xlu0 %6848, %v6829
        %v6850 = vpop.permute.xlu0 %6849
        %v6852 = vsel %vm6831, %v6835, %v6793
        %v6853 = vsel %vm6831, %v6840, %v6794
        %v6854 = vsel %vm6831, %v6845, %v6795
        %v6855 = vsel %vm6831, %v6850, %v6796
        %6857 = vset.pattern.permute.xlu0 24
        %6858 = vperm.xlu0 %6857, %v6821
        %v6859 = vpop.permute.xlu0 %6858
        %6862 = vset.pattern.permute.xlu0 24
        %6863 = vperm.xlu0 %6862, %v6822
        %v6864 = vpop.permute.xlu0 %6863
        %6867 = vset.pattern.permute.xlu0 24
        %6868 = vperm.xlu0 %6867, %v6823
        %v6869 = vpop.permute.xlu0 %6868
        %6872 = vset.pattern.permute.xlu0 24
        %6873 = vperm.xlu0 %6872, %v6824
        %v6874 = vpop.permute.xlu0 %6873
        %v6876 = vlaneseq
        %v6877 = vshrl.u32 %v6876, 7
        %v6878 = vsub.s32 0, %v6877
        %v6879 = vrot.slane %v6852, %v6878
        %v6880 = vlaneseq
        %v6881 = vshrl.u32 %v6880, 7
        %v6882 = vsub.s32 0, %v6881
        %v6883 = vrot.slane %v6853, %v6882
        %v6884 = vlaneseq
        %v6885 = vshrl.u32 %v6884, 7
        %v6886 = vsub.s32 0, %v6885
        %v6887 = vrot.slane %v6854, %v6886
        %v6888 = vlaneseq
        %v6889 = vshrl.u32 %v6888, 7
        %v6890 = vsub.s32 0, %v6889
        %v6891 = vrot.slane %v6855, %v6890
        %v6892 = vmul.f32 %v6859, %v6879
        %v6893 = vmul.f32 %v6864, %v6883
        %v6894 = vmul.f32 %v6869, %v6887
        %v6895 = vmul.f32 %v6874, %v6891
        %v6896 = vsub.f32 %v6793, %v6892
        %v6897 = vsub.f32 %v6794, %v6893
        %v6898 = vsub.f32 %v6795, %v6894
        %v6899 = vsub.f32 %v6796, %v6895
        %v6904 = vrot.slane %v6897, 7
        %vm6905 = vcmask 1042434
        %v6906 = vsel %vm6905, %v6904, %v6896
        %v6907 = vrot.slane %v6898, 6
        %vm6908 = vcmask 1043459
        %v6909 = vsel %vm6908, %v6907, %v6906
        %v6910 = vrot.slane %v6899, 5
        %vm6911 = vcmask 1044484
        %v6912 = vsel %vm6911, %v6910, %v6909
        %vm6914 = vcmask 126977
        %6915 = vst.msk [vmem:[#allocation19 - $0x1] sm:$0x1e] %vm6914, %v6912
        %v6916 = vld [vmem:[#allocation16] sm:$0xff]
        %v6917 = vld [vmem:[#allocation16 + $0x8] sm:$0xff]
        %v6918 = vrot.slane %v6896, 1
        %vm6919 = vcmask 1041409
        %v6920 = vsel %vm6919, %v6897, %v6918
        %v6921 = vrot.slane %v6898, 7
        %v6922 = vsel %vm6905, %v6921, %v6920
        %v6923 = vrot.slane %v6899, 6
        %v6924 = vsel %vm6908, %v6923, %v6922
        %v6925 = vsel %vm2217, %v6924, 0
        %6927 = vmatprep.subr.mxu0 0.0
        %6928 = vmatpush1.msra.mxu0 %v6916
        %6929 = vmatprep.subr.mxu0 0.0
        %6930 = vmatpush1.msra.mxu0 %v6917
        %6931 = vmatprep.subr.mxu0 0.0
        %6932 = vmatpush1.msra.mxu0 0.0
        %6933 = vmatprep.subr.mxu0 0.0
        %6934 = vmatpush1.msra.mxu0 0.0
        %6935 = vmatprep.subr.mxu0 0.0
        %6936 = vmatpush1.msra.mxu0 0.0
        %6937 = vmatprep.subr.mxu0 0.0
        %6938 = vmatpush1.msra.mxu0 0.0
        %6939 = vmatprep.subr.mxu0 0.0
        %6940 = vmatpush1.msra.mxu0 0.0
        %6941 = vmatprep.subr.mxu0 0.0
        %6942 = vmatpush1.msra.mxu0 0.0
        %6943 = vmatprep.subr.mxu0 0.0
        %6944 = vmatpush1.msra.mxu0 0.0
        %6945 = vmatprep.subr.mxu0 0.0
        %6946 = vmatpush1.msra.mxu0 0.0
        %6947 = vmatprep.subr.mxu0 0.0
        %6948 = vmatpush1.msra.mxu0 0.0
        %6949 = vmatprep.subr.mxu0 0.0
        %6950 = vmatpush1.msra.mxu0 0.0
        %6951 = vmatprep.subr.mxu0 0.0
        %6952 = vmatpush1.msra.mxu0 0.0
        %6953 = vmatprep.subr.mxu0 0.0
        %6954 = vmatpush1.msra.mxu0 0.0
        %6955 = vmatprep.subr.mxu0 0.0
        %6956 = vmatpush1.msra.mxu0 0.0
        %6957 = vmatprep.subr.mxu0 0.0
        %6958 = vmatpush1.msra.mxu0 0.0
        %6959 = vmatprep.subr.mxu0 0.0
        %6960 = vmatpush1.msra.mxu0 0.0
        %6961 = vmatprep.subr.mxu0 0.0
        %6962 = vmatpush1.msra.mxu0 0.0
        %6963 = vmatprep.subr.mxu0 0.0
        %6964 = vmatpush1.msra.mxu0 0.0
        %6965 = vmatprep.subr.mxu0 0.0
        %6966 = vmatpush1.msra.mxu0 0.0
        %6967 = vmatprep.subr.mxu0 0.0
        %6968 = vmatpush1.msra.mxu0 0.0
        %6969 = vmatprep.subr.mxu0 0.0
        %6970 = vmatpush1.msra.mxu0 0.0
        %6971 = vmatprep.subr.mxu0 0.0
        %6972 = vmatpush1.msra.mxu0 0.0
        %6973 = vmatprep.subr.mxu0 0.0
        %6974 = vmatpush1.msra.mxu0 0.0
        %6975 = vmatprep.subr.mxu0 0.0
        %6976 = vmatpush1.msra.mxu0 0.0
        %6977 = vmatprep.subr.mxu0 0.0
        %6978 = vmatpush1.msra.mxu0 0.0
        %6979 = vmatprep.subr.mxu0 0.0
        %6980 = vmatpush1.msra.mxu0 0.0
        %6981 = vmatprep.subr.mxu0 0.0
        %6982 = vmatpush1.msra.mxu0 0.0
        %6983 = vmatprep.subr.mxu0 0.0
        %6984 = vmatpush1.msra.mxu0 0.0
        %6985 = vmatprep.subr.mxu0 0.0
        %6986 = vmatpush1.msra.mxu0 0.0
        %6987 = vmatprep.subr.mxu0 0.0
        %6988 = vmatpush1.msra.mxu0 0.0
        %6989 = vmatprep.subr.mxu0 0.0
        %6990 = vmatpush1.msra.mxu0 0.0
        %6991 = vmatprep.mubr.f32.mxu0 0.0
        %6992 = vmatmul.mubr.f32.gmra.mrb[0].mxu0 %v6925
        %v6993 = vpop.f32.mrb[0].mxu0
        %v6994 = vadd.f32 0.0, %v6993
        %v6995 = vpop.f32.mrb[0].mxu0
        %6996 = vdwg.mxu0
        %v6997 = vld [vmem:[#allocation18] sm:$0xff]
        %vm6998 = vcmask 64512
        %v6999 = vsel %vm6998, %v6924, 0
        %7001 = vmatprep.subr.mxu0 0.0
        %7002 = vmatpush1.msra.mxu0 %v6997
        %7003 = vmatprep.subr.mxu0 0.0
        %7004 = vmatpush1.msra.mxu0 0.0
        %7005 = vmatprep.subr.mxu0 0.0
        %7006 = vmatpush1.msra.mxu0 0.0
        %7007 = vmatprep.subr.mxu0 0.0
        %7008 = vmatpush1.msra.mxu0 0.0
        %7009 = vmatprep.subr.mxu0 0.0
        %7010 = vmatpush1.msra.mxu0 0.0
        %7011 = vmatprep.subr.mxu0 0.0
        %7012 = vmatpush1.msra.mxu0 0.0
        %7013 = vmatprep.subr.mxu0 0.0
        %7014 = vmatpush1.msra.mxu0 0.0
        %7015 = vmatprep.subr.mxu0 0.0
        %7016 = vmatpush1.msra.mxu0 0.0
        %7017 = vmatprep.subr.mxu0 0.0
        %7018 = vmatpush1.msra.mxu0 0.0
        %7019 = vmatprep.subr.mxu0 0.0
        %7020 = vmatpush1.msra.mxu0 0.0
        %7021 = vmatprep.subr.mxu0 0.0
        %7022 = vmatpush1.msra.mxu0 0.0
        %7023 = vmatprep.subr.mxu0 0.0
        %7024 = vmatpush1.msra.mxu0 0.0
        %7025 = vmatprep.subr.mxu0 0.0
        %7026 = vmatpush1.msra.mxu0 0.0
        %7027 = vmatprep.subr.mxu0 0.0
        %7028 = vmatpush1.msra.mxu0 0.0
        %7029 = vmatprep.subr.mxu0 0.0
        %7030 = vmatpush1.msra.mxu0 0.0
        %7031 = vmatprep.subr.mxu0 0.0
        %7032 = vmatpush1.msra.mxu0 0.0
        %7033 = vmatprep.subr.mxu0 0.0
        %7034 = vmatpush1.msra.mxu0 0.0
        %7035 = vmatprep.subr.mxu0 0.0
        %7036 = vmatpush1.msra.mxu0 0.0
        %7037 = vmatprep.subr.mxu0 0.0
        %7038 = vmatpush1.msra.mxu0 0.0
        %7039 = vmatprep.subr.mxu0 0.0
        %7040 = vmatpush1.msra.mxu0 0.0
        %7041 = vmatprep.subr.mxu0 0.0
        %7042 = vmatpush1.msra.mxu0 0.0
        %7043 = vmatprep.subr.mxu0 0.0
        %7044 = vmatpush1.msra.mxu0 0.0
        %7045 = vmatprep.subr.mxu0 0.0
        %7046 = vmatpush1.msra.mxu0 0.0
        %7047 = vmatprep.subr.mxu0 0.0
        %7048 = vmatpush1.msra.mxu0 0.0
        %7049 = vmatprep.subr.mxu0 0.0
        %7050 = vmatpush1.msra.mxu0 0.0
        %7051 = vmatprep.subr.mxu0 0.0
        %7052 = vmatpush1.msra.mxu0 0.0
        %7053 = vmatprep.subr.mxu0 0.0
        %7054 = vmatpush1.msra.mxu0 0.0
        %7055 = vmatprep.subr.mxu0 0.0
        %7056 = vmatpush1.msra.mxu0 0.0
        %7057 = vmatprep.subr.mxu0 0.0
        %7058 = vmatpush1.msra.mxu0 0.0
        %7059 = vmatprep.subr.mxu0 0.0
        %7060 = vmatpush1.msra.mxu0 0.0
        %7061 = vmatprep.subr.mxu0 0.0
        %7062 = vmatpush1.msra.mxu0 0.0
        %7063 = vmatprep.subr.mxu0 0.0
        %7064 = vmatpush1.msra.mxu0 0.0
        %7065 = vmatprep.mubr.f32.mxu0 0.0
        %7066 = vmatmul.mubr.f32.gmra.mrb[0].mxu0 %v6999
        %v7067 = vpop.f32.mrb[0].mxu0
        %v7068 = vadd.f32 0.0, %v7067
        %v7069 = vpop.f32.mrb[0].mxu0
        %7070 = vdwg.mxu0
        %7071 = vrot.lane.b32.xlu0 %v6924, 120
        %v7072 = vpop.permute.xlu0 %7071
        %v7073 = vsel %vm6998, %v7072, 0
        %7075 = vmatprep.subr.mxu0 0.0
        %7076 = vmatpush1.msra.mxu0 %v6997
        %7077 = vmatprep.subr.mxu0 0.0
        %7078 = vmatpush1.msra.mxu0 0.0
        %7079 = vmatprep.subr.mxu0 0.0
        %7080 = vmatpush1.msra.mxu0 0.0
        %7081 = vmatprep.subr.mxu0 0.0
        %7082 = vmatpush1.msra.mxu0 0.0
        %7083 = vmatprep.subr.mxu0 0.0
        %7084 = vmatpush1.msra.mxu0 0.0
        %7085 = vmatprep.subr.mxu0 0.0
        %7086 = vmatpush1.msra.mxu0 0.0
        %7087 = vmatprep.subr.mxu0 0.0
        %7088 = vmatpush1.msra.mxu0 0.0
        %7089 = vmatprep.subr.mxu0 0.0
        %7090 = vmatpush1.msra.mxu0 0.0
        %7091 = vmatprep.subr.mxu0 0.0
        %7092 = vmatpush1.msra.mxu0 0.0
        %7093 = vmatprep.subr.mxu0 0.0
        %7094 = vmatpush1.msra.mxu0 0.0
        %7095 = vmatprep.subr.mxu0 0.0
        %7096 = vmatpush1.msra.mxu0 0.0
        %7097 = vmatprep.subr.mxu0 0.0
        %7098 = vmatpush1.msra.mxu0 0.0
        %7099 = vmatprep.subr.mxu0 0.0
        %7100 = vmatpush1.msra.mxu0 0.0
        %7101 = vmatprep.subr.mxu0 0.0
        %7102 = vmatpush1.msra.mxu0 0.0
        %7103 = vmatprep.subr.mxu0 0.0
        %7104 = vmatpush1.msra.mxu0 0.0
        %7105 = vmatprep.subr.mxu0 0.0
        %7106 = vmatpush1.msra.mxu0 0.0
        %7107 = vmatprep.subr.mxu0 0.0
        %7108 = vmatpush1.msra.mxu0 0.0
        %7109 = vmatprep.subr.mxu0 0.0
        %7110 = vmatpush1.msra.mxu0 0.0
        %7111 = vmatprep.subr.mxu0 0.0
        %7112 = vmatpush1.msra.mxu0 0.0
        %7113 = vmatprep.subr.mxu0 0.0
        %7114 = vmatpush1.msra.mxu0 0.0
        %7115 = vmatprep.subr.mxu0 0.0
        %7116 = vmatpush1.msra.mxu0 0.0
        %7117 = vmatprep.subr.mxu0 0.0
        %7118 = vmatpush1.msra.mxu0 0.0
        %7119 = vmatprep.subr.mxu0 0.0
        %7120 = vmatpush1.msra.mxu0 0.0
        %7121 = vmatprep.subr.mxu0 0.0
        %7122 = vmatpush1.msra.mxu0 0.0
        %7123 = vmatprep.subr.mxu0 0.0
        %7124 = vmatpush1.msra.mxu0 0.0
        %7125 = vmatprep.subr.mxu0 0.0
        %7126 = vmatpush1.msra.mxu0 0.0
        %7127 = vmatprep.subr.mxu0 0.0
        %7128 = vmatpush1.msra.mxu0 0.0
        %7129 = vmatprep.subr.mxu0 0.0
        %7130 = vmatpush1.msra.mxu0 0.0
        %7131 = vmatprep.subr.mxu0 0.0
        %7132 = vmatpush1.msra.mxu0 0.0
        %7133 = vmatprep.subr.mxu0 0.0
        %7134 = vmatpush1.msra.mxu0 0.0
        %7135 = vmatprep.subr.mxu0 0.0
        %7136 = vmatpush1.msra.mxu0 0.0
        %7137 = vmatprep.subr.mxu0 0.0
        %7138 = vmatpush1.msra.mxu0 0.0
        %7139 = vmatprep.mubr.f32.mxu0 0.0
        %7140 = vmatmul.mubr.f32.gmra.mrb[0].mxu0 %v7073
        %v7141 = vpop.f32.mrb[0].mxu0
        %v7142 = vadd.f32 0.0, %v7141
        %v7143 = vpop.f32.mrb[0].mxu0
        %7144 = vdwg.mxu0
        %v7145 = vld [vmem:[%s55] sm:$0xf]
        %v7146 = vsub.f32 %v7068, %v7145
        %v7147 = vld [vmem:[%s57] sm:$0xf]
        %v7148 = vsub.f32 %v7142, %v7147
        %v7149 = vld [vmem:[%s59] sm:$0xf]
        %v7150 = vld [vmem:[%s61] sm:$0xf]
        %v7151 = vmul.f32 %v7148, %v7149
        %v7152 = vmul.f32 %v7146, %v7150
        %v7153 = vmul.f32 %v7151, %v7151
        %v7154 = vmul.f32 %v7152, %v7152
        %v7155 = vadd.f32 %v7153, %v7154
        %v7156 = vrsqrt.pop %v7155
        %v7157 = vmul.f32 %v7155, %v7156
        %vm7158 = vcmp.eq.f32.partialorder %v7155, inf
        %v7159 = vsel %vm7158, %v7155, %v7157
        %vm7160 = vcmp.eq.f32.partialorder %v7155, 0.0
        %v7161 = vand.u32 %v7155, 2147483648
        %v7162 = vsel %vm7160, %v7161, %v7159
        %v7163 = vmax.f32 %v7162, 1e-12
        %v7164 = vrcp.pop %v7163
        %v7165 = vmul.f32 1.0, %v7164
        %vm7166 = vcmp.gt.f32.partialorder %v7162, 0.0
        %v7167 = vmul.f32 %v7152, %v7165
        %v7168 = vsel %vm7166, %v7167, 1.0
        %v7169 = vmul.f32 %v7151, %v7165
        %v7170 = vsel %vm7166, %v7169, 0.0
        %v7171 = vmul.f32 %v7149, %v7149
        %v7172 = vmul.f32 %v7171, %v7168
        %v7173 = vmul.f32 %v7172, %v7168
        %v7174 = vmul.f32 %v7150, %v7150
        %v7175 = vmul.f32 %v7174, %v7170
        %v7176 = vmul.f32 %v7175, %v7170
        %v7177 = vadd.f32 %v7173, %v7176
        %v7178 = vmul.f32 %v7149, %v7146
        %v7179 = vmul.f32 %v7178, %v7168
        %v7180 = vmul.f32 %v7150, %v7148
        %v7181 = vmul.f32 %v7180, %v7170
        %v7182 = vadd.f32 %v7179, %v7181
        %v7183 = vrcp.pop %v7177
        %v7184 = vmul.f32 %v7182, %v7183
        %v7185 = vmax.f32 %v7184, 1.0
        %v7186 = vmul.f32 %v7149, %v7185
        %v7187 = vmul.f32 %v7186, %v7168
        %v7188 = vsub.f32 %v7146, %v7187
        %v7189 = vmul.f32 %v7150, %v7185
        %v7190 = vmul.f32 %v7189, %v7170
        %v7191 = vsub.f32 %v7148, %v7190
        %v7192 = vmul.f32 %v7188, %v7188
        %v7193 = vmul.f32 %v7191, %v7191
        %v7194 = vadd.f32 %v7192, %v7193
        %vm7195 = vcmask 781312
        %v7196 = vsel %vm7195, %v7194, 0.0
        %7197 = vadd.xlane.f32.xlu0 %v7196
        %v7198 = vpop.xlane.xlu0 %7197
        %v7199 = vmul.f32 %v6994, %v6994
        %7201 = vrot.lane.b32.xlu0 %v7199, 80
        %v7202 = vpop.permute.xlu0 %7201
        %v7204 = vadd.f32 %v7199, %v7202
        %v7205 = vrsqrt.pop %v7204
        %v7206 = vmul.f32 %v7204, %v7205
        %vm7207 = vcmp.eq.f32.partialorder %v7204, inf
        %v7208 = vsel %vm7207, %v7204, %v7206
        %vm7209 = vcmp.eq.f32.partialorder %v7204, 0.0
        %v7210 = vand.u32 %v7204, 2147483648
        %v7211 = vsel %vm7209, %v7210, %v7208
        %v7212 = vmax.f32 %v7211, 1e-12
        %v7213 = vrcp.pop %v7212
        %v7214 = vmul.f32 1.0, %v7213
        %vm7215 = vcmp.gt.f32.partialorder %v7211, 0.0
        %v7216 = vmul.f32 %v6994, %v7214
        %v7217 = vsel %vm7215, %v7216, 1.0
        %7219 = vrot.lane.b32.xlu0 %v7214, 48
        %v7220 = vpop.permute.xlu0 %7219
        %v7222 = vmul.f32 %v6994, %v7220
        %7224 = vrot.lane.b32.xlu0 %v7222, 80
        %v7225 = vpop.permute.xlu0 %7224
        %v7227 = vsel %vm7215, %v7225, 0.0
        %vm7228 = vcmp.ge.f32.partialorder %v7217, 0.5
        %v7229 = vsel %vm7228, %v7217, 0.5
        %vm7230 = vcmp.ge.f32.partialorder %v7227, 0.0
        %v7231 = vsel %vm7230, 0.8660254, -0.8660254
        %v7232 = vsel %vm7228, %v7227, %v7231
        %v7233 = vmul.f32 %v6994, %v7229
        %7235 = vrot.lane.b32.xlu0 %v7232, 48
        %v7236 = vpop.permute.xlu0 %7235
        %v7238 = vmul.f32 %v6994, %v7236
        %7240 = vrot.lane.b32.xlu0 %v7238, 80
        %v7241 = vpop.permute.xlu0 %7240
        %v7243 = vadd.f32 %v7233, %v7241
        %v7244 = vmul.f32 %v7229, %v7229
        %v7245 = vmul.f32 %v7232, %v7232
        %v7246 = vadd.f32 %v7244, %v7245
        %v7247 = vrcp.pop %v7246
        %v7248 = vmul.f32 %v7243, %v7247
        %v7249 = vmax.f32 %v7248, 0.001
        %v7250 = vmin.f32 %v7249, 18.0
        %v7251 = vmul.f32 %v7250, %v7229
        %v7252 = vsub.f32 %v6994, %v7251
        %v7253 = vmul.f32 %v7250, %v7232
        %7255 = vrot.lane.b32.xlu0 %v7253, 48
        %v7256 = vpop.permute.xlu0 %7255
        %v7258 = vsub.f32 %v6994, %v7256
        %v7259 = vmul.f32 %v7252, %v7252
        %v7260 = vmul.f32 %v7258, %v7258
        %7262 = vrot.lane.b32.xlu0 %v7260, 80
        %v7263 = vpop.permute.xlu0 %7262
        %v7265 = vadd.f32 %v7259, %v7263
        %7267 = vrot.lane.b32.xlu0 %v7265, 112
        %v7268 = vpop.permute.xlu0 %7267
        %vm7270 = vcmask 125952
        %v7271 = vsel %vm7270, %v7268, 0.0
        %7272 = vadd.xlane.f32.xlu0 %v7271
        %v7273 = vpop.xlane.xlu0 %7272
        %v7274 = vmul.f32 %v6994, %v7217
        %7276 = vrot.lane.b32.xlu0 %v7227, 48
        %v7277 = vpop.permute.xlu0 %7276
        %v7279 = vmul.f32 %v6994, %v7277
        %7281 = vrot.lane.b32.xlu0 %v7279, 80
        %v7282 = vpop.permute.xlu0 %7281
        %v7284 = vadd.f32 %v7274, %v7282
        %v7285 = vmul.f32 %v7217, %v7217
        %v7286 = vmul.f32 %v7227, %v7227
        %v7287 = vadd.f32 %v7285, %v7286
        %v7288 = vrcp.pop %v7287
        %v7289 = vmul.f32 %v7284, %v7288
        %v7290 = vmax.f32 %v7289, 0.0
        %v7291 = vmin.f32 %v7290, 6.0
        %v7292 = vmul.f32 %v7291, %v7217
        %v7293 = vsub.f32 %v6994, %v7292
        %v7294 = vmul.f32 %v7291, %v7227
        %7296 = vrot.lane.b32.xlu0 %v7294, 48
        %v7297 = vpop.permute.xlu0 %7296
        %v7299 = vsub.f32 %v6994, %v7297
        %v7300 = vmul.f32 %v7293, %v7293
        %v7301 = vmul.f32 %v7299, %v7299
        %7303 = vrot.lane.b32.xlu0 %v7301, 80
        %v7304 = vpop.permute.xlu0 %7303
        %v7306 = vadd.f32 %v7300, %v7304
        %7308 = vrot.lane.b32.xlu0 %v7306, 96
        %v7309 = vpop.permute.xlu0 %7308
        %v7311 = vsel %vm7270, %v7309, 0.0
        %7312 = vadd.xlane.f32.xlu0 %v7311
        %v7313 = vpop.xlane.xlu0 %7312
        %v7314 = vld [vmem:[%s63] sm:$0xf]
        %v7315 = vld [vmem:[%s65] sm:$0xf]
        %v7316 = vsub.f32 0.0, %v6994
        %7318 = vset.pattern.permute.xlu0 0
        %7319 = vperm.xlu0 %7318, %v7314
        %v7320 = vpop.permute.xlu0 %7319
        %v7322 = vadd.f32 %v7316, %v7320
        %v7323 = vmax.f32 %v7322, 0.0
        %7325 = vset.pattern.permute.xlu0 0
        %7326 = vperm.xlu0 %7325, %v7315
        %v7327 = vpop.permute.xlu0 %7326
        %v7329 = vsub.f32 %v6994, %v7327
        %v7330 = vmax.f32 %v7329, 0.0
        %v7331 = vsub.f32 %v6994, %v7320
        %v7332 = vadd.f32 %v7331, %v7323
        %v7333 = vadd.f32 %v7316, %v7327
        %v7334 = vadd.f32 %v7333, %v7330
        %v7335 = vmul.f32 %v7332, %v7332
        %v7336 = vmul.f32 %v7334, %v7334
        %v7337 = vadd.f32 %v7335, %v7336
        %7339 = vrot.lane.b32.xlu0 %v7337, 80
        %v7340 = vpop.permute.xlu0 %7339
        %v7342 = vsel %vm7270, %v7340, 0.0
        %7343 = vadd.xlane.f32.xlu0 %v7342
        %v7344 = vpop.xlane.xlu0 %7343
        %v7345 = vadd.f32 %v7204, 0.0001
        %7347 = vrot.lane.b32.xlu0 %v6994, 96
        %v7348 = vpop.permute.xlu0 %7347
        %v7350 = vmul.f32 %v6994, %v7348
        %7351 = vrot.lane.b32.xlu0 %v6994, 64
        %v7352 = vpop.permute.xlu0 %7351
        %v7354 = vmul.f32 %v6994, %v7352
        %7356 = vrot.lane.b32.xlu0 %v7354, 16
        %v7357 = vpop.permute.xlu0 %7356
        %v7359 = vsub.f32 %v7350, %v7357
        %v7360 = vrsqrt.pop %v7345
        %v7361 = vmul.f32 %v7345, %v7360
        %vm7362 = vcmp.eq.f32.partialorder %v7345, inf
        %v7363 = vsel %vm7362, %v7345, %v7361
        %vm7364 = vcmp.eq.f32.partialorder %v7345, 0.0
        %v7365 = vand.u32 %v7345, 2147483648
        %v7366 = vsel %vm7364, %v7365, %v7363
        %v7367 = vmul.f32 %v7345, %v7366
        %7369 = vrot.lane.b32.xlu0 %v7367, 16
        %v7370 = vpop.permute.xlu0 %7369
        %v7372 = vrcp.pop %v7370
        %v7373 = vmul.f32 %v7359, %v7372
        %v7374 = vmul.f32 %v7373, 2.5
        %v7375 = vand.u32 2147483647, %v7374
        %v7376 = vmax.f32 %v7375, 1.0
        %v7377 = vrcp.pop %v7376
        %v7378 = vmul.f32 1.0, %v7377
        %v7379 = vmin.f32 %v7375, %v7378
        %v7380 = vmul.f32 %v7379, %v7379
        %v7381 = vmul.f32 %v7380, -0.0117212
        %v7382 = vadd.f32 %v7381, 0.05265332
        %v7383 = vmul.f32 %v7380, %v7382
        %v7384 = vadd.f32 %v7383, -0.11643287
        %v7385 = vmul.f32 %v7380, %v7384
        %v7386 = vadd.f32 %v7385, 0.19354346
        %v7387 = vmul.f32 %v7380, %v7386
        %v7388 = vadd.f32 %v7387, -0.33262348
        %v7389 = vmul.f32 %v7380, %v7388
        %v7390 = vadd.f32 %v7389, 0.99997723
        %v7391 = vmul.f32 %v7379, %v7390
        %vm7392 = vcmp.le.f32.partialorder %v7375, 1.0
        %v7393 = vsub.f32 1.5707964, %v7391
        %v7394 = vsel %vm7392, %v7391, %v7393
        %vm7395 = vcmp.lt.f32.partialorder %v7374, 0.0
        %v7396 = vsub.f32 0.0, %v7394
        %v7397 = vsel %vm7395, %v7396, %v7394
        %v7398 = vsub.f32 %v7397, 0.5
        %v7399 = vmax.f32 %v7398, 0.0
        %v7400 = vsub.f32 0.0, %v7397
        %v7401 = vsub.f32 %v7400, 0.5
        %v7402 = vmax.f32 %v7401, 0.0
        %v7403 = vadd.f32 %v7399, %v7402
        %v7404 = vmul.f32 %v7403, %v7403
        %7406 = vrot.lane.b32.xlu0 %v7404, 96
        %v7407 = vpop.permute.xlu0 %7406
        %v7409 = vsel %vm7270, %v7407, 0.0
        %7410 = vadd.xlane.f32.xlu0 %v7409
        %v7411 = vpop.xlane.xlu0 %7410
        %v7412 = vrsqrt.pop %v7313
        %v7413 = vmul.f32 %v7313, %v7412
        %vm7414 = vcmp.eq.f32.partialorder %v7313, inf
        %v7415 = vsel %vm7414, %v7313, %v7413
        %vm7416 = vcmp.eq.f32.partialorder %v7313, 0.0
        %v7417 = vand.u32 %v7313, 2147483648
        %v7418 = vsel %vm7416, %v7417, %v7415
        %v7419 = vrsqrt.pop %v7273
        %v7420 = vmul.f32 %v7273, %v7419
        %vm7421 = vcmp.eq.f32.partialorder %v7273, inf
        %v7422 = vsel %vm7421, %v7273, %v7420
        %vm7423 = vcmp.eq.f32.partialorder %v7273, 0.0
        %v7424 = vand.u32 %v7273, 2147483648
        %v7425 = vsel %vm7423, %v7424, %v7422
        %v7426 = vadd.f32 %v7418, %v7425
        %v7427 = vrsqrt.pop %v7198
        %v7428 = vmul.f32 %v7198, %v7427
        %vm7429 = vcmp.eq.f32.partialorder %v7198, inf
        %v7430 = vsel %vm7429, %v7198, %v7428
        %vm7431 = vcmp.eq.f32.partialorder %v7198, 0.0
        %v7432 = vand.u32 %v7198, 2147483648
        %v7433 = vsel %vm7431, %v7432, %v7430
        %v7434 = vadd.f32 %v7426, %v7433
        %v7435 = vrsqrt.pop %v7344
        %v7436 = vmul.f32 %v7344, %v7435
        %vm7437 = vcmp.eq.f32.partialorder %v7344, inf
        %v7438 = vsel %vm7437, %v7344, %v7436
        %vm7439 = vcmp.eq.f32.partialorder %v7344, 0.0
        %v7440 = vand.u32 %v7344, 2147483648
        %v7441 = vsel %vm7439, %v7440, %v7438
        %v7442 = vadd.f32 %v7434, %v7441
        %v7443 = vrsqrt.pop %v7411
        %v7444 = vmul.f32 %v7411, %v7443
        %vm7445 = vcmp.eq.f32.partialorder %v7411, inf
        %v7446 = vsel %vm7445, %v7411, %v7444
        %vm7447 = vcmp.eq.f32.partialorder %v7411, 0.0
        %v7448 = vand.u32 %v7411, 2147483648
        %v7449 = vsel %vm7447, %v7448, %v7446
        %v7450 = vadd.f32 %v7442, %v7449
        %v7451 = vld [vmem:[%s71] sm:$0xf]
        %v7452 = vadd.f32 %v7451, %v7450
        %vm7453 = vcmask 3072
        %7454 = vst.msk [vmem:[%s71] sm:$0xf] %vm7453, %v7452
        %p7455 = scmp.lt.s32.totalorder %s88, 4
        // Predicated region
        $region189: #{_lambda_.1} parent=155 // pred_check
          %p7456 = pneg %p7455
        $region190: #{_lambda_.1} parent=155 // pred_check_branch
          %7458 = sbr.rel (%p7456) target = $region192
        $region191: #{_lambda_.1} parent=155 // pred_region
          %v7459 = vld [vmem:[%s33] sm:$0xff]
          %v7460 = vld [vmem:[%s33 + $0x8] sm:$0xff]
          %v7461 = vld [vmem:[%s33 + $0x10] sm:$0xff]
          %v7462 = vld [vmem:[%s33 + $0x18] sm:$0xff]
          %v7463 = vld [vmem:[%s33 + $0x20] sm:$0xff]
          %v7464 = vld [vmem:[%s33 + $0x28] sm:$0xff]
          %v7465 = vld [vmem:[%s35] sm:$0x7]
          %v7467 = vlaneseq
          %v7468 = vshrl.u32 %v7467, 7
          %v7469 = vsub.s32 0, %v7468
          %v7470 = vrot.slane %v7465, %v7469
          %v7471 = vlaneseq
          %v7472 = vshrl.u32 %v7471, 7
          %v7473 = vsub.s32 1, %v7472
          %v7474 = vrot.slane %v7465, %v7473
          %v7475 = vlaneseq
          %v7476 = vshrl.u32 %v7475, 7
          %v7477 = vsub.s32 2, %v7476
          %v7478 = vrot.slane %v7465, %v7477
          %v7482 = vmul.f32 %v7450, %v7470
          %v7483 = vmul.f32 %v7450, %v7474
          %v7484 = vmul.f32 %v7450, %v7478
          %7485 = vmatprep.subr.mxu0 %v7460
          %7486 = vmatpush1.msra.mxu0 %v7459
          %7487 = vmatprep.subr.mxu0 %v7463
          %7488 = vmatpush1.msra.mxu0 %v7462
          %7489 = vmatprep.subr.mxu0 0.0
          %7490 = vmatpush1.msra.mxu0 0.0
          %7491 = vmatprep.subr.mxu0 0.0
          %7492 = vmatpush1.msra.mxu0 0.0
          %7493 = vmatprep.subr.mxu0 0.0
          %7494 = vmatpush1.msra.mxu0 0.0
          %7495 = vmatprep.subr.mxu0 0.0
          %7496 = vmatpush1.msra.mxu0 0.0
          %7497 = vmatprep.subr.mxu0 0.0
          %7498 = vmatpush1.msra.mxu0 0.0
          %7499 = vmatprep.subr.mxu0 0.0
          %7500 = vmatpush1.msra.mxu0 0.0
          %7501 = vmatprep.subr.mxu0 0.0
          %7502 = vmatpush1.msra.mxu0 0.0
          %7503 = vmatprep.subr.mxu0 0.0
          %7504 = vmatpush1.msra.mxu0 0.0
          %7505 = vmatprep.subr.mxu0 0.0
          %7506 = vmatpush1.msra.mxu0 0.0
          %7507 = vmatprep.subr.mxu0 0.0
          %7508 = vmatpush1.msra.mxu0 0.0
          %7509 = vmatprep.subr.mxu0 0.0
          %7510 = vmatpush1.msra.mxu0 0.0
          %7511 = vmatprep.subr.mxu0 0.0
          %7512 = vmatpush1.msra.mxu0 0.0
          %7513 = vmatprep.subr.mxu0 0.0
          %7514 = vmatpush1.msra.mxu0 0.0
          %7515 = vmatprep.subr.mxu0 0.0
          %7516 = vmatpush1.msra.mxu0 0.0
          %7517 = vmatprep.subr.mxu0 0.0
          %7518 = vmatpush1.msra.mxu0 0.0
          %7519 = vmatprep.subr.mxu0 0.0
          %7520 = vmatpush1.msra.mxu0 0.0
          %7521 = vmatprep.subr.mxu0 0.0
          %7522 = vmatpush1.msra.mxu0 0.0
          %7523 = vmatprep.subr.mxu0 0.0
          %7524 = vmatpush1.msra.mxu0 0.0
          %7525 = vmatprep.subr.mxu0 0.0
          %7526 = vmatpush1.msra.mxu0 0.0
          %7527 = vmatprep.subr.mxu0 0.0
          %7528 = vmatpush1.msra.mxu0 0.0
          %7529 = vmatprep.subr.mxu0 0.0
          %7530 = vmatpush1.msra.mxu0 0.0
          %7531 = vmatprep.subr.mxu0 0.0
          %7532 = vmatpush1.msra.mxu0 0.0
          %7533 = vmatprep.subr.mxu0 0.0
          %7534 = vmatpush1.msra.mxu0 0.0
          %7535 = vmatprep.subr.mxu0 0.0
          %7536 = vmatpush1.msra.mxu0 0.0
          %7537 = vmatprep.subr.mxu0 0.0
          %7538 = vmatpush1.msra.mxu0 0.0
          %7539 = vmatprep.subr.mxu0 0.0
          %7540 = vmatpush1.msra.mxu0 0.0
          %7541 = vmatprep.subr.mxu0 0.0
          %7542 = vmatpush1.msra.mxu0 0.0
          %7543 = vmatprep.subr.mxu0 0.0
          %7544 = vmatpush1.msra.mxu0 0.0
          %7545 = vmatprep.subr.mxu0 0.0
          %7546 = vmatpush1.msra.mxu0 0.0
          %7547 = vmatprep.subr.mxu0 0.0
          %7548 = vmatpush1.msra.mxu0 0.0
          %7549 = vmatprep.mubr.f32.mxu0 0.0
          %7550 = vmatmul.mubr.f32.gmra.mrb[0].mxu0 %v6925
          %v7551 = vpop.f32.mrb[0].mxu0
          %v7552 = vadd.f32 %v7482, %v7551
          %v7553 = vpop.f32.mrb[0].mxu0
          %v7554 = vadd.f32 %v7483, %v7553
          %7555 = vdwg.mxu0
          %7556 = vmatprep.subr.mxu0 0.0
          %7557 = vmatpush1.msra.mxu0 %v7461
          %7558 = vmatprep.subr.mxu0 0.0
          %7559 = vmatpush1.msra.mxu0 %v7464
          %7560 = vmatprep.subr.mxu0 0.0
          %7561 = vmatpush1.msra.mxu0 0.0
          %7562 = vmatprep.subr.mxu0 0.0
          %7563 = vmatpush1.msra.mxu0 0.0
          %7564 = vmatprep.subr.mxu0 0.0
          %7565 = vmatpush1.msra.mxu0 0.0
          %7566 = vmatprep.subr.mxu0 0.0
          %7567 = vmatpush1.msra.mxu0 0.0
          %7568 = vmatprep.subr.mxu0 0.0
          %7569 = vmatpush1.msra.mxu0 0.0
          %7570 = vmatprep.subr.mxu0 0.0
          %7571 = vmatpush1.msra.mxu0 0.0
          %7572 = vmatprep.subr.mxu0 0.0
          %7573 = vmatpush1.msra.mxu0 0.0
          %7574 = vmatprep.subr.mxu0 0.0
          %7575 = vmatpush1.msra.mxu0 0.0
          %7576 = vmatprep.subr.mxu0 0.0
          %7577 = vmatpush1.msra.mxu0 0.0
          %7578 = vmatprep.subr.mxu0 0.0
          %7579 = vmatpush1.msra.mxu0 0.0
          %7580 = vmatprep.subr.mxu0 0.0
          %7581 = vmatpush1.msra.mxu0 0.0
          %7582 = vmatprep.subr.mxu0 0.0
          %7583 = vmatpush1.msra.mxu0 0.0
          %7584 = vmatprep.subr.mxu0 0.0
          %7585 = vmatpush1.msra.mxu0 0.0
          %7586 = vmatprep.subr.mxu0 0.0
          %7587 = vmatpush1.msra.mxu0 0.0
          %7588 = vmatprep.subr.mxu0 0.0
          %7589 = vmatpush1.msra.mxu0 0.0
          %7590 = vmatprep.subr.mxu0 0.0
          %7591 = vmatpush1.msra.mxu0 0.0
          %7592 = vmatprep.subr.mxu0 0.0
          %7593 = vmatpush1.msra.mxu0 0.0
          %7594 = vmatprep.subr.mxu0 0.0
          %7595 = vmatpush1.msra.mxu0 0.0
          %7596 = vmatprep.subr.mxu0 0.0
          %7597 = vmatpush1.msra.mxu0 0.0
          %7598 = vmatprep.subr.mxu0 0.0
          %7599 = vmatpush1.msra.mxu0 0.0
          %7600 = vmatprep.subr.mxu0 0.0
          %7601 = vmatpush1.msra.mxu0 0.0
          %7602 = vmatprep.subr.mxu0 0.0
          %7603 = vmatpush1.msra.mxu0 0.0
          %7604 = vmatprep.subr.mxu0 0.0
          %7605 = vmatpush1.msra.mxu0 0.0
          %7606 = vmatprep.subr.mxu0 0.0
          %7607 = vmatpush1.msra.mxu0 0.0
          %7608 = vmatprep.subr.mxu0 0.0
          %7609 = vmatpush1.msra.mxu0 0.0
          %7610 = vmatprep.subr.mxu0 0.0
          %7611 = vmatpush1.msra.mxu0 0.0
          %7612 = vmatprep.subr.mxu0 0.0
          %7613 = vmatpush1.msra.mxu0 0.0
          %7614 = vmatprep.subr.mxu0 0.0
          %7615 = vmatpush1.msra.mxu0 0.0
          %7616 = vmatprep.subr.mxu0 0.0
          %7617 = vmatpush1.msra.mxu0 0.0
          %7618 = vmatprep.subr.mxu0 0.0
          %7619 = vmatpush1.msra.mxu0 0.0
          %7620 = vmatprep.mubr.f32.mxu0 0.0
          %7621 = vmatmul.mubr.f32.gmra.mrb[0].mxu0 %v6925
          %v7622 = vpop.f32.mrb[0].mxu0
          %v7623 = vadd.f32 %v7484, %v7622
          %v7624 = vpop.f32.mrb[0].mxu0
          %7625 = vdwg.mxu0
          %v7626 = vld [vmem:[%s37] sm:$0x7]
          %v7628 = vlaneseq
          %v7629 = vshrl.u32 %v7628, 7
          %v7630 = vsub.s32 0, %v7629
          %v7631 = vrot.slane %v7626, %v7630
          %v7632 = vlaneseq
          %v7633 = vshrl.u32 %v7632, 7
          %v7634 = vsub.s32 1, %v7633
          %v7635 = vrot.slane %v7626, %v7634
          %v7636 = vlaneseq
          %v7637 = vshrl.u32 %v7636, 7
          %v7638 = vsub.s32 2, %v7637
          %v7639 = vrot.slane %v7626, %v7638
          %v7643 = vadd.f32 %v7552, %v7631
          %v7644 = vadd.f32 %v7554, %v7635
          %v7645 = vadd.f32 %v7623, %v7639
          %v7646 = vld [vmem:[%s39] sm:$0xff]
          %v7647 = vld [vmem:[%s39 + $0x8] sm:$0xff]
          %v7648 = vld [vmem:[%s39 + $0x10] sm:$0xff]
          %v7649 = vld [vmem:[%s39 + $0x18] sm:$0xff]
          %v7650 = vld [vmem:[%s39 + $0x20] sm:$0xff]
          %v7651 = vld [vmem:[%s39 + $0x28] sm:$0xff]
          %v7652 = vld [vmem:[%s39 + $0x30] sm:$0xff]
          %v7653 = vld [vmem:[%s39 + $0x38] sm:$0xff]
          %v7654 = vld [vmem:[%s39 + $0x40] sm:$0xff]
          %v7655 = vld [vmem:[%s39 + $0x48] sm:$0xff]
          %v7656 = vld [vmem:[%s39 + $0x50] sm:$0xff]
          %v7657 = vld [vmem:[%s39 + $0x58] sm:$0xff]
          %v7658 = vld [vmem:[%s39 + $0x60] sm:$0xff]
          %v7659 = vld [vmem:[%s39 + $0x68] sm:$0xff]
          %v7660 = vld [vmem:[%s39 + $0x70] sm:$0xff]
          %v7661 = vld [vmem:[%s39 + $0x78] sm:$0xff]
          %v7662 = vld [vmem:[%s39 + $0x80] sm:$0xff]
          %v7663 = vld [vmem:[%s39 + $0x88] sm:$0xff]
          %v7664 = vld [vmem:[%s39 + $0x90] sm:$0xff]
          %v7665 = vld [vmem:[%s39 + $0x98] sm:$0xff]
          %v7666 = vld [vmem:[%s39 + $0xa0] sm:$0xff]
          %v7667 = vld [vmem:[%s39 + $0xa8] sm:$0xff]
          %v7668 = vld [vmem:[%s39 + $0xb0] sm:$0xff]
          %v7669 = vld [vmem:[%s39 + $0xb8] sm:$0xff]
          %v7670 = vld [vmem:[%s39 + $0xc0] sm:$0xff]
          %v7671 = vld [vmem:[%s39 + $0xc8] sm:$0xff]
          %v7672 = vld [vmem:[%s39 + $0xd0] sm:$0xff]
          %v7673 = vld [vmem:[%s39 + $0xd8] sm:$0xff]
          %v7674 = vld [vmem:[%s39 + $0xe0] sm:$0xff]
          %v7675 = vld [vmem:[%s39 + $0xe8] sm:$0xff]
          %v7676 = vld [vmem:[%s39 + $0xf0] sm:$0xff]
          %v7677 = vld [vmem:[%s39 + $0xf8] sm:$0xff]
          %v7678 = vld [vmem:[%s39 + $0x100] sm:$0xff]
          %v7679 = vld [vmem:[%s39 + $0x108] sm:$0xff]
          %v7680 = vld [vmem:[%s39 + $0x110] sm:$0xff]
          %v7681 = vld [vmem:[%s39 + $0x118] sm:$0xff]
          %v7682 = vld [vmem:[%s39 + $0x120] sm:$0xff]
          %v7683 = vld [vmem:[%s39 + $0x128] sm:$0xff]
          %v7684 = vld [vmem:[%s39 + $0x130] sm:$0xff]
          %v7685 = vld [vmem:[%s39 + $0x138] sm:$0xff]
          %v7686 = vld [vmem:[%s39 + $0x140] sm:$0xff]
          %v7687 = vld [vmem:[%s39 + $0x148] sm:$0xff]
          %v7688 = vld [vmem:[%s39 + $0x150] sm:$0xff]
          %v7689 = vld [vmem:[%s39 + $0x158] sm:$0xff]
          %v7690 = vld [vmem:[%s39 + $0x160] sm:$0xff]
          %v7691 = vld [vmem:[%s39 + $0x168] sm:$0xff]
          %v7692 = vld [vmem:[%s39 + $0x170] sm:$0xff]
          %v7693 = vld [vmem:[%s39 + $0x178] sm:$0xff]
          %v7694 = vld [vmem:[%s41] sm:$0x7]
          %v7696 = vlaneseq
          %v7697 = vshrl.u32 %v7696, 7
          %v7698 = vsub.s32 0, %v7697
          %v7699 = vrot.slane %v7694, %v7698
          %v7700 = vlaneseq
          %v7701 = vshrl.u32 %v7700, 7
          %v7702 = vsub.s32 1, %v7701
          %v7703 = vrot.slane %v7694, %v7702
          %v7704 = vlaneseq
          %v7705 = vshrl.u32 %v7704, 7
          %v7706 = vsub.s32 2, %v7705
          %v7707 = vrot.slane %v7694, %v7706
          %7711 = vmatprep.subr.mxu0 %v7647
          %7712 = vmatpush1.msra.mxu0 %v7646
          %7713 = vmatprep.subr.mxu0 %v7650
          %7714 = vmatpush1.msra.mxu0 %v7649
          %7715 = vmatprep.subr.mxu0 %v7653
          %7716 = vmatpush1.msra.mxu0 %v7652
          %7717 = vmatprep.subr.mxu0 %v7656
          %7718 = vmatpush1.msra.mxu0 %v7655
          %7719 = vmatprep.subr.mxu0 %v7659
          %7720 = vmatpush1.msra.mxu0 %v7658
          %7721 = vmatprep.subr.mxu0 %v7662
          %7722 = vmatpush1.msra.mxu0 %v7661
          %7723 = vmatprep.subr.mxu0 %v7665
          %7724 = vmatpush1.msra.mxu0 %v7664
          %7725 = vmatprep.subr.mxu0 %v7668
          %7726 = vmatpush1.msra.mxu0 %v7667
          %7727 = vmatprep.subr.mxu0 %v7671
          %7728 = vmatpush1.msra.mxu0 %v7670
          %7729 = vmatprep.subr.mxu0 %v7674
          %7730 = vmatpush1.msra.mxu0 %v7673
          %7731 = vmatprep.subr.mxu0 %v7677
          %7732 = vmatpush1.msra.mxu0 %v7676
          %7733 = vmatprep.subr.mxu0 %v7680
          %7734 = vmatpush1.msra.mxu0 %v7679
          %7735 = vmatprep.subr.mxu0 %v7683
          %7736 = vmatpush1.msra.mxu0 %v7682
          %7737 = vmatprep.subr.mxu0 %v7686
          %7738 = vmatpush1.msra.mxu0 %v7685
          %7739 = vmatprep.subr.mxu0 %v7689
          %7740 = vmatpush1.msra.mxu0 %v7688
          %7741 = vmatprep.subr.mxu0 %v7692
          %7742 = vmatpush1.msra.mxu0 %v7691
          %7743 = vmatprep.subr.mxu0 0.0
          %7744 = vmatpush1.msra.mxu0 0.0
          %7745 = vmatprep.subr.mxu0 0.0
          %7746 = vmatpush1.msra.mxu0 0.0
          %7747 = vmatprep.subr.mxu0 0.0
          %7748 = vmatpush1.msra.mxu0 0.0
          %7749 = vmatprep.subr.mxu0 0.0
          %7750 = vmatpush1.msra.mxu0 0.0
          %7751 = vmatprep.subr.mxu0 0.0
          %7752 = vmatpush1.msra.mxu0 0.0
          %7753 = vmatprep.subr.mxu0 0.0
          %7754 = vmatpush1.msra.mxu0 0.0
          %7755 = vmatprep.subr.mxu0 0.0
          %7756 = vmatpush1.msra.mxu0 0.0
          %7757 = vmatprep.subr.mxu0 0.0
          %7758 = vmatpush1.msra.mxu0 0.0
          %7759 = vmatprep.subr.mxu0 0.0
          %7760 = vmatpush1.msra.mxu0 0.0
          %7761 = vmatprep.subr.mxu0 0.0
          %7762 = vmatpush1.msra.mxu0 0.0
          %7763 = vmatprep.subr.mxu0 0.0
          %7764 = vmatpush1.msra.mxu0 0.0
          %7765 = vmatprep.subr.mxu0 0.0
          %7766 = vmatpush1.msra.mxu0 0.0
          %7767 = vmatprep.subr.mxu0 0.0
          %7768 = vmatpush1.msra.mxu0 0.0
          %7769 = vmatprep.subr.mxu0 0.0
          %7770 = vmatpush1.msra.mxu0 0.0
          %7771 = vmatprep.subr.mxu0 0.0
          %7772 = vmatpush1.msra.mxu0 0.0
          %7773 = vmatprep.subr.mxu0 0.0
          %7774 = vmatpush1.msra.mxu0 0.0
          %7775 = vmatprep.mubr.f32.mxu0 0.0
          %7776 = vmatmul.mubr.f32.gmra.mrb[0].mxu0 %v1886
          %v7777 = vpop.f32.mrb[0].mxu0
          %v7778 = vadd.f32 %v7699, %v7777
          %v7779 = vpop.f32.mrb[0].mxu0
          %v7780 = vadd.f32 %v7703, %v7779
          %7781 = vdwg.mxu0
          %7782 = vmatprep.subr.mxu0 0.0
          %7783 = vmatpush1.msra.mxu0 %v7648
          %7784 = vmatprep.subr.mxu0 0.0
          %7785 = vmatpush1.msra.mxu0 %v7651
          %7786 = vmatprep.subr.mxu0 0.0
          %7787 = vmatpush1.msra.mxu0 %v7654
          %7788 = vmatprep.subr.mxu0 0.0
          %7789 = vmatpush1.msra.mxu0 %v7657
          %7790 = vmatprep.subr.mxu0 0.0
          %7791 = vmatpush1.msra.mxu0 %v7660
          %7792 = vmatprep.subr.mxu0 0.0
          %7793 = vmatpush1.msra.mxu0 %v7663
          %7794 = vmatprep.subr.mxu0 0.0
          %7795 = vmatpush1.msra.mxu0 %v7666
          %7796 = vmatprep.subr.mxu0 0.0
          %7797 = vmatpush1.msra.mxu0 %v7669
          %7798 = vmatprep.subr.mxu0 0.0
          %7799 = vmatpush1.msra.mxu0 %v7672
          %7800 = vmatprep.subr.mxu0 0.0
          %7801 = vmatpush1.msra.mxu0 %v7675
          %7802 = vmatprep.subr.mxu0 0.0
          %7803 = vmatpush1.msra.mxu0 %v7678
          %7804 = vmatprep.subr.mxu0 0.0
          %7805 = vmatpush1.msra.mxu0 %v7681
          %7806 = vmatprep.subr.mxu0 0.0
          %7807 = vmatpush1.msra.mxu0 %v7684
          %7808 = vmatprep.subr.mxu0 0.0
          %7809 = vmatpush1.msra.mxu0 %v7687
          %7810 = vmatprep.subr.mxu0 0.0
          %7811 = vmatpush1.msra.mxu0 %v7690
          %7812 = vmatprep.subr.mxu0 0.0
          %7813 = vmatpush1.msra.mxu0 %v7693
          %7814 = vmatprep.subr.mxu0 0.0
          %7815 = vmatpush1.msra.mxu0 0.0
          %7816 = vmatprep.subr.mxu0 0.0
          %7817 = vmatpush1.msra.mxu0 0.0
          %7818 = vmatprep.subr.mxu0 0.0
          %7819 = vmatpush1.msra.mxu0 0.0
          %7820 = vmatprep.subr.mxu0 0.0
          %7821 = vmatpush1.msra.mxu0 0.0
          %7822 = vmatprep.subr.mxu0 0.0
          %7823 = vmatpush1.msra.mxu0 0.0
          %7824 = vmatprep.subr.mxu0 0.0
          %7825 = vmatpush1.msra.mxu0 0.0
          %7826 = vmatprep.subr.mxu0 0.0
          %7827 = vmatpush1.msra.mxu0 0.0
          %7828 = vmatprep.subr.mxu0 0.0
          %7829 = vmatpush1.msra.mxu0 0.0
          %7830 = vmatprep.subr.mxu0 0.0
          %7831 = vmatpush1.msra.mxu0 0.0
          %7832 = vmatprep.subr.mxu0 0.0
          %7833 = vmatpush1.msra.mxu0 0.0
          %7834 = vmatprep.subr.mxu0 0.0
          %7835 = vmatpush1.msra.mxu0 0.0
          %7836 = vmatprep.subr.mxu0 0.0
          %7837 = vmatpush1.msra.mxu0 0.0
          %7838 = vmatprep.subr.mxu0 0.0
          %7839 = vmatpush1.msra.mxu0 0.0
          %7840 = vmatprep.subr.mxu0 0.0
          %7841 = vmatpush1.msra.mxu0 0.0
          %7842 = vmatprep.subr.mxu0 0.0
          %7843 = vmatpush1.msra.mxu0 0.0
          %7844 = vmatprep.subr.mxu0 0.0
          %7845 = vmatpush1.msra.mxu0 0.0
          %7846 = vmatprep.mubr.f32.mxu0 0.0
          %7847 = vmatmul.mubr.f32.gmra.mrb[0].mxu0 %v1886
          %v7848 = vpop.f32.mrb[0].mxu0
          %v7849 = vadd.f32 %v7707, %v7848
          %v7850 = vpop.f32.mrb[0].mxu0
          %7851 = vdwg.mxu0
          %v7852 = vadd.f32 %v7643, %v7778
          %v7853 = vmul.f32 %v7852, 0.5
          %v7854 = vtanh.pop %v7853
          %v7855 = vadd.f32 %v7854, 1.0
          %v7856 = vmul.f32 %v7855, 0.5
          %v7857 = vadd.f32 %v7644, %v7780
          %v7858 = vmul.f32 %v7857, 0.5
          %v7859 = vtanh.pop %v7858
          %v7860 = vadd.f32 %v7859, 1.0
          %v7861 = vmul.f32 %v7860, 0.5
          %v7862 = vmul.f32 %v7856, %v7849
          %v7863 = vadd.f32 %v7645, %v7862
          %v7864 = vtanh.pop %v7863
          %v7865 = vsub.f32 1.0, %v7861
          %v7866 = vmul.f32 %v7865, %v7864
          %v7867 = vmul.f32 %v7861, %v1886
          %v7868 = vadd.f32 %v7866, %v7867
          %7869 = vst [vmem:[#allocation4] sm:$0xf] %v7868
          %v7870 = vld [vmem:[%s43] sm:$0xff]
          %v7871 = vld [vmem:[%s43 + $0x8] sm:$0xff]
          %v7872 = vld [vmem:[%s43 + $0x10] sm:$0xff]
          %v7873 = vld [vmem:[%s43 + $0x18] sm:$0xff]
          %v7874 = vld [vmem:[%s43 + $0x20] sm:$0xff]
          %v7875 = vld [vmem:[%s43 + $0x28] sm:$0xff]
          %v7876 = vld [vmem:[%s43 + $0x30] sm:$0xff]
          %v7877 = vld [vmem:[%s43 + $0x38] sm:$0xff]
          %v7878 = vld [vmem:[%s43 + $0x40] sm:$0xff]
          %v7879 = vld [vmem:[%s43 + $0x48] sm:$0xff]
          %v7880 = vld [vmem:[%s43 + $0x50] sm:$0xff]
          %v7881 = vld [vmem:[%s43 + $0x58] sm:$0xff]
          %v7882 = vld [vmem:[%s43 + $0x60] sm:$0xff]
          %v7883 = vld [vmem:[%s43 + $0x68] sm:$0xff]
          %v7884 = vld [vmem:[%s43 + $0x70] sm:$0xff]
          %v7885 = vld [vmem:[%s43 + $0x78] sm:$0xff]
          %v7886 = vld [vmem:[%s43 + $0x80] sm:$0xff]
          %v7887 = vld [vmem:[%s43 + $0x88] sm:$0xff]
          %v7888 = vld [vmem:[%s43 + $0x90] sm:$0xff]
          %v7889 = vld [vmem:[%s43 + $0x98] sm:$0xff]
          %v7890 = vld [vmem:[%s43 + $0xa0] sm:$0xff]
          %v7891 = vld [vmem:[%s43 + $0xa8] sm:$0xff]
          %v7892 = vld [vmem:[%s43 + $0xb0] sm:$0xff]
          %v7893 = vld [vmem:[%s43 + $0xb8] sm:$0xff]
          %v7894 = vld [vmem:[%s43 + $0xc0] sm:$0xff]
          %v7895 = vld [vmem:[%s43 + $0xc8] sm:$0xff]
          %v7896 = vld [vmem:[%s43 + $0xd0] sm:$0xff]
          %v7897 = vld [vmem:[%s43 + $0xd8] sm:$0xff]
          %v7898 = vld [vmem:[%s43 + $0xe0] sm:$0xff]
          %v7899 = vld [vmem:[%s43 + $0xe8] sm:$0xff]
          %v7900 = vld [vmem:[%s43 + $0xf0] sm:$0xff]
          %v7901 = vld [vmem:[%s43 + $0xf8] sm:$0xff]
          %v7902 = vld [vmem:[%s47] sm:$0x3]
          %v7904 = vlaneseq
          %v7905 = vshrl.u32 %v7904, 7
          %v7906 = vsub.s32 0, %v7905
          %v7907 = vrot.slane %v7902, %v7906
          %v7908 = vlaneseq
          %v7909 = vshrl.u32 %v7908, 7
          %v7910 = vsub.s32 1, %v7909
          %v7911 = vrot.slane %v7902, %v7910
          %7914 = vmatprep.subr.mxu0 %v7871
          %7915 = vmatpush1.msra.mxu0 %v7870
          %7916 = vmatprep.subr.mxu0 %v7873
          %7917 = vmatpush1.msra.mxu0 %v7872
          %7918 = vmatprep.subr.mxu0 %v7875
          %7919 = vmatpush1.msra.mxu0 %v7874
          %7920 = vmatprep.subr.mxu0 %v7877
          %7921 = vmatpush1.msra.mxu0 %v7876
          %7922 = vmatprep.subr.mxu0 %v7879
          %7923 = vmatpush1.msra.mxu0 %v7878
          %7924 = vmatprep.subr.mxu0 %v7881
          %7925 = vmatpush1.msra.mxu0 %v7880
          %7926 = vmatprep.subr.mxu0 %v7883
          %7927 = vmatpush1.msra.mxu0 %v7882
          %7928 = vmatprep.subr.mxu0 %v7885
          %7929 = vmatpush1.msra.mxu0 %v7884
          %7930 = vmatprep.subr.mxu0 %v7887
          %7931 = vmatpush1.msra.mxu0 %v7886
          %7932 = vmatprep.subr.mxu0 %v7889
          %7933 = vmatpush1.msra.mxu0 %v7888
          %7934 = vmatprep.subr.mxu0 %v7891
          %7935 = vmatpush1.msra.mxu0 %v7890
          %7936 = vmatprep.subr.mxu0 %v7893
          %7937 = vmatpush1.msra.mxu0 %v7892
          %7938 = vmatprep.subr.mxu0 %v7895
          %7939 = vmatpush1.msra.mxu0 %v7894
          %7940 = vmatprep.subr.mxu0 %v7897
          %7941 = vmatpush1.msra.mxu0 %v7896
          %7942 = vmatprep.subr.mxu0 %v7899
          %7943 = vmatpush1.msra.mxu0 %v7898
          %7944 = vmatprep.subr.mxu0 %v7901
          %7945 = vmatpush1.msra.mxu0 %v7900
          %7946 = vmatprep.subr.mxu0 0.0
          %7947 = vmatpush1.msra.mxu0 0.0
          %7948 = vmatprep.subr.mxu0 0.0
          %7949 = vmatpush1.msra.mxu0 0.0
          %7950 = vmatprep.subr.mxu0 0.0
          %7951 = vmatpush1.msra.mxu0 0.0
          %7952 = vmatprep.subr.mxu0 0.0
          %7953 = vmatpush1.msra.mxu0 0.0
          %7954 = vmatprep.subr.mxu0 0.0
          %7955 = vmatpush1.msra.mxu0 0.0
          %7956 = vmatprep.subr.mxu0 0.0
          %7957 = vmatpush1.msra.mxu0 0.0
          %7958 = vmatprep.subr.mxu0 0.0
          %7959 = vmatpush1.msra.mxu0 0.0
          %7960 = vmatprep.subr.mxu0 0.0
          %7961 = vmatpush1.msra.mxu0 0.0
          %7962 = vmatprep.subr.mxu0 0.0
          %7963 = vmatpush1.msra.mxu0 0.0
          %7964 = vmatprep.subr.mxu0 0.0
          %7965 = vmatpush1.msra.mxu0 0.0
          %7966 = vmatprep.subr.mxu0 0.0
          %7967 = vmatpush1.msra.mxu0 0.0
          %7968 = vmatprep.subr.mxu0 0.0
          %7969 = vmatpush1.msra.mxu0 0.0
          %7970 = vmatprep.subr.mxu0 0.0
          %7971 = vmatpush1.msra.mxu0 0.0
          %7972 = vmatprep.subr.mxu0 0.0
          %7973 = vmatpush1.msra.mxu0 0.0
          %7974 = vmatprep.subr.mxu0 0.0
          %7975 = vmatpush1.msra.mxu0 0.0
          %7976 = vmatprep.subr.mxu0 0.0
          %7977 = vmatpush1.msra.mxu0 0.0
          %7978 = vmatprep.mubr.f32.mxu0 0.0
          %7979 = vmatmul.mubr.f32.gmra.mrb[0].mxu0 %v7868
          %v7980 = vpop.f32.mrb[0].mxu0
          %v7981 = vadd.f32 %v7907, %v7980
          %v7982 = vpop.f32.mrb[0].mxu0
          %v7983 = vadd.f32 %v7911, %v7982
          %7984 = vdwg.mxu0
          %v7987 = vcombine.low %v7981, %v7983
          %7989 = vst [vmem:[#allocation2] sm:$0xff] %v7987
          %v7990 = vld [vmem:[%s45] sm:$0xff]
          %v7991 = vld [vmem:[%s45 + $0x8] sm:$0xff]
          %v7992 = vld [vmem:[%s45 + $0x10] sm:$0xff]
          %v7993 = vld [vmem:[%s45 + $0x18] sm:$0xff]
          %v7994 = vld [vmem:[%s45 + $0x20] sm:$0xff]
          %v7995 = vld [vmem:[%s45 + $0x28] sm:$0xff]
          %v7996 = vld [vmem:[%s45 + $0x30] sm:$0xff]
          %v7997 = vld [vmem:[%s45 + $0x38] sm:$0xff]
          %v7998 = vld [vmem:[%s45 + $0x40] sm:$0xff]
          %v7999 = vld [vmem:[%s45 + $0x48] sm:$0xff]
          %v8000 = vld [vmem:[%s45 + $0x50] sm:$0xff]
          %v8001 = vld [vmem:[%s45 + $0x58] sm:$0xff]
          %v8002 = vld [vmem:[%s45 + $0x60] sm:$0xff]
          %v8003 = vld [vmem:[%s45 + $0x68] sm:$0xff]
          %v8004 = vld [vmem:[%s45 + $0x70] sm:$0xff]
          %v8005 = vld [vmem:[%s45 + $0x78] sm:$0xff]
          %v8006 = vld [vmem:[#allocation15] sm:$0x1]
          %v8008 = vlaneseq
          %v8009 = vshrl.u32 %v8008, 7
          %v8010 = vsub.s32 0, %v8009
          %v8011 = vrot.slane %v8006, %v8010
          %8013 = vmatprep.subr.mxu0 0.0
          %8014 = vmatpush1.msra.mxu0 %v7990
          %8015 = vmatprep.subr.mxu0 0.0
          %8016 = vmatpush1.msra.mxu0 %v7991
          %8017 = vmatprep.subr.mxu0 0.0
          %8018 = vmatpush1.msra.mxu0 %v7992
          %8019 = vmatprep.subr.mxu0 0.0
          %8020 = vmatpush1.msra.mxu0 %v7993
          %8021 = vmatprep.subr.mxu0 0.0
          %8022 = vmatpush1.msra.mxu0 %v7994
          %8023 = vmatprep.subr.mxu0 0.0
          %8024 = vmatpush1.msra.mxu0 %v7995
          %8025 = vmatprep.subr.mxu0 0.0
          %8026 = vmatpush1.msra.mxu0 %v7996
          %8027 = vmatprep.subr.mxu0 0.0
          %8028 = vmatpush1.msra.mxu0 %v7997
          %8029 = vmatprep.subr.mxu0 0.0
          %8030 = vmatpush1.msra.mxu0 %v7998
          %8031 = vmatprep.subr.mxu0 0.0
          %8032 = vmatpush1.msra.mxu0 %v7999
          %8033 = vmatprep.subr.mxu0 0.0
          %8034 = vmatpush1.msra.mxu0 %v8000
          %8035 = vmatprep.subr.mxu0 0.0
          %8036 = vmatpush1.msra.mxu0 %v8001
          %8037 = vmatprep.subr.mxu0 0.0
          %8038 = vmatpush1.msra.mxu0 %v8002
          %8039 = vmatprep.subr.mxu0 0.0
          %8040 = vmatpush1.msra.mxu0 %v8003
          %8041 = vmatprep.subr.mxu0 0.0
          %8042 = vmatpush1.msra.mxu0 %v8004
          %8043 = vmatprep.subr.mxu0 0.0
          %8044 = vmatpush1.msra.mxu0 %v8005
          %8045 = vmatprep.subr.mxu0 0.0
          %8046 = vmatpush1.msra.mxu0 0.0
          %8047 = vmatprep.subr.mxu0 0.0
          %8048 = vmatpush1.msra.mxu0 0.0
          %8049 = vmatprep.subr.mxu0 0.0
          %8050 = vmatpush1.msra.mxu0 0.0
          %8051 = vmatprep.subr.mxu0 0.0
          %8052 = vmatpush1.msra.mxu0 0.0
          %8053 = vmatprep.subr.mxu0 0.0
          %8054 = vmatpush1.msra.mxu0 0.0
          %8055 = vmatprep.subr.mxu0 0.0
          %8056 = vmatpush1.msra.mxu0 0.0
          %8057 = vmatprep.subr.mxu0 0.0
          %8058 = vmatpush1.msra.mxu0 0.0
          %8059 = vmatprep.subr.mxu0 0.0
          %8060 = vmatpush1.msra.mxu0 0.0
          %8061 = vmatprep.subr.mxu0 0.0
          %8062 = vmatpush1.msra.mxu0 0.0
          %8063 = vmatprep.subr.mxu0 0.0
          %8064 = vmatpush1.msra.mxu0 0.0
          %8065 = vmatprep.subr.mxu0 0.0
          %8066 = vmatpush1.msra.mxu0 0.0
          %8067 = vmatprep.subr.mxu0 0.0
          %8068 = vmatpush1.msra.mxu0 0.0
          %8069 = vmatprep.subr.mxu0 0.0
          %8070 = vmatpush1.msra.mxu0 0.0
          %8071 = vmatprep.subr.mxu0 0.0
          %8072 = vmatpush1.msra.mxu0 0.0
          %8073 = vmatprep.subr.mxu0 0.0
          %8074 = vmatpush1.msra.mxu0 0.0
          %8075 = vmatprep.subr.mxu0 0.0
          %8076 = vmatpush1.msra.mxu0 0.0
          %8077 = vmatprep.mubr.f32.mxu0 0.0
          %8078 = vmatmul.mubr.f32.gmra.mrb[0].mxu0 %v7868
          %v8079 = vpop.f32.mrb[0].mxu0
          %v8080 = vadd.f32 %v8011, %v8079
          %v8081 = vpop.f32.mrb[0].mxu0
          %8082 = vdwg.mxu0
          %8083 = vst.msk [vmem:[#allocation3] sm:$0xf] %vm7270, %v8080
        $region192: #{_lambda_.1} parent=155 // pred_fallthru
          _
        %p8084 = scmp.eq.s32.totalorder %s88, 4
        // Predicated region
        $region193: #{_lambda_.1} parent=155 // pred_check
          %p8085 = pneg %p8084
        $region194: #{_lambda_.1} parent=155 // pred_check_branch
          %8087 = sbr.rel (%p8085) target = $region196
        $region195: #{_lambda_.1} parent=155 // pred_region
          %v8088 = vld [vmem:[%s71] sm:$0xf]
          %v8089 = vmul.f32 %v8088, 0.2
          %8090 = vst.msk [vmem:[%s71] sm:$0xf] %vm7453, %v8089
        $region196: #{_lambda_.1} parent=155 // pred_fallthru
          _
        // Predicated region
        $region197: #{_lambda_.1} parent=155 // pred_check
          %p8091 = pneg %p815
        $region198: #{_lambda_.1} parent=155 // pred_check_branch
          %8093 = sbr.rel (%p8091) target = $region200
        $region199: #{_lambda_.1} parent=155 // pred_region
          %s8095 = ssub.s32 64, 64
          %8096 = vsyncadd [#allocation9], %s8095
          %s8098 = sshll.u32 [#allocation19], 4
          %s8099 = int_to_ptr.vmem [resolvable:$true] %s8098
          %8101 = dma.vmem_to_hbm [thread:$0]  %s8099, 64, %s69, [#allocation9]
        $region200: #{_lambda_.1} parent=155 // pred_fallthru
          _
        // Predicated region
        $region201: #{_lambda_.1} parent=155 // pred_check
          %p8102 = pneg %p836
        $region202: #{_lambda_.1} parent=155 // pred_check_branch
          %8104 = sbr.rel (%p8102) target = $region204
        $region203: #{_lambda_.1} parent=155 // pred_region
          _
        $region204: #{_lambda_.1} parent=155 // pred_fallthru
          _
        // Predicated region
        $region205: #{_lambda_.1} parent=155 // pred_check
          %p8105 = pneg %p815
        $region206: #{_lambda_.1} parent=155 // pred_check_branch
          %8107 = sbr.rel (%p8105) target = $region208
        $region207: #{_lambda_.1} parent=155 // pred_region
          %8108 = dma.done [#allocation9], 64
        $region208: #{_lambda_.1} parent=155 // pred_fallthru
          _
        // Predicated region
        $region209: #{_lambda_.1} parent=155 // pred_check
          %p8109 = pneg %p836
        $region210: #{_lambda_.1} parent=155 // pred_check_branch
          %8111 = sbr.rel (%p8109) target = $region212
        $region211: #{_lambda_.1} parent=155 // pred_region
          _
        $region212: #{_lambda_.1} parent=155 // pred_fallthru
          _
      $region156: #{_lambda_.1} parent=5 // pred_fallthru
        _
      %p8112 = scmp.le.s32.totalorder 2, %s83
      // Predicated region
      $region213: #{_lambda_.1} parent=5 // pred_check
        %p8113 = pneg %p8112
      $region214: #{_lambda_.1} parent=5 // pred_check_branch
        %8115 = sbr.rel (%p8113) target = $region216
      $region215: #{_lambda_.1} parent=5 // pred_region
        %s8116 = ssub.s32 %s83, 2
      $region216: #{_lambda_.1} parent=5 // pred_fallthru
        _
    $region6: #{_lambda_.1} parent=1 // loop_footer
      %s87 = sadd.s32 1, %s83
    $region7: #{_lambda_.1} parent=1 // loop_footer_branch
      %82 = sbr.rel target = $region3
    $region8: #{_lambda_.1} parent=1 // loop_exit
      _
    %8117 = vsyncpa [#allocation8], 1
    %s8118 = scalar_lea.sflag [#allocation8], 1
    %8119 = vsyncpa %s8118, 1
    %8120 = vsyncpa [#allocation11], 1
    %8121 = vsyncpa [#allocation14], 1
    %8122 = vsyncpa [#allocation17], 1
    %8123 = vsyncpa [#allocation9], 1
    %s8124 = scalar_lea.sflag [#allocation9], 1
    %8125 = vsyncpa %s8124, 1

</llo_original>
